<compile_context>
chip_gen: v5e
topology: v5e:2x2
jax: 0.10.0
libtpu: 0.0.40
codegen_flags: <defaults>
</compile_context>

<pallas_src>
import numpy as np

import jax
import jax.numpy as jnp
from jax import lax
from jax.experimental import pallas as pl
from jax.experimental.pallas import tpu as pltpu

EMBED_DIM = 128          # forced by the conv-stack / flatten geometry
GAT_EMBED_DIM = 32
OUTBERT_DIM = 768
DRUG_RWR_DIM = 1500
SIDE_RWR_DIM = 2982
CHANNEL_SIZE = 8         # 2 * 4
NUMBER_MAP = 6           # 2 * 3 interaction maps
NMAP_PAD = 8             # NUMBER_MAP padded to a sublane tile for the MXU path
BN_EPS = 1e-5

CONV_W_COLS = 33         # up to 8*4 = 32 weights per output channel + 1 bias
CONV_BIAS_COL = 32
N_CONV_LAYERS = 5


def _round_up(x, m):
    return (x + m - 1) // m * m


def _bitrev(bits):
    n = 1 << bits
    out = np.zeros(n, dtype=np.int32)
    for i in range(n):
        r, x = 0, i
        for _ in range(bits):
            r = (r << 1) | (x & 1)
            x >>= 1
        out[i] = r
    return out


_REV6 = _bitrev(6)                                        # involution
_REV2 = _bitrev(2)                                        # [0, 2, 1, 3]
# _POS[r, kh] = 2 * rev6(r) + kh  -> stride-2 split + bit-reversed permutation
_POS = (2 * _REV6[:, None] + np.arange(2, dtype=np.int32)[None, :])
# flatten fix-up: stored (rev2(h), rev2(w)) -> PyTorch order h*4 + w
_FLAT_PERM = (_REV2[:, None] * 4 + _REV2[None, :]).reshape(-1)


# ---------------------------------------------------------------------------
# Generic row-tiled pallas_call helper (batch rows tiled, weights broadcast).
# ---------------------------------------------------------------------------
def _row_blocked_call(kernel, batched, consts, out_cols, block_m=128):
    m = batched[0].shape[0]
    tm = m if m <= block_m else block_m
    mp = _round_up(m, tm)
    if mp != m:
        batched = [jnp.pad(a, ((0, mp - m), (0, 0))) for a in batched]
    consts = [c if c.ndim == 2 else c.reshape(1, -1) for c in consts]
    in_specs = (
        [pl.BlockSpec((tm, int(a.shape[1])), lambda i: (i, 0)) for a in batched]
        + [pl.BlockSpec(tuple(c.shape), lambda i: (0, 0)) for c in consts])
    out = pl.pallas_call(
        kernel,
        grid=(mp // tm,),
        in_specs=in_specs,
        out_specs=pl.BlockSpec((tm, out_cols), lambda i: (i, 0)),
        out_shape=jax.ShapeDtypeStruct((mp, out_cols), jnp.float32),
        compiler_params=pltpu.CompilerParams(
            dimension_semantics=("parallel",)),
    )(*batched, *consts)
    return out if mp == m else out[:m]


# ---------------------------------------------------------------------------
# Fused 2-layer MLP kernels (BN already folded into the weights at init).
# ---------------------------------------------------------------------------
def _mlp2_kernel(x_ref, w1_ref, b1_ref, w2_ref, b2_ref, o_ref):
    h = jnp.maximum(
        jnp.dot(x_ref[...], w1_ref[...], preferred_element_type=jnp.float32)
        + b1_ref[...], 0.0)
    o_ref[...] = (jnp.dot(h, w2_ref[...], preferred_element_type=jnp.float32)
                  + b2_ref[...])


def _prodmlp2_kernel(d1_ref, d2_ref, d3_ref, s1_ref, s2_ref,
                     w1_ref, b1_ref, w2_ref, b2_ref, o_ref):
    # sumelementproduct fused in: sum over all 6 (drug, side) element-wise
    # products == (sum of drugs) * (sum of sides).
    x = ((d1_ref[...] + d2_ref[...] + d3_ref[...])
         * (s1_ref[...] + s2_ref[...]))
    h = jnp.maximum(
        jnp.dot(x, w1_ref[...], preferred_element_type=jnp.float32)
        + b1_ref[...], 0.0)
    o_ref[...] = (jnp.dot(h, w2_ref[...], preferred_element_type=jnp.float32)
                  + b2_ref[...])


def _head_kernel(s_ref, h_ref, w1a_ref, w1b_ref, b1_ref, w2_ref, b2_ref,
                 wh_ref, bh_ref, o_ref):
    # total_layer (2 fused linears, BN folded) + classifier/con heads.
    # concat(scalar, h) @ W1 is computed as a split matmul (no concat needed).
    z1 = (jnp.dot(s_ref[...], w1a_ref[...], preferred_element_type=jnp.float32)
          + jnp.dot(h_ref[...], w1b_ref[...], preferred_element_type=jnp.float32)
          + b1_ref[...])
    h1 = jnp.maximum(z1, 0.0)
    h2 = jnp.maximum(
        jnp.dot(h1, w2_ref[...], preferred_element_type=jnp.float32)
        + b2_ref[...], 0.0)
    y = (jnp.dot(h2, wh_ref[...], preferred_element_type=jnp.float32)
         + bh_ref[...])                                    # (tm, 2)
    col = lax.broadcasted_iota(jnp.int32, y.shape, 1)
    o_ref[...] = jnp.where(col == 0, jax.nn.sigmoid(y), y)


def mlp2(x, w1, b1, w2, b2):
    return _row_blocked_call(_mlp2_kernel, [x], [w1, b1, w2, b2],
                             int(w2.shape[1]))


def prod_mlp2(d1, d2, d3, s1, s2, w1, b1, w2, b2):
    return _row_blocked_call(_prodmlp2_kernel, [d1, d2, d3, s1, s2],
                             [w1, b1, w2, b2], int(w2.shape[1]))


def total_and_heads(scalar, h_flat, w1a, w1b, b1, w2, b2, wh, bh):
    return _row_blocked_call(_head_kernel, [scalar, h_flat],
                             [w1a, w1b, b1, w2, b2, wh, bh], 2)


# ---------------------------------------------------------------------------
# Contrastive term: sum_b ( 1 - |cosine_similarity(a_b, c_b)| )
# (matches the PyTorch reference, which uses the two SIDE embeddings)
# Row-blocked kernel -> per-row values, summed outside (scales to any batch).
# ---------------------------------------------------------------------------
def _contrast_rows_kernel(a_ref, b_ref, o_ref):
    a = a_ref[...]
    b = b_ref[...]
    dot = jnp.sum(a * b, axis=1, keepdims=True)
    na = jnp.maximum(jnp.sqrt(jnp.sum(a * a, axis=1, keepdims=True)), 1e-8)
    nb = jnp.maximum(jnp.sqrt(jnp.sum(b * b, axis=1, keepdims=True)), 1e-8)
    o_ref[...] = 1.0 - jnp.abs(dot / (na * nb))


def cosine_contrast(a, b):
    rows = _row_blocked_call(_contrast_rows_kernel, [a, b], [], 1)
    return jnp.sum(rows)


# ---------------------------------------------------------------------------
# Fused interaction-map + 5x(conv2d k=2 s=2 + BN + ReLU) + flatten kernel.
#
# Per batch element (grid axis, "parallel"):
#   * conv1 is computed directly from the drug/side embedding vectors on the
#     MXU: T = W1p @ srows (one small matmul), then per output channel
#     c1[co] = relu(dcols @ T[co-block] + bias).  The 6 [128,128] interaction
#     maps are never materialised.  W1p / dcols are zero-padded so every slice
#     is an aligned 8-sublane block.
#   * Feature maps are stored with BIT-REVERSED spatial indices, so the 2x2
#     stride-2 taps of every later conv are contiguous quadrant slices of the
#     previous layer's plane (no strided VMEM access).
#   * All intermediates live in VMEM scratch; only the [8, 4, 4] conv5 output
#     (still bit-reversed; fixed up by a tiny gather outside) is written out.
#
# Conv weights: one (40, 33) f32 table; row = layer*8 + out_channel,
# columns 0..cin*4-1 = weights in (ci, kh, kw) order, column 32 = folded bias.
# Conv1 additionally ships a permuted (64, 4) table W1p with
# row = co*8 + (i*2+kh) (rows 6,7 of each block zero), col = j*2+kw.
# ---------------------------------------------------------------------------
def _conv_stack_kernel(dcols_ref, srows_ref, w1p_ref, cw_ref, out_ref,
                       c1_ref, c2_ref, c3_ref, c4_ref):
    # dcols_ref: (64, 8)  column (i*2+kh) = d_i[2*rev6(row) + kh], cols 6,7 = 0
    # srows_ref: (4, 64)  row    (j*2+kw) = s_j[2*rev6(col) + kw]
    dc = dcols_ref[...]                                      # (64, 8)
    sr = srows_ref[...]                                      # (4, 64)

    # ---- conv1 on the MXU:
    # T[co*8 + (i*2+kh), c] = sum_{j,kw} W1[co, i*2+j, kh, kw] * sr[j*2+kw, c]
    # c1[co, r, c]          = relu( sum_k dc[r, k] * T[co*8 + k, c] + bias )
    t_all = jnp.dot(w1p_ref[...], sr,
                    preferred_element_type=jnp.float32)      # (64, 64)
    for co in range(CHANNEL_SIZE):
        t_co = t_all[co * NMAP_PAD:(co + 1) * NMAP_PAD, :]   # (8, 64) aligned
        bias = cw_ref[co:co + 1, CONV_BIAS_COL:CONV_BIAS_COL + 1]
        c1_ref[co] = jnp.maximum(
            jnp.dot(dc, t_co, preferred_element_type=jnp.float32) + bias, 0.0)

    # ---- conv2..conv5: quadrant-slice taps thanks to bit-reversed storage.
    def conv_layer(in_ref, dst_ref, layer_idx, ho):
        row0 = layer_idx * CHANNEL_SIZE

        @pl.loop(0, CHANNEL_SIZE)
        def _(co):
            wrow = cw_ref[pl.ds(row0 + co, 1), :]           # (1, 33)
            acc = None
            for ci in range(CHANNEL_SIZE):
                for kh in range(2):
                    for kw in range(2):
                        tap = in_ref[ci, kh * ho:(kh + 1) * ho,
                                     kw * ho:(kw + 1) * ho]
                        col = ci * 4 + kh * 2 + kw
                        term = wrow[:, col:col + 1] * tap
                        acc = term if acc is None else acc + term
            bias = wrow[:, CONV_BIAS_COL:CONV_BIAS_COL + 1]
            dst_ref[co] = jnp.maximum(acc + bias, 0.0)

    conv_layer(c1_ref, c2_ref, 1, 32)
    conv_layer(c2_ref, c3_ref, 2, 16)
    conv_layer(c3_ref, c4_ref, 3, 8)
    conv_layer(c4_ref, out_ref, 4, 4)


def conv_stack(dcols, srows, w1p, conv_w):
    batch = dcols.shape[0]
    return pl.pallas_call(
        _conv_stack_kernel,
        grid=(batch,),
        in_specs=[
            pl.BlockSpec((None, 64, NMAP_PAD), lambda b: (b, 0, 0)),
            pl.BlockSpec((None, 4, 64), lambda b: (b, 0, 0)),
            pl.BlockSpec((CHANNEL_SIZE * NMAP_PAD, 4), lambda b: (0, 0)),
            pl.BlockSpec((N_CONV_LAYERS * CHANNEL_SIZE, CONV_W_COLS),
                         lambda b: (0, 0)),
        ],
        out_specs=pl.BlockSpec((None, CHANNEL_SIZE, 4, 4),
                               lambda b: (b, 0, 0, 0)),
        out_shape=jax.ShapeDtypeStruct((batch, CHANNEL_SIZE, 4, 4),
                                       jnp.float32),
        scratch_shapes=[
            pltpu.VMEM((CHANNEL_SIZE, 64, 64), jnp.float32),
            pltpu.VMEM((CHANNEL_SIZE, 32, 32), jnp.float32),
            pltpu.VMEM((CHANNEL_SIZE, 16, 16), jnp.float32),
            pltpu.VMEM((CHANNEL_SIZE, 8, 8), jnp.float32),
        ],
        compiler_params=pltpu.CompilerParams(
            dimension_semantics=("parallel",)),
    )(dcols, srows, w1p, conv_w)


def _conv_stack_inputs(drugs, sides):
    """Stride-2 split + bit-reversed permutation of the embedding vectors."""
    batch = drugs.shape[1]
    dg = drugs[:, :, _POS]                                  # (3, B, 64, 2)
    dcols = jnp.transpose(dg, (1, 2, 0, 3)).reshape(batch, 64, NUMBER_MAP)
    dcols = jnp.pad(dcols, ((0, 0), (0, 0), (0, NMAP_PAD - NUMBER_MAP)))
    sg = sides[:, :, _POS]                                  # (2, B, 64, 2)
    srows = jnp.transpose(sg, (1, 0, 3, 2)).reshape(batch, 4, 64)
    return dcols, srows


# ---------------------------------------------------------------------------
# Deterministic parameter construction.  Eval-mode BatchNorm (default running
# stats) is folded into the adjacent Linear / Conv weights; Dropout = identity.
# ---------------------------------------------------------------------------
def init_params(key):
    keys = iter(jax.random.split(key, 64))

    def linear(fi, fo):
        kw_, kb_ = next(keys), next(keys)
        bound = float(fi) ** -0.5
        w = jax.random.uniform(kw_, (fi, fo), jnp.float32, -bound, bound)
        b = jax.random.uniform(kb_, (fo,), jnp.float32, -bound, bound)
        return w, b

    def bn_eval(n):
        gamma = jnp.ones((n,), jnp.float32)
        beta = jnp.zeros((n,), jnp.float32)
        mean = jnp.zeros((n,), jnp.float32)
        var = jnp.ones((n,), jnp.float32)
        scale = gamma * lax.rsqrt(var + BN_EPS)
        shift = beta - mean * scale
        return scale, shift

    def mlp_bn_first(fi, fh, fo):
        # Linear -> BN -> ReLU -> Linear : fold BN into the FIRST Linear.
        w1, b1 = linear(fi, fh)
        w2, b2 = linear(fh, fo)
        s, t = bn_eval(fh)
        return (w1 * s[None, :], b1 * s + t, w2, b2)

    def mlp_bn_second(fi, fh, fo):
        # Linear -> ReLU -> BN -> (Dropout) -> Linear : fold BN into the SECOND.
        w1, b1 = linear(fi, fh)
        w2, b2 = linear(fh, fo)
        s, t = bn_eval(fh)
        return (w1, b1, w2 * s[:, None], b2 + t @ w2)

    def conv_fold(cin):
        kw_, kb_ = next(keys), next(keys)
        bound = float(cin * 4) ** -0.5
        w = jax.random.uniform(kw_, (CHANNEL_SIZE, cin, 2, 2), jnp.float32,
                               -bound, bound)
        b = jax.random.uniform(kb_, (CHANNEL_SIZE,), jnp.float32,
                               -bound, bound)
        s, t = bn_eval(CHANNEL_SIZE)
        wf = w * s[:, None, None, None]                      # (8, cin, 2, 2)
        bf = b * s + t
        return wf, bf

    def conv_rows(wf, bf, cin):
        rows = jnp.zeros((CHANNEL_SIZE, CONV_W_COLS), jnp.float32)
        rows = rows.at[:, :cin * 4].set(wf.reshape(CHANNEL_SIZE, cin * 4))
        rows = rows.at[:, CONV_BIAS_COL].set(bf)
        return rows

    wf1, bf1 = conv_fold(NUMBER_MAP)
    row_blocks = [conv_rows(wf1, bf1, NUMBER_MAP)]
    for _ in range(4):
        wfi, bfi = conv_fold(CHANNEL_SIZE)
        row_blocks.append(conv_rows(wfi, bfi, CHANNEL_SIZE))
    conv_w = jnp.concatenate(row_blocks, axis=0)             # (40, 33)

    # conv1 weights permuted for the MXU path: [co, (i*2+kh), (j*2+kw)],
    # zero-padded from 6 -> 8 rows per channel block so slices are aligned.
    w1p_core = jnp.transpose(
        wf1.reshape(CHANNEL_SIZE, 3, 2, 2, 2),               # (co, i, j, kh, kw)
        (0, 1, 3, 2, 4)                                      # (co, i, kh, j, kw)
    ).reshape(CHANNEL_SIZE, NUMBER_MAP, 4)
    w1p = jnp.zeros((CHANNEL_SIZE, NMAP_PAD, 4), jnp.float32)
    w1p = w1p.at[:, :NUMBER_MAP, :].set(w1p_core)
    w1p = w1p.reshape(CHANNEL_SIZE * NMAP_PAD, 4)            # (64, 4)

    # total_layer (Linear-ReLU-BN-Drop-Linear-ReLU-BN-Drop) + heads,
    # BN1 folded into the second Linear, BN2 folded into the heads.
    w1, b1 = linear(2 * EMBED_DIM, EMBED_DIM)
    w2, b2 = linear(EMBED_DIM, EMBED_DIM)
    s1, t1 = bn_eval(EMBED_DIM)
    s2, t2 = bn_eval(EMBED_DIM)
    w2f = w2 * s1[:, None]
    b2f = b2 + t1 @ w2
    wc, bc = linear(EMBED_DIM, 1)
    wr, br = linear(EMBED_DIM, 1)
    wh_raw = jnp.concatenate([wc, wr], axis=1)               # (128, 2)
    bh_raw = jnp.concatenate([bc, br])                       # (2,)
    wh = wh_raw * s2[:, None]
    bh = bh_raw + t2 @ wh_raw

    return {
        "gcnfc": mlp_bn_first(GAT_EMBED_DIM, EMBED_DIM // 2, EMBED_DIM),
        "drugdesc": mlp_bn_second(OUTBERT_DIM, EMBED_DIM, EMBED_DIM),
        "sidedesc": mlp_bn_second(OUTBERT_DIM, EMBED_DIM, EMBED_DIM),
        "drugrwr": mlp_bn_second(DRUG_RWR_DIM, EMBED_DIM, EMBED_DIM),
        "siderwr": mlp_bn_second(SIDE_RWR_DIM, EMBED_DIM, EMBED_DIM),
        "scalar": mlp_bn_second(EMBED_DIM, EMBED_DIM, EMBED_DIM),
        "conv": conv_w,
        "conv1p": w1p,
        "total_heads": (w1[:EMBED_DIM, :], w1[EMBED_DIM:, :], b1,
                        w2f, b2f, wh, bh),
    }


# ---------------------------------------------------------------------------
# Full forward pass (mirrors ConvNCF.forward in eval mode).
# ---------------------------------------------------------------------------
def convncf_forward(params, graph_pooled, drug_node, side_node,
                    drug_train, side_train, drug_embed_table, side_embed_table):
    p = params
    # TODO(synk): GATConv x2 + global_max_pool replaced by `graph_pooled` [B, 32].
    drug_x = mlp2(graph_pooled, *p["gcnfc"])

    # embedding-description lookups (glue gather)
    u_des = drug_embed_table[drug_node]                     # [B, 768]
    s_des = side_embed_table[side_node]                     # [B, 768]

    u_embed_description = mlp2(u_des, *p["drugdesc"])
    s_embed_description = mlp2(s_des, *p["sidedesc"])
    u_embed_rwr = mlp2(drug_train, *p["drugrwr"])
    s_embed_rwr = mlp2(side_train, *p["siderwr"])

    # Contrast term: side description vs side RWR (as in the PyTorch reference).
    drug_contrastive = cosine_contrast(s_embed_description, s_embed_rwr)

    # scalar branch: sumelementproduct = (sum of drugs) * (sum of sides),
    # fully fused (sums + elementwise product + MLP) in one kernel.
    scalar = prod_mlp2(drug_x, u_embed_description, u_embed_rwr,
                       s_embed_description, s_embed_rwr, *p["scalar"])

    # conv branch: interaction maps + conv stack fully fused, batch-gridded.
    drugs = jnp.stack([drug_x, u_embed_description, u_embed_rwr], axis=0)
    sides = jnp.stack([s_embed_description, s_embed_rwr], axis=0)
    dcols, srows = _conv_stack_inputs(drugs, sides)
    conv_out = conv_stack(dcols, srows, p["conv1p"], p["conv"])  # (B,8,4,4) bit-rev
    batch = conv_out.shape[0]
    h_flat = conv_out.reshape(batch, CHANNEL_SIZE, 16)[:, :, _FLAT_PERM]
    h_flat = h_flat.reshape(batch, CHANNEL_SIZE * 16)       # PyTorch .view order

    cls_reg = total_and_heads(scalar, h_flat, *p["total_heads"])   # (B, 2)
    classification = cls_reg[:, 0]
    regression = cls_reg[:, 1]
    return classification, regression, drug_contrastive


if __name__ == "__main__":
    key = jax.random.PRNGKey(0)
    k_param, k_data = jax.random.split(key)
    params = init_params(k_param)

    B = 2
    N_DRUGS, N_SIDES = 5, 7
    ks = jax.random.split(k_data, 6)
    graph_pooled = jax.random.normal(ks[0], (B, GAT_EMBED_DIM), jnp.float32)
    drug_node = jnp.array([0, 3], dtype=jnp.int32)
    side_node = jnp.array([1, 4], dtype=jnp.int32)
    drug_train = jax.random.normal(ks[1], (B, DRUG_RWR_DIM), jnp.float32)
    side_train = jax.random.normal(ks[2], (B, SIDE_RWR_DIM), jnp.float32)
    drug_embed_table = jax.random.normal(ks[3], (N_DRUGS, OUTBERT_DIM),
                                         jnp.float32)
    side_embed_table = jax.random.normal(ks[4], (N_SIDES, OUTBERT_DIM),
                                         jnp.float32)

    fwd = jax.jit(convncf_forward)
    cls_out, reg_out, contrast = fwd(params, graph_pooled, drug_node, side_node,
                                     drug_train, side_train,
                                     drug_embed_table, side_embed_table)
    jax.block_until_ready((cls_out, reg_out, contrast))

    assert cls_out.shape == (B,)
    assert reg_out.shape == (B,)
    assert contrast.shape == ()
    assert bool(jnp.all(jnp.isfinite(cls_out)))
    assert bool(jnp.all(jnp.isfinite(reg_out)))
    assert bool(jnp.all((cls_out >= 0.0) & (cls_out <= 1.0)))
    print("KERNEL_OK")
</pallas_src>

<mosaic_0001>
module attributes {stable_mosaic.version = 11 : i64} {
  func.func @_mlp2_kernel(%arg0: i32, %arg1: memref<2x32xf32, #tpu.memory_space<vmem>>, %arg2: memref<32x64xf32, #tpu.memory_space<vmem>>, %arg3: memref<1x64xf32, #tpu.memory_space<vmem>>, %arg4: memref<64x128xf32, #tpu.memory_space<vmem>>, %arg5: memref<1x128xf32, #tpu.memory_space<vmem>>, %arg6: memref<2x128xf32, #tpu.memory_space<vmem>>) attributes {dimension_semantics = [#tpu.dimension_semantics<parallel>], iteration_bounds = array<i64: 1>, scalar_prefetch = 0 : i64, scratch_operands = 0 : i64, tpu.core_type = #tpu.core_type<tc>, window_params = [{transform_indices = @transform_0, window_bounds = array<i64: 2, 32>}, {pipeline_mode = #tpu.pipeline_mode<synchronous>, transform_indices = @transform_1, window_bounds = array<i64: 32, 64>}, {pipeline_mode = #tpu.pipeline_mode<synchronous>, transform_indices = @transform_2, window_bounds = array<i64: 1, 64>}, {pipeline_mode = #tpu.pipeline_mode<synchronous>, transform_indices = @transform_3, window_bounds = array<i64: 64, 128>}, {pipeline_mode = #tpu.pipeline_mode<synchronous>, transform_indices = @transform_4, window_bounds = array<i64: 1, 128>}, {transform_indices = @transform_5, window_bounds = array<i64: 2, 128>}]} {
    %c0 = arith.constant 0 : index
    %c0_0 = arith.constant 0 : index
    %0 = vector.load %arg1[%c0, %c0_0] : memref<2x32xf32, #tpu.memory_space<vmem>>, vector<2x32xf32>
    %c0_1 = arith.constant 0 : index
    %c0_2 = arith.constant 0 : index
    %1 = vector.load %arg2[%c0_1, %c0_2] : memref<32x64xf32, #tpu.memory_space<vmem>>, vector<32x64xf32>
    %cst = arith.constant dense<0.000000e+00> : vector<2x64xf32>
    %2 = tpu.matmul %0, %1, %cst {dimension_numbers = #tpu.dot_dimension_numbers<[1], [0], [0], [1], [0, 0, 1, 1], [], []>} : vector<2x32xf32>, vector<32x64xf32>, vector<2x64xf32> -> vector<2x64xf32>
    %c0_3 = arith.constant 0 : index
    %c0_4 = arith.constant 0 : index
    %3 = vector.load %arg3[%c0_3, %c0_4] : memref<1x64xf32, #tpu.memory_space<vmem>>, vector<1x64xf32>
    %4 = vector.broadcast %3 : vector<1x64xf32> to vector<2x64xf32>
    %5 = arith.addf %2, %4 : vector<2x64xf32>
    %cst_5 = arith.constant 0.000000e+00 : f32
    %6 = vector.broadcast %cst_5 : f32 to vector<2x64xf32>
    %7 = arith.maximumf %5, %6 : vector<2x64xf32>
    %c0_6 = arith.constant 0 : index
    %c0_7 = arith.constant 0 : index
    %8 = vector.load %arg4[%c0_6, %c0_7] : memref<64x128xf32, #tpu.memory_space<vmem>>, vector<64x128xf32>
    %cst_8 = arith.constant dense<0.000000e+00> : vector<2x128xf32>
    %9 = tpu.matmul %7, %8, %cst_8 {dimension_numbers = #tpu.dot_dimension_numbers<[1], [0], [0], [1], [0, 0, 1, 1], [], []>} : vector<2x64xf32>, vector<64x128xf32>, vector<2x128xf32> -> vector<2x128xf32>
    %c0_9 = arith.constant 0 : index
    %c0_10 = arith.constant 0 : index
    %10 = vector.load %arg5[%c0_9, %c0_10] : memref<1x128xf32, #tpu.memory_space<vmem>>, vector<1x128xf32>
    %11 = vector.broadcast %10 : vector<1x128xf32> to vector<2x128xf32>
    %12 = arith.addf %9, %11 : vector<2x128xf32>
    %c0_11 = arith.constant 0 : index
    %c0_12 = arith.constant 0 : index
    %13 = vector.load %arg6[%c0_11, %c0_12] : memref<2x128xf32, #tpu.memory_space<vmem>>, vector<2x128xf32>
    tpu.vector_store %arg6[%c0_11, %c0_12], %12 {strides = array<i32>} : memref<2x128xf32, #tpu.memory_space<vmem>>, vector<2x128xf32>,
    return
  }
  func.func @transform_0(%arg0: i32) -> (i32, i32) {
    %c0_i32 = arith.constant 0 : i32
    %c0_i32_0 = arith.constant 0 : i32
    return %arg0, %c0_i32 : i32, i32
  }
  func.func @transform_1(%arg0: i32) -> (i32, i32) {
    %c0_i32 = arith.constant 0 : i32
    %c0_i32_0 = arith.constant 0 : i32
    %c0_i32_1 = arith.constant 0 : i32
    return %c0_i32, %c0_i32_0 : i32, i32
  }
  func.func @transform_2(%arg0: i32) -> (i32, i32) {
    %c0_i32 = arith.constant 0 : i32
    %c0_i32_0 = arith.constant 0 : i32
    %c0_i32_1 = arith.constant 0 : i32
    return %c0_i32, %c0_i32_0 : i32, i32
  }
  func.func @transform_3(%arg0: i32) -> (i32, i32) {
    %c0_i32 = arith.constant 0 : i32
    %c0_i32_0 = arith.constant 0 : i32
    %c0_i32_1 = arith.constant 0 : i32
    return %c0_i32, %c0_i32_0 : i32, i32
  }
  func.func @transform_4(%arg0: i32) -> (i32, i32) {
    %c0_i32 = arith.constant 0 : i32
    %c0_i32_0 = arith.constant 0 : i32
    %c0_i32_1 = arith.constant 0 : i32
    return %c0_i32, %c0_i32_0 : i32, i32
  }
  func.func @transform_5(%arg0: i32) -> (i32, i32) {
    %c0_i32 = arith.constant 0 : i32
    %c0_i32_0 = arith.constant 0 : i32
    return %arg0, %c0_i32 : i32, i32
  }
}

module attributes {stable_mosaic.version = 11 : i64} {
  func.func @_mlp2_kernel(%arg0: i32, %arg1: memref<2x1500xf32, #tpu.memory_space<vmem>>, %arg2: memref<1500x128xf32, #tpu.memory_space<vmem>>, %arg3: memref<1x128xf32, #tpu.memory_space<vmem>>, %arg4: memref<128x128xf32, #tpu.memory_space<vmem>>, %arg5: memref<1x128xf32, #tpu.memory_space<vmem>>, %arg6: memref<2x128xf32, #tpu.memory_space<vmem>>) attributes {dimension_semantics = [#tpu.dimension_semantics<parallel>], iteration_bounds = array<i64: 1>, scalar_prefetch = 0 : i64, scratch_operands = 0 : i64, tpu.core_type = #tpu.core_type<tc>, window_params = [{transform_indices = @transform_0, window_bounds = array<i64: 2, 1500>}, {pipeline_mode = #tpu.pipeline_mode<synchronous>, transform_indices = @transform_1, window_bounds = array<i64: 1500, 128>}, {pipeline_mode = #tpu.pipeline_mode<synchronous>, transform_indices = @transform_2, window_bounds = array<i64: 1, 128>}, {pipeline_mode = #tpu.pipeline_mode<synchronous>, transform_indices = @transform_3, window_bounds = array<i64: 128, 128>}, {pipeline_mode = #tpu.pipeline_mode<synchronous>, transform_indices = @transform_4, window_bounds = array<i64: 1, 128>}, {transform_indices = @transform_5, window_bounds = array<i64: 2, 128>}]} {
    %c0 = arith.constant 0 : index
    %c0_0 = arith.constant 0 : index
    %0 = vector.load %arg1[%c0, %c0_0] : memref<2x1500xf32, #tpu.memory_space<vmem>>, vector<2x1500xf32>
    %c0_1 = arith.constant 0 : index
    %c0_2 = arith.constant 0 : index
    %1 = vector.load %arg2[%c0_1, %c0_2] : memref<1500x128xf32, #tpu.memory_space<vmem>>, vector<1500x128xf32>
    %cst = arith.constant dense<0.000000e+00> : vector<2x128xf32>
    %2 = tpu.matmul %0, %1, %cst {dimension_numbers = #tpu.dot_dimension_numbers<[1], [0], [0], [1], [0, 0, 1, 1], [], []>} : vector<2x1500xf32>, vector<1500x128xf32>, vector<2x128xf32> -> vector<2x128xf32>
    %c0_3 = arith.constant 0 : index
    %c0_4 = arith.constant 0 : index
    %3 = vector.load %arg3[%c0_3, %c0_4] : memref<1x128xf32, #tpu.memory_space<vmem>>, vector<1x128xf32>
    %4 = vector.broadcast %3 : vector<1x128xf32> to vector<2x128xf32>
    %5 = arith.addf %2, %4 : vector<2x128xf32>
    %cst_5 = arith.constant 0.000000e+00 : f32
    %6 = vector.broadcast %cst_5 : f32 to vector<2x128xf32>
    %7 = arith.maximumf %5, %6 : vector<2x128xf32>
    %c0_6 = arith.constant 0 : index
    %c0_7 = arith.constant 0 : index
    %8 = vector.load %arg4[%c0_6, %c0_7] : memref<128x128xf32, #tpu.memory_space<vmem>>, vector<128x128xf32>
    %cst_8 = arith.constant dense<0.000000e+00> : vector<2x128xf32>
    %9 = tpu.matmul %7, %8, %cst_8 {dimension_numbers = #tpu.dot_dimension_numbers<[1], [0], [0], [1], [0, 0, 1, 1], [], []>} : vector<2x128xf32>, vector<128x128xf32>, vector<2x128xf32> -> vector<2x128xf32>
    %c0_9 = arith.constant 0 : index
    %c0_10 = arith.constant 0 : index
    %10 = vector.load %arg5[%c0_9, %c0_10] : memref<1x128xf32, #tpu.memory_space<vmem>>, vector<1x128xf32>
    %11 = vector.broadcast %10 : vector<1x128xf32> to vector<2x128xf32>
    %12 = arith.addf %9, %11 : vector<2x128xf32>
    %c0_11 = arith.constant 0 : index
    %c0_12 = arith.constant 0 : index
    %13 = vector.load %arg6[%c0_11, %c0_12] : memref<2x128xf32, #tpu.memory_space<vmem>>, vector<2x128xf32>
    tpu.vector_store %arg6[%c0_11, %c0_12], %12 {strides = array<i32>} : memref<2x128xf32, #tpu.memory_space<vmem>>, vector<2x128xf32>,
    return
  }
  func.func @transform_0(%arg0: i32) -> (i32, i32) {
    %c0_i32 = arith.constant 0 : i32
    %c0_i32_0 = arith.constant 0 : i32
    return %arg0, %c0_i32 : i32, i32
  }
  func.func @transform_1(%arg0: i32) -> (i32, i32) {
    %c0_i32 = arith.constant 0 : i32
    %c0_i32_0 = arith.constant 0 : i32
    %c0_i32_1 = arith.constant 0 : i32
    return %c0_i32, %c0_i32_0 : i32, i32
  }
  func.func @transform_2(%arg0: i32) -> (i32, i32) {
    %c0_i32 = arith.constant 0 : i32
    %c0_i32_0 = arith.constant 0 : i32
    %c0_i32_1 = arith.constant 0 : i32
    return %c0_i32, %c0_i32_0 : i32, i32
  }
  func.func @transform_3(%arg0: i32) -> (i32, i32) {
    %c0_i32 = arith.constant 0 : i32
    %c0_i32_0 = arith.constant 0 : i32
    %c0_i32_1 = arith.constant 0 : i32
    return %c0_i32, %c0_i32_0 : i32, i32
  }
  func.func @transform_4(%arg0: i32) -> (i32, i32) {
    %c0_i32 = arith.constant 0 : i32
    %c0_i32_0 = arith.constant 0 : i32
    %c0_i32_1 = arith.constant 0 : i32
    return %c0_i32, %c0_i32_0 : i32, i32
  }
  func.func @transform_5(%arg0: i32) -> (i32, i32) {
    %c0_i32 = arith.constant 0 : i32
    %c0_i32_0 = arith.constant 0 : i32
    return %arg0, %c0_i32 : i32, i32
  }
}

module attributes {stable_mosaic.version = 11 : i64} {
  func.func @_mlp2_kernel(%arg0: i32, %arg1: memref<2x768xf32, #tpu.memory_space<vmem>>, %arg2: memref<768x128xf32, #tpu.memory_space<vmem>>, %arg3: memref<1x128xf32, #tpu.memory_space<vmem>>, %arg4: memref<128x128xf32, #tpu.memory_space<vmem>>, %arg5: memref<1x128xf32, #tpu.memory_space<vmem>>, %arg6: memref<2x128xf32, #tpu.memory_space<vmem>>) attributes {dimension_semantics = [#tpu.dimension_semantics<parallel>], iteration_bounds = array<i64: 1>, scalar_prefetch = 0 : i64, scratch_operands = 0 : i64, tpu.core_type = #tpu.core_type<tc>, window_params = [{transform_indices = @transform_0, window_bounds = array<i64: 2, 768>}, {pipeline_mode = #tpu.pipeline_mode<synchronous>, transform_indices = @transform_1, window_bounds = array<i64: 768, 128>}, {pipeline_mode = #tpu.pipeline_mode<synchronous>, transform_indices = @transform_2, window_bounds = array<i64: 1, 128>}, {pipeline_mode = #tpu.pipeline_mode<synchronous>, transform_indices = @transform_3, window_bounds = array<i64: 128, 128>}, {pipeline_mode = #tpu.pipeline_mode<synchronous>, transform_indices = @transform_4, window_bounds = array<i64: 1, 128>}, {transform_indices = @transform_5, window_bounds = array<i64: 2, 128>}]} {
    %c0 = arith.constant 0 : index
    %c0_0 = arith.constant 0 : index
    %0 = vector.load %arg1[%c0, %c0_0] : memref<2x768xf32, #tpu.memory_space<vmem>>, vector<2x768xf32>
    %c0_1 = arith.constant 0 : index
    %c0_2 = arith.constant 0 : index
    %1 = vector.load %arg2[%c0_1, %c0_2] : memref<768x128xf32, #tpu.memory_space<vmem>>, vector<768x128xf32>
    %cst = arith.constant dense<0.000000e+00> : vector<2x128xf32>
    %2 = tpu.matmul %0, %1, %cst {dimension_numbers = #tpu.dot_dimension_numbers<[1], [0], [0], [1], [0, 0, 1, 1], [], []>} : vector<2x768xf32>, vector<768x128xf32>, vector<2x128xf32> -> vector<2x128xf32>
    %c0_3 = arith.constant 0 : index
    %c0_4 = arith.constant 0 : index
    %3 = vector.load %arg3[%c0_3, %c0_4] : memref<1x128xf32, #tpu.memory_space<vmem>>, vector<1x128xf32>
    %4 = vector.broadcast %3 : vector<1x128xf32> to vector<2x128xf32>
    %5 = arith.addf %2, %4 : vector<2x128xf32>
    %cst_5 = arith.constant 0.000000e+00 : f32
    %6 = vector.broadcast %cst_5 : f32 to vector<2x128xf32>
    %7 = arith.maximumf %5, %6 : vector<2x128xf32>
    %c0_6 = arith.constant 0 : index
    %c0_7 = arith.constant 0 : index
    %8 = vector.load %arg4[%c0_6, %c0_7] : memref<128x128xf32, #tpu.memory_space<vmem>>, vector<128x128xf32>
    %cst_8 = arith.constant dense<0.000000e+00> : vector<2x128xf32>
    %9 = tpu.matmul %7, %8, %cst_8 {dimension_numbers = #tpu.dot_dimension_numbers<[1], [0], [0], [1], [0, 0, 1, 1], [], []>} : vector<2x128xf32>, vector<128x128xf32>, vector<2x128xf32> -> vector<2x128xf32>
    %c0_9 = arith.constant 0 : index
    %c0_10 = arith.constant 0 : index
    %10 = vector.load %arg5[%c0_9, %c0_10] : memref<1x128xf32, #tpu.memory_space<vmem>>, vector<1x128xf32>
    %11 = vector.broadcast %10 : vector<1x128xf32> to vector<2x128xf32>
    %12 = arith.addf %9, %11 : vector<2x128xf32>
    %c0_11 = arith.constant 0 : index
    %c0_12 = arith.constant 0 : index
    %13 = vector.load %arg6[%c0_11, %c0_12] : memref<2x128xf32, #tpu.memory_space<vmem>>, vector<2x128xf32>
    tpu.vector_store %arg6[%c0_11, %c0_12], %12 {strides = array<i32>} : memref<2x128xf32, #tpu.memory_space<vmem>>, vector<2x128xf32>,
    return
  }
  func.func @transform_0(%arg0: i32) -> (i32, i32) {
    %c0_i32 = arith.constant 0 : i32
    %c0_i32_0 = arith.constant 0 : i32
    return %arg0, %c0_i32 : i32, i32
  }
  func.func @transform_1(%arg0: i32) -> (i32, i32) {
    %c0_i32 = arith.constant 0 : i32
    %c0_i32_0 = arith.constant 0 : i32
    %c0_i32_1 = arith.constant 0 : i32
    return %c0_i32, %c0_i32_0 : i32, i32
  }
  func.func @transform_2(%arg0: i32) -> (i32, i32) {
    %c0_i32 = arith.constant 0 : i32
    %c0_i32_0 = arith.constant 0 : i32
    %c0_i32_1 = arith.constant 0 : i32
    return %c0_i32, %c0_i32_0 : i32, i32
  }
  func.func @transform_3(%arg0: i32) -> (i32, i32) {
    %c0_i32 = arith.constant 0 : i32
    %c0_i32_0 = arith.constant 0 : i32
    %c0_i32_1 = arith.constant 0 : i32
    return %c0_i32, %c0_i32_0 : i32, i32
  }
  func.func @transform_4(%arg0: i32) -> (i32, i32) {
    %c0_i32 = arith.constant 0 : i32
    %c0_i32_0 = arith.constant 0 : i32
    %c0_i32_1 = arith.constant 0 : i32
    return %c0_i32, %c0_i32_0 : i32, i32
  }
  func.func @transform_5(%arg0: i32) -> (i32, i32) {
    %c0_i32 = arith.constant 0 : i32
    %c0_i32_0 = arith.constant 0 : i32
    return %arg0, %c0_i32 : i32, i32
  }
}

module attributes {stable_mosaic.version = 11 : i64} {
  func.func @_mlp2_kernel(%arg0: i32, %arg1: memref<2x2982xf32, #tpu.memory_space<vmem>>, %arg2: memref<2982x128xf32, #tpu.memory_space<vmem>>, %arg3: memref<1x128xf32, #tpu.memory_space<vmem>>, %arg4: memref<128x128xf32, #tpu.memory_space<vmem>>, %arg5: memref<1x128xf32, #tpu.memory_space<vmem>>, %arg6: memref<2x128xf32, #tpu.memory_space<vmem>>) attributes {dimension_semantics = [#tpu.dimension_semantics<parallel>], iteration_bounds = array<i64: 1>, scalar_prefetch = 0 : i64, scratch_operands = 0 : i64, tpu.core_type = #tpu.core_type<tc>, window_params = [{transform_indices = @transform_0, window_bounds = array<i64: 2, 2982>}, {pipeline_mode = #tpu.pipeline_mode<synchronous>, transform_indices = @transform_1, window_bounds = array<i64: 2982, 128>}, {pipeline_mode = #tpu.pipeline_mode<synchronous>, transform_indices = @transform_2, window_bounds = array<i64: 1, 128>}, {pipeline_mode = #tpu.pipeline_mode<synchronous>, transform_indices = @transform_3, window_bounds = array<i64: 128, 128>}, {pipeline_mode = #tpu.pipeline_mode<synchronous>, transform_indices = @transform_4, window_bounds = array<i64: 1, 128>}, {transform_indices = @transform_5, window_bounds = array<i64: 2, 128>}]} {
    %c0 = arith.constant 0 : index
    %c0_0 = arith.constant 0 : index
    %0 = vector.load %arg1[%c0, %c0_0] : memref<2x2982xf32, #tpu.memory_space<vmem>>, vector<2x2982xf32>
    %c0_1 = arith.constant 0 : index
    %c0_2 = arith.constant 0 : index
    %1 = vector.load %arg2[%c0_1, %c0_2] : memref<2982x128xf32, #tpu.memory_space<vmem>>, vector<2982x128xf32>
    %cst = arith.constant dense<0.000000e+00> : vector<2x128xf32>
    %2 = tpu.matmul %0, %1, %cst {dimension_numbers = #tpu.dot_dimension_numbers<[1], [0], [0], [1], [0, 0, 1, 1], [], []>} : vector<2x2982xf32>, vector<2982x128xf32>, vector<2x128xf32> -> vector<2x128xf32>
    %c0_3 = arith.constant 0 : index
    %c0_4 = arith.constant 0 : index
    %3 = vector.load %arg3[%c0_3, %c0_4] : memref<1x128xf32, #tpu.memory_space<vmem>>, vector<1x128xf32>
    %4 = vector.broadcast %3 : vector<1x128xf32> to vector<2x128xf32>
    %5 = arith.addf %2, %4 : vector<2x128xf32>
    %cst_5 = arith.constant 0.000000e+00 : f32
    %6 = vector.broadcast %cst_5 : f32 to vector<2x128xf32>
    %7 = arith.maximumf %5, %6 : vector<2x128xf32>
    %c0_6 = arith.constant 0 : index
    %c0_7 = arith.constant 0 : index
    %8 = vector.load %arg4[%c0_6, %c0_7] : memref<128x128xf32, #tpu.memory_space<vmem>>, vector<128x128xf32>
    %cst_8 = arith.constant dense<0.000000e+00> : vector<2x128xf32>
    %9 = tpu.matmul %7, %8, %cst_8 {dimension_numbers = #tpu.dot_dimension_numbers<[1], [0], [0], [1], [0, 0, 1, 1], [], []>} : vector<2x128xf32>, vector<128x128xf32>, vector<2x128xf32> -> vector<2x128xf32>
    %c0_9 = arith.constant 0 : index
    %c0_10 = arith.constant 0 : index
    %10 = vector.load %arg5[%c0_9, %c0_10] : memref<1x128xf32, #tpu.memory_space<vmem>>, vector<1x128xf32>
    %11 = vector.broadcast %10 : vector<1x128xf32> to vector<2x128xf32>
    %12 = arith.addf %9, %11 : vector<2x128xf32>
    %c0_11 = arith.constant 0 : index
    %c0_12 = arith.constant 0 : index
    %13 = vector.load %arg6[%c0_11, %c0_12] : memref<2x128xf32, #tpu.memory_space<vmem>>, vector<2x128xf32>
    tpu.vector_store %arg6[%c0_11, %c0_12], %12 {strides = array<i32>} : memref<2x128xf32, #tpu.memory_space<vmem>>, vector<2x128xf32>,
    return
  }
  func.func @transform_0(%arg0: i32) -> (i32, i32) {
    %c0_i32 = arith.constant 0 : i32
    %c0_i32_0 = arith.constant 0 : i32
    return %arg0, %c0_i32 : i32, i32
  }
  func.func @transform_1(%arg0: i32) -> (i32, i32) {
    %c0_i32 = arith.constant 0 : i32
    %c0_i32_0 = arith.constant 0 : i32
    %c0_i32_1 = arith.constant 0 : i32
    return %c0_i32, %c0_i32_0 : i32, i32
  }
  func.func @transform_2(%arg0: i32) -> (i32, i32) {
    %c0_i32 = arith.constant 0 : i32
    %c0_i32_0 = arith.constant 0 : i32
    %c0_i32_1 = arith.constant 0 : i32
    return %c0_i32, %c0_i32_0 : i32, i32
  }
  func.func @transform_3(%arg0: i32) -> (i32, i32) {
    %c0_i32 = arith.constant 0 : i32
    %c0_i32_0 = arith.constant 0 : i32
    %c0_i32_1 = arith.constant 0 : i32
    return %c0_i32, %c0_i32_0 : i32, i32
  }
  func.func @transform_4(%arg0: i32) -> (i32, i32) {
    %c0_i32 = arith.constant 0 : i32
    %c0_i32_0 = arith.constant 0 : i32
    %c0_i32_1 = arith.constant 0 : i32
    return %c0_i32, %c0_i32_0 : i32, i32
  }
  func.func @transform_5(%arg0: i32) -> (i32, i32) {
    %c0_i32 = arith.constant 0 : i32
    %c0_i32_0 = arith.constant 0 : i32
    return %arg0, %c0_i32 : i32, i32
  }
}

module attributes {stable_mosaic.version = 11 : i64} {
  func.func @_prodmlp2_kernel(%arg0: i32, %arg1: memref<2x128xf32, #tpu.memory_space<vmem>>, %arg2: memref<2x128xf32, #tpu.memory_space<vmem>>, %arg3: memref<2x128xf32, #tpu.memory_space<vmem>>, %arg4: memref<2x128xf32, #tpu.memory_space<vmem>>, %arg5: memref<2x128xf32, #tpu.memory_space<vmem>>, %arg6: memref<128x128xf32, #tpu.memory_space<vmem>>, %arg7: memref<1x128xf32, #tpu.memory_space<vmem>>, %arg8: memref<128x128xf32, #tpu.memory_space<vmem>>, %arg9: memref<1x128xf32, #tpu.memory_space<vmem>>, %arg10: memref<2x128xf32, #tpu.memory_space<vmem>>) attributes {dimension_semantics = [#tpu.dimension_semantics<parallel>], iteration_bounds = array<i64: 1>, scalar_prefetch = 0 : i64, scratch_operands = 0 : i64, tpu.core_type = #tpu.core_type<tc>, window_params = [{transform_indices = @transform_0, window_bounds = array<i64: 2, 128>}, {transform_indices = @transform_1, window_bounds = array<i64: 2, 128>}, {transform_indices = @transform_2, window_bounds = array<i64: 2, 128>}, {transform_indices = @transform_3, window_bounds = array<i64: 2, 128>}, {transform_indices = @transform_4, window_bounds = array<i64: 2, 128>}, {pipeline_mode = #tpu.pipeline_mode<synchronous>, transform_indices = @transform_5, window_bounds = array<i64: 128, 128>}, {pipeline_mode = #tpu.pipeline_mode<synchronous>, transform_indices = @transform_6, window_bounds = array<i64: 1, 128>}, {pipeline_mode = #tpu.pipeline_mode<synchronous>, transform_indices = @transform_7, window_bounds = array<i64: 128, 128>}, {pipeline_mode = #tpu.pipeline_mode<synchronous>, transform_indices = @transform_8, window_bounds = array<i64: 1, 128>}, {transform_indices = @transform_9, window_bounds = array<i64: 2, 128>}]} {
    %c0 = arith.constant 0 : index
    %c0_0 = arith.constant 0 : index
    %0 = vector.load %arg1[%c0, %c0_0] : memref<2x128xf32, #tpu.memory_space<vmem>>, vector<2x128xf32>
    %c0_1 = arith.constant 0 : index
    %c0_2 = arith.constant 0 : index
    %1 = vector.load %arg2[%c0_1, %c0_2] : memref<2x128xf32, #tpu.memory_space<vmem>>, vector<2x128xf32>
    %2 = arith.addf %0, %1 : vector<2x128xf32>
    %c0_3 = arith.constant 0 : index
    %c0_4 = arith.constant 0 : index
    %3 = vector.load %arg3[%c0_3, %c0_4] : memref<2x128xf32, #tpu.memory_space<vmem>>, vector<2x128xf32>
    %4 = arith.addf %2, %3 : vector<2x128xf32>
    %c0_5 = arith.constant 0 : index
    %c0_6 = arith.constant 0 : index
    %5 = vector.load %arg4[%c0_5, %c0_6] : memref<2x128xf32, #tpu.memory_space<vmem>>, vector<2x128xf32>
    %c0_7 = arith.constant 0 : index
    %c0_8 = arith.constant 0 : index
    %6 = vector.load %arg5[%c0_7, %c0_8] : memref<2x128xf32, #tpu.memory_space<vmem>>, vector<2x128xf32>
    %7 = arith.addf %5, %6 : vector<2x128xf32>
    %8 = arith.mulf %4, %7 : vector<2x128xf32>
    %c0_9 = arith.constant 0 : index
    %c0_10 = arith.constant 0 : index
    %9 = vector.load %arg6[%c0_9, %c0_10] : memref<128x128xf32, #tpu.memory_space<vmem>>, vector<128x128xf32>
    %cst = arith.constant dense<0.000000e+00> : vector<2x128xf32>
    %10 = tpu.matmul %8, %9, %cst {dimension_numbers = #tpu.dot_dimension_numbers<[1], [0], [0], [1], [0, 0, 1, 1], [], []>} : vector<2x128xf32>, vector<128x128xf32>, vector<2x128xf32> -> vector<2x128xf32>
    %c0_11 = arith.constant 0 : index
    %c0_12 = arith.constant 0 : index
    %11 = vector.load %arg7[%c0_11, %c0_12] : memref<1x128xf32, #tpu.memory_space<vmem>>, vector<1x128xf32>
    %12 = vector.broadcast %11 : vector<1x128xf32> to vector<2x128xf32>
    %13 = arith.addf %10, %12 : vector<2x128xf32>
    %cst_13 = arith.constant 0.000000e+00 : f32
    %14 = vector.broadcast %cst_13 : f32 to vector<2x128xf32>
    %15 = arith.maximumf %13, %14 : vector<2x128xf32>
    %c0_14 = arith.constant 0 : index
    %c0_15 = arith.constant 0 : index
    %16 = vector.load %arg8[%c0_14, %c0_15] : memref<128x128xf32, #tpu.memory_space<vmem>>, vector<128x128xf32>
    %cst_16 = arith.constant dense<0.000000e+00> : vector<2x128xf32>
    %17 = tpu.matmul %15, %16, %cst_16 {dimension_numbers = #tpu.dot_dimension_numbers<[1], [0], [0], [1], [0, 0, 1, 1], [], []>} : vector<2x128xf32>, vector<128x128xf32>, vector<2x128xf32> -> vector<2x128xf32>
    %c0_17 = arith.constant 0 : index
    %c0_18 = arith.constant 0 : index
    %18 = vector.load %arg9[%c0_17, %c0_18] : memref<1x128xf32, #tpu.memory_space<vmem>>, vector<1x128xf32>
    %19 = vector.broadcast %18 : vector<1x128xf32> to vector<2x128xf32>
    %20 = arith.addf %17, %19 : vector<2x128xf32>
    %c0_19 = arith.constant 0 : index
    %c0_20 = arith.constant 0 : index
    %21 = vector.load %arg10[%c0_19, %c0_20] : memref<2x128xf32, #tpu.memory_space<vmem>>, vector<2x128xf32>
    tpu.vector_store %arg10[%c0_19, %c0_20], %20 {strides = array<i32>} : memref<2x128xf32, #tpu.memory_space<vmem>>, vector<2x128xf32>,
    return
  }
  func.func @transform_0(%arg0: i32) -> (i32, i32) {
    %c0_i32 = arith.constant 0 : i32
    %c0_i32_0 = arith.constant 0 : i32
    return %arg0, %c0_i32 : i32, i32
  }
  func.func @transform_1(%arg0: i32) -> (i32, i32) {
    %c0_i32 = arith.constant 0 : i32
    %c0_i32_0 = arith.constant 0 : i32
    return %arg0, %c0_i32 : i32, i32
  }
  func.func @transform_2(%arg0: i32) -> (i32, i32) {
    %c0_i32 = arith.constant 0 : i32
    %c0_i32_0 = arith.constant 0 : i32
    return %arg0, %c0_i32 : i32, i32
  }
  func.func @transform_3(%arg0: i32) -> (i32, i32) {
    %c0_i32 = arith.constant 0 : i32
    %c0_i32_0 = arith.constant 0 : i32
    return %arg0, %c0_i32 : i32, i32
  }
  func.func @transform_4(%arg0: i32) -> (i32, i32) {
    %c0_i32 = arith.constant 0 : i32
    %c0_i32_0 = arith.constant 0 : i32
    return %arg0, %c0_i32 : i32, i32
  }
  func.func @transform_5(%arg0: i32) -> (i32, i32) {
    %c0_i32 = arith.constant 0 : i32
    %c0_i32_0 = arith.constant 0 : i32
    %c0_i32_1 = arith.constant 0 : i32
    return %c0_i32, %c0_i32_0 : i32, i32
  }
  func.func @transform_6(%arg0: i32) -> (i32, i32) {
    %c0_i32 = arith.constant 0 : i32
    %c0_i32_0 = arith.constant 0 : i32
    %c0_i32_1 = arith.constant 0 : i32
    return %c0_i32, %c0_i32_0 : i32, i32
  }
  func.func @transform_7(%arg0: i32) -> (i32, i32) {
    %c0_i32 = arith.constant 0 : i32
    %c0_i32_0 = arith.constant 0 : i32
    %c0_i32_1 = arith.constant 0 : i32
    return %c0_i32, %c0_i32_0 : i32, i32
  }
  func.func @transform_8(%arg0: i32) -> (i32, i32) {
    %c0_i32 = arith.constant 0 : i32
    %c0_i32_0 = arith.constant 0 : i32
    %c0_i32_1 = arith.constant 0 : i32
    return %c0_i32, %c0_i32_0 : i32, i32
  }
  func.func @transform_9(%arg0: i32) -> (i32, i32) {
    %c0_i32 = arith.constant 0 : i32
    %c0_i32_0 = arith.constant 0 : i32
    return %arg0, %c0_i32 : i32, i32
  }
}

module attributes {stable_mosaic.version = 11 : i64} {
  func.func @_conv_stack_kernel(%arg0: i32, %arg1: memref<1x64x8xf32, #tpu.memory_space<vmem>>, %arg2: memref<1x4x64xf32, #tpu.memory_space<vmem>>, %arg3: memref<64x4xf32, #tpu.memory_space<vmem>>, %arg4: memref<40x33xf32, #tpu.memory_space<vmem>>, %arg5: memref<1x8x4x4xf32, #tpu.memory_space<vmem>>, %arg6: memref<8x64x64xf32, #tpu.memory_space<vmem>>, %arg7: memref<8x32x32xf32, #tpu.memory_space<vmem>>, %arg8: memref<8x16x16xf32, #tpu.memory_space<vmem>>, %arg9: memref<8x8x8xf32, #tpu.memory_space<vmem>>) attributes {dimension_semantics = [#tpu.dimension_semantics<parallel>], iteration_bounds = array<i64: 2>, scalar_prefetch = 0 : i64, scratch_operands = 4 : i64, tpu.core_type = #tpu.core_type<tc>, window_params = [{transform_indices = @transform_0, window_bounds = array<i64: 1, 64, 8>}, {transform_indices = @transform_1, window_bounds = array<i64: 1, 4, 64>}, {pipeline_mode = #tpu.pipeline_mode<synchronous>, transform_indices = @transform_2, window_bounds = array<i64: 64, 4>}, {pipeline_mode = #tpu.pipeline_mode<synchronous>, transform_indices = @transform_3, window_bounds = array<i64: 40, 33>}, {transform_indices = @transform_4, window_bounds = array<i64: 1, 8, 4, 4>}]} {
    %c0 = arith.constant 0 : index
    %c0_0 = arith.constant 0 : index
    %c0_1 = arith.constant 0 : index
    %0 = vector.load %arg1[%c0, %c0_0, %c0_1] : memref<1x64x8xf32, #tpu.memory_space<vmem>>, vector<1x64x8xf32>
    %1 = vector.shape_cast %0 : vector<1x64x8xf32> to vector<64x8xf32>
    %c0_2 = arith.constant 0 : index
    %c0_3 = arith.constant 0 : index
    %c0_4 = arith.constant 0 : index
    %2 = vector.load %arg2[%c0_2, %c0_3, %c0_4] : memref<1x4x64xf32, #tpu.memory_space<vmem>>, vector<1x4x64xf32>
    %3 = vector.shape_cast %2 : vector<1x4x64xf32> to vector<4x64xf32>
    %c0_5 = arith.constant 0 : index
    %c0_6 = arith.constant 0 : index
    %4 = vector.load %arg3[%c0_5, %c0_6] : memref<64x4xf32, #tpu.memory_space<vmem>>, vector<64x4xf32>
    %cst = arith.constant dense<0.000000e+00> : vector<64x64xf32>
    %5 = tpu.matmul %4, %3, %cst {dimension_numbers = #tpu.dot_dimension_numbers<[1], [0], [0], [1], [0, 0, 1, 1], [], []>} : vector<64x4xf32>, vector<4x64xf32>, vector<64x64xf32> -> vector<64x64xf32>
    %6 = vector.extract_strided_slice %5 {offsets = [0, 0], sizes = [8, 64], strides = [1, 1]} : vector<64x64xf32> to vector<8x64xf32>
    %c0_7 = arith.constant 0 : index
    %c32 = arith.constant 32 : index
    %7 = vector.load %arg4[%c0_7, %c32] : memref<40x33xf32, #tpu.memory_space<vmem>>, vector<1x1xf32>
    %cst_8 = arith.constant dense<0.000000e+00> : vector<64x64xf32>
    %8 = tpu.matmul %1, %6, %cst_8 {dimension_numbers = #tpu.dot_dimension_numbers<[1], [0], [0], [1], [0, 0, 1, 1], [], []>} : vector<64x8xf32>, vector<8x64xf32>, vector<64x64xf32> -> vector<64x64xf32>
    %9 = vector.broadcast %7 : vector<1x1xf32> to vector<64x64xf32>
    %10 = arith.addf %8, %9 : vector<64x64xf32>
    %cst_9 = arith.constant 0.000000e+00 : f32
    %11 = vector.broadcast %cst_9 : f32 to vector<64x64xf32>
    %12 = arith.maximumf %10, %11 : vector<64x64xf32>
    %c0_10 = arith.constant 0 : index
    %c0_11 = arith.constant 0 : index
    %c0_12 = arith.constant 0 : index
    %13 = vector.load %arg6[%c0_10, %c0_11, %c0_12] : memref<8x64x64xf32, #tpu.memory_space<vmem>>, vector<1x64x64xf32>
    %14 = vector.shape_cast %13 : vector<1x64x64xf32> to vector<64x64xf32>
    %15 = vector.shape_cast %12 : vector<64x64xf32> to vector<1x64x64xf32>
    tpu.vector_store %arg6[%c0_10, %c0_11, %c0_12], %15 {strides = array<i32>} : memref<8x64x64xf32, #tpu.memory_space<vmem>>, vector<1x64x64xf32>,
    %16 = vector.extract_strided_slice %5 {offsets = [8, 0], sizes = [8, 64], strides = [1, 1]} : vector<64x64xf32> to vector<8x64xf32>
    %c1 = arith.constant 1 : index
    %c32_13 = arith.constant 32 : index
    %17 = vector.load %arg4[%c1, %c32_13] : memref<40x33xf32, #tpu.memory_space<vmem>>, vector<1x1xf32>
    %cst_14 = arith.constant dense<0.000000e+00> : vector<64x64xf32>
    %18 = tpu.matmul %1, %16, %cst_14 {dimension_numbers = #tpu.dot_dimension_numbers<[1], [0], [0], [1], [0, 0, 1, 1], [], []>} : vector<64x8xf32>, vector<8x64xf32>, vector<64x64xf32> -> vector<64x64xf32>
    %19 = vector.broadcast %17 : vector<1x1xf32> to vector<64x64xf32>
    %20 = arith.addf %18, %19 : vector<64x64xf32>
    %cst_15 = arith.constant 0.000000e+00 : f32
    %21 = vector.broadcast %cst_15 : f32 to vector<64x64xf32>
    %22 = arith.maximumf %20, %21 : vector<64x64xf32>
    %c1_16 = arith.constant 1 : index
    %c0_17 = arith.constant 0 : index
    %c0_18 = arith.constant 0 : index
    %23 = vector.load %arg6[%c1_16, %c0_17, %c0_18] : memref<8x64x64xf32, #tpu.memory_space<vmem>>, vector<1x64x64xf32>
    %24 = vector.shape_cast %23 : vector<1x64x64xf32> to vector<64x64xf32>
    %25 = vector.shape_cast %22 : vector<64x64xf32> to vector<1x64x64xf32>
    tpu.vector_store %arg6[%c1_16, %c0_17, %c0_18], %25 {strides = array<i32>} : memref<8x64x64xf32, #tpu.memory_space<vmem>>, vector<1x64x64xf32>,
    %26 = vector.extract_strided_slice %5 {offsets = [16, 0], sizes = [8, 64], strides = [1, 1]} : vector<64x64xf32> to vector<8x64xf32>
    %c2 = arith.constant 2 : index
    %c32_19 = arith.constant 32 : index
    %27 = vector.load %arg4[%c2, %c32_19] : memref<40x33xf32, #tpu.memory_space<vmem>>, vector<1x1xf32>
    %cst_20 = arith.constant dense<0.000000e+00> : vector<64x64xf32>
    %28 = tpu.matmul %1, %26, %cst_20 {dimension_numbers = #tpu.dot_dimension_numbers<[1], [0], [0], [1], [0, 0, 1, 1], [], []>} : vector<64x8xf32>, vector<8x64xf32>, vector<64x64xf32> -> vector<64x64xf32>
    %29 = vector.broadcast %27 : vector<1x1xf32> to vector<64x64xf32>
    %30 = arith.addf %28, %29 : vector<64x64xf32>
    %cst_21 = arith.constant 0.000000e+00 : f32
    %31 = vector.broadcast %cst_21 : f32 to vector<64x64xf32>
    %32 = arith.maximumf %30, %31 : vector<64x64xf32>
    %c2_22 = arith.constant 2 : index
    %c0_23 = arith.constant 0 : index
    %c0_24 = arith.constant 0 : index
    %33 = vector.load %arg6[%c2_22, %c0_23, %c0_24] : memref<8x64x64xf32, #tpu.memory_space<vmem>>, vector<1x64x64xf32>
    %34 = vector.shape_cast %33 : vector<1x64x64xf32> to vector<64x64xf32>
    %35 = vector.shape_cast %32 : vector<64x64xf32> to vector<1x64x64xf32>
    tpu.vector_store %arg6[%c2_22, %c0_23, %c0_24], %35 {strides = array<i32>} : memref<8x64x64xf32, #tpu.memory_space<vmem>>, vector<1x64x64xf32>,
    %36 = vector.extract_strided_slice %5 {offsets = [24, 0], sizes = [8, 64], strides = [1, 1]} : vector<64x64xf32> to vector<8x64xf32>
    %c3 = arith.constant 3 : index
    %c32_25 = arith.constant 32 : index
    %37 = vector.load %arg4[%c3, %c32_25] : memref<40x33xf32, #tpu.memory_space<vmem>>, vector<1x1xf32>
    %cst_26 = arith.constant dense<0.000000e+00> : vector<64x64xf32>
    %38 = tpu.matmul %1, %36, %cst_26 {dimension_numbers = #tpu.dot_dimension_numbers<[1], [0], [0], [1], [0, 0, 1, 1], [], []>} : vector<64x8xf32>, vector<8x64xf32>, vector<64x64xf32> -> vector<64x64xf32>
    %39 = vector.broadcast %37 : vector<1x1xf32> to vector<64x64xf32>
    %40 = arith.addf %38, %39 : vector<64x64xf32>
    %cst_27 = arith.constant 0.000000e+00 : f32
    %41 = vector.broadcast %cst_27 : f32 to vector<64x64xf32>
    %42 = arith.maximumf %40, %41 : vector<64x64xf32>
    %c3_28 = arith.constant 3 : index
    %c0_29 = arith.constant 0 : index
    %c0_30 = arith.constant 0 : index
    %43 = vector.load %arg6[%c3_28, %c0_29, %c0_30] : memref<8x64x64xf32, #tpu.memory_space<vmem>>, vector<1x64x64xf32>
    %44 = vector.shape_cast %43 : vector<1x64x64xf32> to vector<64x64xf32>
    %45 = vector.shape_cast %42 : vector<64x64xf32> to vector<1x64x64xf32>
    tpu.vector_store %arg6[%c3_28, %c0_29, %c0_30], %45 {strides = array<i32>} : memref<8x64x64xf32, #tpu.memory_space<vmem>>, vector<1x64x64xf32>,
    %46 = vector.extract_strided_slice %5 {offsets = [32, 0], sizes = [8, 64], strides = [1, 1]} : vector<64x64xf32> to vector<8x64xf32>
    %c4 = arith.constant 4 : index
    %c32_31 = arith.constant 32 : index
    %47 = vector.load %arg4[%c4, %c32_31] : memref<40x33xf32, #tpu.memory_space<vmem>>, vector<1x1xf32>
    %cst_32 = arith.constant dense<0.000000e+00> : vector<64x64xf32>
    %48 = tpu.matmul %1, %46, %cst_32 {dimension_numbers = #tpu.dot_dimension_numbers<[1], [0], [0], [1], [0, 0, 1, 1], [], []>} : vector<64x8xf32>, vector<8x64xf32>, vector<64x64xf32> -> vector<64x64xf32>
    %49 = vector.broadcast %47 : vector<1x1xf32> to vector<64x64xf32>
    %50 = arith.addf %48, %49 : vector<64x64xf32>
    %cst_33 = arith.constant 0.000000e+00 : f32
    %51 = vector.broadcast %cst_33 : f32 to vector<64x64xf32>
    %52 = arith.maximumf %50, %51 : vector<64x64xf32>
    %c4_34 = arith.constant 4 : index
    %c0_35 = arith.constant 0 : index
    %c0_36 = arith.constant 0 : index
    %53 = vector.load %arg6[%c4_34, %c0_35, %c0_36] : memref<8x64x64xf32, #tpu.memory_space<vmem>>, vector<1x64x64xf32>
    %54 = vector.shape_cast %53 : vector<1x64x64xf32> to vector<64x64xf32>
    %55 = vector.shape_cast %52 : vector<64x64xf32> to vector<1x64x64xf32>
    tpu.vector_store %arg6[%c4_34, %c0_35, %c0_36], %55 {strides = array<i32>} : memref<8x64x64xf32, #tpu.memory_space<vmem>>, vector<1x64x64xf32>,
    %56 = vector.extract_strided_slice %5 {offsets = [40, 0], sizes = [8, 64], strides = [1, 1]} : vector<64x64xf32> to vector<8x64xf32>
    %c5 = arith.constant 5 : index
    %c32_37 = arith.constant 32 : index
    %57 = vector.load %arg4[%c5, %c32_37] : memref<40x33xf32, #tpu.memory_space<vmem>>, vector<1x1xf32>
    %cst_38 = arith.constant dense<0.000000e+00> : vector<64x64xf32>
    %58 = tpu.matmul %1, %56, %cst_38 {dimension_numbers = #tpu.dot_dimension_numbers<[1], [0], [0], [1], [0, 0, 1, 1], [], []>} : vector<64x8xf32>, vector<8x64xf32>, vector<64x64xf32> -> vector<64x64xf32>
    %59 = vector.broadcast %57 : vector<1x1xf32> to vector<64x64xf32>
    %60 = arith.addf %58, %59 : vector<64x64xf32>
    %cst_39 = arith.constant 0.000000e+00 : f32
    %61 = vector.broadcast %cst_39 : f32 to vector<64x64xf32>
    %62 = arith.maximumf %60, %61 : vector<64x64xf32>
    %c5_40 = arith.constant 5 : index
    %c0_41 = arith.constant 0 : index
    %c0_42 = arith.constant 0 : index
    %63 = vector.load %arg6[%c5_40, %c0_41, %c0_42] : memref<8x64x64xf32, #tpu.memory_space<vmem>>, vector<1x64x64xf32>
    %64 = vector.shape_cast %63 : vector<1x64x64xf32> to vector<64x64xf32>
    %65 = vector.shape_cast %62 : vector<64x64xf32> to vector<1x64x64xf32>
    tpu.vector_store %arg6[%c5_40, %c0_41, %c0_42], %65 {strides = array<i32>} : memref<8x64x64xf32, #tpu.memory_space<vmem>>, vector<1x64x64xf32>,
    %66 = vector.extract_strided_slice %5 {offsets = [48, 0], sizes = [8, 64], strides = [1, 1]} : vector<64x64xf32> to vector<8x64xf32>
    %c6 = arith.constant 6 : index
    %c32_43 = arith.constant 32 : index
    %67 = vector.load %arg4[%c6, %c32_43] : memref<40x33xf32, #tpu.memory_space<vmem>>, vector<1x1xf32>
    %cst_44 = arith.constant dense<0.000000e+00> : vector<64x64xf32>
    %68 = tpu.matmul %1, %66, %cst_44 {dimension_numbers = #tpu.dot_dimension_numbers<[1], [0], [0], [1], [0, 0, 1, 1], [], []>} : vector<64x8xf32>, vector<8x64xf32>, vector<64x64xf32> -> vector<64x64xf32>
    %69 = vector.broadcast %67 : vector<1x1xf32> to vector<64x64xf32>
    %70 = arith.addf %68, %69 : vector<64x64xf32>
    %cst_45 = arith.constant 0.000000e+00 : f32
    %71 = vector.broadcast %cst_45 : f32 to vector<64x64xf32>
    %72 = arith.maximumf %70, %71 : vector<64x64xf32>
    %c6_46 = arith.constant 6 : index
    %c0_47 = arith.constant 0 : index
    %c0_48 = arith.constant 0 : index
    %73 = vector.load %arg6[%c6_46, %c0_47, %c0_48] : memref<8x64x64xf32, #tpu.memory_space<vmem>>, vector<1x64x64xf32>
    %74 = vector.shape_cast %73 : vector<1x64x64xf32> to vector<64x64xf32>
    %75 = vector.shape_cast %72 : vector<64x64xf32> to vector<1x64x64xf32>
    tpu.vector_store %arg6[%c6_46, %c0_47, %c0_48], %75 {strides = array<i32>} : memref<8x64x64xf32, #tpu.memory_space<vmem>>, vector<1x64x64xf32>,
    %76 = vector.extract_strided_slice %5 {offsets = [56, 0], sizes = [8, 64], strides = [1, 1]} : vector<64x64xf32> to vector<8x64xf32>
    %c7 = arith.constant 7 : index
    %c32_49 = arith.constant 32 : index
    %77 = vector.load %arg4[%c7, %c32_49] : memref<40x33xf32, #tpu.memory_space<vmem>>, vector<1x1xf32>
    %cst_50 = arith.constant dense<0.000000e+00> : vector<64x64xf32>
    %78 = tpu.matmul %1, %76, %cst_50 {dimension_numbers = #tpu.dot_dimension_numbers<[1], [0], [0], [1], [0, 0, 1, 1], [], []>} : vector<64x8xf32>, vector<8x64xf32>, vector<64x64xf32> -> vector<64x64xf32>
    %79 = vector.broadcast %77 : vector<1x1xf32> to vector<64x64xf32>
    %80 = arith.addf %78, %79 : vector<64x64xf32>
    %cst_51 = arith.constant 0.000000e+00 : f32
    %81 = vector.broadcast %cst_51 : f32 to vector<64x64xf32>
    %82 = arith.maximumf %80, %81 : vector<64x64xf32>
    %c7_52 = arith.constant 7 : index
    %c0_53 = arith.constant 0 : index
    %c0_54 = arith.constant 0 : index
    %83 = vector.load %arg6[%c7_52, %c0_53, %c0_54] : memref<8x64x64xf32, #tpu.memory_space<vmem>>, vector<1x64x64xf32>
    %84 = vector.shape_cast %83 : vector<1x64x64xf32> to vector<64x64xf32>
    %85 = vector.shape_cast %82 : vector<64x64xf32> to vector<1x64x64xf32>
    tpu.vector_store %arg6[%c7_52, %c0_53, %c0_54], %85 {strides = array<i32>} : memref<8x64x64xf32, #tpu.memory_space<vmem>>, vector<1x64x64xf32>,
    %c0_i32 = arith.constant 0 : i32
    %c8_i32 = arith.constant 8 : i32
    %86 = arith.addi %c0_i32, %c8_i32 : i32
    %c1_i32 = arith.constant 1 : i32
    scf.for %arg10 = %c0_i32 to %86 step %c1_i32  : i32 {
      %c1_i32_68 = arith.constant 1 : i32
      %90 = arith.muli %arg10, %c1_i32_68 : i32
      %c0_i32_69 = arith.constant 0 : i32
      %91 = arith.addi %c0_i32_69, %90 : i32
      %c8_i32_70 = arith.constant 8 : i32
      %92 = arith.addi %c8_i32_70, %91 : i32
      %93 = arith.index_cast %92 : i32 to index
      %c0_71 = arith.constant 0 : index
      %94 = vector.load %arg4[%93, %c0_71] : memref<40x33xf32, #tpu.memory_space<vmem>>, vector<1x33xf32>
      %c0_72 = arith.constant 0 : index
      %c0_73 = arith.constant 0 : index
      %c0_74 = arith.constant 0 : index
      %95 = vector.load %arg6[%c0_72, %c0_73, %c0_74] : memref<8x64x64xf32, #tpu.memory_space<vmem>>, vector<1x32x32xf32>
      %96 = vector.shape_cast %95 : vector<1x32x32xf32> to vector<32x32xf32>
      %97 = vector.extract_strided_slice %94 {offsets = [0, 0], sizes = [1, 1], strides = [1, 1]} : vector<1x33xf32> to vector<1x1xf32>
      %98 = vector.broadcast %97 : vector<1x1xf32> to vector<32x32xf32>
      %99 = arith.mulf %98, %96 : vector<32x32xf32>
      %c0_75 = arith.constant 0 : index
      %c0_76 = arith.constant 0 : index
      %c32_77 = arith.constant 32 : index
      %100 = vector.load %arg6[%c0_75, %c0_76, %c32_77] : memref<8x64x64xf32, #tpu.memory_space<vmem>>, vector<1x32x32xf32>
      %101 = vector.shape_cast %100 : vector<1x32x32xf32> to vector<32x32xf32>
      %102 = vector.extract_strided_slice %94 {offsets = [0, 1], sizes = [1, 1], strides = [1, 1]} : vector<1x33xf32> to vector<1x1xf32>
      %103 = vector.broadcast %102 : vector<1x1xf32> to vector<32x32xf32>
      %104 = arith.mulf %103, %101 : vector<32x32xf32>
      %105 = arith.addf %99, %104 : vector<32x32xf32>
      %c0_78 = arith.constant 0 : index
      %c32_79 = arith.constant 32 : index
      %c0_80 = arith.constant 0 : index
      %106 = vector.load %arg6[%c0_78, %c32_79, %c0_80] : memref<8x64x64xf32, #tpu.memory_space<vmem>>, vector<1x32x32xf32>
      %107 = vector.shape_cast %106 : vector<1x32x32xf32> to vector<32x32xf32>
      %108 = vector.extract_strided_slice %94 {offsets = [0, 2], sizes = [1, 1], strides = [1, 1]} : vector<1x33xf32> to vector<1x1xf32>
      %109 = vector.broadcast %108 : vector<1x1xf32> to vector<32x32xf32>
      %110 = arith.mulf %109, %107 : vector<32x32xf32>
      %111 = arith.addf %105, %110 : vector<32x32xf32>
      %c0_81 = arith.constant 0 : index
      %c32_82 = arith.constant 32 : index
      %c32_83 = arith.constant 32 : index
      %112 = vector.load %arg6[%c0_81, %c32_82, %c32_83] : memref<8x64x64xf32, #tpu.memory_space<vmem>>, vector<1x32x32xf32>
      %113 = vector.shape_cast %112 : vector<1x32x32xf32> to vector<32x32xf32>
      %114 = vector.extract_strided_slice %94 {offsets = [0, 3], sizes = [1, 1], strides = [1, 1]} : vector<1x33xf32> to vector<1x1xf32>
      %115 = vector.broadcast %114 : vector<1x1xf32> to vector<32x32xf32>
      %116 = arith.mulf %115, %113 : vector<32x32xf32>
      %117 = arith.addf %111, %116 : vector<32x32xf32>
      %c1_84 = arith.constant 1 : index
      %c0_85 = arith.constant 0 : index
      %c0_86 = arith.constant 0 : index
      %118 = vector.load %arg6[%c1_84, %c0_85, %c0_86] : memref<8x64x64xf32, #tpu.memory_space<vmem>>, vector<1x32x32xf32>
      %119 = vector.shape_cast %118 : vector<1x32x32xf32> to vector<32x32xf32>
      %120 = vector.extract_strided_slice %94 {offsets = [0, 4], sizes = [1, 1], strides = [1, 1]} : vector<1x33xf32> to vector<1x1xf32>
      %121 = vector.broadcast %120 : vector<1x1xf32> to vector<32x32xf32>
      %122 = arith.mulf %121, %119 : vector<32x32xf32>
      %123 = arith.addf %117, %122 : vector<32x32xf32>
      %c1_87 = arith.constant 1 : index
      %c0_88 = arith.constant 0 : index
      %c32_89 = arith.constant 32 : index
      %124 = vector.load %arg6[%c1_87, %c0_88, %c32_89] : memref<8x64x64xf32, #tpu.memory_space<vmem>>, vector<1x32x32xf32>
      %125 = vector.shape_cast %124 : vector<1x32x32xf32> to vector<32x32xf32>
      %126 = vector.extract_strided_slice %94 {offsets = [0, 5], sizes = [1, 1], strides = [1, 1]} : vector<1x33xf32> to vector<1x1xf32>
      %127 = vector.broadcast %126 : vector<1x1xf32> to vector<32x32xf32>
      %128 = arith.mulf %127, %125 : vector<32x32xf32>
      %129 = arith.addf %123, %128 : vector<32x32xf32>
      %c1_90 = arith.constant 1 : index
      %c32_91 = arith.constant 32 : index
      %c0_92 = arith.constant 0 : index
      %130 = vector.load %arg6[%c1_90, %c32_91, %c0_92] : memref<8x64x64xf32, #tpu.memory_space<vmem>>, vector<1x32x32xf32>
      %131 = vector.shape_cast %130 : vector<1x32x32xf32> to vector<32x32xf32>
      %132 = vector.extract_strided_slice %94 {offsets = [0, 6], sizes = [1, 1], strides = [1, 1]} : vector<1x33xf32> to vector<1x1xf32>
      %133 = vector.broadcast %132 : vector<1x1xf32> to vector<32x32xf32>
      %134 = arith.mulf %133, %131 : vector<32x32xf32>
      %135 = arith.addf %129, %134 : vector<32x32xf32>
      %c1_93 = arith.constant 1 : index
      %c32_94 = arith.constant 32 : index
      %c32_95 = arith.constant 32 : index
      %136 = vector.load %arg6[%c1_93, %c32_94, %c32_95] : memref<8x64x64xf32, #tpu.memory_space<vmem>>, vector<1x32x32xf32>
      %137 = vector.shape_cast %136 : vector<1x32x32xf32> to vector<32x32xf32>
      %138 = vector.extract_strided_slice %94 {offsets = [0, 7], sizes = [1, 1], strides = [1, 1]} : vector<1x33xf32> to vector<1x1xf32>
      %139 = vector.broadcast %138 : vector<1x1xf32> to vector<32x32xf32>
      %140 = arith.mulf %139, %137 : vector<32x32xf32>
      %141 = arith.addf %135, %140 : vector<32x32xf32>
      %c2_96 = arith.constant 2 : index
      %c0_97 = arith.constant 0 : index
      %c0_98 = arith.constant 0 : index
      %142 = vector.load %arg6[%c2_96, %c0_97, %c0_98] : memref<8x64x64xf32, #tpu.memory_space<vmem>>, vector<1x32x32xf32>
      %143 = vector.shape_cast %142 : vector<1x32x32xf32> to vector<32x32xf32>
      %144 = vector.extract_strided_slice %94 {offsets = [0, 8], sizes = [1, 1], strides = [1, 1]} : vector<1x33xf32> to vector<1x1xf32>
      %145 = vector.broadcast %144 : vector<1x1xf32> to vector<32x32xf32>
      %146 = arith.mulf %145, %143 : vector<32x32xf32>
      %147 = arith.addf %141, %146 : vector<32x32xf32>
      %c2_99 = arith.constant 2 : index
      %c0_100 = arith.constant 0 : index
      %c32_101 = arith.constant 32 : index
      %148 = vector.load %arg6[%c2_99, %c0_100, %c32_101] : memref<8x64x64xf32, #tpu.memory_space<vmem>>, vector<1x32x32xf32>
      %149 = vector.shape_cast %148 : vector<1x32x32xf32> to vector<32x32xf32>
      %150 = vector.extract_strided_slice %94 {offsets = [0, 9], sizes = [1, 1], strides = [1, 1]} : vector<1x33xf32> to vector<1x1xf32>
      %151 = vector.broadcast %150 : vector<1x1xf32> to vector<32x32xf32>
      %152 = arith.mulf %151, %149 : vector<32x32xf32>
      %153 = arith.addf %147, %152 : vector<32x32xf32>
      %c2_102 = arith.constant 2 : index
      %c32_103 = arith.constant 32 : index
      %c0_104 = arith.constant 0 : index
      %154 = vector.load %arg6[%c2_102, %c32_103, %c0_104] : memref<8x64x64xf32, #tpu.memory_space<vmem>>, vector<1x32x32xf32>
      %155 = vector.shape_cast %154 : vector<1x32x32xf32> to vector<32x32xf32>
      %156 = vector.extract_strided_slice %94 {offsets = [0, 10], sizes = [1, 1], strides = [1, 1]} : vector<1x33xf32> to vector<1x1xf32>
      %157 = vector.broadcast %156 : vector<1x1xf32> to vector<32x32xf32>
      %158 = arith.mulf %157, %155 : vector<32x32xf32>
      %159 = arith.addf %153, %158 : vector<32x32xf32>
      %c2_105 = arith.constant 2 : index
      %c32_106 = arith.constant 32 : index
      %c32_107 = arith.constant 32 : index
      %160 = vector.load %arg6[%c2_105, %c32_106, %c32_107] : memref<8x64x64xf32, #tpu.memory_space<vmem>>, vector<1x32x32xf32>
      %161 = vector.shape_cast %160 : vector<1x32x32xf32> to vector<32x32xf32>
      %162 = vector.extract_strided_slice %94 {offsets = [0, 11], sizes = [1, 1], strides = [1, 1]} : vector<1x33xf32> to vector<1x1xf32>
      %163 = vector.broadcast %162 : vector<1x1xf32> to vector<32x32xf32>
      %164 = arith.mulf %163, %161 : vector<32x32xf32>
      %165 = arith.addf %159, %164 : vector<32x32xf32>
      %c3_108 = arith.constant 3 : index
      %c0_109 = arith.constant 0 : index
      %c0_110 = arith.constant 0 : index
      %166 = vector.load %arg6[%c3_108, %c0_109, %c0_110] : memref<8x64x64xf32, #tpu.memory_space<vmem>>, vector<1x32x32xf32>
      %167 = vector.shape_cast %166 : vector<1x32x32xf32> to vector<32x32xf32>
      %168 = vector.extract_strided_slice %94 {offsets = [0, 12], sizes = [1, 1], strides = [1, 1]} : vector<1x33xf32> to vector<1x1xf32>
      %169 = vector.broadcast %168 : vector<1x1xf32> to vector<32x32xf32>
      %170 = arith.mulf %169, %167 : vector<32x32xf32>
      %171 = arith.addf %165, %170 : vector<32x32xf32>
      %c3_111 = arith.constant 3 : index
      %c0_112 = arith.constant 0 : index
      %c32_113 = arith.constant 32 : index
      %172 = vector.load %arg6[%c3_111, %c0_112, %c32_113] : memref<8x64x64xf32, #tpu.memory_space<vmem>>, vector<1x32x32xf32>
      %173 = vector.shape_cast %172 : vector<1x32x32xf32> to vector<32x32xf32>
      %174 = vector.extract_strided_slice %94 {offsets = [0, 13], sizes = [1, 1], strides = [1, 1]} : vector<1x33xf32> to vector<1x1xf32>
      %175 = vector.broadcast %174 : vector<1x1xf32> to vector<32x32xf32>
      %176 = arith.mulf %175, %173 : vector<32x32xf32>
      %177 = arith.addf %171, %176 : vector<32x32xf32>
      %c3_114 = arith.constant 3 : index
      %c32_115 = arith.constant 32 : index
      %c0_116 = arith.constant 0 : index
      %178 = vector.load %arg6[%c3_114, %c32_115, %c0_116] : memref<8x64x64xf32, #tpu.memory_space<vmem>>, vector<1x32x32xf32>
      %179 = vector.shape_cast %178 : vector<1x32x32xf32> to vector<32x32xf32>
      %180 = vector.extract_strided_slice %94 {offsets = [0, 14], sizes = [1, 1], strides = [1, 1]} : vector<1x33xf32> to vector<1x1xf32>
      %181 = vector.broadcast %180 : vector<1x1xf32> to vector<32x32xf32>
      %182 = arith.mulf %181, %179 : vector<32x32xf32>
      %183 = arith.addf %177, %182 : vector<32x32xf32>
      %c3_117 = arith.constant 3 : index
      %c32_118 = arith.constant 32 : index
      %c32_119 = arith.constant 32 : index
      %184 = vector.load %arg6[%c3_117, %c32_118, %c32_119] : memref<8x64x64xf32, #tpu.memory_space<vmem>>, vector<1x32x32xf32>
      %185 = vector.shape_cast %184 : vector<1x32x32xf32> to vector<32x32xf32>
      %186 = vector.extract_strided_slice %94 {offsets = [0, 15], sizes = [1, 1], strides = [1, 1]} : vector<1x33xf32> to vector<1x1xf32>
      %187 = vector.broadcast %186 : vector<1x1xf32> to vector<32x32xf32>
      %188 = arith.mulf %187, %185 : vector<32x32xf32>
      %189 = arith.addf %183, %188 : vector<32x32xf32>
      %c4_120 = arith.constant 4 : index
      %c0_121 = arith.constant 0 : index
      %c0_122 = arith.constant 0 : index
      %190 = vector.load %arg6[%c4_120, %c0_121, %c0_122] : memref<8x64x64xf32, #tpu.memory_space<vmem>>, vector<1x32x32xf32>
      %191 = vector.shape_cast %190 : vector<1x32x32xf32> to vector<32x32xf32>
      %192 = vector.extract_strided_slice %94 {offsets = [0, 16], sizes = [1, 1], strides = [1, 1]} : vector<1x33xf32> to vector<1x1xf32>
      %193 = vector.broadcast %192 : vector<1x1xf32> to vector<32x32xf32>
      %194 = arith.mulf %193, %191 : vector<32x32xf32>
      %195 = arith.addf %189, %194 : vector<32x32xf32>
      %c4_123 = arith.constant 4 : index
      %c0_124 = arith.constant 0 : index
      %c32_125 = arith.constant 32 : index
      %196 = vector.load %arg6[%c4_123, %c0_124, %c32_125] : memref<8x64x64xf32, #tpu.memory_space<vmem>>, vector<1x32x32xf32>
      %197 = vector.shape_cast %196 : vector<1x32x32xf32> to vector<32x32xf32>
      %198 = vector.extract_strided_slice %94 {offsets = [0, 17], sizes = [1, 1], strides = [1, 1]} : vector<1x33xf32> to vector<1x1xf32>
      %199 = vector.broadcast %198 : vector<1x1xf32> to vector<32x32xf32>
      %200 = arith.mulf %199, %197 : vector<32x32xf32>
      %201 = arith.addf %195, %200 : vector<32x32xf32>
      %c4_126 = arith.constant 4 : index
      %c32_127 = arith.constant 32 : index
      %c0_128 = arith.constant 0 : index
      %202 = vector.load %arg6[%c4_126, %c32_127, %c0_128] : memref<8x64x64xf32, #tpu.memory_space<vmem>>, vector<1x32x32xf32>
      %203 = vector.shape_cast %202 : vector<1x32x32xf32> to vector<32x32xf32>
      %204 = vector.extract_strided_slice %94 {offsets = [0, 18], sizes = [1, 1], strides = [1, 1]} : vector<1x33xf32> to vector<1x1xf32>
      %205 = vector.broadcast %204 : vector<1x1xf32> to vector<32x32xf32>
      %206 = arith.mulf %205, %203 : vector<32x32xf32>
      %207 = arith.addf %201, %206 : vector<32x32xf32>
      %c4_129 = arith.constant 4 : index
      %c32_130 = arith.constant 32 : index
      %c32_131 = arith.constant 32 : index
      %208 = vector.load %arg6[%c4_129, %c32_130, %c32_131] : memref<8x64x64xf32, #tpu.memory_space<vmem>>, vector<1x32x32xf32>
      %209 = vector.shape_cast %208 : vector<1x32x32xf32> to vector<32x32xf32>
      %210 = vector.extract_strided_slice %94 {offsets = [0, 19], sizes = [1, 1], strides = [1, 1]} : vector<1x33xf32> to vector<1x1xf32>
      %211 = vector.broadcast %210 : vector<1x1xf32> to vector<32x32xf32>
      %212 = arith.mulf %211, %209 : vector<32x32xf32>
      %213 = arith.addf %207, %212 : vector<32x32xf32>
      %c5_132 = arith.constant 5 : index
      %c0_133 = arith.constant 0 : index
      %c0_134 = arith.constant 0 : index
      %214 = vector.load %arg6[%c5_132, %c0_133, %c0_134] : memref<8x64x64xf32, #tpu.memory_space<vmem>>, vector<1x32x32xf32>
      %215 = vector.shape_cast %214 : vector<1x32x32xf32> to vector<32x32xf32>
      %216 = vector.extract_strided_slice %94 {offsets = [0, 20], sizes = [1, 1], strides = [1, 1]} : vector<1x33xf32> to vector<1x1xf32>
      %217 = vector.broadcast %216 : vector<1x1xf32> to vector<32x32xf32>
      %218 = arith.mulf %217, %215 : vector<32x32xf32>
      %219 = arith.addf %213, %218 : vector<32x32xf32>
      %c5_135 = arith.constant 5 : index
      %c0_136 = arith.constant 0 : index
      %c32_137 = arith.constant 32 : index
      %220 = vector.load %arg6[%c5_135, %c0_136, %c32_137] : memref<8x64x64xf32, #tpu.memory_space<vmem>>, vector<1x32x32xf32>
      %221 = vector.shape_cast %220 : vector<1x32x32xf32> to vector<32x32xf32>
      %222 = vector.extract_strided_slice %94 {offsets = [0, 21], sizes = [1, 1], strides = [1, 1]} : vector<1x33xf32> to vector<1x1xf32>
      %223 = vector.broadcast %222 : vector<1x1xf32> to vector<32x32xf32>
      %224 = arith.mulf %223, %221 : vector<32x32xf32>
      %225 = arith.addf %219, %224 : vector<32x32xf32>
      %c5_138 = arith.constant 5 : index
      %c32_139 = arith.constant 32 : index
      %c0_140 = arith.constant 0 : index
      %226 = vector.load %arg6[%c5_138, %c32_139, %c0_140] : memref<8x64x64xf32, #tpu.memory_space<vmem>>, vector<1x32x32xf32>
      %227 = vector.shape_cast %226 : vector<1x32x32xf32> to vector<32x32xf32>
      %228 = vector.extract_strided_slice %94 {offsets = [0, 22], sizes = [1, 1], strides = [1, 1]} : vector<1x33xf32> to vector<1x1xf32>
      %229 = vector.broadcast %228 : vector<1x1xf32> to vector<32x32xf32>
      %230 = arith.mulf %229, %227 : vector<32x32xf32>
      %231 = arith.addf %225, %230 : vector<32x32xf32>
      %c5_141 = arith.constant 5 : index
      %c32_142 = arith.constant 32 : index
      %c32_143 = arith.constant 32 : index
      %232 = vector.load %arg6[%c5_141, %c32_142, %c32_143] : memref<8x64x64xf32, #tpu.memory_space<vmem>>, vector<1x32x32xf32>
      %233 = vector.shape_cast %232 : vector<1x32x32xf32> to vector<32x32xf32>
      %234 = vector.extract_strided_slice %94 {offsets = [0, 23], sizes = [1, 1], strides = [1, 1]} : vector<1x33xf32> to vector<1x1xf32>
      %235 = vector.broadcast %234 : vector<1x1xf32> to vector<32x32xf32>
      %236 = arith.mulf %235, %233 : vector<32x32xf32>
      %237 = arith.addf %231, %236 : vector<32x32xf32>
      %c6_144 = arith.constant 6 : index
      %c0_145 = arith.constant 0 : index
      %c0_146 = arith.constant 0 : index
      %238 = vector.load %arg6[%c6_144, %c0_145, %c0_146] : memref<8x64x64xf32, #tpu.memory_space<vmem>>, vector<1x32x32xf32>
      %239 = vector.shape_cast %238 : vector<1x32x32xf32> to vector<32x32xf32>
      %240 = vector.extract_strided_slice %94 {offsets = [0, 24], sizes = [1, 1], strides = [1, 1]} : vector<1x33xf32> to vector<1x1xf32>
      %241 = vector.broadcast %240 : vector<1x1xf32> to vector<32x32xf32>
      %242 = arith.mulf %241, %239 : vector<32x32xf32>
      %243 = arith.addf %237, %242 : vector<32x32xf32>
      %c6_147 = arith.constant 6 : index
      %c0_148 = arith.constant 0 : index
      %c32_149 = arith.constant 32 : index
      %244 = vector.load %arg6[%c6_147, %c0_148, %c32_149] : memref<8x64x64xf32, #tpu.memory_space<vmem>>, vector<1x32x32xf32>
      %245 = vector.shape_cast %244 : vector<1x32x32xf32> to vector<32x32xf32>
      %246 = vector.extract_strided_slice %94 {offsets = [0, 25], sizes = [1, 1], strides = [1, 1]} : vector<1x33xf32> to vector<1x1xf32>
      %247 = vector.broadcast %246 : vector<1x1xf32> to vector<32x32xf32>
      %248 = arith.mulf %247, %245 : vector<32x32xf32>
      %249 = arith.addf %243, %248 : vector<32x32xf32>
      %c6_150 = arith.constant 6 : index
      %c32_151 = arith.constant 32 : index
      %c0_152 = arith.constant 0 : index
      %250 = vector.load %arg6[%c6_150, %c32_151, %c0_152] : memref<8x64x64xf32, #tpu.memory_space<vmem>>, vector<1x32x32xf32>
      %251 = vector.shape_cast %250 : vector<1x32x32xf32> to vector<32x32xf32>
      %252 = vector.extract_strided_slice %94 {offsets = [0, 26], sizes = [1, 1], strides = [1, 1]} : vector<1x33xf32> to vector<1x1xf32>
      %253 = vector.broadcast %252 : vector<1x1xf32> to vector<32x32xf32>
      %254 = arith.mulf %253, %251 : vector<32x32xf32>
      %255 = arith.addf %249, %254 : vector<32x32xf32>
      %c6_153 = arith.constant 6 : index
      %c32_154 = arith.constant 32 : index
      %c32_155 = arith.constant 32 : index
      %256 = vector.load %arg6[%c6_153, %c32_154, %c32_155] : memref<8x64x64xf32, #tpu.memory_space<vmem>>, vector<1x32x32xf32>
      %257 = vector.shape_cast %256 : vector<1x32x32xf32> to vector<32x32xf32>
      %258 = vector.extract_strided_slice %94 {offsets = [0, 27], sizes = [1, 1], strides = [1, 1]} : vector<1x33xf32> to vector<1x1xf32>
      %259 = vector.broadcast %258 : vector<1x1xf32> to vector<32x32xf32>
      %260 = arith.mulf %259, %257 : vector<32x32xf32>
      %261 = arith.addf %255, %260 : vector<32x32xf32>
      %c7_156 = arith.constant 7 : index
      %c0_157 = arith.constant 0 : index
      %c0_158 = arith.constant 0 : index
      %262 = vector.load %arg6[%c7_156, %c0_157, %c0_158] : memref<8x64x64xf32, #tpu.memory_space<vmem>>, vector<1x32x32xf32>
      %263 = vector.shape_cast %262 : vector<1x32x32xf32> to vector<32x32xf32>
      %264 = vector.extract_strided_slice %94 {offsets = [0, 28], sizes = [1, 1], strides = [1, 1]} : vector<1x33xf32> to vector<1x1xf32>
      %265 = vector.broadcast %264 : vector<1x1xf32> to vector<32x32xf32>
      %266 = arith.mulf %265, %263 : vector<32x32xf32>
      %267 = arith.addf %261, %266 : vector<32x32xf32>
      %c7_159 = arith.constant 7 : index
      %c0_160 = arith.constant 0 : index
      %c32_161 = arith.constant 32 : index
      %268 = vector.load %arg6[%c7_159, %c0_160, %c32_161] : memref<8x64x64xf32, #tpu.memory_space<vmem>>, vector<1x32x32xf32>
      %269 = vector.shape_cast %268 : vector<1x32x32xf32> to vector<32x32xf32>
      %270 = vector.extract_strided_slice %94 {offsets = [0, 29], sizes = [1, 1], strides = [1, 1]} : vector<1x33xf32> to vector<1x1xf32>
      %271 = vector.broadcast %270 : vector<1x1xf32> to vector<32x32xf32>
      %272 = arith.mulf %271, %269 : vector<32x32xf32>
      %273 = arith.addf %267, %272 : vector<32x32xf32>
      %c7_162 = arith.constant 7 : index
      %c32_163 = arith.constant 32 : index
      %c0_164 = arith.constant 0 : index
      %274 = vector.load %arg6[%c7_162, %c32_163, %c0_164] : memref<8x64x64xf32, #tpu.memory_space<vmem>>, vector<1x32x32xf32>
      %275 = vector.shape_cast %274 : vector<1x32x32xf32> to vector<32x32xf32>
      %276 = vector.extract_strided_slice %94 {offsets = [0, 30], sizes = [1, 1], strides = [1, 1]} : vector<1x33xf32> to vector<1x1xf32>
      %277 = vector.broadcast %276 : vector<1x1xf32> to vector<32x32xf32>
      %278 = arith.mulf %277, %275 : vector<32x32xf32>
      %279 = arith.addf %273, %278 : vector<32x32xf32>
      %c7_165 = arith.constant 7 : index
      %c32_166 = arith.constant 32 : index
      %c32_167 = arith.constant 32 : index
      %280 = vector.load %arg6[%c7_165, %c32_166, %c32_167] : memref<8x64x64xf32, #tpu.memory_space<vmem>>, vector<1x32x32xf32>
      %281 = vector.shape_cast %280 : vector<1x32x32xf32> to vector<32x32xf32>
      %282 = vector.extract_strided_slice %94 {offsets = [0, 31], sizes = [1, 1], strides = [1, 1]} : vector<1x33xf32> to vector<1x1xf32>
      %283 = vector.broadcast %282 : vector<1x1xf32> to vector<32x32xf32>
      %284 = arith.mulf %283, %281 : vector<32x32xf32>
      %285 = arith.addf %279, %284 : vector<32x32xf32>
      %286 = vector.extract_strided_slice %94 {offsets = [0, 32], sizes = [1, 1], strides = [1, 1]} : vector<1x33xf32> to vector<1x1xf32>
      %287 = vector.broadcast %286 : vector<1x1xf32> to vector<32x32xf32>
      %288 = arith.addf %285, %287 : vector<32x32xf32>
      %cst_168 = arith.constant 0.000000e+00 : f32
      %289 = vector.broadcast %cst_168 : f32 to vector<32x32xf32>
      %290 = arith.maximumf %288, %289 : vector<32x32xf32>
      %291 = arith.index_cast %91 : i32 to index
      %c0_169 = arith.constant 0 : index
      %c0_170 = arith.constant 0 : index
      %292 = vector.load %arg7[%291, %c0_169, %c0_170] : memref<8x32x32xf32, #tpu.memory_space<vmem>>, vector<1x32x32xf32>
      %293 = vector.shape_cast %292 : vector<1x32x32xf32> to vector<32x32xf32>
      %294 = vector.shape_cast %290 : vector<32x32xf32> to vector<1x32x32xf32>
      tpu.vector_store %arg7[%291, %c0_169, %c0_170], %294 {strides = array<i32>} : memref<8x32x32xf32, #tpu.memory_space<vmem>>, vector<1x32x32xf32>,
    }
    %c8_i32_55 = arith.constant 8 : i32
    %c0_i32_56 = arith.constant 0 : i32
    %c8_i32_57 = arith.constant 8 : i32
    %87 = arith.addi %c0_i32_56, %c8_i32_57 : i32
    %c1_i32_58 = arith.constant 1 : i32
    scf.for %arg10 = %c0_i32_56 to %87 step %c1_i32_58  : i32 {
      %c1_i32_68 = arith.constant 1 : i32
      %90 = arith.muli %arg10, %c1_i32_68 : i32
      %c0_i32_69 = arith.constant 0 : i32
      %91 = arith.addi %c0_i32_69, %90 : i32
      %c16_i32 = arith.constant 16 : i32
      %92 = arith.addi %c16_i32, %91 : i32
      %93 = arith.index_cast %92 : i32 to index
      %c0_70 = arith.constant 0 : index
      %94 = vector.load %arg4[%93, %c0_70] : memref<40x33xf32, #tpu.memory_space<vmem>>, vector<1x33xf32>
      %c0_71 = arith.constant 0 : index
      %c0_72 = arith.constant 0 : index
      %c0_73 = arith.constant 0 : index
      %95 = vector.load %arg7[%c0_71, %c0_72, %c0_73] : memref<8x32x32xf32, #tpu.memory_space<vmem>>, vector<1x16x16xf32>
      %96 = vector.shape_cast %95 : vector<1x16x16xf32> to vector<16x16xf32>
      %97 = vector.extract_strided_slice %94 {offsets = [0, 0], sizes = [1, 1], strides = [1, 1]} : vector<1x33xf32> to vector<1x1xf32>
      %98 = vector.broadcast %97 : vector<1x1xf32> to vector<16x16xf32>
      %99 = arith.mulf %98, %96 : vector<16x16xf32>
      %c0_74 = arith.constant 0 : index
      %c0_75 = arith.constant 0 : index
      %c16 = arith.constant 16 : index
      %100 = vector.load %arg7[%c0_74, %c0_75, %c16] : memref<8x32x32xf32, #tpu.memory_space<vmem>>, vector<1x16x16xf32>
      %101 = vector.shape_cast %100 : vector<1x16x16xf32> to vector<16x16xf32>
      %102 = vector.extract_strided_slice %94 {offsets = [0, 1], sizes = [1, 1], strides = [1, 1]} : vector<1x33xf32> to vector<1x1xf32>
      %103 = vector.broadcast %102 : vector<1x1xf32> to vector<16x16xf32>
      %104 = arith.mulf %103, %101 : vector<16x16xf32>
      %105 = arith.addf %99, %104 : vector<16x16xf32>
      %c0_76 = arith.constant 0 : index
      %c16_77 = arith.constant 16 : index
      %c0_78 = arith.constant 0 : index
      %106 = vector.load %arg7[%c0_76, %c16_77, %c0_78] : memref<8x32x32xf32, #tpu.memory_space<vmem>>, vector<1x16x16xf32>
      %107 = vector.shape_cast %106 : vector<1x16x16xf32> to vector<16x16xf32>
      %108 = vector.extract_strided_slice %94 {offsets = [0, 2], sizes = [1, 1], strides = [1, 1]} : vector<1x33xf32> to vector<1x1xf32>
      %109 = vector.broadcast %108 : vector<1x1xf32> to vector<16x16xf32>
      %110 = arith.mulf %109, %107 : vector<16x16xf32>
      %111 = arith.addf %105, %110 : vector<16x16xf32>
      %c0_79 = arith.constant 0 : index
      %c16_80 = arith.constant 16 : index
      %c16_81 = arith.constant 16 : index
      %112 = vector.load %arg7[%c0_79, %c16_80, %c16_81] : memref<8x32x32xf32, #tpu.memory_space<vmem>>, vector<1x16x16xf32>
      %113 = vector.shape_cast %112 : vector<1x16x16xf32> to vector<16x16xf32>
      %114 = vector.extract_strided_slice %94 {offsets = [0, 3], sizes = [1, 1], strides = [1, 1]} : vector<1x33xf32> to vector<1x1xf32>
      %115 = vector.broadcast %114 : vector<1x1xf32> to vector<16x16xf32>
      %116 = arith.mulf %115, %113 : vector<16x16xf32>
      %117 = arith.addf %111, %116 : vector<16x16xf32>
      %c1_82 = arith.constant 1 : index
      %c0_83 = arith.constant 0 : index
      %c0_84 = arith.constant 0 : index
      %118 = vector.load %arg7[%c1_82, %c0_83, %c0_84] : memref<8x32x32xf32, #tpu.memory_space<vmem>>, vector<1x16x16xf32>
      %119 = vector.shape_cast %118 : vector<1x16x16xf32> to vector<16x16xf32>
      %120 = vector.extract_strided_slice %94 {offsets = [0, 4], sizes = [1, 1], strides = [1, 1]} : vector<1x33xf32> to vector<1x1xf32>
      %121 = vector.broadcast %120 : vector<1x1xf32> to vector<16x16xf32>
      %122 = arith.mulf %121, %119 : vector<16x16xf32>
      %123 = arith.addf %117, %122 : vector<16x16xf32>
      %c1_85 = arith.constant 1 : index
      %c0_86 = arith.constant 0 : index
      %c16_87 = arith.constant 16 : index
      %124 = vector.load %arg7[%c1_85, %c0_86, %c16_87] : memref<8x32x32xf32, #tpu.memory_space<vmem>>, vector<1x16x16xf32>
      %125 = vector.shape_cast %124 : vector<1x16x16xf32> to vector<16x16xf32>
      %126 = vector.extract_strided_slice %94 {offsets = [0, 5], sizes = [1, 1], strides = [1, 1]} : vector<1x33xf32> to vector<1x1xf32>
      %127 = vector.broadcast %126 : vector<1x1xf32> to vector<16x16xf32>
      %128 = arith.mulf %127, %125 : vector<16x16xf32>
      %129 = arith.addf %123, %128 : vector<16x16xf32>
      %c1_88 = arith.constant 1 : index
      %c16_89 = arith.constant 16 : index
      %c0_90 = arith.constant 0 : index
      %130 = vector.load %arg7[%c1_88, %c16_89, %c0_90] : memref<8x32x32xf32, #tpu.memory_space<vmem>>, vector<1x16x16xf32>
      %131 = vector.shape_cast %130 : vector<1x16x16xf32> to vector<16x16xf32>
      %132 = vector.extract_strided_slice %94 {offsets = [0, 6], sizes = [1, 1], strides = [1, 1]} : vector<1x33xf32> to vector<1x1xf32>
      %133 = vector.broadcast %132 : vector<1x1xf32> to vector<16x16xf32>
      %134 = arith.mulf %133, %131 : vector<16x16xf32>
      %135 = arith.addf %129, %134 : vector<16x16xf32>
      %c1_91 = arith.constant 1 : index
      %c16_92 = arith.constant 16 : index
      %c16_93 = arith.constant 16 : index
      %136 = vector.load %arg7[%c1_91, %c16_92, %c16_93] : memref<8x32x32xf32, #tpu.memory_space<vmem>>, vector<1x16x16xf32>
      %137 = vector.shape_cast %136 : vector<1x16x16xf32> to vector<16x16xf32>
      %138 = vector.extract_strided_slice %94 {offsets = [0, 7], sizes = [1, 1], strides = [1, 1]} : vector<1x33xf32> to vector<1x1xf32>
      %139 = vector.broadcast %138 : vector<1x1xf32> to vector<16x16xf32>
      %140 = arith.mulf %139, %137 : vector<16x16xf32>
      %141 = arith.addf %135, %140 : vector<16x16xf32>
      %c2_94 = arith.constant 2 : index
      %c0_95 = arith.constant 0 : index
      %c0_96 = arith.constant 0 : index
      %142 = vector.load %arg7[%c2_94, %c0_95, %c0_96] : memref<8x32x32xf32, #tpu.memory_space<vmem>>, vector<1x16x16xf32>
      %143 = vector.shape_cast %142 : vector<1x16x16xf32> to vector<16x16xf32>
      %144 = vector.extract_strided_slice %94 {offsets = [0, 8], sizes = [1, 1], strides = [1, 1]} : vector<1x33xf32> to vector<1x1xf32>
      %145 = vector.broadcast %144 : vector<1x1xf32> to vector<16x16xf32>
      %146 = arith.mulf %145, %143 : vector<16x16xf32>
      %147 = arith.addf %141, %146 : vector<16x16xf32>
      %c2_97 = arith.constant 2 : index
      %c0_98 = arith.constant 0 : index
      %c16_99 = arith.constant 16 : index
      %148 = vector.load %arg7[%c2_97, %c0_98, %c16_99] : memref<8x32x32xf32, #tpu.memory_space<vmem>>, vector<1x16x16xf32>
      %149 = vector.shape_cast %148 : vector<1x16x16xf32> to vector<16x16xf32>
      %150 = vector.extract_strided_slice %94 {offsets = [0, 9], sizes = [1, 1], strides = [1, 1]} : vector<1x33xf32> to vector<1x1xf32>
      %151 = vector.broadcast %150 : vector<1x1xf32> to vector<16x16xf32>
      %152 = arith.mulf %151, %149 : vector<16x16xf32>
      %153 = arith.addf %147, %152 : vector<16x16xf32>
      %c2_100 = arith.constant 2 : index
      %c16_101 = arith.constant 16 : index
      %c0_102 = arith.constant 0 : index
      %154 = vector.load %arg7[%c2_100, %c16_101, %c0_102] : memref<8x32x32xf32, #tpu.memory_space<vmem>>, vector<1x16x16xf32>
      %155 = vector.shape_cast %154 : vector<1x16x16xf32> to vector<16x16xf32>
      %156 = vector.extract_strided_slice %94 {offsets = [0, 10], sizes = [1, 1], strides = [1, 1]} : vector<1x33xf32> to vector<1x1xf32>
      %157 = vector.broadcast %156 : vector<1x1xf32> to vector<16x16xf32>
      %158 = arith.mulf %157, %155 : vector<16x16xf32>
      %159 = arith.addf %153, %158 : vector<16x16xf32>
      %c2_103 = arith.constant 2 : index
      %c16_104 = arith.constant 16 : index
      %c16_105 = arith.constant 16 : index
      %160 = vector.load %arg7[%c2_103, %c16_104, %c16_105] : memref<8x32x32xf32, #tpu.memory_space<vmem>>, vector<1x16x16xf32>
      %161 = vector.shape_cast %160 : vector<1x16x16xf32> to vector<16x16xf32>
      %162 = vector.extract_strided_slice %94 {offsets = [0, 11], sizes = [1, 1], strides = [1, 1]} : vector<1x33xf32> to vector<1x1xf32>
      %163 = vector.broadcast %162 : vector<1x1xf32> to vector<16x16xf32>
      %164 = arith.mulf %163, %161 : vector<16x16xf32>
      %165 = arith.addf %159, %164 : vector<16x16xf32>
      %c3_106 = arith.constant 3 : index
      %c0_107 = arith.constant 0 : index
      %c0_108 = arith.constant 0 : index
      %166 = vector.load %arg7[%c3_106, %c0_107, %c0_108] : memref<8x32x32xf32, #tpu.memory_space<vmem>>, vector<1x16x16xf32>
      %167 = vector.shape_cast %166 : vector<1x16x16xf32> to vector<16x16xf32>
      %168 = vector.extract_strided_slice %94 {offsets = [0, 12], sizes = [1, 1], strides = [1, 1]} : vector<1x33xf32> to vector<1x1xf32>
      %169 = vector.broadcast %168 : vector<1x1xf32> to vector<16x16xf32>
      %170 = arith.mulf %169, %167 : vector<16x16xf32>
      %171 = arith.addf %165, %170 : vector<16x16xf32>
      %c3_109 = arith.constant 3 : index
      %c0_110 = arith.constant 0 : index
      %c16_111 = arith.constant 16 : index
      %172 = vector.load %arg7[%c3_109, %c0_110, %c16_111] : memref<8x32x32xf32, #tpu.memory_space<vmem>>, vector<1x16x16xf32>
      %173 = vector.shape_cast %172 : vector<1x16x16xf32> to vector<16x16xf32>
      %174 = vector.extract_strided_slice %94 {offsets = [0, 13], sizes = [1, 1], strides = [1, 1]} : vector<1x33xf32> to vector<1x1xf32>
      %175 = vector.broadcast %174 : vector<1x1xf32> to vector<16x16xf32>
      %176 = arith.mulf %175, %173 : vector<16x16xf32>
      %177 = arith.addf %171, %176 : vector<16x16xf32>
      %c3_112 = arith.constant 3 : index
      %c16_113 = arith.constant 16 : index
      %c0_114 = arith.constant 0 : index
      %178 = vector.load %arg7[%c3_112, %c16_113, %c0_114] : memref<8x32x32xf32, #tpu.memory_space<vmem>>, vector<1x16x16xf32>
      %179 = vector.shape_cast %178 : vector<1x16x16xf32> to vector<16x16xf32>
      %180 = vector.extract_strided_slice %94 {offsets = [0, 14], sizes = [1, 1], strides = [1, 1]} : vector<1x33xf32> to vector<1x1xf32>
      %181 = vector.broadcast %180 : vector<1x1xf32> to vector<16x16xf32>
      %182 = arith.mulf %181, %179 : vector<16x16xf32>
      %183 = arith.addf %177, %182 : vector<16x16xf32>
      %c3_115 = arith.constant 3 : index
      %c16_116 = arith.constant 16 : index
      %c16_117 = arith.constant 16 : index
      %184 = vector.load %arg7[%c3_115, %c16_116, %c16_117] : memref<8x32x32xf32, #tpu.memory_space<vmem>>, vector<1x16x16xf32>
      %185 = vector.shape_cast %184 : vector<1x16x16xf32> to vector<16x16xf32>
      %186 = vector.extract_strided_slice %94 {offsets = [0, 15], sizes = [1, 1], strides = [1, 1]} : vector<1x33xf32> to vector<1x1xf32>
      %187 = vector.broadcast %186 : vector<1x1xf32> to vector<16x16xf32>
      %188 = arith.mulf %187, %185 : vector<16x16xf32>
      %189 = arith.addf %183, %188 : vector<16x16xf32>
      %c4_118 = arith.constant 4 : index
      %c0_119 = arith.constant 0 : index
      %c0_120 = arith.constant 0 : index
      %190 = vector.load %arg7[%c4_118, %c0_119, %c0_120] : memref<8x32x32xf32, #tpu.memory_space<vmem>>, vector<1x16x16xf32>
      %191 = vector.shape_cast %190 : vector<1x16x16xf32> to vector<16x16xf32>
      %192 = vector.extract_strided_slice %94 {offsets = [0, 16], sizes = [1, 1], strides = [1, 1]} : vector<1x33xf32> to vector<1x1xf32>
      %193 = vector.broadcast %192 : vector<1x1xf32> to vector<16x16xf32>
      %194 = arith.mulf %193, %191 : vector<16x16xf32>
      %195 = arith.addf %189, %194 : vector<16x16xf32>
      %c4_121 = arith.constant 4 : index
      %c0_122 = arith.constant 0 : index
      %c16_123 = arith.constant 16 : index
      %196 = vector.load %arg7[%c4_121, %c0_122, %c16_123] : memref<8x32x32xf32, #tpu.memory_space<vmem>>, vector<1x16x16xf32>
      %197 = vector.shape_cast %196 : vector<1x16x16xf32> to vector<16x16xf32>
      %198 = vector.extract_strided_slice %94 {offsets = [0, 17], sizes = [1, 1], strides = [1, 1]} : vector<1x33xf32> to vector<1x1xf32>
      %199 = vector.broadcast %198 : vector<1x1xf32> to vector<16x16xf32>
      %200 = arith.mulf %199, %197 : vector<16x16xf32>
      %201 = arith.addf %195, %200 : vector<16x16xf32>
      %c4_124 = arith.constant 4 : index
      %c16_125 = arith.constant 16 : index
      %c0_126 = arith.constant 0 : index
      %202 = vector.load %arg7[%c4_124, %c16_125, %c0_126] : memref<8x32x32xf32, #tpu.memory_space<vmem>>, vector<1x16x16xf32>
      %203 = vector.shape_cast %202 : vector<1x16x16xf32> to vector<16x16xf32>
      %204 = vector.extract_strided_slice %94 {offsets = [0, 18], sizes = [1, 1], strides = [1, 1]} : vector<1x33xf32> to vector<1x1xf32>
      %205 = vector.broadcast %204 : vector<1x1xf32> to vector<16x16xf32>
      %206 = arith.mulf %205, %203 : vector<16x16xf32>
      %207 = arith.addf %201, %206 : vector<16x16xf32>
      %c4_127 = arith.constant 4 : index
      %c16_128 = arith.constant 16 : index
      %c16_129 = arith.constant 16 : index
      %208 = vector.load %arg7[%c4_127, %c16_128, %c16_129] : memref<8x32x32xf32, #tpu.memory_space<vmem>>, vector<1x16x16xf32>
      %209 = vector.shape_cast %208 : vector<1x16x16xf32> to vector<16x16xf32>
      %210 = vector.extract_strided_slice %94 {offsets = [0, 19], sizes = [1, 1], strides = [1, 1]} : vector<1x33xf32> to vector<1x1xf32>
      %211 = vector.broadcast %210 : vector<1x1xf32> to vector<16x16xf32>
      %212 = arith.mulf %211, %209 : vector<16x16xf32>
      %213 = arith.addf %207, %212 : vector<16x16xf32>
      %c5_130 = arith.constant 5 : index
      %c0_131 = arith.constant 0 : index
      %c0_132 = arith.constant 0 : index
      %214 = vector.load %arg7[%c5_130, %c0_131, %c0_132] : memref<8x32x32xf32, #tpu.memory_space<vmem>>, vector<1x16x16xf32>
      %215 = vector.shape_cast %214 : vector<1x16x16xf32> to vector<16x16xf32>
      %216 = vector.extract_strided_slice %94 {offsets = [0, 20], sizes = [1, 1], strides = [1, 1]} : vector<1x33xf32> to vector<1x1xf32>
      %217 = vector.broadcast %216 : vector<1x1xf32> to vector<16x16xf32>
      %218 = arith.mulf %217, %215 : vector<16x16xf32>
      %219 = arith.addf %213, %218 : vector<16x16xf32>
      %c5_133 = arith.constant 5 : index
      %c0_134 = arith.constant 0 : index
      %c16_135 = arith.constant 16 : index
      %220 = vector.load %arg7[%c5_133, %c0_134, %c16_135] : memref<8x32x32xf32, #tpu.memory_space<vmem>>, vector<1x16x16xf32>
      %221 = vector.shape_cast %220 : vector<1x16x16xf32> to vector<16x16xf32>
      %222 = vector.extract_strided_slice %94 {offsets = [0, 21], sizes = [1, 1], strides = [1, 1]} : vector<1x33xf32> to vector<1x1xf32>
      %223 = vector.broadcast %222 : vector<1x1xf32> to vector<16x16xf32>
      %224 = arith.mulf %223, %221 : vector<16x16xf32>
      %225 = arith.addf %219, %224 : vector<16x16xf32>
      %c5_136 = arith.constant 5 : index
      %c16_137 = arith.constant 16 : index
      %c0_138 = arith.constant 0 : index
      %226 = vector.load %arg7[%c5_136, %c16_137, %c0_138] : memref<8x32x32xf32, #tpu.memory_space<vmem>>, vector<1x16x16xf32>
      %227 = vector.shape_cast %226 : vector<1x16x16xf32> to vector<16x16xf32>
      %228 = vector.extract_strided_slice %94 {offsets = [0, 22], sizes = [1, 1], strides = [1, 1]} : vector<1x33xf32> to vector<1x1xf32>
      %229 = vector.broadcast %228 : vector<1x1xf32> to vector<16x16xf32>
      %230 = arith.mulf %229, %227 : vector<16x16xf32>
      %231 = arith.addf %225, %230 : vector<16x16xf32>
      %c5_139 = arith.constant 5 : index
      %c16_140 = arith.constant 16 : index
      %c16_141 = arith.constant 16 : index
      %232 = vector.load %arg7[%c5_139, %c16_140, %c16_141] : memref<8x32x32xf32, #tpu.memory_space<vmem>>, vector<1x16x16xf32>
      %233 = vector.shape_cast %232 : vector<1x16x16xf32> to vector<16x16xf32>
      %234 = vector.extract_strided_slice %94 {offsets = [0, 23], sizes = [1, 1], strides = [1, 1]} : vector<1x33xf32> to vector<1x1xf32>
      %235 = vector.broadcast %234 : vector<1x1xf32> to vector<16x16xf32>
      %236 = arith.mulf %235, %233 : vector<16x16xf32>
      %237 = arith.addf %231, %236 : vector<16x16xf32>
      %c6_142 = arith.constant 6 : index
      %c0_143 = arith.constant 0 : index
      %c0_144 = arith.constant 0 : index
      %238 = vector.load %arg7[%c6_142, %c0_143, %c0_144] : memref<8x32x32xf32, #tpu.memory_space<vmem>>, vector<1x16x16xf32>
      %239 = vector.shape_cast %238 : vector<1x16x16xf32> to vector<16x16xf32>
      %240 = vector.extract_strided_slice %94 {offsets = [0, 24], sizes = [1, 1], strides = [1, 1]} : vector<1x33xf32> to vector<1x1xf32>
      %241 = vector.broadcast %240 : vector<1x1xf32> to vector<16x16xf32>
      %242 = arith.mulf %241, %239 : vector<16x16xf32>
      %243 = arith.addf %237, %242 : vector<16x16xf32>
      %c6_145 = arith.constant 6 : index
      %c0_146 = arith.constant 0 : index
      %c16_147 = arith.constant 16 : index
      %244 = vector.load %arg7[%c6_145, %c0_146, %c16_147] : memref<8x32x32xf32, #tpu.memory_space<vmem>>, vector<1x16x16xf32>
      %245 = vector.shape_cast %244 : vector<1x16x16xf32> to vector<16x16xf32>
      %246 = vector.extract_strided_slice %94 {offsets = [0, 25], sizes = [1, 1], strides = [1, 1]} : vector<1x33xf32> to vector<1x1xf32>
      %247 = vector.broadcast %246 : vector<1x1xf32> to vector<16x16xf32>
      %248 = arith.mulf %247, %245 : vector<16x16xf32>
      %249 = arith.addf %243, %248 : vector<16x16xf32>
      %c6_148 = arith.constant 6 : index
      %c16_149 = arith.constant 16 : index
      %c0_150 = arith.constant 0 : index
      %250 = vector.load %arg7[%c6_148, %c16_149, %c0_150] : memref<8x32x32xf32, #tpu.memory_space<vmem>>, vector<1x16x16xf32>
      %251 = vector.shape_cast %250 : vector<1x16x16xf32> to vector<16x16xf32>
      %252 = vector.extract_strided_slice %94 {offsets = [0, 26], sizes = [1, 1], strides = [1, 1]} : vector<1x33xf32> to vector<1x1xf32>
      %253 = vector.broadcast %252 : vector<1x1xf32> to vector<16x16xf32>
      %254 = arith.mulf %253, %251 : vector<16x16xf32>
      %255 = arith.addf %249, %254 : vector<16x16xf32>
      %c6_151 = arith.constant 6 : index
      %c16_152 = arith.constant 16 : index
      %c16_153 = arith.constant 16 : index
      %256 = vector.load %arg7[%c6_151, %c16_152, %c16_153] : memref<8x32x32xf32, #tpu.memory_space<vmem>>, vector<1x16x16xf32>
      %257 = vector.shape_cast %256 : vector<1x16x16xf32> to vector<16x16xf32>
      %258 = vector.extract_strided_slice %94 {offsets = [0, 27], sizes = [1, 1], strides = [1, 1]} : vector<1x33xf32> to vector<1x1xf32>
      %259 = vector.broadcast %258 : vector<1x1xf32> to vector<16x16xf32>
      %260 = arith.mulf %259, %257 : vector<16x16xf32>
      %261 = arith.addf %255, %260 : vector<16x16xf32>
      %c7_154 = arith.constant 7 : index
      %c0_155 = arith.constant 0 : index
      %c0_156 = arith.constant 0 : index
      %262 = vector.load %arg7[%c7_154, %c0_155, %c0_156] : memref<8x32x32xf32, #tpu.memory_space<vmem>>, vector<1x16x16xf32>
      %263 = vector.shape_cast %262 : vector<1x16x16xf32> to vector<16x16xf32>
      %264 = vector.extract_strided_slice %94 {offsets = [0, 28], sizes = [1, 1], strides = [1, 1]} : vector<1x33xf32> to vector<1x1xf32>
      %265 = vector.broadcast %264 : vector<1x1xf32> to vector<16x16xf32>
      %266 = arith.mulf %265, %263 : vector<16x16xf32>
      %267 = arith.addf %261, %266 : vector<16x16xf32>
      %c7_157 = arith.constant 7 : index
      %c0_158 = arith.constant 0 : index
      %c16_159 = arith.constant 16 : index
      %268 = vector.load %arg7[%c7_157, %c0_158, %c16_159] : memref<8x32x32xf32, #tpu.memory_space<vmem>>, vector<1x16x16xf32>
      %269 = vector.shape_cast %268 : vector<1x16x16xf32> to vector<16x16xf32>
      %270 = vector.extract_strided_slice %94 {offsets = [0, 29], sizes = [1, 1], strides = [1, 1]} : vector<1x33xf32> to vector<1x1xf32>
      %271 = vector.broadcast %270 : vector<1x1xf32> to vector<16x16xf32>
      %272 = arith.mulf %271, %269 : vector<16x16xf32>
      %273 = arith.addf %267, %272 : vector<16x16xf32>
      %c7_160 = arith.constant 7 : index
      %c16_161 = arith.constant 16 : index
      %c0_162 = arith.constant 0 : index
      %274 = vector.load %arg7[%c7_160, %c16_161, %c0_162] : memref<8x32x32xf32, #tpu.memory_space<vmem>>, vector<1x16x16xf32>
      %275 = vector.shape_cast %274 : vector<1x16x16xf32> to vector<16x16xf32>
      %276 = vector.extract_strided_slice %94 {offsets = [0, 30], sizes = [1, 1], strides = [1, 1]} : vector<1x33xf32> to vector<1x1xf32>
      %277 = vector.broadcast %276 : vector<1x1xf32> to vector<16x16xf32>
      %278 = arith.mulf %277, %275 : vector<16x16xf32>
      %279 = arith.addf %273, %278 : vector<16x16xf32>
      %c7_163 = arith.constant 7 : index
      %c16_164 = arith.constant 16 : index
      %c16_165 = arith.constant 16 : index
      %280 = vector.load %arg7[%c7_163, %c16_164, %c16_165] : memref<8x32x32xf32, #tpu.memory_space<vmem>>, vector<1x16x16xf32>
      %281 = vector.shape_cast %280 : vector<1x16x16xf32> to vector<16x16xf32>
      %282 = vector.extract_strided_slice %94 {offsets = [0, 31], sizes = [1, 1], strides = [1, 1]} : vector<1x33xf32> to vector<1x1xf32>
      %283 = vector.broadcast %282 : vector<1x1xf32> to vector<16x16xf32>
      %284 = arith.mulf %283, %281 : vector<16x16xf32>
      %285 = arith.addf %279, %284 : vector<16x16xf32>
      %286 = vector.extract_strided_slice %94 {offsets = [0, 32], sizes = [1, 1], strides = [1, 1]} : vector<1x33xf32> to vector<1x1xf32>
      %287 = vector.broadcast %286 : vector<1x1xf32> to vector<16x16xf32>
      %288 = arith.addf %285, %287 : vector<16x16xf32>
      %cst_166 = arith.constant 0.000000e+00 : f32
      %289 = vector.broadcast %cst_166 : f32 to vector<16x16xf32>
      %290 = arith.maximumf %288, %289 : vector<16x16xf32>
      %291 = arith.index_cast %91 : i32 to index
      %c0_167 = arith.constant 0 : index
      %c0_168 = arith.constant 0 : index
      %292 = vector.load %arg8[%291, %c0_167, %c0_168] : memref<8x16x16xf32, #tpu.memory_space<vmem>>, vector<1x16x16xf32>
      %293 = vector.shape_cast %292 : vector<1x16x16xf32> to vector<16x16xf32>
      %294 = vector.shape_cast %290 : vector<16x16xf32> to vector<1x16x16xf32>
      tpu.vector_store %arg8[%291, %c0_167, %c0_168], %294 {strides = array<i32>} : memref<8x16x16xf32, #tpu.memory_space<vmem>>, vector<1x16x16xf32>,
    }
    %c8_i32_59 = arith.constant 8 : i32
    %c0_i32_60 = arith.constant 0 : i32
    %c8_i32_61 = arith.constant 8 : i32
    %88 = arith.addi %c0_i32_60, %c8_i32_61 : i32
    %c1_i32_62 = arith.constant 1 : i32
    scf.for %arg10 = %c0_i32_60 to %88 step %c1_i32_62  : i32 {
      %c1_i32_68 = arith.constant 1 : i32
      %90 = arith.muli %arg10, %c1_i32_68 : i32
      %c0_i32_69 = arith.constant 0 : i32
      %91 = arith.addi %c0_i32_69, %90 : i32
      %c24_i32 = arith.constant 24 : i32
      %92 = arith.addi %c24_i32, %91 : i32
      %93 = arith.index_cast %92 : i32 to index
      %c0_70 = arith.constant 0 : index
      %94 = vector.load %arg4[%93, %c0_70] : memref<40x33xf32, #tpu.memory_space<vmem>>, vector<1x33xf32>
      %c0_71 = arith.constant 0 : index
      %c0_72 = arith.constant 0 : index
      %c0_73 = arith.constant 0 : index
      %95 = vector.load %arg8[%c0_71, %c0_72, %c0_73] : memref<8x16x16xf32, #tpu.memory_space<vmem>>, vector<1x8x8xf32>
      %96 = vector.shape_cast %95 : vector<1x8x8xf32> to vector<8x8xf32>
      %97 = vector.extract_strided_slice %94 {offsets = [0, 0], sizes = [1, 1], strides = [1, 1]} : vector<1x33xf32> to vector<1x1xf32>
      %98 = vector.broadcast %97 : vector<1x1xf32> to vector<8x8xf32>
      %99 = arith.mulf %98, %96 : vector<8x8xf32>
      %c0_74 = arith.constant 0 : index
      %c0_75 = arith.constant 0 : index
      %c8 = arith.constant 8 : index
      %100 = vector.load %arg8[%c0_74, %c0_75, %c8] : memref<8x16x16xf32, #tpu.memory_space<vmem>>, vector<1x8x8xf32>
      %101 = vector.shape_cast %100 : vector<1x8x8xf32> to vector<8x8xf32>
      %102 = vector.extract_strided_slice %94 {offsets = [0, 1], sizes = [1, 1], strides = [1, 1]} : vector<1x33xf32> to vector<1x1xf32>
      %103 = vector.broadcast %102 : vector<1x1xf32> to vector<8x8xf32>
      %104 = arith.mulf %103, %101 : vector<8x8xf32>
      %105 = arith.addf %99, %104 : vector<8x8xf32>
      %c0_76 = arith.constant 0 : index
      %c8_77 = arith.constant 8 : index
      %c0_78 = arith.constant 0 : index
      %106 = vector.load %arg8[%c0_76, %c8_77, %c0_78] : memref<8x16x16xf32, #tpu.memory_space<vmem>>, vector<1x8x8xf32>
      %107 = vector.shape_cast %106 : vector<1x8x8xf32> to vector<8x8xf32>
      %108 = vector.extract_strided_slice %94 {offsets = [0, 2], sizes = [1, 1], strides = [1, 1]} : vector<1x33xf32> to vector<1x1xf32>
      %109 = vector.broadcast %108 : vector<1x1xf32> to vector<8x8xf32>
      %110 = arith.mulf %109, %107 : vector<8x8xf32>
      %111 = arith.addf %105, %110 : vector<8x8xf32>
      %c0_79 = arith.constant 0 : index
      %c8_80 = arith.constant 8 : index
      %c8_81 = arith.constant 8 : index
      %112 = vector.load %arg8[%c0_79, %c8_80, %c8_81] : memref<8x16x16xf32, #tpu.memory_space<vmem>>, vector<1x8x8xf32>
      %113 = vector.shape_cast %112 : vector<1x8x8xf32> to vector<8x8xf32>
      %114 = vector.extract_strided_slice %94 {offsets = [0, 3], sizes = [1, 1], strides = [1, 1]} : vector<1x33xf32> to vector<1x1xf32>
      %115 = vector.broadcast %114 : vector<1x1xf32> to vector<8x8xf32>
      %116 = arith.mulf %115, %113 : vector<8x8xf32>
      %117 = arith.addf %111, %116 : vector<8x8xf32>
      %c1_82 = arith.constant 1 : index
      %c0_83 = arith.constant 0 : index
      %c0_84 = arith.constant 0 : index
      %118 = vector.load %arg8[%c1_82, %c0_83, %c0_84] : memref<8x16x16xf32, #tpu.memory_space<vmem>>, vector<1x8x8xf32>
      %119 = vector.shape_cast %118 : vector<1x8x8xf32> to vector<8x8xf32>
      %120 = vector.extract_strided_slice %94 {offsets = [0, 4], sizes = [1, 1], strides = [1, 1]} : vector<1x33xf32> to vector<1x1xf32>
      %121 = vector.broadcast %120 : vector<1x1xf32> to vector<8x8xf32>
      %122 = arith.mulf %121, %119 : vector<8x8xf32>
      %123 = arith.addf %117, %122 : vector<8x8xf32>
      %c1_85 = arith.constant 1 : index
      %c0_86 = arith.constant 0 : index
      %c8_87 = arith.constant 8 : index
      %124 = vector.load %arg8[%c1_85, %c0_86, %c8_87] : memref<8x16x16xf32, #tpu.memory_space<vmem>>, vector<1x8x8xf32>
      %125 = vector.shape_cast %124 : vector<1x8x8xf32> to vector<8x8xf32>
      %126 = vector.extract_strided_slice %94 {offsets = [0, 5], sizes = [1, 1], strides = [1, 1]} : vector<1x33xf32> to vector<1x1xf32>
      %127 = vector.broadcast %126 : vector<1x1xf32> to vector<8x8xf32>
      %128 = arith.mulf %127, %125 : vector<8x8xf32>
      %129 = arith.addf %123, %128 : vector<8x8xf32>
      %c1_88 = arith.constant 1 : index
      %c8_89 = arith.constant 8 : index
      %c0_90 = arith.constant 0 : index
      %130 = vector.load %arg8[%c1_88, %c8_89, %c0_90] : memref<8x16x16xf32, #tpu.memory_space<vmem>>, vector<1x8x8xf32>
      %131 = vector.shape_cast %130 : vector<1x8x8xf32> to vector<8x8xf32>
      %132 = vector.extract_strided_slice %94 {offsets = [0, 6], sizes = [1, 1], strides = [1, 1]} : vector<1x33xf32> to vector<1x1xf32>
      %133 = vector.broadcast %132 : vector<1x1xf32> to vector<8x8xf32>
      %134 = arith.mulf %133, %131 : vector<8x8xf32>
      %135 = arith.addf %129, %134 : vector<8x8xf32>
      %c1_91 = arith.constant 1 : index
      %c8_92 = arith.constant 8 : index
      %c8_93 = arith.constant 8 : index
      %136 = vector.load %arg8[%c1_91, %c8_92, %c8_93] : memref<8x16x16xf32, #tpu.memory_space<vmem>>, vector<1x8x8xf32>
      %137 = vector.shape_cast %136 : vector<1x8x8xf32> to vector<8x8xf32>
      %138 = vector.extract_strided_slice %94 {offsets = [0, 7], sizes = [1, 1], strides = [1, 1]} : vector<1x33xf32> to vector<1x1xf32>
      %139 = vector.broadcast %138 : vector<1x1xf32> to vector<8x8xf32>
      %140 = arith.mulf %139, %137 : vector<8x8xf32>
      %141 = arith.addf %135, %140 : vector<8x8xf32>
      %c2_94 = arith.constant 2 : index
      %c0_95 = arith.constant 0 : index
      %c0_96 = arith.constant 0 : index
      %142 = vector.load %arg8[%c2_94, %c0_95, %c0_96] : memref<8x16x16xf32, #tpu.memory_space<vmem>>, vector<1x8x8xf32>
      %143 = vector.shape_cast %142 : vector<1x8x8xf32> to vector<8x8xf32>
      %144 = vector.extract_strided_slice %94 {offsets = [0, 8], sizes = [1, 1], strides = [1, 1]} : vector<1x33xf32> to vector<1x1xf32>
      %145 = vector.broadcast %144 : vector<1x1xf32> to vector<8x8xf32>
      %146 = arith.mulf %145, %143 : vector<8x8xf32>
      %147 = arith.addf %141, %146 : vector<8x8xf32>
      %c2_97 = arith.constant 2 : index
      %c0_98 = arith.constant 0 : index
      %c8_99 = arith.constant 8 : index
      %148 = vector.load %arg8[%c2_97, %c0_98, %c8_99] : memref<8x16x16xf32, #tpu.memory_space<vmem>>, vector<1x8x8xf32>
      %149 = vector.shape_cast %148 : vector<1x8x8xf32> to vector<8x8xf32>
      %150 = vector.extract_strided_slice %94 {offsets = [0, 9], sizes = [1, 1], strides = [1, 1]} : vector<1x33xf32> to vector<1x1xf32>
      %151 = vector.broadcast %150 : vector<1x1xf32> to vector<8x8xf32>
      %152 = arith.mulf %151, %149 : vector<8x8xf32>
      %153 = arith.addf %147, %152 : vector<8x8xf32>
      %c2_100 = arith.constant 2 : index
      %c8_101 = arith.constant 8 : index
      %c0_102 = arith.constant 0 : index
      %154 = vector.load %arg8[%c2_100, %c8_101, %c0_102] : memref<8x16x16xf32, #tpu.memory_space<vmem>>, vector<1x8x8xf32>
      %155 = vector.shape_cast %154 : vector<1x8x8xf32> to vector<8x8xf32>
      %156 = vector.extract_strided_slice %94 {offsets = [0, 10], sizes = [1, 1], strides = [1, 1]} : vector<1x33xf32> to vector<1x1xf32>
      %157 = vector.broadcast %156 : vector<1x1xf32> to vector<8x8xf32>
      %158 = arith.mulf %157, %155 : vector<8x8xf32>
      %159 = arith.addf %153, %158 : vector<8x8xf32>
      %c2_103 = arith.constant 2 : index
      %c8_104 = arith.constant 8 : index
      %c8_105 = arith.constant 8 : index
      %160 = vector.load %arg8[%c2_103, %c8_104, %c8_105] : memref<8x16x16xf32, #tpu.memory_space<vmem>>, vector<1x8x8xf32>
      %161 = vector.shape_cast %160 : vector<1x8x8xf32> to vector<8x8xf32>
      %162 = vector.extract_strided_slice %94 {offsets = [0, 11], sizes = [1, 1], strides = [1, 1]} : vector<1x33xf32> to vector<1x1xf32>
      %163 = vector.broadcast %162 : vector<1x1xf32> to vector<8x8xf32>
      %164 = arith.mulf %163, %161 : vector<8x8xf32>
      %165 = arith.addf %159, %164 : vector<8x8xf32>
      %c3_106 = arith.constant 3 : index
      %c0_107 = arith.constant 0 : index
      %c0_108 = arith.constant 0 : index
      %166 = vector.load %arg8[%c3_106, %c0_107, %c0_108] : memref<8x16x16xf32, #tpu.memory_space<vmem>>, vector<1x8x8xf32>
      %167 = vector.shape_cast %166 : vector<1x8x8xf32> to vector<8x8xf32>
      %168 = vector.extract_strided_slice %94 {offsets = [0, 12], sizes = [1, 1], strides = [1, 1]} : vector<1x33xf32> to vector<1x1xf32>
      %169 = vector.broadcast %168 : vector<1x1xf32> to vector<8x8xf32>
      %170 = arith.mulf %169, %167 : vector<8x8xf32>
      %171 = arith.addf %165, %170 : vector<8x8xf32>
      %c3_109 = arith.constant 3 : index
      %c0_110 = arith.constant 0 : index
      %c8_111 = arith.constant 8 : index
      %172 = vector.load %arg8[%c3_109, %c0_110, %c8_111] : memref<8x16x16xf32, #tpu.memory_space<vmem>>, vector<1x8x8xf32>
      %173 = vector.shape_cast %172 : vector<1x8x8xf32> to vector<8x8xf32>
      %174 = vector.extract_strided_slice %94 {offsets = [0, 13], sizes = [1, 1], strides = [1, 1]} : vector<1x33xf32> to vector<1x1xf32>
      %175 = vector.broadcast %174 : vector<1x1xf32> to vector<8x8xf32>
      %176 = arith.mulf %175, %173 : vector<8x8xf32>
      %177 = arith.addf %171, %176 : vector<8x8xf32>
      %c3_112 = arith.constant 3 : index
      %c8_113 = arith.constant 8 : index
      %c0_114 = arith.constant 0 : index
      %178 = vector.load %arg8[%c3_112, %c8_113, %c0_114] : memref<8x16x16xf32, #tpu.memory_space<vmem>>, vector<1x8x8xf32>
      %179 = vector.shape_cast %178 : vector<1x8x8xf32> to vector<8x8xf32>
      %180 = vector.extract_strided_slice %94 {offsets = [0, 14], sizes = [1, 1], strides = [1, 1]} : vector<1x33xf32> to vector<1x1xf32>
      %181 = vector.broadcast %180 : vector<1x1xf32> to vector<8x8xf32>
      %182 = arith.mulf %181, %179 : vector<8x8xf32>
      %183 = arith.addf %177, %182 : vector<8x8xf32>
      %c3_115 = arith.constant 3 : index
      %c8_116 = arith.constant 8 : index
      %c8_117 = arith.constant 8 : index
      %184 = vector.load %arg8[%c3_115, %c8_116, %c8_117] : memref<8x16x16xf32, #tpu.memory_space<vmem>>, vector<1x8x8xf32>
      %185 = vector.shape_cast %184 : vector<1x8x8xf32> to vector<8x8xf32>
      %186 = vector.extract_strided_slice %94 {offsets = [0, 15], sizes = [1, 1], strides = [1, 1]} : vector<1x33xf32> to vector<1x1xf32>
      %187 = vector.broadcast %186 : vector<1x1xf32> to vector<8x8xf32>
      %188 = arith.mulf %187, %185 : vector<8x8xf32>
      %189 = arith.addf %183, %188 : vector<8x8xf32>
      %c4_118 = arith.constant 4 : index
      %c0_119 = arith.constant 0 : index
      %c0_120 = arith.constant 0 : index
      %190 = vector.load %arg8[%c4_118, %c0_119, %c0_120] : memref<8x16x16xf32, #tpu.memory_space<vmem>>, vector<1x8x8xf32>
      %191 = vector.shape_cast %190 : vector<1x8x8xf32> to vector<8x8xf32>
      %192 = vector.extract_strided_slice %94 {offsets = [0, 16], sizes = [1, 1], strides = [1, 1]} : vector<1x33xf32> to vector<1x1xf32>
      %193 = vector.broadcast %192 : vector<1x1xf32> to vector<8x8xf32>
      %194 = arith.mulf %193, %191 : vector<8x8xf32>
      %195 = arith.addf %189, %194 : vector<8x8xf32>
      %c4_121 = arith.constant 4 : index
      %c0_122 = arith.constant 0 : index
      %c8_123 = arith.constant 8 : index
      %196 = vector.load %arg8[%c4_121, %c0_122, %c8_123] : memref<8x16x16xf32, #tpu.memory_space<vmem>>, vector<1x8x8xf32>
      %197 = vector.shape_cast %196 : vector<1x8x8xf32> to vector<8x8xf32>
      %198 = vector.extract_strided_slice %94 {offsets = [0, 17], sizes = [1, 1], strides = [1, 1]} : vector<1x33xf32> to vector<1x1xf32>
      %199 = vector.broadcast %198 : vector<1x1xf32> to vector<8x8xf32>
      %200 = arith.mulf %199, %197 : vector<8x8xf32>
      %201 = arith.addf %195, %200 : vector<8x8xf32>
      %c4_124 = arith.constant 4 : index
      %c8_125 = arith.constant 8 : index
      %c0_126 = arith.constant 0 : index
      %202 = vector.load %arg8[%c4_124, %c8_125, %c0_126] : memref<8x16x16xf32, #tpu.memory_space<vmem>>, vector<1x8x8xf32>
      %203 = vector.shape_cast %202 : vector<1x8x8xf32> to vector<8x8xf32>
      %204 = vector.extract_strided_slice %94 {offsets = [0, 18], sizes = [1, 1], strides = [1, 1]} : vector<1x33xf32> to vector<1x1xf32>
      %205 = vector.broadcast %204 : vector<1x1xf32> to vector<8x8xf32>
      %206 = arith.mulf %205, %203 : vector<8x8xf32>
      %207 = arith.addf %201, %206 : vector<8x8xf32>
      %c4_127 = arith.constant 4 : index
      %c8_128 = arith.constant 8 : index
      %c8_129 = arith.constant 8 : index
      %208 = vector.load %arg8[%c4_127, %c8_128, %c8_129] : memref<8x16x16xf32, #tpu.memory_space<vmem>>, vector<1x8x8xf32>
      %209 = vector.shape_cast %208 : vector<1x8x8xf32> to vector<8x8xf32>
      %210 = vector.extract_strided_slice %94 {offsets = [0, 19], sizes = [1, 1], strides = [1, 1]} : vector<1x33xf32> to vector<1x1xf32>
      %211 = vector.broadcast %210 : vector<1x1xf32> to vector<8x8xf32>
      %212 = arith.mulf %211, %209 : vector<8x8xf32>
      %213 = arith.addf %207, %212 : vector<8x8xf32>
      %c5_130 = arith.constant 5 : index
      %c0_131 = arith.constant 0 : index
      %c0_132 = arith.constant 0 : index
      %214 = vector.load %arg8[%c5_130, %c0_131, %c0_132] : memref<8x16x16xf32, #tpu.memory_space<vmem>>, vector<1x8x8xf32>
      %215 = vector.shape_cast %214 : vector<1x8x8xf32> to vector<8x8xf32>
      %216 = vector.extract_strided_slice %94 {offsets = [0, 20], sizes = [1, 1], strides = [1, 1]} : vector<1x33xf32> to vector<1x1xf32>
      %217 = vector.broadcast %216 : vector<1x1xf32> to vector<8x8xf32>
      %218 = arith.mulf %217, %215 : vector<8x8xf32>
      %219 = arith.addf %213, %218 : vector<8x8xf32>
      %c5_133 = arith.constant 5 : index
      %c0_134 = arith.constant 0 : index
      %c8_135 = arith.constant 8 : index
      %220 = vector.load %arg8[%c5_133, %c0_134, %c8_135] : memref<8x16x16xf32, #tpu.memory_space<vmem>>, vector<1x8x8xf32>
      %221 = vector.shape_cast %220 : vector<1x8x8xf32> to vector<8x8xf32>
      %222 = vector.extract_strided_slice %94 {offsets = [0, 21], sizes = [1, 1], strides = [1, 1]} : vector<1x33xf32> to vector<1x1xf32>
      %223 = vector.broadcast %222 : vector<1x1xf32> to vector<8x8xf32>
      %224 = arith.mulf %223, %221 : vector<8x8xf32>
      %225 = arith.addf %219, %224 : vector<8x8xf32>
      %c5_136 = arith.constant 5 : index
      %c8_137 = arith.constant 8 : index
      %c0_138 = arith.constant 0 : index
      %226 = vector.load %arg8[%c5_136, %c8_137, %c0_138] : memref<8x16x16xf32, #tpu.memory_space<vmem>>, vector<1x8x8xf32>
      %227 = vector.shape_cast %226 : vector<1x8x8xf32> to vector<8x8xf32>
      %228 = vector.extract_strided_slice %94 {offsets = [0, 22], sizes = [1, 1], strides = [1, 1]} : vector<1x33xf32> to vector<1x1xf32>
      %229 = vector.broadcast %228 : vector<1x1xf32> to vector<8x8xf32>
      %230 = arith.mulf %229, %227 : vector<8x8xf32>
      %231 = arith.addf %225, %230 : vector<8x8xf32>
      %c5_139 = arith.constant 5 : index
      %c8_140 = arith.constant 8 : index
      %c8_141 = arith.constant 8 : index
      %232 = vector.load %arg8[%c5_139, %c8_140, %c8_141] : memref<8x16x16xf32, #tpu.memory_space<vmem>>, vector<1x8x8xf32>
      %233 = vector.shape_cast %232 : vector<1x8x8xf32> to vector<8x8xf32>
      %234 = vector.extract_strided_slice %94 {offsets = [0, 23], sizes = [1, 1], strides = [1, 1]} : vector<1x33xf32> to vector<1x1xf32>
      %235 = vector.broadcast %234 : vector<1x1xf32> to vector<8x8xf32>
      %236 = arith.mulf %235, %233 : vector<8x8xf32>
      %237 = arith.addf %231, %236 : vector<8x8xf32>
      %c6_142 = arith.constant 6 : index
      %c0_143 = arith.constant 0 : index
      %c0_144 = arith.constant 0 : index
      %238 = vector.load %arg8[%c6_142, %c0_143, %c0_144] : memref<8x16x16xf32, #tpu.memory_space<vmem>>, vector<1x8x8xf32>
      %239 = vector.shape_cast %238 : vector<1x8x8xf32> to vector<8x8xf32>
      %240 = vector.extract_strided_slice %94 {offsets = [0, 24], sizes = [1, 1], strides = [1, 1]} : vector<1x33xf32> to vector<1x1xf32>
      %241 = vector.broadcast %240 : vector<1x1xf32> to vector<8x8xf32>
      %242 = arith.mulf %241, %239 : vector<8x8xf32>
      %243 = arith.addf %237, %242 : vector<8x8xf32>
      %c6_145 = arith.constant 6 : index
      %c0_146 = arith.constant 0 : index
      %c8_147 = arith.constant 8 : index
      %244 = vector.load %arg8[%c6_145, %c0_146, %c8_147] : memref<8x16x16xf32, #tpu.memory_space<vmem>>, vector<1x8x8xf32>
      %245 = vector.shape_cast %244 : vector<1x8x8xf32> to vector<8x8xf32>
      %246 = vector.extract_strided_slice %94 {offsets = [0, 25], sizes = [1, 1], strides = [1, 1]} : vector<1x33xf32> to vector<1x1xf32>
      %247 = vector.broadcast %246 : vector<1x1xf32> to vector<8x8xf32>
      %248 = arith.mulf %247, %245 : vector<8x8xf32>
      %249 = arith.addf %243, %248 : vector<8x8xf32>
      %c6_148 = arith.constant 6 : index
      %c8_149 = arith.constant 8 : index
      %c0_150 = arith.constant 0 : index
      %250 = vector.load %arg8[%c6_148, %c8_149, %c0_150] : memref<8x16x16xf32, #tpu.memory_space<vmem>>, vector<1x8x8xf32>
      %251 = vector.shape_cast %250 : vector<1x8x8xf32> to vector<8x8xf32>
      %252 = vector.extract_strided_slice %94 {offsets = [0, 26], sizes = [1, 1], strides = [1, 1]} : vector<1x33xf32> to vector<1x1xf32>
      %253 = vector.broadcast %252 : vector<1x1xf32> to vector<8x8xf32>
      %254 = arith.mulf %253, %251 : vector<8x8xf32>
      %255 = arith.addf %249, %254 : vector<8x8xf32>
      %c6_151 = arith.constant 6 : index
      %c8_152 = arith.constant 8 : index
      %c8_153 = arith.constant 8 : index
      %256 = vector.load %arg8[%c6_151, %c8_152, %c8_153] : memref<8x16x16xf32, #tpu.memory_space<vmem>>, vector<1x8x8xf32>
      %257 = vector.shape_cast %256 : vector<1x8x8xf32> to vector<8x8xf32>
      %258 = vector.extract_strided_slice %94 {offsets = [0, 27], sizes = [1, 1], strides = [1, 1]} : vector<1x33xf32> to vector<1x1xf32>
      %259 = vector.broadcast %258 : vector<1x1xf32> to vector<8x8xf32>
      %260 = arith.mulf %259, %257 : vector<8x8xf32>
      %261 = arith.addf %255, %260 : vector<8x8xf32>
      %c7_154 = arith.constant 7 : index
      %c0_155 = arith.constant 0 : index
      %c0_156 = arith.constant 0 : index
      %262 = vector.load %arg8[%c7_154, %c0_155, %c0_156] : memref<8x16x16xf32, #tpu.memory_space<vmem>>, vector<1x8x8xf32>
      %263 = vector.shape_cast %262 : vector<1x8x8xf32> to vector<8x8xf32>
      %264 = vector.extract_strided_slice %94 {offsets = [0, 28], sizes = [1, 1], strides = [1, 1]} : vector<1x33xf32> to vector<1x1xf32>
      %265 = vector.broadcast %264 : vector<1x1xf32> to vector<8x8xf32>
      %266 = arith.mulf %265, %263 : vector<8x8xf32>
      %267 = arith.addf %261, %266 : vector<8x8xf32>
      %c7_157 = arith.constant 7 : index
      %c0_158 = arith.constant 0 : index
      %c8_159 = arith.constant 8 : index
      %268 = vector.load %arg8[%c7_157, %c0_158, %c8_159] : memref<8x16x16xf32, #tpu.memory_space<vmem>>, vector<1x8x8xf32>
      %269 = vector.shape_cast %268 : vector<1x8x8xf32> to vector<8x8xf32>
      %270 = vector.extract_strided_slice %94 {offsets = [0, 29], sizes = [1, 1], strides = [1, 1]} : vector<1x33xf32> to vector<1x1xf32>
      %271 = vector.broadcast %270 : vector<1x1xf32> to vector<8x8xf32>
      %272 = arith.mulf %271, %269 : vector<8x8xf32>
      %273 = arith.addf %267, %272 : vector<8x8xf32>
      %c7_160 = arith.constant 7 : index
      %c8_161 = arith.constant 8 : index
      %c0_162 = arith.constant 0 : index
      %274 = vector.load %arg8[%c7_160, %c8_161, %c0_162] : memref<8x16x16xf32, #tpu.memory_space<vmem>>, vector<1x8x8xf32>
      %275 = vector.shape_cast %274 : vector<1x8x8xf32> to vector<8x8xf32>
      %276 = vector.extract_strided_slice %94 {offsets = [0, 30], sizes = [1, 1], strides = [1, 1]} : vector<1x33xf32> to vector<1x1xf32>
      %277 = vector.broadcast %276 : vector<1x1xf32> to vector<8x8xf32>
      %278 = arith.mulf %277, %275 : vector<8x8xf32>
      %279 = arith.addf %273, %278 : vector<8x8xf32>
      %c7_163 = arith.constant 7 : index
      %c8_164 = arith.constant 8 : index
      %c8_165 = arith.constant 8 : index
      %280 = vector.load %arg8[%c7_163, %c8_164, %c8_165] : memref<8x16x16xf32, #tpu.memory_space<vmem>>, vector<1x8x8xf32>
      %281 = vector.shape_cast %280 : vector<1x8x8xf32> to vector<8x8xf32>
      %282 = vector.extract_strided_slice %94 {offsets = [0, 31], sizes = [1, 1], strides = [1, 1]} : vector<1x33xf32> to vector<1x1xf32>
      %283 = vector.broadcast %282 : vector<1x1xf32> to vector<8x8xf32>
      %284 = arith.mulf %283, %281 : vector<8x8xf32>
      %285 = arith.addf %279, %284 : vector<8x8xf32>
      %286 = vector.extract_strided_slice %94 {offsets = [0, 32], sizes = [1, 1], strides = [1, 1]} : vector<1x33xf32> to vector<1x1xf32>
      %287 = vector.broadcast %286 : vector<1x1xf32> to vector<8x8xf32>
      %288 = arith.addf %285, %287 : vector<8x8xf32>
      %cst_166 = arith.constant 0.000000e+00 : f32
      %289 = vector.broadcast %cst_166 : f32 to vector<8x8xf32>
      %290 = arith.maximumf %288, %289 : vector<8x8xf32>
      %291 = arith.index_cast %91 : i32 to index
      %c0_167 = arith.constant 0 : index
      %c0_168 = arith.constant 0 : index
      %292 = vector.load %arg9[%291, %c0_167, %c0_168] : memref<8x8x8xf32, #tpu.memory_space<vmem>>, vector<1x8x8xf32>
      %293 = vector.shape_cast %292 : vector<1x8x8xf32> to vector<8x8xf32>
      %294 = vector.shape_cast %290 : vector<8x8xf32> to vector<1x8x8xf32>
      tpu.vector_store %arg9[%291, %c0_167, %c0_168], %294 {strides = array<i32>} : memref<8x8x8xf32, #tpu.memory_space<vmem>>, vector<1x8x8xf32>,
    }
    %c8_i32_63 = arith.constant 8 : i32
    %c0_i32_64 = arith.constant 0 : i32
    %c8_i32_65 = arith.constant 8 : i32
    %89 = arith.addi %c0_i32_64, %c8_i32_65 : i32
    %c1_i32_66 = arith.constant 1 : i32
    scf.for %arg10 = %c0_i32_64 to %89 step %c1_i32_66  : i32 {
      %c1_i32_68 = arith.constant 1 : i32
      %90 = arith.muli %arg10, %c1_i32_68 : i32
      %c0_i32_69 = arith.constant 0 : i32
      %91 = arith.addi %c0_i32_69, %90 : i32
      %c32_i32 = arith.constant 32 : i32
      %92 = arith.addi %c32_i32, %91 : i32
      %93 = arith.index_cast %92 : i32 to index
      %c0_70 = arith.constant 0 : index
      %94 = vector.load %arg4[%93, %c0_70] : memref<40x33xf32, #tpu.memory_space<vmem>>, vector<1x33xf32>
      %c0_71 = arith.constant 0 : index
      %c0_72 = arith.constant 0 : index
      %c0_73 = arith.constant 0 : index
      %95 = vector.load %arg9[%c0_71, %c0_72, %c0_73] : memref<8x8x8xf32, #tpu.memory_space<vmem>>, vector<1x4x4xf32>
      %96 = vector.shape_cast %95 : vector<1x4x4xf32> to vector<4x4xf32>
      %97 = vector.extract_strided_slice %94 {offsets = [0, 0], sizes = [1, 1], strides = [1, 1]} : vector<1x33xf32> to vector<1x1xf32>
      %98 = vector.broadcast %97 : vector<1x1xf32> to vector<4x4xf32>
      %99 = arith.mulf %98, %96 : vector<4x4xf32>
      %c0_74 = arith.constant 0 : index
      %c0_75 = arith.constant 0 : index
      %c4_76 = arith.constant 4 : index
      %100 = vector.load %arg9[%c0_74, %c0_75, %c4_76] : memref<8x8x8xf32, #tpu.memory_space<vmem>>, vector<1x4x4xf32>
      %101 = vector.shape_cast %100 : vector<1x4x4xf32> to vector<4x4xf32>
      %102 = vector.extract_strided_slice %94 {offsets = [0, 1], sizes = [1, 1], strides = [1, 1]} : vector<1x33xf32> to vector<1x1xf32>
      %103 = vector.broadcast %102 : vector<1x1xf32> to vector<4x4xf32>
      %104 = arith.mulf %103, %101 : vector<4x4xf32>
      %105 = arith.addf %99, %104 : vector<4x4xf32>
      %c0_77 = arith.constant 0 : index
      %c4_78 = arith.constant 4 : index
      %c0_79 = arith.constant 0 : index
      %106 = vector.load %arg9[%c0_77, %c4_78, %c0_79] : memref<8x8x8xf32, #tpu.memory_space<vmem>>, vector<1x4x4xf32>
      %107 = vector.shape_cast %106 : vector<1x4x4xf32> to vector<4x4xf32>
      %108 = vector.extract_strided_slice %94 {offsets = [0, 2], sizes = [1, 1], strides = [1, 1]} : vector<1x33xf32> to vector<1x1xf32>
      %109 = vector.broadcast %108 : vector<1x1xf32> to vector<4x4xf32>
      %110 = arith.mulf %109, %107 : vector<4x4xf32>
      %111 = arith.addf %105, %110 : vector<4x4xf32>
      %c0_80 = arith.constant 0 : index
      %c4_81 = arith.constant 4 : index
      %c4_82 = arith.constant 4 : index
      %112 = vector.load %arg9[%c0_80, %c4_81, %c4_82] : memref<8x8x8xf32, #tpu.memory_space<vmem>>, vector<1x4x4xf32>
      %113 = vector.shape_cast %112 : vector<1x4x4xf32> to vector<4x4xf32>
      %114 = vector.extract_strided_slice %94 {offsets = [0, 3], sizes = [1, 1], strides = [1, 1]} : vector<1x33xf32> to vector<1x1xf32>
      %115 = vector.broadcast %114 : vector<1x1xf32> to vector<4x4xf32>
      %116 = arith.mulf %115, %113 : vector<4x4xf32>
      %117 = arith.addf %111, %116 : vector<4x4xf32>
      %c1_83 = arith.constant 1 : index
      %c0_84 = arith.constant 0 : index
      %c0_85 = arith.constant 0 : index
      %118 = vector.load %arg9[%c1_83, %c0_84, %c0_85] : memref<8x8x8xf32, #tpu.memory_space<vmem>>, vector<1x4x4xf32>
      %119 = vector.shape_cast %118 : vector<1x4x4xf32> to vector<4x4xf32>
      %120 = vector.extract_strided_slice %94 {offsets = [0, 4], sizes = [1, 1], strides = [1, 1]} : vector<1x33xf32> to vector<1x1xf32>
      %121 = vector.broadcast %120 : vector<1x1xf32> to vector<4x4xf32>
      %122 = arith.mulf %121, %119 : vector<4x4xf32>
      %123 = arith.addf %117, %122 : vector<4x4xf32>
      %c1_86 = arith.constant 1 : index
      %c0_87 = arith.constant 0 : index
      %c4_88 = arith.constant 4 : index
      %124 = vector.load %arg9[%c1_86, %c0_87, %c4_88] : memref<8x8x8xf32, #tpu.memory_space<vmem>>, vector<1x4x4xf32>
      %125 = vector.shape_cast %124 : vector<1x4x4xf32> to vector<4x4xf32>
      %126 = vector.extract_strided_slice %94 {offsets = [0, 5], sizes = [1, 1], strides = [1, 1]} : vector<1x33xf32> to vector<1x1xf32>
      %127 = vector.broadcast %126 : vector<1x1xf32> to vector<4x4xf32>
      %128 = arith.mulf %127, %125 : vector<4x4xf32>
      %129 = arith.addf %123, %128 : vector<4x4xf32>
      %c1_89 = arith.constant 1 : index
      %c4_90 = arith.constant 4 : index
      %c0_91 = arith.constant 0 : index
      %130 = vector.load %arg9[%c1_89, %c4_90, %c0_91] : memref<8x8x8xf32, #tpu.memory_space<vmem>>, vector<1x4x4xf32>
      %131 = vector.shape_cast %130 : vector<1x4x4xf32> to vector<4x4xf32>
      %132 = vector.extract_strided_slice %94 {offsets = [0, 6], sizes = [1, 1], strides = [1, 1]} : vector<1x33xf32> to vector<1x1xf32>
      %133 = vector.broadcast %132 : vector<1x1xf32> to vector<4x4xf32>
      %134 = arith.mulf %133, %131 : vector<4x4xf32>
      %135 = arith.addf %129, %134 : vector<4x4xf32>
      %c1_92 = arith.constant 1 : index
      %c4_93 = arith.constant 4 : index
      %c4_94 = arith.constant 4 : index
      %136 = vector.load %arg9[%c1_92, %c4_93, %c4_94] : memref<8x8x8xf32, #tpu.memory_space<vmem>>, vector<1x4x4xf32>
      %137 = vector.shape_cast %136 : vector<1x4x4xf32> to vector<4x4xf32>
      %138 = vector.extract_strided_slice %94 {offsets = [0, 7], sizes = [1, 1], strides = [1, 1]} : vector<1x33xf32> to vector<1x1xf32>
      %139 = vector.broadcast %138 : vector<1x1xf32> to vector<4x4xf32>
      %140 = arith.mulf %139, %137 : vector<4x4xf32>
      %141 = arith.addf %135, %140 : vector<4x4xf32>
      %c2_95 = arith.constant 2 : index
      %c0_96 = arith.constant 0 : index
      %c0_97 = arith.constant 0 : index
      %142 = vector.load %arg9[%c2_95, %c0_96, %c0_97] : memref<8x8x8xf32, #tpu.memory_space<vmem>>, vector<1x4x4xf32>
      %143 = vector.shape_cast %142 : vector<1x4x4xf32> to vector<4x4xf32>
      %144 = vector.extract_strided_slice %94 {offsets = [0, 8], sizes = [1, 1], strides = [1, 1]} : vector<1x33xf32> to vector<1x1xf32>
      %145 = vector.broadcast %144 : vector<1x1xf32> to vector<4x4xf32>
      %146 = arith.mulf %145, %143 : vector<4x4xf32>
      %147 = arith.addf %141, %146 : vector<4x4xf32>
      %c2_98 = arith.constant 2 : index
      %c0_99 = arith.constant 0 : index
      %c4_100 = arith.constant 4 : index
      %148 = vector.load %arg9[%c2_98, %c0_99, %c4_100] : memref<8x8x8xf32, #tpu.memory_space<vmem>>, vector<1x4x4xf32>
      %149 = vector.shape_cast %148 : vector<1x4x4xf32> to vector<4x4xf32>
      %150 = vector.extract_strided_slice %94 {offsets = [0, 9], sizes = [1, 1], strides = [1, 1]} : vector<1x33xf32> to vector<1x1xf32>
      %151 = vector.broadcast %150 : vector<1x1xf32> to vector<4x4xf32>
      %152 = arith.mulf %151, %149 : vector<4x4xf32>
      %153 = arith.addf %147, %152 : vector<4x4xf32>
      %c2_101 = arith.constant 2 : index
      %c4_102 = arith.constant 4 : index
      %c0_103 = arith.constant 0 : index
      %154 = vector.load %arg9[%c2_101, %c4_102, %c0_103] : memref<8x8x8xf32, #tpu.memory_space<vmem>>, vector<1x4x4xf32>
      %155 = vector.shape_cast %154 : vector<1x4x4xf32> to vector<4x4xf32>
      %156 = vector.extract_strided_slice %94 {offsets = [0, 10], sizes = [1, 1], strides = [1, 1]} : vector<1x33xf32> to vector<1x1xf32>
      %157 = vector.broadcast %156 : vector<1x1xf32> to vector<4x4xf32>
      %158 = arith.mulf %157, %155 : vector<4x4xf32>
      %159 = arith.addf %153, %158 : vector<4x4xf32>
      %c2_104 = arith.constant 2 : index
      %c4_105 = arith.constant 4 : index
      %c4_106 = arith.constant 4 : index
      %160 = vector.load %arg9[%c2_104, %c4_105, %c4_106] : memref<8x8x8xf32, #tpu.memory_space<vmem>>, vector<1x4x4xf32>
      %161 = vector.shape_cast %160 : vector<1x4x4xf32> to vector<4x4xf32>
      %162 = vector.extract_strided_slice %94 {offsets = [0, 11], sizes = [1, 1], strides = [1, 1]} : vector<1x33xf32> to vector<1x1xf32>
      %163 = vector.broadcast %162 : vector<1x1xf32> to vector<4x4xf32>
      %164 = arith.mulf %163, %161 : vector<4x4xf32>
      %165 = arith.addf %159, %164 : vector<4x4xf32>
      %c3_107 = arith.constant 3 : index
      %c0_108 = arith.constant 0 : index
      %c0_109 = arith.constant 0 : index
      %166 = vector.load %arg9[%c3_107, %c0_108, %c0_109] : memref<8x8x8xf32, #tpu.memory_space<vmem>>, vector<1x4x4xf32>
      %167 = vector.shape_cast %166 : vector<1x4x4xf32> to vector<4x4xf32>
      %168 = vector.extract_strided_slice %94 {offsets = [0, 12], sizes = [1, 1], strides = [1, 1]} : vector<1x33xf32> to vector<1x1xf32>
      %169 = vector.broadcast %168 : vector<1x1xf32> to vector<4x4xf32>
      %170 = arith.mulf %169, %167 : vector<4x4xf32>
      %171 = arith.addf %165, %170 : vector<4x4xf32>
      %c3_110 = arith.constant 3 : index
      %c0_111 = arith.constant 0 : index
      %c4_112 = arith.constant 4 : index
      %172 = vector.load %arg9[%c3_110, %c0_111, %c4_112] : memref<8x8x8xf32, #tpu.memory_space<vmem>>, vector<1x4x4xf32>
      %173 = vector.shape_cast %172 : vector<1x4x4xf32> to vector<4x4xf32>
      %174 = vector.extract_strided_slice %94 {offsets = [0, 13], sizes = [1, 1], strides = [1, 1]} : vector<1x33xf32> to vector<1x1xf32>
      %175 = vector.broadcast %174 : vector<1x1xf32> to vector<4x4xf32>
      %176 = arith.mulf %175, %173 : vector<4x4xf32>
      %177 = arith.addf %171, %176 : vector<4x4xf32>
      %c3_113 = arith.constant 3 : index
      %c4_114 = arith.constant 4 : index
      %c0_115 = arith.constant 0 : index
      %178 = vector.load %arg9[%c3_113, %c4_114, %c0_115] : memref<8x8x8xf32, #tpu.memory_space<vmem>>, vector<1x4x4xf32>
      %179 = vector.shape_cast %178 : vector<1x4x4xf32> to vector<4x4xf32>
      %180 = vector.extract_strided_slice %94 {offsets = [0, 14], sizes = [1, 1], strides = [1, 1]} : vector<1x33xf32> to vector<1x1xf32>
      %181 = vector.broadcast %180 : vector<1x1xf32> to vector<4x4xf32>
      %182 = arith.mulf %181, %179 : vector<4x4xf32>
      %183 = arith.addf %177, %182 : vector<4x4xf32>
      %c3_116 = arith.constant 3 : index
      %c4_117 = arith.constant 4 : index
      %c4_118 = arith.constant 4 : index
      %184 = vector.load %arg9[%c3_116, %c4_117, %c4_118] : memref<8x8x8xf32, #tpu.memory_space<vmem>>, vector<1x4x4xf32>
      %185 = vector.shape_cast %184 : vector<1x4x4xf32> to vector<4x4xf32>
      %186 = vector.extract_strided_slice %94 {offsets = [0, 15], sizes = [1, 1], strides = [1, 1]} : vector<1x33xf32> to vector<1x1xf32>
      %187 = vector.broadcast %186 : vector<1x1xf32> to vector<4x4xf32>
      %188 = arith.mulf %187, %185 : vector<4x4xf32>
      %189 = arith.addf %183, %188 : vector<4x4xf32>
      %c4_119 = arith.constant 4 : index
      %c0_120 = arith.constant 0 : index
      %c0_121 = arith.constant 0 : index
      %190 = vector.load %arg9[%c4_119, %c0_120, %c0_121] : memref<8x8x8xf32, #tpu.memory_space<vmem>>, vector<1x4x4xf32>
      %191 = vector.shape_cast %190 : vector<1x4x4xf32> to vector<4x4xf32>
      %192 = vector.extract_strided_slice %94 {offsets = [0, 16], sizes = [1, 1], strides = [1, 1]} : vector<1x33xf32> to vector<1x1xf32>
      %193 = vector.broadcast %192 : vector<1x1xf32> to vector<4x4xf32>
      %194 = arith.mulf %193, %191 : vector<4x4xf32>
      %195 = arith.addf %189, %194 : vector<4x4xf32>
      %c4_122 = arith.constant 4 : index
      %c0_123 = arith.constant 0 : index
      %c4_124 = arith.constant 4 : index
      %196 = vector.load %arg9[%c4_122, %c0_123, %c4_124] : memref<8x8x8xf32, #tpu.memory_space<vmem>>, vector<1x4x4xf32>
      %197 = vector.shape_cast %196 : vector<1x4x4xf32> to vector<4x4xf32>
      %198 = vector.extract_strided_slice %94 {offsets = [0, 17], sizes = [1, 1], strides = [1, 1]} : vector<1x33xf32> to vector<1x1xf32>
      %199 = vector.broadcast %198 : vector<1x1xf32> to vector<4x4xf32>
      %200 = arith.mulf %199, %197 : vector<4x4xf32>
      %201 = arith.addf %195, %200 : vector<4x4xf32>
      %c4_125 = arith.constant 4 : index
      %c4_126 = arith.constant 4 : index
      %c0_127 = arith.constant 0 : index
      %202 = vector.load %arg9[%c4_125, %c4_126, %c0_127] : memref<8x8x8xf32, #tpu.memory_space<vmem>>, vector<1x4x4xf32>
      %203 = vector.shape_cast %202 : vector<1x4x4xf32> to vector<4x4xf32>
      %204 = vector.extract_strided_slice %94 {offsets = [0, 18], sizes = [1, 1], strides = [1, 1]} : vector<1x33xf32> to vector<1x1xf32>
      %205 = vector.broadcast %204 : vector<1x1xf32> to vector<4x4xf32>
      %206 = arith.mulf %205, %203 : vector<4x4xf32>
      %207 = arith.addf %201, %206 : vector<4x4xf32>
      %c4_128 = arith.constant 4 : index
      %c4_129 = arith.constant 4 : index
      %c4_130 = arith.constant 4 : index
      %208 = vector.load %arg9[%c4_128, %c4_129, %c4_130] : memref<8x8x8xf32, #tpu.memory_space<vmem>>, vector<1x4x4xf32>
      %209 = vector.shape_cast %208 : vector<1x4x4xf32> to vector<4x4xf32>
      %210 = vector.extract_strided_slice %94 {offsets = [0, 19], sizes = [1, 1], strides = [1, 1]} : vector<1x33xf32> to vector<1x1xf32>
      %211 = vector.broadcast %210 : vector<1x1xf32> to vector<4x4xf32>
      %212 = arith.mulf %211, %209 : vector<4x4xf32>
      %213 = arith.addf %207, %212 : vector<4x4xf32>
      %c5_131 = arith.constant 5 : index
      %c0_132 = arith.constant 0 : index
      %c0_133 = arith.constant 0 : index
      %214 = vector.load %arg9[%c5_131, %c0_132, %c0_133] : memref<8x8x8xf32, #tpu.memory_space<vmem>>, vector<1x4x4xf32>
      %215 = vector.shape_cast %214 : vector<1x4x4xf32> to vector<4x4xf32>
      %216 = vector.extract_strided_slice %94 {offsets = [0, 20], sizes = [1, 1], strides = [1, 1]} : vector<1x33xf32> to vector<1x1xf32>
      %217 = vector.broadcast %216 : vector<1x1xf32> to vector<4x4xf32>
      %218 = arith.mulf %217, %215 : vector<4x4xf32>
      %219 = arith.addf %213, %218 : vector<4x4xf32>
      %c5_134 = arith.constant 5 : index
      %c0_135 = arith.constant 0 : index
      %c4_136 = arith.constant 4 : index
      %220 = vector.load %arg9[%c5_134, %c0_135, %c4_136] : memref<8x8x8xf32, #tpu.memory_space<vmem>>, vector<1x4x4xf32>
      %221 = vector.shape_cast %220 : vector<1x4x4xf32> to vector<4x4xf32>
      %222 = vector.extract_strided_slice %94 {offsets = [0, 21], sizes = [1, 1], strides = [1, 1]} : vector<1x33xf32> to vector<1x1xf32>
      %223 = vector.broadcast %222 : vector<1x1xf32> to vector<4x4xf32>
      %224 = arith.mulf %223, %221 : vector<4x4xf32>
      %225 = arith.addf %219, %224 : vector<4x4xf32>
      %c5_137 = arith.constant 5 : index
      %c4_138 = arith.constant 4 : index
      %c0_139 = arith.constant 0 : index
      %226 = vector.load %arg9[%c5_137, %c4_138, %c0_139] : memref<8x8x8xf32, #tpu.memory_space<vmem>>, vector<1x4x4xf32>
      %227 = vector.shape_cast %226 : vector<1x4x4xf32> to vector<4x4xf32>
      %228 = vector.extract_strided_slice %94 {offsets = [0, 22], sizes = [1, 1], strides = [1, 1]} : vector<1x33xf32> to vector<1x1xf32>
      %229 = vector.broadcast %228 : vector<1x1xf32> to vector<4x4xf32>
      %230 = arith.mulf %229, %227 : vector<4x4xf32>
      %231 = arith.addf %225, %230 : vector<4x4xf32>
      %c5_140 = arith.constant 5 : index
      %c4_141 = arith.constant 4 : index
      %c4_142 = arith.constant 4 : index
      %232 = vector.load %arg9[%c5_140, %c4_141, %c4_142] : memref<8x8x8xf32, #tpu.memory_space<vmem>>, vector<1x4x4xf32>
      %233 = vector.shape_cast %232 : vector<1x4x4xf32> to vector<4x4xf32>
      %234 = vector.extract_strided_slice %94 {offsets = [0, 23], sizes = [1, 1], strides = [1, 1]} : vector<1x33xf32> to vector<1x1xf32>
      %235 = vector.broadcast %234 : vector<1x1xf32> to vector<4x4xf32>
      %236 = arith.mulf %235, %233 : vector<4x4xf32>
      %237 = arith.addf %231, %236 : vector<4x4xf32>
      %c6_143 = arith.constant 6 : index
      %c0_144 = arith.constant 0 : index
      %c0_145 = arith.constant 0 : index
      %238 = vector.load %arg9[%c6_143, %c0_144, %c0_145] : memref<8x8x8xf32, #tpu.memory_space<vmem>>, vector<1x4x4xf32>
      %239 = vector.shape_cast %238 : vector<1x4x4xf32> to vector<4x4xf32>
      %240 = vector.extract_strided_slice %94 {offsets = [0, 24], sizes = [1, 1], strides = [1, 1]} : vector<1x33xf32> to vector<1x1xf32>
      %241 = vector.broadcast %240 : vector<1x1xf32> to vector<4x4xf32>
      %242 = arith.mulf %241, %239 : vector<4x4xf32>
      %243 = arith.addf %237, %242 : vector<4x4xf32>
      %c6_146 = arith.constant 6 : index
      %c0_147 = arith.constant 0 : index
      %c4_148 = arith.constant 4 : index
      %244 = vector.load %arg9[%c6_146, %c0_147, %c4_148] : memref<8x8x8xf32, #tpu.memory_space<vmem>>, vector<1x4x4xf32>
      %245 = vector.shape_cast %244 : vector<1x4x4xf32> to vector<4x4xf32>
      %246 = vector.extract_strided_slice %94 {offsets = [0, 25], sizes = [1, 1], strides = [1, 1]} : vector<1x33xf32> to vector<1x1xf32>
      %247 = vector.broadcast %246 : vector<1x1xf32> to vector<4x4xf32>
      %248 = arith.mulf %247, %245 : vector<4x4xf32>
      %249 = arith.addf %243, %248 : vector<4x4xf32>
      %c6_149 = arith.constant 6 : index
      %c4_150 = arith.constant 4 : index
      %c0_151 = arith.constant 0 : index
      %250 = vector.load %arg9[%c6_149, %c4_150, %c0_151] : memref<8x8x8xf32, #tpu.memory_space<vmem>>, vector<1x4x4xf32>
      %251 = vector.shape_cast %250 : vector<1x4x4xf32> to vector<4x4xf32>
      %252 = vector.extract_strided_slice %94 {offsets = [0, 26], sizes = [1, 1], strides = [1, 1]} : vector<1x33xf32> to vector<1x1xf32>
      %253 = vector.broadcast %252 : vector<1x1xf32> to vector<4x4xf32>
      %254 = arith.mulf %253, %251 : vector<4x4xf32>
      %255 = arith.addf %249, %254 : vector<4x4xf32>
      %c6_152 = arith.constant 6 : index
      %c4_153 = arith.constant 4 : index
      %c4_154 = arith.constant 4 : index
      %256 = vector.load %arg9[%c6_152, %c4_153, %c4_154] : memref<8x8x8xf32, #tpu.memory_space<vmem>>, vector<1x4x4xf32>
      %257 = vector.shape_cast %256 : vector<1x4x4xf32> to vector<4x4xf32>
      %258 = vector.extract_strided_slice %94 {offsets = [0, 27], sizes = [1, 1], strides = [1, 1]} : vector<1x33xf32> to vector<1x1xf32>
      %259 = vector.broadcast %258 : vector<1x1xf32> to vector<4x4xf32>
      %260 = arith.mulf %259, %257 : vector<4x4xf32>
      %261 = arith.addf %255, %260 : vector<4x4xf32>
      %c7_155 = arith.constant 7 : index
      %c0_156 = arith.constant 0 : index
      %c0_157 = arith.constant 0 : index
      %262 = vector.load %arg9[%c7_155, %c0_156, %c0_157] : memref<8x8x8xf32, #tpu.memory_space<vmem>>, vector<1x4x4xf32>
      %263 = vector.shape_cast %262 : vector<1x4x4xf32> to vector<4x4xf32>
      %264 = vector.extract_strided_slice %94 {offsets = [0, 28], sizes = [1, 1], strides = [1, 1]} : vector<1x33xf32> to vector<1x1xf32>
      %265 = vector.broadcast %264 : vector<1x1xf32> to vector<4x4xf32>
      %266 = arith.mulf %265, %263 : vector<4x4xf32>
      %267 = arith.addf %261, %266 : vector<4x4xf32>
      %c7_158 = arith.constant 7 : index
      %c0_159 = arith.constant 0 : index
      %c4_160 = arith.constant 4 : index
      %268 = vector.load %arg9[%c7_158, %c0_159, %c4_160] : memref<8x8x8xf32, #tpu.memory_space<vmem>>, vector<1x4x4xf32>
      %269 = vector.shape_cast %268 : vector<1x4x4xf32> to vector<4x4xf32>
      %270 = vector.extract_strided_slice %94 {offsets = [0, 29], sizes = [1, 1], strides = [1, 1]} : vector<1x33xf32> to vector<1x1xf32>
      %271 = vector.broadcast %270 : vector<1x1xf32> to vector<4x4xf32>
      %272 = arith.mulf %271, %269 : vector<4x4xf32>
      %273 = arith.addf %267, %272 : vector<4x4xf32>
      %c7_161 = arith.constant 7 : index
      %c4_162 = arith.constant 4 : index
      %c0_163 = arith.constant 0 : index
      %274 = vector.load %arg9[%c7_161, %c4_162, %c0_163] : memref<8x8x8xf32, #tpu.memory_space<vmem>>, vector<1x4x4xf32>
      %275 = vector.shape_cast %274 : vector<1x4x4xf32> to vector<4x4xf32>
      %276 = vector.extract_strided_slice %94 {offsets = [0, 30], sizes = [1, 1], strides = [1, 1]} : vector<1x33xf32> to vector<1x1xf32>
      %277 = vector.broadcast %276 : vector<1x1xf32> to vector<4x4xf32>
      %278 = arith.mulf %277, %275 : vector<4x4xf32>
      %279 = arith.addf %273, %278 : vector<4x4xf32>
      %c7_164 = arith.constant 7 : index
      %c4_165 = arith.constant 4 : index
      %c4_166 = arith.constant 4 : index
      %280 = vector.load %arg9[%c7_164, %c4_165, %c4_166] : memref<8x8x8xf32, #tpu.memory_space<vmem>>, vector<1x4x4xf32>
      %281 = vector.shape_cast %280 : vector<1x4x4xf32> to vector<4x4xf32>
      %282 = vector.extract_strided_slice %94 {offsets = [0, 31], sizes = [1, 1], strides = [1, 1]} : vector<1x33xf32> to vector<1x1xf32>
      %283 = vector.broadcast %282 : vector<1x1xf32> to vector<4x4xf32>
      %284 = arith.mulf %283, %281 : vector<4x4xf32>
      %285 = arith.addf %279, %284 : vector<4x4xf32>
      %286 = vector.extract_strided_slice %94 {offsets = [0, 32], sizes = [1, 1], strides = [1, 1]} : vector<1x33xf32> to vector<1x1xf32>
      %287 = vector.broadcast %286 : vector<1x1xf32> to vector<4x4xf32>
      %288 = arith.addf %285, %287 : vector<4x4xf32>
      %cst_167 = arith.constant 0.000000e+00 : f32
      %289 = vector.broadcast %cst_167 : f32 to vector<4x4xf32>
      %290 = arith.maximumf %288, %289 : vector<4x4xf32>
      %c0_168 = arith.constant 0 : index
      %291 = arith.index_cast %91 : i32 to index
      %c0_169 = arith.constant 0 : index
      %c0_170 = arith.constant 0 : index
      %292 = vector.load %arg5[%c0_168, %291, %c0_169, %c0_170] : memref<1x8x4x4xf32, #tpu.memory_space<vmem>>, vector<1x1x4x4xf32>
      %293 = vector.shape_cast %292 : vector<1x1x4x4xf32> to vector<4x4xf32>
      %294 = vector.shape_cast %290 : vector<4x4xf32> to vector<1x1x4x4xf32>
      tpu.vector_store %arg5[%c0_168, %291, %c0_169, %c0_170], %294 {strides = array<i32>} : memref<1x8x4x4xf32, #tpu.memory_space<vmem>>, vector<1x1x4x4xf32>,
    }
    %c8_i32_67 = arith.constant 8 : i32
    return
  }
  func.func @transform_0(%arg0: i32) -> (i32, i32, i32) {
    %c0_i32 = arith.constant 0 : i32
    %c0_i32_0 = arith.constant 0 : i32
    %c0_i32_1 = arith.constant 0 : i32
    return %arg0, %c0_i32, %c0_i32_0 : i32, i32, i32
  }
  func.func @transform_1(%arg0: i32) -> (i32, i32, i32) {
    %c0_i32 = arith.constant 0 : i32
    %c0_i32_0 = arith.constant 0 : i32
    %c0_i32_1 = arith.constant 0 : i32
    return %arg0, %c0_i32, %c0_i32_0 : i32, i32, i32
  }
  func.func @transform_2(%arg0: i32) -> (i32, i32) {
    %c0_i32 = arith.constant 0 : i32
    %c0_i32_0 = arith.constant 0 : i32
    %c0_i32_1 = arith.constant 0 : i32
    return %c0_i32, %c0_i32_0 : i32, i32
  }
  func.func @transform_3(%arg0: i32) -> (i32, i32) {
    %c0_i32 = arith.constant 0 : i32
    %c0_i32_0 = arith.constant 0 : i32
    %c0_i32_1 = arith.constant 0 : i32
    return %c0_i32, %c0_i32_0 : i32, i32
  }
  func.func @transform_4(%arg0: i32) -> (i32, i32, i32, i32) {
    %c0_i32 = arith.constant 0 : i32
    %c0_i32_0 = arith.constant 0 : i32
    %c0_i32_1 = arith.constant 0 : i32
    %c0_i32_2 = arith.constant 0 : i32
    return %arg0, %c0_i32, %c0_i32_0, %c0_i32_1 : i32, i32, i32, i32
  }
}

module attributes {stable_mosaic.version = 11 : i64} {
  func.func @_head_kernel(%arg0: i32, %arg1: memref<2x128xf32, #tpu.memory_space<vmem>>, %arg2: memref<2x128xf32, #tpu.memory_space<vmem>>, %arg3: memref<128x128xf32, #tpu.memory_space<vmem>>, %arg4: memref<128x128xf32, #tpu.memory_space<vmem>>, %arg5: memref<1x128xf32, #tpu.memory_space<vmem>>, %arg6: memref<128x128xf32, #tpu.memory_space<vmem>>, %arg7: memref<1x128xf32, #tpu.memory_space<vmem>>, %arg8: memref<128x2xf32, #tpu.memory_space<vmem>>, %arg9: memref<1x2xf32, #tpu.memory_space<vmem>>, %arg10: memref<2x2xf32, #tpu.memory_space<vmem>>) attributes {dimension_semantics = [#tpu.dimension_semantics<parallel>], iteration_bounds = array<i64: 1>, scalar_prefetch = 0 : i64, scratch_operands = 0 : i64, tpu.core_type = #tpu.core_type<tc>, window_params = [{transform_indices = @transform_0, window_bounds = array<i64: 2, 128>}, {transform_indices = @transform_1, window_bounds = array<i64: 2, 128>}, {pipeline_mode = #tpu.pipeline_mode<synchronous>, transform_indices = @transform_2, window_bounds = array<i64: 128, 128>}, {pipeline_mode = #tpu.pipeline_mode<synchronous>, transform_indices = @transform_3, window_bounds = array<i64: 128, 128>}, {pipeline_mode = #tpu.pipeline_mode<synchronous>, transform_indices = @transform_4, window_bounds = array<i64: 1, 128>}, {pipeline_mode = #tpu.pipeline_mode<synchronous>, transform_indices = @transform_5, window_bounds = array<i64: 128, 128>}, {pipeline_mode = #tpu.pipeline_mode<synchronous>, transform_indices = @transform_6, window_bounds = array<i64: 1, 128>}, {pipeline_mode = #tpu.pipeline_mode<synchronous>, transform_indices = @transform_7, window_bounds = array<i64: 128, 2>}, {pipeline_mode = #tpu.pipeline_mode<synchronous>, transform_indices = @transform_8, window_bounds = array<i64: 1, 2>}, {transform_indices = @transform_9, window_bounds = array<i64: 2, 2>}]} {
    %c0 = arith.constant 0 : index
    %c0_0 = arith.constant 0 : index
    %0 = vector.load %arg1[%c0, %c0_0] : memref<2x128xf32, #tpu.memory_space<vmem>>, vector<2x128xf32>
    %c0_1 = arith.constant 0 : index
    %c0_2 = arith.constant 0 : index
    %1 = vector.load %arg3[%c0_1, %c0_2] : memref<128x128xf32, #tpu.memory_space<vmem>>, vector<128x128xf32>
    %cst = arith.constant dense<0.000000e+00> : vector<2x128xf32>
    %2 = tpu.matmul %0, %1, %cst {dimension_numbers = #tpu.dot_dimension_numbers<[1], [0], [0], [1], [0, 0, 1, 1], [], []>} : vector<2x128xf32>, vector<128x128xf32>, vector<2x128xf32> -> vector<2x128xf32>
    %c0_3 = arith.constant 0 : index
    %c0_4 = arith.constant 0 : index
    %3 = vector.load %arg2[%c0_3, %c0_4] : memref<2x128xf32, #tpu.memory_space<vmem>>, vector<2x128xf32>
    %c0_5 = arith.constant 0 : index
    %c0_6 = arith.constant 0 : index
    %4 = vector.load %arg4[%c0_5, %c0_6] : memref<128x128xf32, #tpu.memory_space<vmem>>, vector<128x128xf32>
    %cst_7 = arith.constant dense<0.000000e+00> : vector<2x128xf32>
    %5 = tpu.matmul %3, %4, %cst_7 {dimension_numbers = #tpu.dot_dimension_numbers<[1], [0], [0], [1], [0, 0, 1, 1], [], []>} : vector<2x128xf32>, vector<128x128xf32>, vector<2x128xf32> -> vector<2x128xf32>
    %6 = arith.addf %2, %5 : vector<2x128xf32>
    %c0_8 = arith.constant 0 : index
    %c0_9 = arith.constant 0 : index
    %7 = vector.load %arg5[%c0_8, %c0_9] : memref<1x128xf32, #tpu.memory_space<vmem>>, vector<1x128xf32>
    %8 = vector.broadcast %7 : vector<1x128xf32> to vector<2x128xf32>
    %9 = arith.addf %6, %8 : vector<2x128xf32>
    %cst_10 = arith.constant 0.000000e+00 : f32
    %10 = vector.broadcast %cst_10 : f32 to vector<2x128xf32>
    %11 = arith.maximumf %9, %10 : vector<2x128xf32>
    %c0_11 = arith.constant 0 : index
    %c0_12 = arith.constant 0 : index
    %12 = vector.load %arg6[%c0_11, %c0_12] : memref<128x128xf32, #tpu.memory_space<vmem>>, vector<128x128xf32>
    %cst_13 = arith.constant dense<0.000000e+00> : vector<2x128xf32>
    %13 = tpu.matmul %11, %12, %cst_13 {dimension_numbers = #tpu.dot_dimension_numbers<[1], [0], [0], [1], [0, 0, 1, 1], [], []>} : vector<2x128xf32>, vector<128x128xf32>, vector<2x128xf32> -> vector<2x128xf32>
    %c0_14 = arith.constant 0 : index
    %c0_15 = arith.constant 0 : index
    %14 = vector.load %arg7[%c0_14, %c0_15] : memref<1x128xf32, #tpu.memory_space<vmem>>, vector<1x128xf32>
    %15 = vector.broadcast %14 : vector<1x128xf32> to vector<2x128xf32>
    %16 = arith.addf %13, %15 : vector<2x128xf32>
    %cst_16 = arith.constant 0.000000e+00 : f32
    %17 = vector.broadcast %cst_16 : f32 to vector<2x128xf32>
    %18 = arith.maximumf %16, %17 : vector<2x128xf32>
    %c0_17 = arith.constant 0 : index
    %c0_18 = arith.constant 0 : index
    %19 = vector.load %arg8[%c0_17, %c0_18] : memref<128x2xf32, #tpu.memory_space<vmem>>, vector<128x2xf32>
    %cst_19 = arith.constant dense<0.000000e+00> : vector<2x2xf32>
    %20 = tpu.matmul %18, %19, %cst_19 {dimension_numbers = #tpu.dot_dimension_numbers<[1], [0], [0], [1], [0, 0, 1, 1], [], []>} : vector<2x128xf32>, vector<128x2xf32>, vector<2x2xf32> -> vector<2x2xf32>
    %c0_20 = arith.constant 0 : index
    %c0_21 = arith.constant 0 : index
    %21 = vector.load %arg9[%c0_20, %c0_21] : memref<1x2xf32, #tpu.memory_space<vmem>>, vector<1x2xf32>
    %22 = vector.broadcast %21 : vector<1x2xf32> to vector<2x2xf32>
    %23 = arith.addf %20, %22 : vector<2x2xf32>
    %24 = tpu.iota {dimensions = array<i32: 1>} : vector<2x2xi32>
    %c0_i32 = arith.constant 0 : i32
    %25 = vector.broadcast %c0_i32 : i32 to vector<2x2xi32>
    %26 = arith.cmpi eq, %24, %25 : vector<2x2xi32>
    %27 = arith.negf %23 : vector<2x2xf32>
    %28 = math.exp %27 : vector<2x2xf32>
    %cst_22 = arith.constant 1.000000e+00 : f32
    %29 = vector.broadcast %cst_22 : f32 to vector<2x2xf32>
    %30 = arith.addf %29, %28 : vector<2x2xf32>
    %31 = arith.divf %29, %30 : vector<2x2xf32>
    %32 = arith.select %26, %31, %23 : vector<2x2xi1>, vector<2x2xf32>
    %c0_23 = arith.constant 0 : index
    %c0_24 = arith.constant 0 : index
    %33 = vector.load %arg10[%c0_23, %c0_24] : memref<2x2xf32, #tpu.memory_space<vmem>>, vector<2x2xf32>
    tpu.vector_store %arg10[%c0_23, %c0_24], %32 {strides = array<i32>} : memref<2x2xf32, #tpu.memory_space<vmem>>, vector<2x2xf32>,
    return
  }
  func.func @transform_0(%arg0: i32) -> (i32, i32) {
    %c0_i32 = arith.constant 0 : i32
    %c0_i32_0 = arith.constant 0 : i32
    return %arg0, %c0_i32 : i32, i32
  }
  func.func @transform_1(%arg0: i32) -> (i32, i32) {
    %c0_i32 = arith.constant 0 : i32
    %c0_i32_0 = arith.constant 0 : i32
    return %arg0, %c0_i32 : i32, i32
  }
  func.func @transform_2(%arg0: i32) -> (i32, i32) {
    %c0_i32 = arith.constant 0 : i32
    %c0_i32_0 = arith.constant 0 : i32
    %c0_i32_1 = arith.constant 0 : i32
    return %c0_i32, %c0_i32_0 : i32, i32
  }
  func.func @transform_3(%arg0: i32) -> (i32, i32) {
    %c0_i32 = arith.constant 0 : i32
    %c0_i32_0 = arith.constant 0 : i32
    %c0_i32_1 = arith.constant 0 : i32
    return %c0_i32, %c0_i32_0 : i32, i32
  }
  func.func @transform_4(%arg0: i32) -> (i32, i32) {
    %c0_i32 = arith.constant 0 : i32
    %c0_i32_0 = arith.constant 0 : i32
    %c0_i32_1 = arith.constant 0 : i32
    return %c0_i32, %c0_i32_0 : i32, i32
  }
  func.func @transform_5(%arg0: i32) -> (i32, i32) {
    %c0_i32 = arith.constant 0 : i32
    %c0_i32_0 = arith.constant 0 : i32
    %c0_i32_1 = arith.constant 0 : i32
    return %c0_i32, %c0_i32_0 : i32, i32
  }
  func.func @transform_6(%arg0: i32) -> (i32, i32) {
    %c0_i32 = arith.constant 0 : i32
    %c0_i32_0 = arith.constant 0 : i32
    %c0_i32_1 = arith.constant 0 : i32
    return %c0_i32, %c0_i32_0 : i32, i32
  }
  func.func @transform_7(%arg0: i32) -> (i32, i32) {
    %c0_i32 = arith.constant 0 : i32
    %c0_i32_0 = arith.constant 0 : i32
    %c0_i32_1 = arith.constant 0 : i32
    return %c0_i32, %c0_i32_0 : i32, i32
  }
  func.func @transform_8(%arg0: i32) -> (i32, i32) {
    %c0_i32 = arith.constant 0 : i32
    %c0_i32_0 = arith.constant 0 : i32
    %c0_i32_1 = arith.constant 0 : i32
    return %c0_i32, %c0_i32_0 : i32, i32
  }
  func.func @transform_9(%arg0: i32) -> (i32, i32) {
    %c0_i32 = arith.constant 0 : i32
    %c0_i32_0 = arith.constant 0 : i32
    return %arg0, %c0_i32 : i32, i32
  }
}

module attributes {stable_mosaic.version = 11 : i64} {
  func.func @_contrast_rows_kernel(%arg0: i32, %arg1: memref<2x128xf32, #tpu.memory_space<vmem>>, %arg2: memref<2x128xf32, #tpu.memory_space<vmem>>, %arg3: memref<2x1xf32, #tpu.memory_space<vmem>>) attributes {dimension_semantics = [#tpu.dimension_semantics<parallel>], iteration_bounds = array<i64: 1>, scalar_prefetch = 0 : i64, scratch_operands = 0 : i64, tpu.core_type = #tpu.core_type<tc>, window_params = [{transform_indices = @transform_0, window_bounds = array<i64: 2, 128>}, {transform_indices = @transform_1, window_bounds = array<i64: 2, 128>}, {transform_indices = @transform_2, window_bounds = array<i64: 2, 1>}]} {
    %c0 = arith.constant 0 : index
    %c0_0 = arith.constant 0 : index
    %0 = vector.load %arg1[%c0, %c0_0] : memref<2x128xf32, #tpu.memory_space<vmem>>, vector<2x128xf32>
    %c0_1 = arith.constant 0 : index
    %c0_2 = arith.constant 0 : index
    %1 = vector.load %arg2[%c0_1, %c0_2] : memref<2x128xf32, #tpu.memory_space<vmem>>, vector<2x128xf32>
    %2 = arith.mulf %0, %1 : vector<2x128xf32>
    %cst = arith.constant dense<0.000000e+00> : vector<2xf32>
    %3 = vector.multi_reduction <add>, %2, %cst [1] : vector<2x128xf32> to vector<2xf32>
    %4 = vector.shape_cast %3 : vector<2xf32> to vector<2x1xf32>
    %5 = arith.mulf %0, %0 : vector<2x128xf32>
    %cst_3 = arith.constant dense<0.000000e+00> : vector<2xf32>
    %6 = vector.multi_reduction <add>, %5, %cst_3 [1] : vector<2x128xf32> to vector<2xf32>
    %7 = vector.shape_cast %6 : vector<2xf32> to vector<2x1xf32>
    %8 = math.sqrt %7 : vector<2x1xf32>
    %cst_4 = arith.constant 9.99999993E-9 : f32
    %9 = vector.broadcast %cst_4 : f32 to vector<2x1xf32>
    %10 = arith.maximumf %8, %9 : vector<2x1xf32>
    %11 = arith.mulf %1, %1 : vector<2x128xf32>
    %cst_5 = arith.constant dense<0.000000e+00> : vector<2xf32>
    %12 = vector.multi_reduction <add>, %11, %cst_5 [1] : vector<2x128xf32> to vector<2xf32>
    %13 = vector.shape_cast %12 : vector<2xf32> to vector<2x1xf32>
    %14 = math.sqrt %13 : vector<2x1xf32>
    %cst_6 = arith.constant 9.99999993E-9 : f32
    %15 = vector.broadcast %cst_6 : f32 to vector<2x1xf32>
    %16 = arith.maximumf %14, %15 : vector<2x1xf32>
    %17 = arith.mulf %10, %16 : vector<2x1xf32>
    %18 = arith.divf %4, %17 : vector<2x1xf32>
    %19 = math.absf %18 : vector<2x1xf32>
    %cst_7 = arith.constant 1.000000e+00 : f32
    %20 = vector.broadcast %cst_7 : f32 to vector<2x1xf32>
    %21 = arith.subf %20, %19 : vector<2x1xf32>
    %c0_8 = arith.constant 0 : index
    %c0_9 = arith.constant 0 : index
    %22 = vector.load %arg3[%c0_8, %c0_9] : memref<2x1xf32, #tpu.memory_space<vmem>>, vector<2x1xf32>
    tpu.vector_store %arg3[%c0_8, %c0_9], %21 {strides = array<i32>} : memref<2x1xf32, #tpu.memory_space<vmem>>, vector<2x1xf32>,
    return
  }
  func.func @transform_0(%arg0: i32) -> (i32, i32) {
    %c0_i32 = arith.constant 0 : i32
    %c0_i32_0 = arith.constant 0 : i32
    return %arg0, %c0_i32 : i32, i32
  }
  func.func @transform_1(%arg0: i32) -> (i32, i32) {
    %c0_i32 = arith.constant 0 : i32
    %c0_i32_0 = arith.constant 0 : i32
    return %arg0, %c0_i32 : i32, i32
  }
  func.func @transform_2(%arg0: i32) -> (i32, i32) {
    %c0_i32 = arith.constant 0 : i32
    %c0_i32_0 = arith.constant 0 : i32
    return %arg0, %c0_i32 : i32, i32
  }
}

</mosaic_0001>

<llo_original>
// kernel: convncf_forward.9
$region0: #{convncf_forward.9}
  #allocation0 [shape = 'u32[]', space=smem, size = 0x4, offset = 0x4, fixed_abs, tag = 'smem constant byte address 0x4 - core index']
  #allocation1 [shape = 'u32[72,128]{1,0:T(1,128)}', space=vmem, size = 0x9000, scoped, tag = 'internal scratch']
  %s0 = inlined_call_operand.hbm [shape: f32[2,32], index: 0, kind: input, shape index: {}]
  %s1 = inlined_call_operand.hbm [shape: f32[32,64], index: 1, kind: input, shape index: {}]
  %s2 = inlined_call_operand.hbm [shape: f32[1,64], index: 2, kind: input, shape index: {}]
  %s3 = inlined_call_operand.hbm [shape: f32[64,128], index: 3, kind: input, shape index: {}]
  %s4 = inlined_call_operand.hbm [shape: f32[1,128], index: 4, kind: input, shape index: {}]
  %s5 = inlined_call_operand.vmem [shape: f32[2,128], index: 5, kind: output, shape index: {}]
  %s6 = sld [smem:[#allocation0]]
  $region50: #{convncf_forward.9} parent=0
    _
  %s8 = ssub.s32 1, %s6
  %s9 = scalar_select 0, %s8, %s6
  $region1: #{convncf_forward.9} parent=0
    #allocation2 [shape = 'u8[1024]{0}', space=vmem, size = 0x400, scoped, tag = 'input window, operand 0, single buffered']
    #allocation3 [shape = 's32[1]{0}', space=sflag, size = 0x4, scoped, tag = 'scoped memory for convncf_forward.9']
    #allocation4 [shape = 'u8[16384]{0}', space=vmem, size = 0x4000, scoped, tag = 'input window, operand 1, single buffered']
    #allocation5 [shape = 's32[1]{0}', space=sflag, size = 0x4, scoped, tag = 'scoped memory for convncf_forward.9']
    #allocation6 [shape = 'u8[512]{0}', space=vmem, size = 0x400, scoped, tag = 'input window, operand 2, single buffered']
    #allocation7 [shape = 'u8[32768]{0}', space=vmem, size = 0x8000, scoped, tag = 'input window, operand 3, single buffered']
    #allocation8 [shape = 's32[1]{0}', space=sflag, size = 0x4, scoped, tag = 'scoped memory for convncf_forward.9']
    #allocation9 [shape = 'u8[512]{0}', space=vmem, size = 0x400, scoped, tag = 'input window, operand 4, single buffered']
    %10 = vsyncpa [#allocation3], 0
    %11 = vsyncpa [#allocation5], 0
    %12 = vsyncpa [#allocation8], 0
    // Predicated region
    $region2: #{convncf_forward.9} parent=1 // pred_check
      _
    $region3: #{convncf_forward.9} parent=1 // pred_check_branch
      %14 = sbr.rel (0) target = $region5
    $region4: #{convncf_forward.9} parent=1 // pred_region
      %16 = vsyncadd [#allocation3], 0
      %s18 = sshll.u32 %s0, 4
      %s19 = int_to_ptr.hbm [resolvable:$true] %s18
      %s20 = sshll.u32 [#allocation2], 4
      %s21 = int_to_ptr.vmem [resolvable:$true] %s20
      %23 = dma.hbm_to_vmem [thread:$0]  %s19, 32, %s21, [#allocation3]
    $region5: #{convncf_forward.9} parent=1 // pred_fallthru
      _
    // Predicated region
    $region6: #{convncf_forward.9} parent=1 // pred_check
      _
    $region7: #{convncf_forward.9} parent=1 // pred_check_branch
      %25 = sbr.rel (0) target = $region9
    $region8: #{convncf_forward.9} parent=1 // pred_region
      %27 = vsyncadd [#allocation5], 0
      %s28 = sshll.u32 %s1, 4
      %s29 = int_to_ptr.hbm [resolvable:$true] %s28
      %s30 = sshll.u32 [#allocation4], 4
      %s31 = int_to_ptr.vmem [resolvable:$true] %s30
      %36 = dma.hbm_to_vmem [thread:$0]  %s29, 512, %s31, [#allocation5], 128, 128, 8
    $region9: #{convncf_forward.9} parent=1 // pred_fallthru
      _
    // Predicated region
    $region10: #{convncf_forward.9} parent=1 // pred_check
      _
    $region11: #{convncf_forward.9} parent=1 // pred_check_branch
      %38 = sbr.rel (0) target = $region13
    $region12: #{convncf_forward.9} parent=1 // pred_region
      %40 = vsyncadd [#allocation5], 0
      %s42 = sshll.u32 %s2, 4
      %s43 = int_to_ptr.hbm [resolvable:$true] %s42
      %s44 = sshll.u32 [#allocation6], 4
      %s45 = int_to_ptr.vmem [resolvable:$true] %s44
      %47 = dma.hbm_to_vmem [thread:$0]  %s43, 16, %s45, [#allocation5]
    $region13: #{convncf_forward.9} parent=1 // pred_fallthru
      _
    // Predicated region
    $region14: #{convncf_forward.9} parent=1 // pred_check
      _
    $region15: #{convncf_forward.9} parent=1 // pred_check_branch
      %49 = sbr.rel (0) target = $region17
    $region16: #{convncf_forward.9} parent=1 // pred_region
      %51 = vsyncadd [#allocation8], 0
      %s52 = sshll.u32 %s3, 4
      %s53 = int_to_ptr.hbm [resolvable:$true] %s52
      %s54 = sshll.u32 [#allocation7], 4
      %s55 = int_to_ptr.vmem [resolvable:$true] %s54
      %60 = dma.hbm_to_vmem [thread:$0]  %s53, 1024, %s55, [#allocation8], 128, 128, 8
    $region17: #{convncf_forward.9} parent=1 // pred_fallthru
      _
    // Predicated region
    $region18: #{convncf_forward.9} parent=1 // pred_check
      _
    $region19: #{convncf_forward.9} parent=1 // pred_check_branch
      %62 = sbr.rel (0) target = $region21
    $region20: #{convncf_forward.9} parent=1 // pred_region
      %64 = vsyncadd [#allocation8], 0
      %s66 = sshll.u32 %s4, 4
      %s67 = int_to_ptr.hbm [resolvable:$true] %s66
      %s68 = sshll.u32 [#allocation9], 4
      %s69 = int_to_ptr.vmem [resolvable:$true] %s68
      %71 = dma.hbm_to_vmem [thread:$0]  %s67, 16, %s69, [#allocation8]
    $region21: #{convncf_forward.9} parent=1 // pred_fallthru
      _
    // Predicated region
    $region22: #{convncf_forward.9} parent=1 // pred_check
      _
    $region23: #{convncf_forward.9} parent=1 // pred_check_branch
      %73 = sbr.rel (0) target = $region25
    $region24: #{convncf_forward.9} parent=1 // pred_region
      %75 = dma.done [#allocation3], 32
    $region25: #{convncf_forward.9} parent=1 // pred_fallthru
      _
    // Predicated region
    $region26: #{convncf_forward.9} parent=1 // pred_check
      _
    $region27: #{convncf_forward.9} parent=1 // pred_check_branch
      %77 = sbr.rel (0) target = $region29
    $region28: #{convncf_forward.9} parent=1 // pred_region
      %79 = dma.done [#allocation5], 512
    $region29: #{convncf_forward.9} parent=1 // pred_fallthru
      _
    // Predicated region
    $region30: #{convncf_forward.9} parent=1 // pred_check
      _
    $region31: #{convncf_forward.9} parent=1 // pred_check_branch
      %81 = sbr.rel (0) target = $region33
    $region32: #{convncf_forward.9} parent=1 // pred_region
      %83 = dma.done [#allocation5], 16
    $region33: #{convncf_forward.9} parent=1 // pred_fallthru
      _
    // Predicated region
    $region34: #{convncf_forward.9} parent=1 // pred_check
      _
    $region35: #{convncf_forward.9} parent=1 // pred_check_branch
      %85 = sbr.rel (0) target = $region37
    $region36: #{convncf_forward.9} parent=1 // pred_region
      %87 = dma.done [#allocation8], 1024
    $region37: #{convncf_forward.9} parent=1 // pred_fallthru
      _
    // Predicated region
    $region38: #{convncf_forward.9} parent=1 // pred_check
      _
    $region39: #{convncf_forward.9} parent=1 // pred_check_branch
      %89 = sbr.rel (0) target = $region41
    $region40: #{convncf_forward.9} parent=1 // pred_region
      %91 = dma.done [#allocation8], 16
    $region41: #{convncf_forward.9} parent=1 // pred_fallthru
      _
    %v92 = vld [vmem:[#allocation2] sm:$0x3]
    %v93 = vld [vmem:[#allocation4] sm:$0xff]
    %v94 = vld [vmem:[#allocation4 + $0x8] sm:$0xff]
    %v95 = vld [vmem:[#allocation4 + $0x10] sm:$0xff]
    %v96 = vld [vmem:[#allocation4 + $0x18] sm:$0xff]
    %v97 = vld [vmem:[#allocation6] sm:$0x1]
    %v99 = vperm.slane %v97, 0
    %vm101 = vcmask 261120
    %v103 = vsel %vm101, %v92, 0
    %105 = vmatpush.msra.mxu0 0.0
    %106 = vmatpush.msra.mxu0 0.0
    %107 = vmatpush.msra.mxu0 0.0
    %108 = vmatpush.msra.mxu0 0.0
    %109 = vmatpush.msra.mxu0 0.0
    %110 = vmatpush.msra.mxu0 0.0
    %111 = vmatpush.msra.mxu0 0.0
    %112 = vmatpush.msra.mxu0 0.0
    %113 = vmatpush.msra.mxu0 0.0
    %114 = vmatpush.msra.mxu0 0.0
    %115 = vmatpush.msra.mxu0 0.0
    %116 = vmatpush.msra.mxu0 0.0
    %117 = vmatpush.msra.mxu0 %v96
    %118 = vmatpush.msra.mxu0 %v95
    %119 = vmatpush.msra.mxu0 %v94
    %120 = vmatpush.msra.mxu0 %v93
    %121 = vmatmul.f32.gmra.mxu0 %v103
    %v122 = vpop.f32.mrf.mxu0
    %v123 = vadd.f32 %v99, %v122
    %124 = vdwg.mxu0
    %v125 = vmax.f32 %v123, 0.0
    %v126 = vld [vmem:[#allocation7] sm:$0xff]
    %v127 = vld [vmem:[#allocation7 + $0x8] sm:$0xff]
    %v128 = vld [vmem:[#allocation7 + $0x10] sm:$0xff]
    %v129 = vld [vmem:[#allocation7 + $0x18] sm:$0xff]
    %v130 = vld [vmem:[#allocation7 + $0x20] sm:$0xff]
    %v131 = vld [vmem:[#allocation7 + $0x28] sm:$0xff]
    %v132 = vld [vmem:[#allocation7 + $0x30] sm:$0xff]
    %v133 = vld [vmem:[#allocation7 + $0x38] sm:$0xff]
    %v134 = vld [vmem:[#allocation9] sm:$0x1]
    %v136 = vperm.slane %v134, 0
    %vm138 = vcmask 523264
    %v140 = vsel %vm138, %v125, 0
    %142 = vmatpush.msra.mxu0 0.0
    %143 = vmatpush.msra.mxu0 0.0
    %144 = vmatpush.msra.mxu0 0.0
    %145 = vmatpush.msra.mxu0 0.0
    %146 = vmatpush.msra.mxu0 0.0
    %147 = vmatpush.msra.mxu0 0.0
    %148 = vmatpush.msra.mxu0 0.0
    %149 = vmatpush.msra.mxu0 0.0
    %150 = vmatpush.msra.mxu0 %v133
    %151 = vmatpush.msra.mxu0 %v132
    %152 = vmatpush.msra.mxu0 %v131
    %153 = vmatpush.msra.mxu0 %v130
    %154 = vmatpush.msra.mxu0 %v129
    %155 = vmatpush.msra.mxu0 %v128
    %156 = vmatpush.msra.mxu0 %v127
    %157 = vmatpush.msra.mxu0 %v126
    %158 = vmatmul.f32.gmra.mxu0 %v140
    %v159 = vpop.f32.mrf.mxu0
    %v160 = vadd.f32 %v136, %v159
    %161 = vdwg.mxu0
    %162 = vst [vmem:[%s5] sm:$0x3] %v160
    // Predicated region
    $region42: #{convncf_forward.9} parent=1 // pred_check
      _
    $region43: #{convncf_forward.9} parent=1 // pred_check_branch
      %164 = sbr.rel (0) target = $region45
    $region44: #{convncf_forward.9} parent=1 // pred_region
      _
    $region45: #{convncf_forward.9} parent=1 // pred_fallthru
      _
    // Predicated region
    $region46: #{convncf_forward.9} parent=1 // pred_check
      _
    $region47: #{convncf_forward.9} parent=1 // pred_check_branch
      %166 = sbr.rel (0) target = $region49
    $region48: #{convncf_forward.9} parent=1 // pred_region
      _
    $region49: #{convncf_forward.9} parent=1 // pred_fallthru
      _
    %167 = vsyncpa [#allocation3], 1
    %168 = vsyncpa [#allocation5], 1
    %169 = vsyncpa [#allocation8], 1

// kernel: convncf_forward.10
$region0: #{convncf_forward.10}
  #allocation0 [shape = 'u32[]', space=smem, size = 0x4, offset = 0x4, fixed_abs, tag = 'smem constant byte address 0x4 - core index']
  #allocation1 [shape = 'u32[72,128]{1,0:T(1,128)}', space=vmem, size = 0x9000, scoped, tag = 'internal scratch']
  %s0 = inlined_call_operand.vmem [shape: f32[2,768], index: 0, kind: input, shape index: {}]
  %s1 = inlined_call_operand.hbm [shape: f32[768,128], index: 1, kind: input, shape index: {}]
  %s2 = inlined_call_operand.hbm [shape: f32[1,128], index: 2, kind: input, shape index: {}]
  %s3 = inlined_call_operand.hbm [shape: f32[128,128], index: 3, kind: input, shape index: {}]
  %s4 = inlined_call_operand.hbm [shape: f32[1,128], index: 4, kind: input, shape index: {}]
  %s5 = inlined_call_operand.vmem [shape: f32[2,128], index: 5, kind: output, shape index: {}]
  %s6 = sld [smem:[#allocation0]]
  $region46: #{convncf_forward.10} parent=0
    _
  %s8 = ssub.s32 1, %s6
  %s9 = scalar_select 0, %s8, %s6
  $region1: #{convncf_forward.10} parent=0
    #allocation2 [shape = 'u8[393216]{0}', space=vmem, size = 0x60000, scoped, tag = 'input window, operand 1, single buffered']
    #allocation3 [shape = 's32[1]{0}', space=sflag, size = 0x4, scoped, tag = 'scoped memory for convncf_forward.10']
    #allocation4 [shape = 'u8[512]{0}', space=vmem, size = 0x400, scoped, tag = 'input window, operand 2, single buffered']
    #allocation5 [shape = 's32[1]{0}', space=sflag, size = 0x4, scoped, tag = 'scoped memory for convncf_forward.10']
    #allocation6 [shape = 'u8[65536]{0}', space=vmem, size = 0x10000, scoped, tag = 'input window, operand 3, single buffered']
    #allocation7 [shape = 'u8[512]{0}', space=vmem, size = 0x400, scoped, tag = 'input window, operand 4, single buffered']
    #allocation8 [shape = 's32[1]{0}', space=sflag, size = 0x4, scoped, tag = 'scoped memory for convncf_forward.10']
    %10 = vsyncpa [#allocation3], 0
    %11 = vsyncpa [#allocation5], 0
    %12 = vsyncpa [#allocation8], 0
    // Predicated region
    $region2: #{convncf_forward.10} parent=1 // pred_check
      _
    $region3: #{convncf_forward.10} parent=1 // pred_check_branch
      %14 = sbr.rel (0) target = $region5
    $region4: #{convncf_forward.10} parent=1 // pred_region
      _
    $region5: #{convncf_forward.10} parent=1 // pred_fallthru
      _
    // Predicated region
    $region6: #{convncf_forward.10} parent=1 // pred_check
      _
    $region7: #{convncf_forward.10} parent=1 // pred_check_branch
      %16 = sbr.rel (0) target = $region9
    $region8: #{convncf_forward.10} parent=1 // pred_region
      %18 = vsyncadd [#allocation3], 0
      %s19 = sshll.u32 %s1, 4
      %s20 = int_to_ptr.hbm [resolvable:$true] %s19
      %s21 = sshll.u32 [#allocation2], 4
      %s22 = int_to_ptr.vmem [resolvable:$true] %s21
      %27 = dma.hbm_to_vmem [thread:$0]  %s20, 12288, %s22, [#allocation3], 128, 128, 8
    $region9: #{convncf_forward.10} parent=1 // pred_fallthru
      _
    // Predicated region
    $region10: #{convncf_forward.10} parent=1 // pred_check
      _
    $region11: #{convncf_forward.10} parent=1 // pred_check_branch
      %29 = sbr.rel (0) target = $region13
    $region12: #{convncf_forward.10} parent=1 // pred_region
      %31 = vsyncadd [#allocation5], 0
      %s33 = sshll.u32 %s2, 4
      %s34 = int_to_ptr.hbm [resolvable:$true] %s33
      %s35 = sshll.u32 [#allocation4], 4
      %s36 = int_to_ptr.vmem [resolvable:$true] %s35
      %38 = dma.hbm_to_vmem [thread:$0]  %s34, 16, %s36, [#allocation5]
    $region13: #{convncf_forward.10} parent=1 // pred_fallthru
      _
    // Predicated region
    $region14: #{convncf_forward.10} parent=1 // pred_check
      _
    $region15: #{convncf_forward.10} parent=1 // pred_check_branch
      %40 = sbr.rel (0) target = $region17
    $region16: #{convncf_forward.10} parent=1 // pred_region
      %42 = vsyncadd [#allocation5], 0
      %s43 = sshll.u32 %s3, 4
      %s44 = int_to_ptr.hbm [resolvable:$true] %s43
      %s45 = sshll.u32 [#allocation6], 4
      %s46 = int_to_ptr.vmem [resolvable:$true] %s45
      %51 = dma.hbm_to_vmem [thread:$0]  %s44, 2048, %s46, [#allocation5], 128, 128, 8
    $region17: #{convncf_forward.10} parent=1 // pred_fallthru
      _
    // Predicated region
    $region18: #{convncf_forward.10} parent=1 // pred_check
      _
    $region19: #{convncf_forward.10} parent=1 // pred_check_branch
      %53 = sbr.rel (0) target = $region21
    $region20: #{convncf_forward.10} parent=1 // pred_region
      %55 = vsyncadd [#allocation8], 0
      %s57 = sshll.u32 %s4, 4
      %s58 = int_to_ptr.hbm [resolvable:$true] %s57
      %s59 = sshll.u32 [#allocation7], 4
      %s60 = int_to_ptr.vmem [resolvable:$true] %s59
      %62 = dma.hbm_to_vmem [thread:$0]  %s58, 16, %s60, [#allocation8]
    $region21: #{convncf_forward.10} parent=1 // pred_fallthru
      _
    // Predicated region
    $region22: #{convncf_forward.10} parent=1 // pred_check
      _
    $region23: #{convncf_forward.10} parent=1 // pred_check_branch
      %64 = sbr.rel (0) target = $region25
    $region24: #{convncf_forward.10} parent=1 // pred_region
      %66 = dma.done [#allocation3], 12288
    $region25: #{convncf_forward.10} parent=1 // pred_fallthru
      _
    // Predicated region
    $region26: #{convncf_forward.10} parent=1 // pred_check
      _
    $region27: #{convncf_forward.10} parent=1 // pred_check_branch
      %68 = sbr.rel (0) target = $region29
    $region28: #{convncf_forward.10} parent=1 // pred_region
      %70 = dma.done [#allocation5], 16
    $region29: #{convncf_forward.10} parent=1 // pred_fallthru
      _
    // Predicated region
    $region30: #{convncf_forward.10} parent=1 // pred_check
      _
    $region31: #{convncf_forward.10} parent=1 // pred_check_branch
      %72 = sbr.rel (0) target = $region33
    $region32: #{convncf_forward.10} parent=1 // pred_region
      %74 = dma.done [#allocation5], 2048
    $region33: #{convncf_forward.10} parent=1 // pred_fallthru
      _
    // Predicated region
    $region34: #{convncf_forward.10} parent=1 // pred_check
      _
    $region35: #{convncf_forward.10} parent=1 // pred_check_branch
      %76 = sbr.rel (0) target = $region37
    $region36: #{convncf_forward.10} parent=1 // pred_region
      %78 = dma.done [#allocation8], 16
    $region37: #{convncf_forward.10} parent=1 // pred_fallthru
      _
    %v79 = vld [vmem:[%s0] sm:$0xff]
    %v80 = vld [vmem:[%s0 + $0x8] sm:$0xf]
    %v81 = vld [vmem:[#allocation2] sm:$0xff]
    %v82 = vld [vmem:[#allocation2 + $0x8] sm:$0xff]
    %v83 = vld [vmem:[#allocation2 + $0x10] sm:$0xff]
    %v84 = vld [vmem:[#allocation2 + $0x18] sm:$0xff]
    %v85 = vld [vmem:[#allocation2 + $0x20] sm:$0xff]
    %v86 = vld [vmem:[#allocation2 + $0x28] sm:$0xff]
    %v87 = vld [vmem:[#allocation2 + $0x30] sm:$0xff]
    %v88 = vld [vmem:[#allocation2 + $0x38] sm:$0xff]
    %v89 = vld [vmem:[#allocation2 + $0x40] sm:$0xff]
    %v90 = vld [vmem:[#allocation2 + $0x48] sm:$0xff]
    %v91 = vld [vmem:[#allocation2 + $0x50] sm:$0xff]
    %v92 = vld [vmem:[#allocation2 + $0x58] sm:$0xff]
    %v93 = vld [vmem:[#allocation2 + $0x60] sm:$0xff]
    %v94 = vld [vmem:[#allocation2 + $0x68] sm:$0xff]
    %v95 = vld [vmem:[#allocation2 + $0x70] sm:$0xff]
    %v96 = vld [vmem:[#allocation2 + $0x78] sm:$0xff]
    %v97 = vld [vmem:[#allocation2 + $0x80] sm:$0xff]
    %v98 = vld [vmem:[#allocation2 + $0x88] sm:$0xff]
    %v99 = vld [vmem:[#allocation2 + $0x90] sm:$0xff]
    %v100 = vld [vmem:[#allocation2 + $0x98] sm:$0xff]
    %v101 = vld [vmem:[#allocation2 + $0xa0] sm:$0xff]
    %v102 = vld [vmem:[#allocation2 + $0xa8] sm:$0xff]
    %v103 = vld [vmem:[#allocation2 + $0xb0] sm:$0xff]
    %v104 = vld [vmem:[#allocation2 + $0xb8] sm:$0xff]
    %v105 = vld [vmem:[#allocation2 + $0xc0] sm:$0xff]
    %v106 = vld [vmem:[#allocation2 + $0xc8] sm:$0xff]
    %v107 = vld [vmem:[#allocation2 + $0xd0] sm:$0xff]
    %v108 = vld [vmem:[#allocation2 + $0xd8] sm:$0xff]
    %v109 = vld [vmem:[#allocation2 + $0xe0] sm:$0xff]
    %v110 = vld [vmem:[#allocation2 + $0xe8] sm:$0xff]
    %v111 = vld [vmem:[#allocation2 + $0xf0] sm:$0xff]
    %v112 = vld [vmem:[#allocation2 + $0xf8] sm:$0xff]
    %v113 = vld [vmem:[#allocation2 + $0x100] sm:$0xff]
    %v114 = vld [vmem:[#allocation2 + $0x108] sm:$0xff]
    %v115 = vld [vmem:[#allocation2 + $0x110] sm:$0xff]
    %v116 = vld [vmem:[#allocation2 + $0x118] sm:$0xff]
    %v117 = vld [vmem:[#allocation2 + $0x120] sm:$0xff]
    %v118 = vld [vmem:[#allocation2 + $0x128] sm:$0xff]
    %v119 = vld [vmem:[#allocation2 + $0x130] sm:$0xff]
    %v120 = vld [vmem:[#allocation2 + $0x138] sm:$0xff]
    %v121 = vld [vmem:[#allocation2 + $0x140] sm:$0xff]
    %v122 = vld [vmem:[#allocation2 + $0x148] sm:$0xff]
    %v123 = vld [vmem:[#allocation2 + $0x150] sm:$0xff]
    %v124 = vld [vmem:[#allocation2 + $0x158] sm:$0xff]
    %v125 = vld [vmem:[#allocation2 + $0x160] sm:$0xff]
    %v126 = vld [vmem:[#allocation2 + $0x168] sm:$0xff]
    %v127 = vld [vmem:[#allocation2 + $0x170] sm:$0xff]
    %v128 = vld [vmem:[#allocation2 + $0x178] sm:$0xff]
    %v129 = vld [vmem:[#allocation2 + $0x180] sm:$0xff]
    %v130 = vld [vmem:[#allocation2 + $0x188] sm:$0xff]
    %v131 = vld [vmem:[#allocation2 + $0x190] sm:$0xff]
    %v132 = vld [vmem:[#allocation2 + $0x198] sm:$0xff]
    %v133 = vld [vmem:[#allocation2 + $0x1a0] sm:$0xff]
    %v134 = vld [vmem:[#allocation2 + $0x1a8] sm:$0xff]
    %v135 = vld [vmem:[#allocation2 + $0x1b0] sm:$0xff]
    %v136 = vld [vmem:[#allocation2 + $0x1b8] sm:$0xff]
    %v137 = vld [vmem:[#allocation2 + $0x1c0] sm:$0xff]
    %v138 = vld [vmem:[#allocation2 + $0x1c8] sm:$0xff]
    %v139 = vld [vmem:[#allocation2 + $0x1d0] sm:$0xff]
    %v140 = vld [vmem:[#allocation2 + $0x1d8] sm:$0xff]
    %v141 = vld [vmem:[#allocation2 + $0x1e0] sm:$0xff]
    %v142 = vld [vmem:[#allocation2 + $0x1e8] sm:$0xff]
    %v143 = vld [vmem:[#allocation2 + $0x1f0] sm:$0xff]
    %v144 = vld [vmem:[#allocation2 + $0x1f8] sm:$0xff]
    %v145 = vld [vmem:[#allocation2 + $0x200] sm:$0xff]
    %v146 = vld [vmem:[#allocation2 + $0x208] sm:$0xff]
    %v147 = vld [vmem:[#allocation2 + $0x210] sm:$0xff]
    %v148 = vld [vmem:[#allocation2 + $0x218] sm:$0xff]
    %v149 = vld [vmem:[#allocation2 + $0x220] sm:$0xff]
    %v150 = vld [vmem:[#allocation2 + $0x228] sm:$0xff]
    %v151 = vld [vmem:[#allocation2 + $0x230] sm:$0xff]
    %v152 = vld [vmem:[#allocation2 + $0x238] sm:$0xff]
    %v153 = vld [vmem:[#allocation2 + $0x240] sm:$0xff]
    %v154 = vld [vmem:[#allocation2 + $0x248] sm:$0xff]
    %v155 = vld [vmem:[#allocation2 + $0x250] sm:$0xff]
    %v156 = vld [vmem:[#allocation2 + $0x258] sm:$0xff]
    %v157 = vld [vmem:[#allocation2 + $0x260] sm:$0xff]
    %v158 = vld [vmem:[#allocation2 + $0x268] sm:$0xff]
    %v159 = vld [vmem:[#allocation2 + $0x270] sm:$0xff]
    %v160 = vld [vmem:[#allocation2 + $0x278] sm:$0xff]
    %v161 = vld [vmem:[#allocation2 + $0x280] sm:$0xff]
    %v162 = vld [vmem:[#allocation2 + $0x288] sm:$0xff]
    %v163 = vld [vmem:[#allocation2 + $0x290] sm:$0xff]
    %v164 = vld [vmem:[#allocation2 + $0x298] sm:$0xff]
    %v165 = vld [vmem:[#allocation2 + $0x2a0] sm:$0xff]
    %v166 = vld [vmem:[#allocation2 + $0x2a8] sm:$0xff]
    %v167 = vld [vmem:[#allocation2 + $0x2b0] sm:$0xff]
    %v168 = vld [vmem:[#allocation2 + $0x2b8] sm:$0xff]
    %v169 = vld [vmem:[#allocation2 + $0x2c0] sm:$0xff]
    %v170 = vld [vmem:[#allocation2 + $0x2c8] sm:$0xff]
    %v171 = vld [vmem:[#allocation2 + $0x2d0] sm:$0xff]
    %v172 = vld [vmem:[#allocation2 + $0x2d8] sm:$0xff]
    %v173 = vld [vmem:[#allocation2 + $0x2e0] sm:$0xff]
    %v174 = vld [vmem:[#allocation2 + $0x2e8] sm:$0xff]
    %v175 = vld [vmem:[#allocation2 + $0x2f0] sm:$0xff]
    %v176 = vld [vmem:[#allocation2 + $0x2f8] sm:$0xff]
    %v177 = vld [vmem:[#allocation4] sm:$0x1]
    %v179 = vperm.slane %v177, 0
    %183 = vst [vmem:[#allocation1] ss:$4 sm:$0xff] %v79
    %s184 = scalar_lea.vmem [#allocation1], 32
    %185 = vst [vmem:[%s184] ss:$4 sm:$0xff] %v80
    %v186 = vld.sshfl [vmem:[#allocation1] sm:$0xff pattern:$0x73625140]
    %v187 = vld.sshfl [vmem:[#allocation1 + $0x8] sm:$0xff pattern:$0x73625140]
    %v188 = vld.sshfl [vmem:[#allocation1 + $0x10] sm:$0xff pattern:$0x73625140]
    %v189 = vld.sshfl [vmem:[#allocation1 + $0x18] sm:$0xff pattern:$0x73625140]
    %v190 = vld.sshfl [vmem:[#allocation1 + $0x20] sm:$0xff pattern:$0x73625140]
    %v191 = vld.sshfl [vmem:[#allocation1 + $0x28] sm:$0xff pattern:$0x73625140]
    %198 = vmatpush.msra.mxu0 %v96
    %199 = vmatpush.msra.mxu0 %v95
    %200 = vmatpush.msra.mxu0 %v94
    %201 = vmatpush.msra.mxu0 %v93
    %202 = vmatpush.msra.mxu0 %v92
    %203 = vmatpush.msra.mxu0 %v91
    %204 = vmatpush.msra.mxu0 %v90
    %205 = vmatpush.msra.mxu0 %v89
    %206 = vmatpush.msra.mxu0 %v88
    %207 = vmatpush.msra.mxu0 %v87
    %208 = vmatpush.msra.mxu0 %v86
    %209 = vmatpush.msra.mxu0 %v85
    %210 = vmatpush.msra.mxu0 %v84
    %211 = vmatpush.msra.mxu0 %v83
    %212 = vmatpush.msra.mxu0 %v82
    %213 = vmatpush.msra.mxu0 %v81
    %214 = vmatmul.f32.gmra.mxu0 %v186
    %v215 = vpop.f32.mrf.mxu0
    %v216 = vadd.f32 %v179, %v215
    %217 = vdwg.mxu0
    %218 = vmatpush.msra.mxu0 %v112
    %219 = vmatpush.msra.mxu0 %v111
    %220 = vmatpush.msra.mxu0 %v110
    %221 = vmatpush.msra.mxu0 %v109
    %222 = vmatpush.msra.mxu0 %v108
    %223 = vmatpush.msra.mxu0 %v107
    %224 = vmatpush.msra.mxu0 %v106
    %225 = vmatpush.msra.mxu0 %v105
    %226 = vmatpush.msra.mxu0 %v104
    %227 = vmatpush.msra.mxu0 %v103
    %228 = vmatpush.msra.mxu0 %v102
    %229 = vmatpush.msra.mxu0 %v101
    %230 = vmatpush.msra.mxu0 %v100
    %231 = vmatpush.msra.mxu0 %v99
    %232 = vmatpush.msra.mxu0 %v98
    %233 = vmatpush.msra.mxu0 %v97
    %234 = vmatmul.f32.gmra.mxu0 %v187
    %v235 = vpop.f32.mrf.mxu0
    %v236 = vadd.f32 %v216, %v235
    %237 = vdwg.mxu0
    %238 = vmatpush.msra.mxu0 %v128
    %239 = vmatpush.msra.mxu0 %v127
    %240 = vmatpush.msra.mxu0 %v126
    %241 = vmatpush.msra.mxu0 %v125
    %242 = vmatpush.msra.mxu0 %v124
    %243 = vmatpush.msra.mxu0 %v123
    %244 = vmatpush.msra.mxu0 %v122
    %245 = vmatpush.msra.mxu0 %v121
    %246 = vmatpush.msra.mxu0 %v120
    %247 = vmatpush.msra.mxu0 %v119
    %248 = vmatpush.msra.mxu0 %v118
    %249 = vmatpush.msra.mxu0 %v117
    %250 = vmatpush.msra.mxu0 %v116
    %251 = vmatpush.msra.mxu0 %v115
    %252 = vmatpush.msra.mxu0 %v114
    %253 = vmatpush.msra.mxu0 %v113
    %254 = vmatmul.f32.gmra.mxu0 %v188
    %v255 = vpop.f32.mrf.mxu0
    %v256 = vadd.f32 %v236, %v255
    %257 = vdwg.mxu0
    %258 = vmatpush.msra.mxu0 %v144
    %259 = vmatpush.msra.mxu0 %v143
    %260 = vmatpush.msra.mxu0 %v142
    %261 = vmatpush.msra.mxu0 %v141
    %262 = vmatpush.msra.mxu0 %v140
    %263 = vmatpush.msra.mxu0 %v139
    %264 = vmatpush.msra.mxu0 %v138
    %265 = vmatpush.msra.mxu0 %v137
    %266 = vmatpush.msra.mxu0 %v136
    %267 = vmatpush.msra.mxu0 %v135
    %268 = vmatpush.msra.mxu0 %v134
    %269 = vmatpush.msra.mxu0 %v133
    %270 = vmatpush.msra.mxu0 %v132
    %271 = vmatpush.msra.mxu0 %v131
    %272 = vmatpush.msra.mxu0 %v130
    %273 = vmatpush.msra.mxu0 %v129
    %274 = vmatmul.f32.gmra.mxu0 %v189
    %v275 = vpop.f32.mrf.mxu0
    %v276 = vadd.f32 %v256, %v275
    %277 = vdwg.mxu0
    %278 = vmatpush.msra.mxu0 %v160
    %279 = vmatpush.msra.mxu0 %v159
    %280 = vmatpush.msra.mxu0 %v158
    %281 = vmatpush.msra.mxu0 %v157
    %282 = vmatpush.msra.mxu0 %v156
    %283 = vmatpush.msra.mxu0 %v155
    %284 = vmatpush.msra.mxu0 %v154
    %285 = vmatpush.msra.mxu0 %v153
    %286 = vmatpush.msra.mxu0 %v152
    %287 = vmatpush.msra.mxu0 %v151
    %288 = vmatpush.msra.mxu0 %v150
    %289 = vmatpush.msra.mxu0 %v149
    %290 = vmatpush.msra.mxu0 %v148
    %291 = vmatpush.msra.mxu0 %v147
    %292 = vmatpush.msra.mxu0 %v146
    %293 = vmatpush.msra.mxu0 %v145
    %294 = vmatmul.f32.gmra.mxu0 %v190
    %v295 = vpop.f32.mrf.mxu0
    %v296 = vadd.f32 %v276, %v295
    %297 = vdwg.mxu0
    %298 = vmatpush.msra.mxu0 %v176
    %299 = vmatpush.msra.mxu0 %v175
    %300 = vmatpush.msra.mxu0 %v174
    %301 = vmatpush.msra.mxu0 %v173
    %302 = vmatpush.msra.mxu0 %v172
    %303 = vmatpush.msra.mxu0 %v171
    %304 = vmatpush.msra.mxu0 %v170
    %305 = vmatpush.msra.mxu0 %v169
    %306 = vmatpush.msra.mxu0 %v168
    %307 = vmatpush.msra.mxu0 %v167
    %308 = vmatpush.msra.mxu0 %v166
    %309 = vmatpush.msra.mxu0 %v165
    %310 = vmatpush.msra.mxu0 %v164
    %311 = vmatpush.msra.mxu0 %v163
    %312 = vmatpush.msra.mxu0 %v162
    %313 = vmatpush.msra.mxu0 %v161
    %314 = vmatmul.f32.gmra.mxu0 %v191
    %v315 = vpop.f32.mrf.mxu0
    %v316 = vadd.f32 %v296, %v315
    %317 = vdwg.mxu0
    %v318 = vmax.f32 %v316, 0.0
    %v319 = vld [vmem:[#allocation6] sm:$0xff]
    %v320 = vld [vmem:[#allocation6 + $0x8] sm:$0xff]
    %v321 = vld [vmem:[#allocation6 + $0x10] sm:$0xff]
    %v322 = vld [vmem:[#allocation6 + $0x18] sm:$0xff]
    %v323 = vld [vmem:[#allocation6 + $0x20] sm:$0xff]
    %v324 = vld [vmem:[#allocation6 + $0x28] sm:$0xff]
    %v325 = vld [vmem:[#allocation6 + $0x30] sm:$0xff]
    %v326 = vld [vmem:[#allocation6 + $0x38] sm:$0xff]
    %v327 = vld [vmem:[#allocation6 + $0x40] sm:$0xff]
    %v328 = vld [vmem:[#allocation6 + $0x48] sm:$0xff]
    %v329 = vld [vmem:[#allocation6 + $0x50] sm:$0xff]
    %v330 = vld [vmem:[#allocation6 + $0x58] sm:$0xff]
    %v331 = vld [vmem:[#allocation6 + $0x60] sm:$0xff]
    %v332 = vld [vmem:[#allocation6 + $0x68] sm:$0xff]
    %v333 = vld [vmem:[#allocation6 + $0x70] sm:$0xff]
    %v334 = vld [vmem:[#allocation6 + $0x78] sm:$0xff]
    %v335 = vld [vmem:[#allocation7] sm:$0x1]
    %v337 = vperm.slane %v335, 0
    %339 = vmatpush.msra.mxu0 %v334
    %340 = vmatpush.msra.mxu0 %v333
    %341 = vmatpush.msra.mxu0 %v332
    %342 = vmatpush.msra.mxu0 %v331
    %343 = vmatpush.msra.mxu0 %v330
    %344 = vmatpush.msra.mxu0 %v329
    %345 = vmatpush.msra.mxu0 %v328
    %346 = vmatpush.msra.mxu0 %v327
    %347 = vmatpush.msra.mxu0 %v326
    %348 = vmatpush.msra.mxu0 %v325
    %349 = vmatpush.msra.mxu0 %v324
    %350 = vmatpush.msra.mxu0 %v323
    %351 = vmatpush.msra.mxu0 %v322
    %352 = vmatpush.msra.mxu0 %v321
    %353 = vmatpush.msra.mxu0 %v320
    %354 = vmatpush.msra.mxu0 %v319
    %355 = vmatmul.f32.gmra.mxu0 %v318
    %v356 = vpop.f32.mrf.mxu0
    %v357 = vadd.f32 %v337, %v356
    %358 = vdwg.mxu0
    %359 = vst [vmem:[%s5] sm:$0x3] %v357
    // Predicated region
    $region38: #{convncf_forward.10} parent=1 // pred_check
      _
    $region39: #{convncf_forward.10} parent=1 // pred_check_branch
      %361 = sbr.rel (0) target = $region41
    $region40: #{convncf_forward.10} parent=1 // pred_region
      _
    $region41: #{convncf_forward.10} parent=1 // pred_fallthru
      _
    // Predicated region
    $region42: #{convncf_forward.10} parent=1 // pred_check
      _
    $region43: #{convncf_forward.10} parent=1 // pred_check_branch
      %363 = sbr.rel (0) target = $region45
    $region44: #{convncf_forward.10} parent=1 // pred_region
      _
    $region45: #{convncf_forward.10} parent=1 // pred_fallthru
      _
    %364 = vsyncpa [#allocation3], 1
    %365 = vsyncpa [#allocation5], 1
    %366 = vsyncpa [#allocation8], 1

// kernel: convncf_forward.12
$region0: #{convncf_forward.12}
  #allocation0 [shape = 'u32[]', space=smem, size = 0x4, offset = 0x4, fixed_abs, tag = 'smem constant byte address 0x4 - core index']
  #allocation1 [shape = 'u32[72,128]{1,0:T(1,128)}', space=vmem, size = 0x9000, scoped, tag = 'internal scratch']
  %s0 = inlined_call_operand.hbm [shape: f32[2,1500], index: 0, kind: input, shape index: {}]
  %s1 = inlined_call_operand.hbm [shape: f32[1500,128], index: 1, kind: input, shape index: {}]
  %s2 = inlined_call_operand.hbm [shape: f32[1,128], index: 2, kind: input, shape index: {}]
  %s3 = inlined_call_operand.hbm [shape: f32[128,128], index: 3, kind: input, shape index: {}]
  %s4 = inlined_call_operand.hbm [shape: f32[1,128], index: 4, kind: input, shape index: {}]
  %s5 = inlined_call_operand.vmem [shape: f32[2,128], index: 5, kind: output, shape index: {}]
  %s6 = sld [smem:[#allocation0]]
  $region50: #{convncf_forward.12} parent=0
    _
  %s8 = ssub.s32 1, %s6
  %s9 = scalar_select 0, %s8, %s6
  $region1: #{convncf_forward.12} parent=0
    #allocation2 [shape = 'u8[12288]{0}', space=vmem, size = 0x3000, scoped, tag = 'input window, operand 0, single buffered']
    #allocation3 [shape = 's32[1]{0}', space=sflag, size = 0x4, scoped, tag = 'scoped memory for convncf_forward.12']
    #allocation4 [shape = 'u8[770048]{0}', space=vmem, size = 0xbc000, scoped, tag = 'input window, operand 1, single buffered']
    #allocation5 [shape = 's32[1]{0}', space=sflag, size = 0x4, scoped, tag = 'scoped memory for convncf_forward.12']
    #allocation6 [shape = 'u8[512]{0}', space=vmem, size = 0x400, scoped, tag = 'input window, operand 2, single buffered']
    #allocation7 [shape = 'u8[65536]{0}', space=vmem, size = 0x10000, scoped, tag = 'input window, operand 3, single buffered']
    #allocation8 [shape = 's32[1]{0}', space=sflag, size = 0x4, scoped, tag = 'scoped memory for convncf_forward.12']
    #allocation9 [shape = 'u8[512]{0}', space=vmem, size = 0x400, scoped, tag = 'input window, operand 4, single buffered']
    %10 = vsyncpa [#allocation3], 0
    %11 = vsyncpa [#allocation5], 0
    %12 = vsyncpa [#allocation8], 0
    // Predicated region
    $region2: #{convncf_forward.12} parent=1 // pred_check
      _
    $region3: #{convncf_forward.12} parent=1 // pred_check_branch
      %14 = sbr.rel (0) target = $region5
    $region4: #{convncf_forward.12} parent=1 // pred_region
      %16 = vsyncadd [#allocation3], 0
      %s18 = sshll.u32 %s0, 4
      %s19 = int_to_ptr.hbm [resolvable:$true] %s18
      %s20 = sshll.u32 [#allocation2], 4
      %s21 = int_to_ptr.vmem [resolvable:$true] %s20
      %23 = dma.hbm_to_vmem [thread:$0]  %s19, 384, %s21, [#allocation3]
    $region5: #{convncf_forward.12} parent=1 // pred_fallthru
      _
    // Predicated region
    $region6: #{convncf_forward.12} parent=1 // pred_check
      _
    $region7: #{convncf_forward.12} parent=1 // pred_check_branch
      %25 = sbr.rel (0) target = $region9
    $region8: #{convncf_forward.12} parent=1 // pred_region
      %27 = vsyncadd [#allocation5], 0
      %s28 = sshll.u32 %s1, 4
      %s29 = int_to_ptr.hbm [resolvable:$true] %s28
      %s30 = sshll.u32 [#allocation4], 4
      %s31 = int_to_ptr.vmem [resolvable:$true] %s30
      %36 = dma.hbm_to_vmem [thread:$0]  %s29, 24064, %s31, [#allocation5], 128, 128, 8
    $region9: #{convncf_forward.12} parent=1 // pred_fallthru
      _
    // Predicated region
    $region10: #{convncf_forward.12} parent=1 // pred_check
      _
    $region11: #{convncf_forward.12} parent=1 // pred_check_branch
      %38 = sbr.rel (0) target = $region13
    $region12: #{convncf_forward.12} parent=1 // pred_region
      %40 = vsyncadd [#allocation5], 0
      %s42 = sshll.u32 %s2, 4
      %s43 = int_to_ptr.hbm [resolvable:$true] %s42
      %s44 = sshll.u32 [#allocation6], 4
      %s45 = int_to_ptr.vmem [resolvable:$true] %s44
      %47 = dma.hbm_to_vmem [thread:$0]  %s43, 16, %s45, [#allocation5]
    $region13: #{convncf_forward.12} parent=1 // pred_fallthru
      _
    // Predicated region
    $region14: #{convncf_forward.12} parent=1 // pred_check
      _
    $region15: #{convncf_forward.12} parent=1 // pred_check_branch
      %49 = sbr.rel (0) target = $region17
    $region16: #{convncf_forward.12} parent=1 // pred_region
      %51 = vsyncadd [#allocation8], 0
      %s52 = sshll.u32 %s3, 4
      %s53 = int_to_ptr.hbm [resolvable:$true] %s52
      %s54 = sshll.u32 [#allocation7], 4
      %s55 = int_to_ptr.vmem [resolvable:$true] %s54
      %60 = dma.hbm_to_vmem [thread:$0]  %s53, 2048, %s55, [#allocation8], 128, 128, 8
    $region17: #{convncf_forward.12} parent=1 // pred_fallthru
      _
    // Predicated region
    $region18: #{convncf_forward.12} parent=1 // pred_check
      _
    $region19: #{convncf_forward.12} parent=1 // pred_check_branch
      %62 = sbr.rel (0) target = $region21
    $region20: #{convncf_forward.12} parent=1 // pred_region
      %64 = vsyncadd [#allocation8], 0
      %s66 = sshll.u32 %s4, 4
      %s67 = int_to_ptr.hbm [resolvable:$true] %s66
      %s68 = sshll.u32 [#allocation9], 4
      %s69 = int_to_ptr.vmem [resolvable:$true] %s68
      %71 = dma.hbm_to_vmem [thread:$0]  %s67, 16, %s69, [#allocation8]
    $region21: #{convncf_forward.12} parent=1 // pred_fallthru
      _
    // Predicated region
    $region22: #{convncf_forward.12} parent=1 // pred_check
      _
    $region23: #{convncf_forward.12} parent=1 // pred_check_branch
      %73 = sbr.rel (0) target = $region25
    $region24: #{convncf_forward.12} parent=1 // pred_region
      %75 = dma.done [#allocation3], 384
    $region25: #{convncf_forward.12} parent=1 // pred_fallthru
      _
    // Predicated region
    $region26: #{convncf_forward.12} parent=1 // pred_check
      _
    $region27: #{convncf_forward.12} parent=1 // pred_check_branch
      %77 = sbr.rel (0) target = $region29
    $region28: #{convncf_forward.12} parent=1 // pred_region
      %79 = dma.done [#allocation5], 24064
    $region29: #{convncf_forward.12} parent=1 // pred_fallthru
      _
    // Predicated region
    $region30: #{convncf_forward.12} parent=1 // pred_check
      _
    $region31: #{convncf_forward.12} parent=1 // pred_check_branch
      %81 = sbr.rel (0) target = $region33
    $region32: #{convncf_forward.12} parent=1 // pred_region
      %83 = dma.done [#allocation5], 16
    $region33: #{convncf_forward.12} parent=1 // pred_fallthru
      _
    // Predicated region
    $region34: #{convncf_forward.12} parent=1 // pred_check
      _
    $region35: #{convncf_forward.12} parent=1 // pred_check_branch
      %85 = sbr.rel (0) target = $region37
    $region36: #{convncf_forward.12} parent=1 // pred_region
      %87 = dma.done [#allocation8], 2048
    $region37: #{convncf_forward.12} parent=1 // pred_fallthru
      _
    // Predicated region
    $region38: #{convncf_forward.12} parent=1 // pred_check
      _
    $region39: #{convncf_forward.12} parent=1 // pred_check_branch
      %89 = sbr.rel (0) target = $region41
    $region40: #{convncf_forward.12} parent=1 // pred_region
      %91 = dma.done [#allocation8], 16
    $region41: #{convncf_forward.12} parent=1 // pred_fallthru
      _
    %v92 = vld [vmem:[#allocation2] sm:$0xff]
    %v93 = vld [vmem:[#allocation2 + $0x8] sm:$0xff]
    %v94 = vld [vmem:[#allocation2 + $0x10] sm:$0xff]
    %v95 = vld [vmem:[#allocation4] sm:$0xff]
    %v96 = vld [vmem:[#allocation4 + $0x8] sm:$0xff]
    %v97 = vld [vmem:[#allocation4 + $0x10] sm:$0xff]
    %v98 = vld [vmem:[#allocation4 + $0x18] sm:$0xff]
    %v99 = vld [vmem:[#allocation4 + $0x20] sm:$0xff]
    %v100 = vld [vmem:[#allocation4 + $0x28] sm:$0xff]
    %v101 = vld [vmem:[#allocation4 + $0x30] sm:$0xff]
    %v102 = vld [vmem:[#allocation4 + $0x38] sm:$0xff]
    %v103 = vld [vmem:[#allocation4 + $0x40] sm:$0xff]
    %v104 = vld [vmem:[#allocation4 + $0x48] sm:$0xff]
    %v105 = vld [vmem:[#allocation4 + $0x50] sm:$0xff]
    %v106 = vld [vmem:[#allocation4 + $0x58] sm:$0xff]
    %v107 = vld [vmem:[#allocation4 + $0x60] sm:$0xff]
    %v108 = vld [vmem:[#allocation4 + $0x68] sm:$0xff]
    %v109 = vld [vmem:[#allocation4 + $0x70] sm:$0xff]
    %v110 = vld [vmem:[#allocation4 + $0x78] sm:$0xff]
    %v111 = vld [vmem:[#allocation4 + $0x80] sm:$0xff]
    %v112 = vld [vmem:[#allocation4 + $0x88] sm:$0xff]
    %v113 = vld [vmem:[#allocation4 + $0x90] sm:$0xff]
    %v114 = vld [vmem:[#allocation4 + $0x98] sm:$0xff]
    %v115 = vld [vmem:[#allocation4 + $0xa0] sm:$0xff]
    %v116 = vld [vmem:[#allocation4 + $0xa8] sm:$0xff]
    %v117 = vld [vmem:[#allocation4 + $0xb0] sm:$0xff]
    %v118 = vld [vmem:[#allocation4 + $0xb8] sm:$0xff]
    %v119 = vld [vmem:[#allocation4 + $0xc0] sm:$0xff]
    %v120 = vld [vmem:[#allocation4 + $0xc8] sm:$0xff]
    %v121 = vld [vmem:[#allocation4 + $0xd0] sm:$0xff]
    %v122 = vld [vmem:[#allocation4 + $0xd8] sm:$0xff]
    %v123 = vld [vmem:[#allocation4 + $0xe0] sm:$0xff]
    %v124 = vld [vmem:[#allocation4 + $0xe8] sm:$0xff]
    %v125 = vld [vmem:[#allocation4 + $0xf0] sm:$0xff]
    %v126 = vld [vmem:[#allocation4 + $0xf8] sm:$0xff]
    %v127 = vld [vmem:[#allocation4 + $0x100] sm:$0xff]
    %v128 = vld [vmem:[#allocation4 + $0x108] sm:$0xff]
    %v129 = vld [vmem:[#allocation4 + $0x110] sm:$0xff]
    %v130 = vld [vmem:[#allocation4 + $0x118] sm:$0xff]
    %v131 = vld [vmem:[#allocation4 + $0x120] sm:$0xff]
    %v132 = vld [vmem:[#allocation4 + $0x128] sm:$0xff]
    %v133 = vld [vmem:[#allocation4 + $0x130] sm:$0xff]
    %v134 = vld [vmem:[#allocation4 + $0x138] sm:$0xff]
    %v135 = vld [vmem:[#allocation4 + $0x140] sm:$0xff]
    %v136 = vld [vmem:[#allocation4 + $0x148] sm:$0xff]
    %v137 = vld [vmem:[#allocation4 + $0x150] sm:$0xff]
    %v138 = vld [vmem:[#allocation4 + $0x158] sm:$0xff]
    %v139 = vld [vmem:[#allocation4 + $0x160] sm:$0xff]
    %v140 = vld [vmem:[#allocation4 + $0x168] sm:$0xff]
    %v141 = vld [vmem:[#allocation4 + $0x170] sm:$0xff]
    %v142 = vld [vmem:[#allocation4 + $0x178] sm:$0xff]
    %v143 = vld [vmem:[#allocation4 + $0x180] sm:$0xff]
    %v144 = vld [vmem:[#allocation4 + $0x188] sm:$0xff]
    %v145 = vld [vmem:[#allocation4 + $0x190] sm:$0xff]
    %v146 = vld [vmem:[#allocation4 + $0x198] sm:$0xff]
    %v147 = vld [vmem:[#allocation4 + $0x1a0] sm:$0xff]
    %v148 = vld [vmem:[#allocation4 + $0x1a8] sm:$0xff]
    %v149 = vld [vmem:[#allocation4 + $0x1b0] sm:$0xff]
    %v150 = vld [vmem:[#allocation4 + $0x1b8] sm:$0xff]
    %v151 = vld [vmem:[#allocation4 + $0x1c0] sm:$0xff]
    %v152 = vld [vmem:[#allocation4 + $0x1c8] sm:$0xff]
    %v153 = vld [vmem:[#allocation4 + $0x1d0] sm:$0xff]
    %v154 = vld [vmem:[#allocation4 + $0x1d8] sm:$0xff]
    %v155 = vld [vmem:[#allocation4 + $0x1e0] sm:$0xff]
    %v156 = vld [vmem:[#allocation4 + $0x1e8] sm:$0xff]
    %v157 = vld [vmem:[#allocation4 + $0x1f0] sm:$0xff]
    %v158 = vld [vmem:[#allocation4 + $0x1f8] sm:$0xff]
    %v159 = vld [vmem:[#allocation4 + $0x200] sm:$0xff]
    %v160 = vld [vmem:[#allocation4 + $0x208] sm:$0xff]
    %v161 = vld [vmem:[#allocation4 + $0x210] sm:$0xff]
    %v162 = vld [vmem:[#allocation4 + $0x218] sm:$0xff]
    %v163 = vld [vmem:[#allocation4 + $0x220] sm:$0xff]
    %v164 = vld [vmem:[#allocation4 + $0x228] sm:$0xff]
    %v165 = vld [vmem:[#allocation4 + $0x230] sm:$0xff]
    %v166 = vld [vmem:[#allocation4 + $0x238] sm:$0xff]
    %v167 = vld [vmem:[#allocation4 + $0x240] sm:$0xff]
    %v168 = vld [vmem:[#allocation4 + $0x248] sm:$0xff]
    %v169 = vld [vmem:[#allocation4 + $0x250] sm:$0xff]
    %v170 = vld [vmem:[#allocation4 + $0x258] sm:$0xff]
    %v171 = vld [vmem:[#allocation4 + $0x260] sm:$0xff]
    %v172 = vld [vmem:[#allocation4 + $0x268] sm:$0xff]
    %v173 = vld [vmem:[#allocation4 + $0x270] sm:$0xff]
    %v174 = vld [vmem:[#allocation4 + $0x278] sm:$0xff]
    %v175 = vld [vmem:[#allocation4 + $0x280] sm:$0xff]
    %v176 = vld [vmem:[#allocation4 + $0x288] sm:$0xff]
    %v177 = vld [vmem:[#allocation4 + $0x290] sm:$0xff]
    %v178 = vld [vmem:[#allocation4 + $0x298] sm:$0xff]
    %v179 = vld [vmem:[#allocation4 + $0x2a0] sm:$0xff]
    %v180 = vld [vmem:[#allocation4 + $0x2a8] sm:$0xff]
    %v181 = vld [vmem:[#allocation4 + $0x2b0] sm:$0xff]
    %v182 = vld [vmem:[#allocation4 + $0x2b8] sm:$0xff]
    %v183 = vld [vmem:[#allocation4 + $0x2c0] sm:$0xff]
    %v184 = vld [vmem:[#allocation4 + $0x2c8] sm:$0xff]
    %v185 = vld [vmem:[#allocation4 + $0x2d0] sm:$0xff]
    %v186 = vld [vmem:[#allocation4 + $0x2d8] sm:$0xff]
    %v187 = vld [vmem:[#allocation4 + $0x2e0] sm:$0xff]
    %v188 = vld [vmem:[#allocation4 + $0x2e8] sm:$0xff]
    %v189 = vld [vmem:[#allocation4 + $0x2f0] sm:$0xff]
    %v190 = vld [vmem:[#allocation4 + $0x2f8] sm:$0xff]
    %v191 = vld [vmem:[#allocation4 + $0x300] sm:$0xff]
    %v192 = vld [vmem:[#allocation4 + $0x308] sm:$0xff]
    %v193 = vld [vmem:[#allocation4 + $0x310] sm:$0xff]
    %v194 = vld [vmem:[#allocation4 + $0x318] sm:$0xff]
    %v195 = vld [vmem:[#allocation4 + $0x320] sm:$0xff]
    %v196 = vld [vmem:[#allocation4 + $0x328] sm:$0xff]
    %v197 = vld [vmem:[#allocation4 + $0x330] sm:$0xff]
    %v198 = vld [vmem:[#allocation4 + $0x338] sm:$0xff]
    %v199 = vld [vmem:[#allocation4 + $0x340] sm:$0xff]
    %v200 = vld [vmem:[#allocation4 + $0x348] sm:$0xff]
    %v201 = vld [vmem:[#allocation4 + $0x350] sm:$0xff]
    %v202 = vld [vmem:[#allocation4 + $0x358] sm:$0xff]
    %v203 = vld [vmem:[#allocation4 + $0x360] sm:$0xff]
    %v204 = vld [vmem:[#allocation4 + $0x368] sm:$0xff]
    %v205 = vld [vmem:[#allocation4 + $0x370] sm:$0xff]
    %v206 = vld [vmem:[#allocation4 + $0x378] sm:$0xff]
    %v207 = vld [vmem:[#allocation4 + $0x380] sm:$0xff]
    %v208 = vld [vmem:[#allocation4 + $0x388] sm:$0xff]
    %v209 = vld [vmem:[#allocation4 + $0x390] sm:$0xff]
    %v210 = vld [vmem:[#allocation4 + $0x398] sm:$0xff]
    %v211 = vld [vmem:[#allocation4 + $0x3a0] sm:$0xff]
    %v212 = vld [vmem:[#allocation4 + $0x3a8] sm:$0xff]
    %v213 = vld [vmem:[#allocation4 + $0x3b0] sm:$0xff]
    %v214 = vld [vmem:[#allocation4 + $0x3b8] sm:$0xff]
    %v215 = vld [vmem:[#allocation4 + $0x3c0] sm:$0xff]
    %v216 = vld [vmem:[#allocation4 + $0x3c8] sm:$0xff]
    %v217 = vld [vmem:[#allocation4 + $0x3d0] sm:$0xff]
    %v218 = vld [vmem:[#allocation4 + $0x3d8] sm:$0xff]
    %v219 = vld [vmem:[#allocation4 + $0x3e0] sm:$0xff]
    %v220 = vld [vmem:[#allocation4 + $0x3e8] sm:$0xff]
    %v221 = vld [vmem:[#allocation4 + $0x3f0] sm:$0xff]
    %v222 = vld [vmem:[#allocation4 + $0x3f8] sm:$0xff]
    %v223 = vld [vmem:[#allocation4 + $0x400] sm:$0xff]
    %v224 = vld [vmem:[#allocation4 + $0x408] sm:$0xff]
    %v225 = vld [vmem:[#allocation4 + $0x410] sm:$0xff]
    %v226 = vld [vmem:[#allocation4 + $0x418] sm:$0xff]
    %v227 = vld [vmem:[#allocation4 + $0x420] sm:$0xff]
    %v228 = vld [vmem:[#allocation4 + $0x428] sm:$0xff]
    %v229 = vld [vmem:[#allocation4 + $0x430] sm:$0xff]
    %v230 = vld [vmem:[#allocation4 + $0x438] sm:$0xff]
    %v231 = vld [vmem:[#allocation4 + $0x440] sm:$0xff]
    %v232 = vld [vmem:[#allocation4 + $0x448] sm:$0xff]
    %v233 = vld [vmem:[#allocation4 + $0x450] sm:$0xff]
    %v234 = vld [vmem:[#allocation4 + $0x458] sm:$0xff]
    %v235 = vld [vmem:[#allocation4 + $0x460] sm:$0xff]
    %v236 = vld [vmem:[#allocation4 + $0x468] sm:$0xff]
    %v237 = vld [vmem:[#allocation4 + $0x470] sm:$0xff]
    %v238 = vld [vmem:[#allocation4 + $0x478] sm:$0xff]
    %v239 = vld [vmem:[#allocation4 + $0x480] sm:$0xff]
    %v240 = vld [vmem:[#allocation4 + $0x488] sm:$0xff]
    %v241 = vld [vmem:[#allocation4 + $0x490] sm:$0xff]
    %v242 = vld [vmem:[#allocation4 + $0x498] sm:$0xff]
    %v243 = vld [vmem:[#allocation4 + $0x4a0] sm:$0xff]
    %v244 = vld [vmem:[#allocation4 + $0x4a8] sm:$0xff]
    %v245 = vld [vmem:[#allocation4 + $0x4b0] sm:$0xff]
    %v246 = vld [vmem:[#allocation4 + $0x4b8] sm:$0xff]
    %v247 = vld [vmem:[#allocation4 + $0x4c0] sm:$0xff]
    %v248 = vld [vmem:[#allocation4 + $0x4c8] sm:$0xff]
    %v249 = vld [vmem:[#allocation4 + $0x4d0] sm:$0xff]
    %v250 = vld [vmem:[#allocation4 + $0x4d8] sm:$0xff]
    %v251 = vld [vmem:[#allocation4 + $0x4e0] sm:$0xff]
    %v252 = vld [vmem:[#allocation4 + $0x4e8] sm:$0xff]
    %v253 = vld [vmem:[#allocation4 + $0x4f0] sm:$0xff]
    %v254 = vld [vmem:[#allocation4 + $0x4f8] sm:$0xff]
    %v255 = vld [vmem:[#allocation4 + $0x500] sm:$0xff]
    %v256 = vld [vmem:[#allocation4 + $0x508] sm:$0xff]
    %v257 = vld [vmem:[#allocation4 + $0x510] sm:$0xff]
    %v258 = vld [vmem:[#allocation4 + $0x518] sm:$0xff]
    %v259 = vld [vmem:[#allocation4 + $0x520] sm:$0xff]
    %v260 = vld [vmem:[#allocation4 + $0x528] sm:$0xff]
    %v261 = vld [vmem:[#allocation4 + $0x530] sm:$0xff]
    %v262 = vld [vmem:[#allocation4 + $0x538] sm:$0xff]
    %v263 = vld [vmem:[#allocation4 + $0x540] sm:$0xff]
    %v264 = vld [vmem:[#allocation4 + $0x548] sm:$0xff]
    %v265 = vld [vmem:[#allocation4 + $0x550] sm:$0xff]
    %v266 = vld [vmem:[#allocation4 + $0x558] sm:$0xff]
    %v267 = vld [vmem:[#allocation4 + $0x560] sm:$0xff]
    %v268 = vld [vmem:[#allocation4 + $0x568] sm:$0xff]
    %v269 = vld [vmem:[#allocation4 + $0x570] sm:$0xff]
    %v270 = vld [vmem:[#allocation4 + $0x578] sm:$0xff]
    %v271 = vld [vmem:[#allocation4 + $0x580] sm:$0xff]
    %v272 = vld [vmem:[#allocation4 + $0x588] sm:$0xff]
    %v273 = vld [vmem:[#allocation4 + $0x590] sm:$0xff]
    %v274 = vld [vmem:[#allocation4 + $0x598] sm:$0xff]
    %v275 = vld [vmem:[#allocation4 + $0x5a0] sm:$0xff]
    %v276 = vld [vmem:[#allocation4 + $0x5a8] sm:$0xff]
    %v277 = vld [vmem:[#allocation4 + $0x5b0] sm:$0xff]
    %v278 = vld [vmem:[#allocation4 + $0x5b8] sm:$0xff]
    %v279 = vld [vmem:[#allocation4 + $0x5c0] sm:$0xff]
    %v280 = vld [vmem:[#allocation4 + $0x5c8] sm:$0xff]
    %v281 = vld [vmem:[#allocation4 + $0x5d0] sm:$0xff]
    %v282 = vld [vmem:[#allocation4 + $0x5d8] sm:$0xf]
    %v283 = vld [vmem:[#allocation6] sm:$0x1]
    %v285 = vperm.slane %v283, 0
    %290 = vst [vmem:[#allocation1] ss:$4 sm:$0xff] %v92
    %s291 = scalar_lea.vmem [#allocation1], 32
    %292 = vst [vmem:[%s291] ss:$4 sm:$0xff] %v93
    %v293 = vld.sshfl [vmem:[#allocation1] sm:$0xff pattern:$0x73625140]
    %v294 = vld.sshfl [vmem:[#allocation1 + $0x8] sm:$0xff pattern:$0x73625140]
    %v295 = vld.sshfl [vmem:[#allocation1 + $0x10] sm:$0xff pattern:$0x73625140]
    %v296 = vld.sshfl [vmem:[#allocation1 + $0x18] sm:$0xff pattern:$0x73625140]
    %v297 = vld.sshfl [vmem:[#allocation1 + $0x20] sm:$0xff pattern:$0x73625140]
    %v298 = vld.sshfl [vmem:[#allocation1 + $0x28] sm:$0xff pattern:$0x73625140]
    %v299 = vld.sshfl [vmem:[#allocation1 + $0x30] sm:$0xff pattern:$0x73625140]
    %v300 = vld.sshfl [vmem:[#allocation1 + $0x38] sm:$0xff pattern:$0x73625140]
    %301 = vst [vmem:[#allocation1] ss:$4 sm:$0xff] %v94
    %v302 = vld.sshfl [vmem:[#allocation1] sm:$0xff pattern:$0x73625140]
    %v303 = vld.sshfl [vmem:[#allocation1 + $0x8] sm:$0xff pattern:$0x73625140]
    %v304 = vld.sshfl [vmem:[#allocation1 + $0x10] sm:$0xff pattern:$0x73625140]
    %v305 = vld.sshfl [vmem:[#allocation1 + $0x18] sm:$0xff pattern:$0x73625140]
    %vm317 = vcmask 752640
    %v318 = vsel %vm317, %v305, 0
    %vm320 = vcmask 1043456
    %v322 = vsel %vm320, %v282, 0
    %324 = vmatpush.msra.mxu0 %v110
    %325 = vmatpush.msra.mxu0 %v109
    %326 = vmatpush.msra.mxu0 %v108
    %327 = vmatpush.msra.mxu0 %v107
    %328 = vmatpush.msra.mxu0 %v106
    %329 = vmatpush.msra.mxu0 %v105
    %330 = vmatpush.msra.mxu0 %v104
    %331 = vmatpush.msra.mxu0 %v103
    %332 = vmatpush.msra.mxu0 %v102
    %333 = vmatpush.msra.mxu0 %v101
    %334 = vmatpush.msra.mxu0 %v100
    %335 = vmatpush.msra.mxu0 %v99
    %336 = vmatpush.msra.mxu0 %v98
    %337 = vmatpush.msra.mxu0 %v97
    %338 = vmatpush.msra.mxu0 %v96
    %339 = vmatpush.msra.mxu0 %v95
    %340 = vmatmul.f32.gmra.mxu0 %v293
    %v341 = vpop.f32.mrf.mxu0
    %v342 = vadd.f32 %v285, %v341
    %343 = vdwg.mxu0
    %344 = vmatpush.msra.mxu0 %v126
    %345 = vmatpush.msra.mxu0 %v125
    %346 = vmatpush.msra.mxu0 %v124
    %347 = vmatpush.msra.mxu0 %v123
    %348 = vmatpush.msra.mxu0 %v122
    %349 = vmatpush.msra.mxu0 %v121
    %350 = vmatpush.msra.mxu0 %v120
    %351 = vmatpush.msra.mxu0 %v119
    %352 = vmatpush.msra.mxu0 %v118
    %353 = vmatpush.msra.mxu0 %v117
    %354 = vmatpush.msra.mxu0 %v116
    %355 = vmatpush.msra.mxu0 %v115
    %356 = vmatpush.msra.mxu0 %v114
    %357 = vmatpush.msra.mxu0 %v113
    %358 = vmatpush.msra.mxu0 %v112
    %359 = vmatpush.msra.mxu0 %v111
    %360 = vmatmul.f32.gmra.mxu0 %v294
    %v361 = vpop.f32.mrf.mxu0
    %v362 = vadd.f32 %v342, %v361
    %363 = vdwg.mxu0
    %364 = vmatpush.msra.mxu0 %v142
    %365 = vmatpush.msra.mxu0 %v141
    %366 = vmatpush.msra.mxu0 %v140
    %367 = vmatpush.msra.mxu0 %v139
    %368 = vmatpush.msra.mxu0 %v138
    %369 = vmatpush.msra.mxu0 %v137
    %370 = vmatpush.msra.mxu0 %v136
    %371 = vmatpush.msra.mxu0 %v135
    %372 = vmatpush.msra.mxu0 %v134
    %373 = vmatpush.msra.mxu0 %v133
    %374 = vmatpush.msra.mxu0 %v132
    %375 = vmatpush.msra.mxu0 %v131
    %376 = vmatpush.msra.mxu0 %v130
    %377 = vmatpush.msra.mxu0 %v129
    %378 = vmatpush.msra.mxu0 %v128
    %379 = vmatpush.msra.mxu0 %v127
    %380 = vmatmul.f32.gmra.mxu0 %v295
    %v381 = vpop.f32.mrf.mxu0
    %v382 = vadd.f32 %v362, %v381
    %383 = vdwg.mxu0
    %384 = vmatpush.msra.mxu0 %v158
    %385 = vmatpush.msra.mxu0 %v157
    %386 = vmatpush.msra.mxu0 %v156
    %387 = vmatpush.msra.mxu0 %v155
    %388 = vmatpush.msra.mxu0 %v154
    %389 = vmatpush.msra.mxu0 %v153
    %390 = vmatpush.msra.mxu0 %v152
    %391 = vmatpush.msra.mxu0 %v151
    %392 = vmatpush.msra.mxu0 %v150
    %393 = vmatpush.msra.mxu0 %v149
    %394 = vmatpush.msra.mxu0 %v148
    %395 = vmatpush.msra.mxu0 %v147
    %396 = vmatpush.msra.mxu0 %v146
    %397 = vmatpush.msra.mxu0 %v145
    %398 = vmatpush.msra.mxu0 %v144
    %399 = vmatpush.msra.mxu0 %v143
    %400 = vmatmul.f32.gmra.mxu0 %v296
    %v401 = vpop.f32.mrf.mxu0
    %v402 = vadd.f32 %v382, %v401
    %403 = vdwg.mxu0
    %404 = vmatpush.msra.mxu0 %v174
    %405 = vmatpush.msra.mxu0 %v173
    %406 = vmatpush.msra.mxu0 %v172
    %407 = vmatpush.msra.mxu0 %v171
    %408 = vmatpush.msra.mxu0 %v170
    %409 = vmatpush.msra.mxu0 %v169
    %410 = vmatpush.msra.mxu0 %v168
    %411 = vmatpush.msra.mxu0 %v167
    %412 = vmatpush.msra.mxu0 %v166
    %413 = vmatpush.msra.mxu0 %v165
    %414 = vmatpush.msra.mxu0 %v164
    %415 = vmatpush.msra.mxu0 %v163
    %416 = vmatpush.msra.mxu0 %v162
    %417 = vmatpush.msra.mxu0 %v161
    %418 = vmatpush.msra.mxu0 %v160
    %419 = vmatpush.msra.mxu0 %v159
    %420 = vmatmul.f32.gmra.mxu0 %v297
    %v421 = vpop.f32.mrf.mxu0
    %v422 = vadd.f32 %v402, %v421
    %423 = vdwg.mxu0
    %424 = vmatpush.msra.mxu0 %v190
    %425 = vmatpush.msra.mxu0 %v189
    %426 = vmatpush.msra.mxu0 %v188
    %427 = vmatpush.msra.mxu0 %v187
    %428 = vmatpush.msra.mxu0 %v186
    %429 = vmatpush.msra.mxu0 %v185
    %430 = vmatpush.msra.mxu0 %v184
    %431 = vmatpush.msra.mxu0 %v183
    %432 = vmatpush.msra.mxu0 %v182
    %433 = vmatpush.msra.mxu0 %v181
    %434 = vmatpush.msra.mxu0 %v180
    %435 = vmatpush.msra.mxu0 %v179
    %436 = vmatpush.msra.mxu0 %v178
    %437 = vmatpush.msra.mxu0 %v177
    %438 = vmatpush.msra.mxu0 %v176
    %439 = vmatpush.msra.mxu0 %v175
    %440 = vmatmul.f32.gmra.mxu0 %v298
    %v441 = vpop.f32.mrf.mxu0
    %v442 = vadd.f32 %v422, %v441
    %443 = vdwg.mxu0
    %444 = vmatpush.msra.mxu0 %v206
    %445 = vmatpush.msra.mxu0 %v205
    %446 = vmatpush.msra.mxu0 %v204
    %447 = vmatpush.msra.mxu0 %v203
    %448 = vmatpush.msra.mxu0 %v202
    %449 = vmatpush.msra.mxu0 %v201
    %450 = vmatpush.msra.mxu0 %v200
    %451 = vmatpush.msra.mxu0 %v199
    %452 = vmatpush.msra.mxu0 %v198
    %453 = vmatpush.msra.mxu0 %v197
    %454 = vmatpush.msra.mxu0 %v196
    %455 = vmatpush.msra.mxu0 %v195
    %456 = vmatpush.msra.mxu0 %v194
    %457 = vmatpush.msra.mxu0 %v193
    %458 = vmatpush.msra.mxu0 %v192
    %459 = vmatpush.msra.mxu0 %v191
    %460 = vmatmul.f32.gmra.mxu0 %v299
    %v461 = vpop.f32.mrf.mxu0
    %v462 = vadd.f32 %v442, %v461
    %463 = vdwg.mxu0
    %464 = vmatpush.msra.mxu0 %v222
    %465 = vmatpush.msra.mxu0 %v221
    %466 = vmatpush.msra.mxu0 %v220
    %467 = vmatpush.msra.mxu0 %v219
    %468 = vmatpush.msra.mxu0 %v218
    %469 = vmatpush.msra.mxu0 %v217
    %470 = vmatpush.msra.mxu0 %v216
    %471 = vmatpush.msra.mxu0 %v215
    %472 = vmatpush.msra.mxu0 %v214
    %473 = vmatpush.msra.mxu0 %v213
    %474 = vmatpush.msra.mxu0 %v212
    %475 = vmatpush.msra.mxu0 %v211
    %476 = vmatpush.msra.mxu0 %v210
    %477 = vmatpush.msra.mxu0 %v209
    %478 = vmatpush.msra.mxu0 %v208
    %479 = vmatpush.msra.mxu0 %v207
    %480 = vmatmul.f32.gmra.mxu0 %v300
    %v481 = vpop.f32.mrf.mxu0
    %v482 = vadd.f32 %v462, %v481
    %483 = vdwg.mxu0
    %484 = vmatpush.msra.mxu0 %v238
    %485 = vmatpush.msra.mxu0 %v237
    %486 = vmatpush.msra.mxu0 %v236
    %487 = vmatpush.msra.mxu0 %v235
    %488 = vmatpush.msra.mxu0 %v234
    %489 = vmatpush.msra.mxu0 %v233
    %490 = vmatpush.msra.mxu0 %v232
    %491 = vmatpush.msra.mxu0 %v231
    %492 = vmatpush.msra.mxu0 %v230
    %493 = vmatpush.msra.mxu0 %v229
    %494 = vmatpush.msra.mxu0 %v228
    %495 = vmatpush.msra.mxu0 %v227
    %496 = vmatpush.msra.mxu0 %v226
    %497 = vmatpush.msra.mxu0 %v225
    %498 = vmatpush.msra.mxu0 %v224
    %499 = vmatpush.msra.mxu0 %v223
    %500 = vmatmul.f32.gmra.mxu0 %v302
    %v501 = vpop.f32.mrf.mxu0
    %v502 = vadd.f32 %v482, %v501
    %503 = vdwg.mxu0
    %504 = vmatpush.msra.mxu0 %v254
    %505 = vmatpush.msra.mxu0 %v253
    %506 = vmatpush.msra.mxu0 %v252
    %507 = vmatpush.msra.mxu0 %v251
    %508 = vmatpush.msra.mxu0 %v250
    %509 = vmatpush.msra.mxu0 %v249
    %510 = vmatpush.msra.mxu0 %v248
    %511 = vmatpush.msra.mxu0 %v247
    %512 = vmatpush.msra.mxu0 %v246
    %513 = vmatpush.msra.mxu0 %v245
    %514 = vmatpush.msra.mxu0 %v244
    %515 = vmatpush.msra.mxu0 %v243
    %516 = vmatpush.msra.mxu0 %v242
    %517 = vmatpush.msra.mxu0 %v241
    %518 = vmatpush.msra.mxu0 %v240
    %519 = vmatpush.msra.mxu0 %v239
    %520 = vmatmul.f32.gmra.mxu0 %v303
    %v521 = vpop.f32.mrf.mxu0
    %v522 = vadd.f32 %v502, %v521
    %523 = vdwg.mxu0
    %524 = vmatpush.msra.mxu0 %v270
    %525 = vmatpush.msra.mxu0 %v269
    %526 = vmatpush.msra.mxu0 %v268
    %527 = vmatpush.msra.mxu0 %v267
    %528 = vmatpush.msra.mxu0 %v266
    %529 = vmatpush.msra.mxu0 %v265
    %530 = vmatpush.msra.mxu0 %v264
    %531 = vmatpush.msra.mxu0 %v263
    %532 = vmatpush.msra.mxu0 %v262
    %533 = vmatpush.msra.mxu0 %v261
    %534 = vmatpush.msra.mxu0 %v260
    %535 = vmatpush.msra.mxu0 %v259
    %536 = vmatpush.msra.mxu0 %v258
    %537 = vmatpush.msra.mxu0 %v257
    %538 = vmatpush.msra.mxu0 %v256
    %539 = vmatpush.msra.mxu0 %v255
    %540 = vmatmul.f32.gmra.mxu0 %v304
    %v541 = vpop.f32.mrf.mxu0
    %v542 = vadd.f32 %v522, %v541
    %543 = vdwg.mxu0
    %544 = vmatpush.msra.mxu0 0.0
    %545 = vmatpush.msra.mxu0 0.0
    %546 = vmatpush.msra.mxu0 0.0
    %547 = vmatpush.msra.mxu0 0.0
    %548 = vmatpush.msra.mxu0 %v322
    %549 = vmatpush.msra.mxu0 %v281
    %550 = vmatpush.msra.mxu0 %v280
    %551 = vmatpush.msra.mxu0 %v279
    %552 = vmatpush.msra.mxu0 %v278
    %553 = vmatpush.msra.mxu0 %v277
    %554 = vmatpush.msra.mxu0 %v276
    %555 = vmatpush.msra.mxu0 %v275
    %556 = vmatpush.msra.mxu0 %v274
    %557 = vmatpush.msra.mxu0 %v273
    %558 = vmatpush.msra.mxu0 %v272
    %559 = vmatpush.msra.mxu0 %v271
    %560 = vmatmul.f32.gmra.mxu0 %v318
    %v561 = vpop.f32.mrf.mxu0
    %v562 = vadd.f32 %v542, %v561
    %563 = vdwg.mxu0
    %v564 = vmax.f32 %v562, 0.0
    %v565 = vld [vmem:[#allocation7] sm:$0xff]
    %v566 = vld [vmem:[#allocation7 + $0x8] sm:$0xff]
    %v567 = vld [vmem:[#allocation7 + $0x10] sm:$0xff]
    %v568 = vld [vmem:[#allocation7 + $0x18] sm:$0xff]
    %v569 = vld [vmem:[#allocation7 + $0x20] sm:$0xff]
    %v570 = vld [vmem:[#allocation7 + $0x28] sm:$0xff]
    %v571 = vld [vmem:[#allocation7 + $0x30] sm:$0xff]
    %v572 = vld [vmem:[#allocation7 + $0x38] sm:$0xff]
    %v573 = vld [vmem:[#allocation7 + $0x40] sm:$0xff]
    %v574 = vld [vmem:[#allocation7 + $0x48] sm:$0xff]
    %v575 = vld [vmem:[#allocation7 + $0x50] sm:$0xff]
    %v576 = vld [vmem:[#allocation7 + $0x58] sm:$0xff]
    %v577 = vld [vmem:[#allocation7 + $0x60] sm:$0xff]
    %v578 = vld [vmem:[#allocation7 + $0x68] sm:$0xff]
    %v579 = vld [vmem:[#allocation7 + $0x70] sm:$0xff]
    %v580 = vld [vmem:[#allocation7 + $0x78] sm:$0xff]
    %v581 = vld [vmem:[#allocation9] sm:$0x1]
    %v583 = vperm.slane %v581, 0
    %585 = vmatpush.msra.mxu0 %v580
    %586 = vmatpush.msra.mxu0 %v579
    %587 = vmatpush.msra.mxu0 %v578
    %588 = vmatpush.msra.mxu0 %v577
    %589 = vmatpush.msra.mxu0 %v576
    %590 = vmatpush.msra.mxu0 %v575
    %591 = vmatpush.msra.mxu0 %v574
    %592 = vmatpush.msra.mxu0 %v573
    %593 = vmatpush.msra.mxu0 %v572
    %594 = vmatpush.msra.mxu0 %v571
    %595 = vmatpush.msra.mxu0 %v570
    %596 = vmatpush.msra.mxu0 %v569
    %597 = vmatpush.msra.mxu0 %v568
    %598 = vmatpush.msra.mxu0 %v567
    %599 = vmatpush.msra.mxu0 %v566
    %600 = vmatpush.msra.mxu0 %v565
    %601 = vmatmul.f32.gmra.mxu0 %v564
    %v602 = vpop.f32.mrf.mxu0
    %v603 = vadd.f32 %v583, %v602
    %604 = vdwg.mxu0
    %605 = vst [vmem:[%s5] sm:$0x3] %v603
    // Predicated region
    $region42: #{convncf_forward.12} parent=1 // pred_check
      _
    $region43: #{convncf_forward.12} parent=1 // pred_check_branch
      %607 = sbr.rel (0) target = $region45
    $region44: #{convncf_forward.12} parent=1 // pred_region
      _
    $region45: #{convncf_forward.12} parent=1 // pred_fallthru
      _
    // Predicated region
    $region46: #{convncf_forward.12} parent=1 // pred_check
      _
    $region47: #{convncf_forward.12} parent=1 // pred_check_branch
      %609 = sbr.rel (0) target = $region49
    $region48: #{convncf_forward.12} parent=1 // pred_region
      _
    $region49: #{convncf_forward.12} parent=1 // pred_fallthru
      _
    %610 = vsyncpa [#allocation3], 1
    %611 = vsyncpa [#allocation5], 1
    %612 = vsyncpa [#allocation8], 1

// kernel: convncf_forward.15
$region0: #{convncf_forward.15}
  #allocation0 [shape = 'u32[]', space=smem, size = 0x4, offset = 0x4, fixed_abs, tag = 'smem constant byte address 0x4 - core index']
  #allocation1 [shape = 'u32[72,128]{1,0:T(1,128)}', space=vmem, size = 0x9000, scoped, tag = 'internal scratch']
  %s0 = inlined_call_operand.vmem [shape: f32[2,128], index: 0, kind: input, shape index: {}]
  %s1 = inlined_call_operand.vmem [shape: f32[2,128], index: 1, kind: input, shape index: {}]
  %s2 = inlined_call_operand.vmem [shape: f32[2,128], index: 2, kind: input, shape index: {}]
  %s3 = inlined_call_operand.vmem [shape: f32[2,128], index: 3, kind: input, shape index: {}]
  %s4 = inlined_call_operand.vmem [shape: f32[2,128], index: 4, kind: input, shape index: {}]
  %s5 = inlined_call_operand.hbm [shape: f32[128,128], index: 5, kind: input, shape index: {}]
  %s6 = inlined_call_operand.hbm [shape: f32[1,128], index: 6, kind: input, shape index: {}]
  %s7 = inlined_call_operand.hbm [shape: f32[128,128], index: 7, kind: input, shape index: {}]
  %s8 = inlined_call_operand.hbm [shape: f32[1,128], index: 8, kind: input, shape index: {}]
  %s9 = inlined_call_operand.vmem [shape: f32[2,128], index: 9, kind: output, shape index: {}]
  %s10 = sld [smem:[#allocation0]]
  $region62: #{convncf_forward.15} parent=0
    _
  %s12 = ssub.s32 1, %s10
  %s13 = scalar_select 0, %s12, %s10
  $region1: #{convncf_forward.15} parent=0
    #allocation2 [shape = 'u8[65536]{0}', space=vmem, size = 0x10000, scoped, tag = 'input window, operand 5, single buffered']
    #allocation3 [shape = 's32[1]{0}', space=sflag, size = 0x4, scoped, tag = 'scoped memory for convncf_forward.15']
    #allocation4 [shape = 'u8[512]{0}', space=vmem, size = 0x400, scoped, tag = 'input window, operand 6, single buffered']
    #allocation5 [shape = 's32[1]{0}', space=sflag, size = 0x4, scoped, tag = 'scoped memory for convncf_forward.15']
    #allocation6 [shape = 'u8[65536]{0}', space=vmem, size = 0x10000, scoped, tag = 'input window, operand 7, single buffered']
    #allocation7 [shape = 'u8[512]{0}', space=vmem, size = 0x400, scoped, tag = 'input window, operand 8, single buffered']
    #allocation8 [shape = 's32[1]{0}', space=sflag, size = 0x4, scoped, tag = 'scoped memory for convncf_forward.15']
    %14 = vsyncpa [#allocation3], 0
    %15 = vsyncpa [#allocation5], 0
    %16 = vsyncpa [#allocation8], 0
    // Predicated region
    $region2: #{convncf_forward.15} parent=1 // pred_check
      _
    $region3: #{convncf_forward.15} parent=1 // pred_check_branch
      %18 = sbr.rel (0) target = $region5
    $region4: #{convncf_forward.15} parent=1 // pred_region
      _
    $region5: #{convncf_forward.15} parent=1 // pred_fallthru
      _
    // Predicated region
    $region6: #{convncf_forward.15} parent=1 // pred_check
      _
    $region7: #{convncf_forward.15} parent=1 // pred_check_branch
      %20 = sbr.rel (0) target = $region9
    $region8: #{convncf_forward.15} parent=1 // pred_region
      _
    $region9: #{convncf_forward.15} parent=1 // pred_fallthru
      _
    // Predicated region
    $region10: #{convncf_forward.15} parent=1 // pred_check
      _
    $region11: #{convncf_forward.15} parent=1 // pred_check_branch
      %22 = sbr.rel (0) target = $region13
    $region12: #{convncf_forward.15} parent=1 // pred_region
      _
    $region13: #{convncf_forward.15} parent=1 // pred_fallthru
      _
    // Predicated region
    $region14: #{convncf_forward.15} parent=1 // pred_check
      _
    $region15: #{convncf_forward.15} parent=1 // pred_check_branch
      %24 = sbr.rel (0) target = $region17
    $region16: #{convncf_forward.15} parent=1 // pred_region
      _
    $region17: #{convncf_forward.15} parent=1 // pred_fallthru
      _
    // Predicated region
    $region18: #{convncf_forward.15} parent=1 // pred_check
      _
    $region19: #{convncf_forward.15} parent=1 // pred_check_branch
      %26 = sbr.rel (0) target = $region21
    $region20: #{convncf_forward.15} parent=1 // pred_region
      _
    $region21: #{convncf_forward.15} parent=1 // pred_fallthru
      _
    // Predicated region
    $region22: #{convncf_forward.15} parent=1 // pred_check
      _
    $region23: #{convncf_forward.15} parent=1 // pred_check_branch
      %28 = sbr.rel (0) target = $region25
    $region24: #{convncf_forward.15} parent=1 // pred_region
      %30 = vsyncadd [#allocation3], 0
      %s31 = sshll.u32 %s5, 4
      %s32 = int_to_ptr.hbm [resolvable:$true] %s31
      %s33 = sshll.u32 [#allocation2], 4
      %s34 = int_to_ptr.vmem [resolvable:$true] %s33
      %39 = dma.hbm_to_vmem [thread:$0]  %s32, 2048, %s34, [#allocation3], 128, 128, 8
    $region25: #{convncf_forward.15} parent=1 // pred_fallthru
      _
    // Predicated region
    $region26: #{convncf_forward.15} parent=1 // pred_check
      _
    $region27: #{convncf_forward.15} parent=1 // pred_check_branch
      %41 = sbr.rel (0) target = $region29
    $region28: #{convncf_forward.15} parent=1 // pred_region
      %43 = vsyncadd [#allocation5], 0
      %s45 = sshll.u32 %s6, 4
      %s46 = int_to_ptr.hbm [resolvable:$true] %s45
      %s47 = sshll.u32 [#allocation4], 4
      %s48 = int_to_ptr.vmem [resolvable:$true] %s47
      %50 = dma.hbm_to_vmem [thread:$0]  %s46, 16, %s48, [#allocation5]
    $region29: #{convncf_forward.15} parent=1 // pred_fallthru
      _
    // Predicated region
    $region30: #{convncf_forward.15} parent=1 // pred_check
      _
    $region31: #{convncf_forward.15} parent=1 // pred_check_branch
      %52 = sbr.rel (0) target = $region33
    $region32: #{convncf_forward.15} parent=1 // pred_region
      %54 = vsyncadd [#allocation5], 0
      %s55 = sshll.u32 %s7, 4
      %s56 = int_to_ptr.hbm [resolvable:$true] %s55
      %s57 = sshll.u32 [#allocation6], 4
      %s58 = int_to_ptr.vmem [resolvable:$true] %s57
      %63 = dma.hbm_to_vmem [thread:$0]  %s56, 2048, %s58, [#allocation5], 128, 128, 8
    $region33: #{convncf_forward.15} parent=1 // pred_fallthru
      _
    // Predicated region
    $region34: #{convncf_forward.15} parent=1 // pred_check
      _
    $region35: #{convncf_forward.15} parent=1 // pred_check_branch
      %65 = sbr.rel (0) target = $region37
    $region36: #{convncf_forward.15} parent=1 // pred_region
      %67 = vsyncadd [#allocation8], 0
      %s69 = sshll.u32 %s8, 4
      %s70 = int_to_ptr.hbm [resolvable:$true] %s69
      %s71 = sshll.u32 [#allocation7], 4
      %s72 = int_to_ptr.vmem [resolvable:$true] %s71
      %74 = dma.hbm_to_vmem [thread:$0]  %s70, 16, %s72, [#allocation8]
    $region37: #{convncf_forward.15} parent=1 // pred_fallthru
      _
    // Predicated region
    $region38: #{convncf_forward.15} parent=1 // pred_check
      _
    $region39: #{convncf_forward.15} parent=1 // pred_check_branch
      %76 = sbr.rel (0) target = $region41
    $region40: #{convncf_forward.15} parent=1 // pred_region
      %78 = dma.done [#allocation3], 2048
    $region41: #{convncf_forward.15} parent=1 // pred_fallthru
      _
    // Predicated region
    $region42: #{convncf_forward.15} parent=1 // pred_check
      _
    $region43: #{convncf_forward.15} parent=1 // pred_check_branch
      %80 = sbr.rel (0) target = $region45
    $region44: #{convncf_forward.15} parent=1 // pred_region
      %82 = dma.done [#allocation5], 16
    $region45: #{convncf_forward.15} parent=1 // pred_fallthru
      _
    // Predicated region
    $region46: #{convncf_forward.15} parent=1 // pred_check
      _
    $region47: #{convncf_forward.15} parent=1 // pred_check_branch
      %84 = sbr.rel (0) target = $region49
    $region48: #{convncf_forward.15} parent=1 // pred_region
      %86 = dma.done [#allocation5], 2048
    $region49: #{convncf_forward.15} parent=1 // pred_fallthru
      _
    // Predicated region
    $region50: #{convncf_forward.15} parent=1 // pred_check
      _
    $region51: #{convncf_forward.15} parent=1 // pred_check_branch
      %88 = sbr.rel (0) target = $region53
    $region52: #{convncf_forward.15} parent=1 // pred_region
      %90 = dma.done [#allocation8], 16
    $region53: #{convncf_forward.15} parent=1 // pred_fallthru
      _
    %v91 = vld [vmem:[%s0] sm:$0x3]
    %v92 = vld [vmem:[%s1] sm:$0x3]
    %v93 = vadd.f32 %v91, %v92
    %v94 = vld [vmem:[%s2] sm:$0x3]
    %v95 = vadd.f32 %v93, %v94
    %v96 = vld [vmem:[%s3] sm:$0x3]
    %v97 = vld [vmem:[%s4] sm:$0x3]
    %v98 = vadd.f32 %v96, %v97
    %v99 = vmul.f32 %v95, %v98
    %v100 = vld [vmem:[#allocation2] sm:$0xff]
    %v101 = vld [vmem:[#allocation2 + $0x8] sm:$0xff]
    %v102 = vld [vmem:[#allocation2 + $0x10] sm:$0xff]
    %v103 = vld [vmem:[#allocation2 + $0x18] sm:$0xff]
    %v104 = vld [vmem:[#allocation2 + $0x20] sm:$0xff]
    %v105 = vld [vmem:[#allocation2 + $0x28] sm:$0xff]
    %v106 = vld [vmem:[#allocation2 + $0x30] sm:$0xff]
    %v107 = vld [vmem:[#allocation2 + $0x38] sm:$0xff]
    %v108 = vld [vmem:[#allocation2 + $0x40] sm:$0xff]
    %v109 = vld [vmem:[#allocation2 + $0x48] sm:$0xff]
    %v110 = vld [vmem:[#allocation2 + $0x50] sm:$0xff]
    %v111 = vld [vmem:[#allocation2 + $0x58] sm:$0xff]
    %v112 = vld [vmem:[#allocation2 + $0x60] sm:$0xff]
    %v113 = vld [vmem:[#allocation2 + $0x68] sm:$0xff]
    %v114 = vld [vmem:[#allocation2 + $0x70] sm:$0xff]
    %v115 = vld [vmem:[#allocation2 + $0x78] sm:$0xff]
    %v116 = vld [vmem:[#allocation4] sm:$0x1]
    %v118 = vperm.slane %v116, 0
    %120 = vmatpush.msra.mxu0 %v115
    %121 = vmatpush.msra.mxu0 %v114
    %122 = vmatpush.msra.mxu0 %v113
    %123 = vmatpush.msra.mxu0 %v112
    %124 = vmatpush.msra.mxu0 %v111
    %125 = vmatpush.msra.mxu0 %v110
    %126 = vmatpush.msra.mxu0 %v109
    %127 = vmatpush.msra.mxu0 %v108
    %128 = vmatpush.msra.mxu0 %v107
    %129 = vmatpush.msra.mxu0 %v106
    %130 = vmatpush.msra.mxu0 %v105
    %131 = vmatpush.msra.mxu0 %v104
    %132 = vmatpush.msra.mxu0 %v103
    %133 = vmatpush.msra.mxu0 %v102
    %134 = vmatpush.msra.mxu0 %v101
    %135 = vmatpush.msra.mxu0 %v100
    %136 = vmatmul.f32.gmra.mxu0 %v99
    %v137 = vpop.f32.mrf.mxu0
    %v138 = vadd.f32 %v118, %v137
    %139 = vdwg.mxu0
    %v140 = vmax.f32 %v138, 0.0
    %v141 = vld [vmem:[#allocation6] sm:$0xff]
    %v142 = vld [vmem:[#allocation6 + $0x8] sm:$0xff]
    %v143 = vld [vmem:[#allocation6 + $0x10] sm:$0xff]
    %v144 = vld [vmem:[#allocation6 + $0x18] sm:$0xff]
    %v145 = vld [vmem:[#allocation6 + $0x20] sm:$0xff]
    %v146 = vld [vmem:[#allocation6 + $0x28] sm:$0xff]
    %v147 = vld [vmem:[#allocation6 + $0x30] sm:$0xff]
    %v148 = vld [vmem:[#allocation6 + $0x38] sm:$0xff]
    %v149 = vld [vmem:[#allocation6 + $0x40] sm:$0xff]
    %v150 = vld [vmem:[#allocation6 + $0x48] sm:$0xff]
    %v151 = vld [vmem:[#allocation6 + $0x50] sm:$0xff]
    %v152 = vld [vmem:[#allocation6 + $0x58] sm:$0xff]
    %v153 = vld [vmem:[#allocation6 + $0x60] sm:$0xff]
    %v154 = vld [vmem:[#allocation6 + $0x68] sm:$0xff]
    %v155 = vld [vmem:[#allocation6 + $0x70] sm:$0xff]
    %v156 = vld [vmem:[#allocation6 + $0x78] sm:$0xff]
    %v157 = vld [vmem:[#allocation7] sm:$0x1]
    %v159 = vperm.slane %v157, 0
    %161 = vmatpush.msra.mxu0 %v156
    %162 = vmatpush.msra.mxu0 %v155
    %163 = vmatpush.msra.mxu0 %v154
    %164 = vmatpush.msra.mxu0 %v153
    %165 = vmatpush.msra.mxu0 %v152
    %166 = vmatpush.msra.mxu0 %v151
    %167 = vmatpush.msra.mxu0 %v150
    %168 = vmatpush.msra.mxu0 %v149
    %169 = vmatpush.msra.mxu0 %v148
    %170 = vmatpush.msra.mxu0 %v147
    %171 = vmatpush.msra.mxu0 %v146
    %172 = vmatpush.msra.mxu0 %v145
    %173 = vmatpush.msra.mxu0 %v144
    %174 = vmatpush.msra.mxu0 %v143
    %175 = vmatpush.msra.mxu0 %v142
    %176 = vmatpush.msra.mxu0 %v141
    %177 = vmatmul.f32.gmra.mxu0 %v140
    %v178 = vpop.f32.mrf.mxu0
    %v179 = vadd.f32 %v159, %v178
    %180 = vdwg.mxu0
    %181 = vst [vmem:[%s9] sm:$0x3] %v179
    // Predicated region
    $region54: #{convncf_forward.15} parent=1 // pred_check
      _
    $region55: #{convncf_forward.15} parent=1 // pred_check_branch
      %183 = sbr.rel (0) target = $region57
    $region56: #{convncf_forward.15} parent=1 // pred_region
      _
    $region57: #{convncf_forward.15} parent=1 // pred_fallthru
      _
    // Predicated region
    $region58: #{convncf_forward.15} parent=1 // pred_check
      _
    $region59: #{convncf_forward.15} parent=1 // pred_check_branch
      %185 = sbr.rel (0) target = $region61
    $region60: #{convncf_forward.15} parent=1 // pred_region
      _
    $region61: #{convncf_forward.15} parent=1 // pred_fallthru
      _
    %186 = vsyncpa [#allocation3], 1
    %187 = vsyncpa [#allocation5], 1
    %188 = vsyncpa [#allocation8], 1

// kernel: convncf_forward.13
$region0: #{convncf_forward.13}
  #allocation0 [shape = 'u32[]', space=smem, size = 0x4, offset = 0x4, fixed_abs, tag = 'smem constant byte address 0x4 - core index']
  #allocation1 [shape = 'u32[72,128]{1,0:T(1,128)}', space=vmem, size = 0x9000, scoped, tag = 'internal scratch']
  %s0 = inlined_call_operand.hbm [shape: f32[2,2982], index: 0, kind: input, shape index: {}]
  %s1 = inlined_call_operand.hbm [shape: f32[2982,128], index: 1, kind: input, shape index: {}]
  %s2 = inlined_call_operand.hbm [shape: f32[1,128], index: 2, kind: input, shape index: {}]
  %s3 = inlined_call_operand.hbm [shape: f32[128,128], index: 3, kind: input, shape index: {}]
  %s4 = inlined_call_operand.hbm [shape: f32[1,128], index: 4, kind: input, shape index: {}]
  %s5 = inlined_call_operand.vmem [shape: f32[2,128], index: 5, kind: output, shape index: {}]
  %s6 = sld [smem:[#allocation0]]
  $region50: #{convncf_forward.13} parent=0
    _
  %s8 = ssub.s32 1, %s6
  %s9 = scalar_select 0, %s8, %s6
  $region1: #{convncf_forward.13} parent=0
    #allocation2 [shape = 'u8[24576]{0}', space=vmem, size = 0x6000, scoped, tag = 'input window, operand 0, single buffered']
    #allocation3 [shape = 's32[1]{0}', space=sflag, size = 0x4, scoped, tag = 'scoped memory for convncf_forward.13']
    #allocation4 [shape = 'u8[1527808]{0}', space=vmem, size = 0x175000, scoped, tag = 'input window, operand 1, single buffered']
    #allocation5 [shape = 's32[1]{0}', space=sflag, size = 0x4, scoped, tag = 'scoped memory for convncf_forward.13']
    #allocation6 [shape = 'u8[512]{0}', space=vmem, size = 0x400, scoped, tag = 'input window, operand 2, single buffered']
    #allocation7 [shape = 'u8[65536]{0}', space=vmem, size = 0x10000, scoped, tag = 'input window, operand 3, single buffered']
    #allocation8 [shape = 's32[1]{0}', space=sflag, size = 0x4, scoped, tag = 'scoped memory for convncf_forward.13']
    #allocation9 [shape = 'u8[512]{0}', space=vmem, size = 0x400, scoped, tag = 'input window, operand 4, single buffered']
    %10 = vsyncpa [#allocation3], 0
    %11 = vsyncpa [#allocation5], 0
    %12 = vsyncpa [#allocation8], 0
    // Predicated region
    $region2: #{convncf_forward.13} parent=1 // pred_check
      _
    $region3: #{convncf_forward.13} parent=1 // pred_check_branch
      %14 = sbr.rel (0) target = $region5
    $region4: #{convncf_forward.13} parent=1 // pred_region
      %16 = vsyncadd [#allocation3], 0
      %s18 = sshll.u32 %s0, 4
      %s19 = int_to_ptr.hbm [resolvable:$true] %s18
      %s20 = sshll.u32 [#allocation2], 4
      %s21 = int_to_ptr.vmem [resolvable:$true] %s20
      %23 = dma.hbm_to_vmem [thread:$0]  %s19, 768, %s21, [#allocation3]
    $region5: #{convncf_forward.13} parent=1 // pred_fallthru
      _
    // Predicated region
    $region6: #{convncf_forward.13} parent=1 // pred_check
      _
    $region7: #{convncf_forward.13} parent=1 // pred_check_branch
      %25 = sbr.rel (0) target = $region9
    $region8: #{convncf_forward.13} parent=1 // pred_region
      %27 = vsyncadd [#allocation5], 0
      %s28 = sshll.u32 %s1, 4
      %s29 = int_to_ptr.hbm [resolvable:$true] %s28
      %s30 = sshll.u32 [#allocation4], 4
      %s31 = int_to_ptr.vmem [resolvable:$true] %s30
      %36 = dma.hbm_to_vmem [thread:$0]  %s29, 47744, %s31, [#allocation5], 128, 128, 8
    $region9: #{convncf_forward.13} parent=1 // pred_fallthru
      _
    // Predicated region
    $region10: #{convncf_forward.13} parent=1 // pred_check
      _
    $region11: #{convncf_forward.13} parent=1 // pred_check_branch
      %38 = sbr.rel (0) target = $region13
    $region12: #{convncf_forward.13} parent=1 // pred_region
      %40 = vsyncadd [#allocation5], 0
      %s42 = sshll.u32 %s2, 4
      %s43 = int_to_ptr.hbm [resolvable:$true] %s42
      %s44 = sshll.u32 [#allocation6], 4
      %s45 = int_to_ptr.vmem [resolvable:$true] %s44
      %47 = dma.hbm_to_vmem [thread:$0]  %s43, 16, %s45, [#allocation5]
    $region13: #{convncf_forward.13} parent=1 // pred_fallthru
      _
    // Predicated region
    $region14: #{convncf_forward.13} parent=1 // pred_check
      _
    $region15: #{convncf_forward.13} parent=1 // pred_check_branch
      %49 = sbr.rel (0) target = $region17
    $region16: #{convncf_forward.13} parent=1 // pred_region
      %51 = vsyncadd [#allocation8], 0
      %s52 = sshll.u32 %s3, 4
      %s53 = int_to_ptr.hbm [resolvable:$true] %s52
      %s54 = sshll.u32 [#allocation7], 4
      %s55 = int_to_ptr.vmem [resolvable:$true] %s54
      %60 = dma.hbm_to_vmem [thread:$0]  %s53, 2048, %s55, [#allocation8], 128, 128, 8
    $region17: #{convncf_forward.13} parent=1 // pred_fallthru
      _
    // Predicated region
    $region18: #{convncf_forward.13} parent=1 // pred_check
      _
    $region19: #{convncf_forward.13} parent=1 // pred_check_branch
      %62 = sbr.rel (0) target = $region21
    $region20: #{convncf_forward.13} parent=1 // pred_region
      %64 = vsyncadd [#allocation8], 0
      %s66 = sshll.u32 %s4, 4
      %s67 = int_to_ptr.hbm [resolvable:$true] %s66
      %s68 = sshll.u32 [#allocation9], 4
      %s69 = int_to_ptr.vmem [resolvable:$true] %s68
      %71 = dma.hbm_to_vmem [thread:$0]  %s67, 16, %s69, [#allocation8]
    $region21: #{convncf_forward.13} parent=1 // pred_fallthru
      _
    // Predicated region
    $region22: #{convncf_forward.13} parent=1 // pred_check
      _
    $region23: #{convncf_forward.13} parent=1 // pred_check_branch
      %73 = sbr.rel (0) target = $region25
    $region24: #{convncf_forward.13} parent=1 // pred_region
      %75 = dma.done [#allocation3], 768
    $region25: #{convncf_forward.13} parent=1 // pred_fallthru
      _
    // Predicated region
    $region26: #{convncf_forward.13} parent=1 // pred_check
      _
    $region27: #{convncf_forward.13} parent=1 // pred_check_branch
      %77 = sbr.rel (0) target = $region29
    $region28: #{convncf_forward.13} parent=1 // pred_region
      %79 = dma.done [#allocation5], 47744
    $region29: #{convncf_forward.13} parent=1 // pred_fallthru
      _
    // Predicated region
    $region30: #{convncf_forward.13} parent=1 // pred_check
      _
    $region31: #{convncf_forward.13} parent=1 // pred_check_branch
      %81 = sbr.rel (0) target = $region33
    $region32: #{convncf_forward.13} parent=1 // pred_region
      %83 = dma.done [#allocation5], 16
    $region33: #{convncf_forward.13} parent=1 // pred_fallthru
      _
    // Predicated region
    $region34: #{convncf_forward.13} parent=1 // pred_check
      _
    $region35: #{convncf_forward.13} parent=1 // pred_check_branch
      %85 = sbr.rel (0) target = $region37
    $region36: #{convncf_forward.13} parent=1 // pred_region
      %87 = dma.done [#allocation8], 2048
    $region37: #{convncf_forward.13} parent=1 // pred_fallthru
      _
    // Predicated region
    $region38: #{convncf_forward.13} parent=1 // pred_check
      _
    $region39: #{convncf_forward.13} parent=1 // pred_check_branch
      %89 = sbr.rel (0) target = $region41
    $region40: #{convncf_forward.13} parent=1 // pred_region
      %91 = dma.done [#allocation8], 16
    $region41: #{convncf_forward.13} parent=1 // pred_fallthru
      _
    %v92 = vld [vmem:[#allocation2] sm:$0xff]
    %v93 = vld [vmem:[#allocation2 + $0x8] sm:$0xff]
    %v94 = vld [vmem:[#allocation2 + $0x10] sm:$0xff]
    %v95 = vld [vmem:[#allocation2 + $0x18] sm:$0xff]
    %v96 = vld [vmem:[#allocation2 + $0x20] sm:$0xff]
    %v97 = vld [vmem:[#allocation2 + $0x28] sm:$0xff]
    %v98 = vld [vmem:[#allocation4] sm:$0xff]
    %v99 = vld [vmem:[#allocation4 + $0x8] sm:$0xff]
    %v100 = vld [vmem:[#allocation4 + $0x10] sm:$0xff]
    %v101 = vld [vmem:[#allocation4 + $0x18] sm:$0xff]
    %v102 = vld [vmem:[#allocation4 + $0x20] sm:$0xff]
    %v103 = vld [vmem:[#allocation4 + $0x28] sm:$0xff]
    %v104 = vld [vmem:[#allocation4 + $0x30] sm:$0xff]
    %v105 = vld [vmem:[#allocation4 + $0x38] sm:$0xff]
    %v106 = vld [vmem:[#allocation4 + $0x40] sm:$0xff]
    %v107 = vld [vmem:[#allocation4 + $0x48] sm:$0xff]
    %v108 = vld [vmem:[#allocation4 + $0x50] sm:$0xff]
    %v109 = vld [vmem:[#allocation4 + $0x58] sm:$0xff]
    %v110 = vld [vmem:[#allocation4 + $0x60] sm:$0xff]
    %v111 = vld [vmem:[#allocation4 + $0x68] sm:$0xff]
    %v112 = vld [vmem:[#allocation4 + $0x70] sm:$0xff]
    %v113 = vld [vmem:[#allocation4 + $0x78] sm:$0xff]
    %v114 = vld [vmem:[#allocation4 + $0x80] sm:$0xff]
    %v115 = vld [vmem:[#allocation4 + $0x88] sm:$0xff]
    %v116 = vld [vmem:[#allocation4 + $0x90] sm:$0xff]
    %v117 = vld [vmem:[#allocation4 + $0x98] sm:$0xff]
    %v118 = vld [vmem:[#allocation4 + $0xa0] sm:$0xff]
    %v119 = vld [vmem:[#allocation4 + $0xa8] sm:$0xff]
    %v120 = vld [vmem:[#allocation4 + $0xb0] sm:$0xff]
    %v121 = vld [vmem:[#allocation4 + $0xb8] sm:$0xff]
    %v122 = vld [vmem:[#allocation4 + $0xc0] sm:$0xff]
    %v123 = vld [vmem:[#allocation4 + $0xc8] sm:$0xff]
    %v124 = vld [vmem:[#allocation4 + $0xd0] sm:$0xff]
    %v125 = vld [vmem:[#allocation4 + $0xd8] sm:$0xff]
    %v126 = vld [vmem:[#allocation4 + $0xe0] sm:$0xff]
    %v127 = vld [vmem:[#allocation4 + $0xe8] sm:$0xff]
    %v128 = vld [vmem:[#allocation4 + $0xf0] sm:$0xff]
    %v129 = vld [vmem:[#allocation4 + $0xf8] sm:$0xff]
    %v130 = vld [vmem:[#allocation4 + $0x100] sm:$0xff]
    %v131 = vld [vmem:[#allocation4 + $0x108] sm:$0xff]
    %v132 = vld [vmem:[#allocation4 + $0x110] sm:$0xff]
    %v133 = vld [vmem:[#allocation4 + $0x118] sm:$0xff]
    %v134 = vld [vmem:[#allocation4 + $0x120] sm:$0xff]
    %v135 = vld [vmem:[#allocation4 + $0x128] sm:$0xff]
    %v136 = vld [vmem:[#allocation4 + $0x130] sm:$0xff]
    %v137 = vld [vmem:[#allocation4 + $0x138] sm:$0xff]
    %v138 = vld [vmem:[#allocation4 + $0x140] sm:$0xff]
    %v139 = vld [vmem:[#allocation4 + $0x148] sm:$0xff]
    %v140 = vld [vmem:[#allocation4 + $0x150] sm:$0xff]
    %v141 = vld [vmem:[#allocation4 + $0x158] sm:$0xff]
    %v142 = vld [vmem:[#allocation4 + $0x160] sm:$0xff]
    %v143 = vld [vmem:[#allocation4 + $0x168] sm:$0xff]
    %v144 = vld [vmem:[#allocation4 + $0x170] sm:$0xff]
    %v145 = vld [vmem:[#allocation4 + $0x178] sm:$0xff]
    %v146 = vld [vmem:[#allocation4 + $0x180] sm:$0xff]
    %v147 = vld [vmem:[#allocation4 + $0x188] sm:$0xff]
    %v148 = vld [vmem:[#allocation4 + $0x190] sm:$0xff]
    %v149 = vld [vmem:[#allocation4 + $0x198] sm:$0xff]
    %v150 = vld [vmem:[#allocation4 + $0x1a0] sm:$0xff]
    %v151 = vld [vmem:[#allocation4 + $0x1a8] sm:$0xff]
    %v152 = vld [vmem:[#allocation4 + $0x1b0] sm:$0xff]
    %v153 = vld [vmem:[#allocation4 + $0x1b8] sm:$0xff]
    %v154 = vld [vmem:[#allocation4 + $0x1c0] sm:$0xff]
    %v155 = vld [vmem:[#allocation4 + $0x1c8] sm:$0xff]
    %v156 = vld [vmem:[#allocation4 + $0x1d0] sm:$0xff]
    %v157 = vld [vmem:[#allocation4 + $0x1d8] sm:$0xff]
    %v158 = vld [vmem:[#allocation4 + $0x1e0] sm:$0xff]
    %v159 = vld [vmem:[#allocation4 + $0x1e8] sm:$0xff]
    %v160 = vld [vmem:[#allocation4 + $0x1f0] sm:$0xff]
    %v161 = vld [vmem:[#allocation4 + $0x1f8] sm:$0xff]
    %v162 = vld [vmem:[#allocation4 + $0x200] sm:$0xff]
    %v163 = vld [vmem:[#allocation4 + $0x208] sm:$0xff]
    %v164 = vld [vmem:[#allocation4 + $0x210] sm:$0xff]
    %v165 = vld [vmem:[#allocation4 + $0x218] sm:$0xff]
    %v166 = vld [vmem:[#allocation4 + $0x220] sm:$0xff]
    %v167 = vld [vmem:[#allocation4 + $0x228] sm:$0xff]
    %v168 = vld [vmem:[#allocation4 + $0x230] sm:$0xff]
    %v169 = vld [vmem:[#allocation4 + $0x238] sm:$0xff]
    %v170 = vld [vmem:[#allocation4 + $0x240] sm:$0xff]
    %v171 = vld [vmem:[#allocation4 + $0x248] sm:$0xff]
    %v172 = vld [vmem:[#allocation4 + $0x250] sm:$0xff]
    %v173 = vld [vmem:[#allocation4 + $0x258] sm:$0xff]
    %v174 = vld [vmem:[#allocation4 + $0x260] sm:$0xff]
    %v175 = vld [vmem:[#allocation4 + $0x268] sm:$0xff]
    %v176 = vld [vmem:[#allocation4 + $0x270] sm:$0xff]
    %v177 = vld [vmem:[#allocation4 + $0x278] sm:$0xff]
    %v178 = vld [vmem:[#allocation4 + $0x280] sm:$0xff]
    %v179 = vld [vmem:[#allocation4 + $0x288] sm:$0xff]
    %v180 = vld [vmem:[#allocation4 + $0x290] sm:$0xff]
    %v181 = vld [vmem:[#allocation4 + $0x298] sm:$0xff]
    %v182 = vld [vmem:[#allocation4 + $0x2a0] sm:$0xff]
    %v183 = vld [vmem:[#allocation4 + $0x2a8] sm:$0xff]
    %v184 = vld [vmem:[#allocation4 + $0x2b0] sm:$0xff]
    %v185 = vld [vmem:[#allocation4 + $0x2b8] sm:$0xff]
    %v186 = vld [vmem:[#allocation4 + $0x2c0] sm:$0xff]
    %v187 = vld [vmem:[#allocation4 + $0x2c8] sm:$0xff]
    %v188 = vld [vmem:[#allocation4 + $0x2d0] sm:$0xff]
    %v189 = vld [vmem:[#allocation4 + $0x2d8] sm:$0xff]
    %v190 = vld [vmem:[#allocation4 + $0x2e0] sm:$0xff]
    %v191 = vld [vmem:[#allocation4 + $0x2e8] sm:$0xff]
    %v192 = vld [vmem:[#allocation4 + $0x2f0] sm:$0xff]
    %v193 = vld [vmem:[#allocation4 + $0x2f8] sm:$0xff]
    %v194 = vld [vmem:[#allocation4 + $0x300] sm:$0xff]
    %v195 = vld [vmem:[#allocation4 + $0x308] sm:$0xff]
    %v196 = vld [vmem:[#allocation4 + $0x310] sm:$0xff]
    %v197 = vld [vmem:[#allocation4 + $0x318] sm:$0xff]
    %v198 = vld [vmem:[#allocation4 + $0x320] sm:$0xff]
    %v199 = vld [vmem:[#allocation4 + $0x328] sm:$0xff]
    %v200 = vld [vmem:[#allocation4 + $0x330] sm:$0xff]
    %v201 = vld [vmem:[#allocation4 + $0x338] sm:$0xff]
    %v202 = vld [vmem:[#allocation4 + $0x340] sm:$0xff]
    %v203 = vld [vmem:[#allocation4 + $0x348] sm:$0xff]
    %v204 = vld [vmem:[#allocation4 + $0x350] sm:$0xff]
    %v205 = vld [vmem:[#allocation4 + $0x358] sm:$0xff]
    %v206 = vld [vmem:[#allocation4 + $0x360] sm:$0xff]
    %v207 = vld [vmem:[#allocation4 + $0x368] sm:$0xff]
    %v208 = vld [vmem:[#allocation4 + $0x370] sm:$0xff]
    %v209 = vld [vmem:[#allocation4 + $0x378] sm:$0xff]
    %v210 = vld [vmem:[#allocation4 + $0x380] sm:$0xff]
    %v211 = vld [vmem:[#allocation4 + $0x388] sm:$0xff]
    %v212 = vld [vmem:[#allocation4 + $0x390] sm:$0xff]
    %v213 = vld [vmem:[#allocation4 + $0x398] sm:$0xff]
    %v214 = vld [vmem:[#allocation4 + $0x3a0] sm:$0xff]
    %v215 = vld [vmem:[#allocation4 + $0x3a8] sm:$0xff]
    %v216 = vld [vmem:[#allocation4 + $0x3b0] sm:$0xff]
    %v217 = vld [vmem:[#allocation4 + $0x3b8] sm:$0xff]
    %v218 = vld [vmem:[#allocation4 + $0x3c0] sm:$0xff]
    %v219 = vld [vmem:[#allocation4 + $0x3c8] sm:$0xff]
    %v220 = vld [vmem:[#allocation4 + $0x3d0] sm:$0xff]
    %v221 = vld [vmem:[#allocation4 + $0x3d8] sm:$0xff]
    %v222 = vld [vmem:[#allocation4 + $0x3e0] sm:$0xff]
    %v223 = vld [vmem:[#allocation4 + $0x3e8] sm:$0xff]
    %v224 = vld [vmem:[#allocation4 + $0x3f0] sm:$0xff]
    %v225 = vld [vmem:[#allocation4 + $0x3f8] sm:$0xff]
    %v226 = vld [vmem:[#allocation4 + $0x400] sm:$0xff]
    %v227 = vld [vmem:[#allocation4 + $0x408] sm:$0xff]
    %v228 = vld [vmem:[#allocation4 + $0x410] sm:$0xff]
    %v229 = vld [vmem:[#allocation4 + $0x418] sm:$0xff]
    %v230 = vld [vmem:[#allocation4 + $0x420] sm:$0xff]
    %v231 = vld [vmem:[#allocation4 + $0x428] sm:$0xff]
    %v232 = vld [vmem:[#allocation4 + $0x430] sm:$0xff]
    %v233 = vld [vmem:[#allocation4 + $0x438] sm:$0xff]
    %v234 = vld [vmem:[#allocation4 + $0x440] sm:$0xff]
    %v235 = vld [vmem:[#allocation4 + $0x448] sm:$0xff]
    %v236 = vld [vmem:[#allocation4 + $0x450] sm:$0xff]
    %v237 = vld [vmem:[#allocation4 + $0x458] sm:$0xff]
    %v238 = vld [vmem:[#allocation4 + $0x460] sm:$0xff]
    %v239 = vld [vmem:[#allocation4 + $0x468] sm:$0xff]
    %v240 = vld [vmem:[#allocation4 + $0x470] sm:$0xff]
    %v241 = vld [vmem:[#allocation4 + $0x478] sm:$0xff]
    %v242 = vld [vmem:[#allocation4 + $0x480] sm:$0xff]
    %v243 = vld [vmem:[#allocation4 + $0x488] sm:$0xff]
    %v244 = vld [vmem:[#allocation4 + $0x490] sm:$0xff]
    %v245 = vld [vmem:[#allocation4 + $0x498] sm:$0xff]
    %v246 = vld [vmem:[#allocation4 + $0x4a0] sm:$0xff]
    %v247 = vld [vmem:[#allocation4 + $0x4a8] sm:$0xff]
    %v248 = vld [vmem:[#allocation4 + $0x4b0] sm:$0xff]
    %v249 = vld [vmem:[#allocation4 + $0x4b8] sm:$0xff]
    %v250 = vld [vmem:[#allocation4 + $0x4c0] sm:$0xff]
    %v251 = vld [vmem:[#allocation4 + $0x4c8] sm:$0xff]
    %v252 = vld [vmem:[#allocation4 + $0x4d0] sm:$0xff]
    %v253 = vld [vmem:[#allocation4 + $0x4d8] sm:$0xff]
    %v254 = vld [vmem:[#allocation4 + $0x4e0] sm:$0xff]
    %v255 = vld [vmem:[#allocation4 + $0x4e8] sm:$0xff]
    %v256 = vld [vmem:[#allocation4 + $0x4f0] sm:$0xff]
    %v257 = vld [vmem:[#allocation4 + $0x4f8] sm:$0xff]
    %v258 = vld [vmem:[#allocation4 + $0x500] sm:$0xff]
    %v259 = vld [vmem:[#allocation4 + $0x508] sm:$0xff]
    %v260 = vld [vmem:[#allocation4 + $0x510] sm:$0xff]
    %v261 = vld [vmem:[#allocation4 + $0x518] sm:$0xff]
    %v262 = vld [vmem:[#allocation4 + $0x520] sm:$0xff]
    %v263 = vld [vmem:[#allocation4 + $0x528] sm:$0xff]
    %v264 = vld [vmem:[#allocation4 + $0x530] sm:$0xff]
    %v265 = vld [vmem:[#allocation4 + $0x538] sm:$0xff]
    %v266 = vld [vmem:[#allocation4 + $0x540] sm:$0xff]
    %v267 = vld [vmem:[#allocation4 + $0x548] sm:$0xff]
    %v268 = vld [vmem:[#allocation4 + $0x550] sm:$0xff]
    %v269 = vld [vmem:[#allocation4 + $0x558] sm:$0xff]
    %v270 = vld [vmem:[#allocation4 + $0x560] sm:$0xff]
    %v271 = vld [vmem:[#allocation4 + $0x568] sm:$0xff]
    %v272 = vld [vmem:[#allocation4 + $0x570] sm:$0xff]
    %v273 = vld [vmem:[#allocation4 + $0x578] sm:$0xff]
    %v274 = vld [vmem:[#allocation4 + $0x580] sm:$0xff]
    %v275 = vld [vmem:[#allocation4 + $0x588] sm:$0xff]
    %v276 = vld [vmem:[#allocation4 + $0x590] sm:$0xff]
    %v277 = vld [vmem:[#allocation4 + $0x598] sm:$0xff]
    %v278 = vld [vmem:[#allocation4 + $0x5a0] sm:$0xff]
    %v279 = vld [vmem:[#allocation4 + $0x5a8] sm:$0xff]
    %v280 = vld [vmem:[#allocation4 + $0x5b0] sm:$0xff]
    %v281 = vld [vmem:[#allocation4 + $0x5b8] sm:$0xff]
    %v282 = vld [vmem:[#allocation4 + $0x5c0] sm:$0xff]
    %v283 = vld [vmem:[#allocation4 + $0x5c8] sm:$0xff]
    %v284 = vld [vmem:[#allocation4 + $0x5d0] sm:$0xff]
    %v285 = vld [vmem:[#allocation4 + $0x5d8] sm:$0xff]
    %v286 = vld [vmem:[#allocation4 + $0x5e0] sm:$0xff]
    %v287 = vld [vmem:[#allocation4 + $0x5e8] sm:$0xff]
    %v288 = vld [vmem:[#allocation4 + $0x5f0] sm:$0xff]
    %v289 = vld [vmem:[#allocation4 + $0x5f8] sm:$0xff]
    %v290 = vld [vmem:[#allocation4 + $0x600] sm:$0xff]
    %v291 = vld [vmem:[#allocation4 + $0x608] sm:$0xff]
    %v292 = vld [vmem:[#allocation4 + $0x610] sm:$0xff]
    %v293 = vld [vmem:[#allocation4 + $0x618] sm:$0xff]
    %v294 = vld [vmem:[#allocation4 + $0x620] sm:$0xff]
    %v295 = vld [vmem:[#allocation4 + $0x628] sm:$0xff]
    %v296 = vld [vmem:[#allocation4 + $0x630] sm:$0xff]
    %v297 = vld [vmem:[#allocation4 + $0x638] sm:$0xff]
    %v298 = vld [vmem:[#allocation4 + $0x640] sm:$0xff]
    %v299 = vld [vmem:[#allocation4 + $0x648] sm:$0xff]
    %v300 = vld [vmem:[#allocation4 + $0x650] sm:$0xff]
    %v301 = vld [vmem:[#allocation4 + $0x658] sm:$0xff]
    %v302 = vld [vmem:[#allocation4 + $0x660] sm:$0xff]
    %v303 = vld [vmem:[#allocation4 + $0x668] sm:$0xff]
    %v304 = vld [vmem:[#allocation4 + $0x670] sm:$0xff]
    %v305 = vld [vmem:[#allocation4 + $0x678] sm:$0xff]
    %v306 = vld [vmem:[#allocation4 + $0x680] sm:$0xff]
    %v307 = vld [vmem:[#allocation4 + $0x688] sm:$0xff]
    %v308 = vld [vmem:[#allocation4 + $0x690] sm:$0xff]
    %v309 = vld [vmem:[#allocation4 + $0x698] sm:$0xff]
    %v310 = vld [vmem:[#allocation4 + $0x6a0] sm:$0xff]
    %v311 = vld [vmem:[#allocation4 + $0x6a8] sm:$0xff]
    %v312 = vld [vmem:[#allocation4 + $0x6b0] sm:$0xff]
    %v313 = vld [vmem:[#allocation4 + $0x6b8] sm:$0xff]
    %v314 = vld [vmem:[#allocation4 + $0x6c0] sm:$0xff]
    %v315 = vld [vmem:[#allocation4 + $0x6c8] sm:$0xff]
    %v316 = vld [vmem:[#allocation4 + $0x6d0] sm:$0xff]
    %v317 = vld [vmem:[#allocation4 + $0x6d8] sm:$0xff]
    %v318 = vld [vmem:[#allocation4 + $0x6e0] sm:$0xff]
    %v319 = vld [vmem:[#allocation4 + $0x6e8] sm:$0xff]
    %v320 = vld [vmem:[#allocation4 + $0x6f0] sm:$0xff]
    %v321 = vld [vmem:[#allocation4 + $0x6f8] sm:$0xff]
    %v322 = vld [vmem:[#allocation4 + $0x700] sm:$0xff]
    %v323 = vld [vmem:[#allocation4 + $0x708] sm:$0xff]
    %v324 = vld [vmem:[#allocation4 + $0x710] sm:$0xff]
    %v325 = vld [vmem:[#allocation4 + $0x718] sm:$0xff]
    %v326 = vld [vmem:[#allocation4 + $0x720] sm:$0xff]
    %v327 = vld [vmem:[#allocation4 + $0x728] sm:$0xff]
    %v328 = vld [vmem:[#allocation4 + $0x730] sm:$0xff]
    %v329 = vld [vmem:[#allocation4 + $0x738] sm:$0xff]
    %v330 = vld [vmem:[#allocation4 + $0x740] sm:$0xff]
    %v331 = vld [vmem:[#allocation4 + $0x748] sm:$0xff]
    %v332 = vld [vmem:[#allocation4 + $0x750] sm:$0xff]
    %v333 = vld [vmem:[#allocation4 + $0x758] sm:$0xff]
    %v334 = vld [vmem:[#allocation4 + $0x760] sm:$0xff]
    %v335 = vld [vmem:[#allocation4 + $0x768] sm:$0xff]
    %v336 = vld [vmem:[#allocation4 + $0x770] sm:$0xff]
    %v337 = vld [vmem:[#allocation4 + $0x778] sm:$0xff]
    %v338 = vld [vmem:[#allocation4 + $0x780] sm:$0xff]
    %v339 = vld [vmem:[#allocation4 + $0x788] sm:$0xff]
    %v340 = vld [vmem:[#allocation4 + $0x790] sm:$0xff]
    %v341 = vld [vmem:[#allocation4 + $0x798] sm:$0xff]
    %v342 = vld [vmem:[#allocation4 + $0x7a0] sm:$0xff]
    %v343 = vld [vmem:[#allocation4 + $0x7a8] sm:$0xff]
    %v344 = vld [vmem:[#allocation4 + $0x7b0] sm:$0xff]
    %v345 = vld [vmem:[#allocation4 + $0x7b8] sm:$0xff]
    %v346 = vld [vmem:[#allocation4 + $0x7c0] sm:$0xff]
    %v347 = vld [vmem:[#allocation4 + $0x7c8] sm:$0xff]
    %v348 = vld [vmem:[#allocation4 + $0x7d0] sm:$0xff]
    %v349 = vld [vmem:[#allocation4 + $0x7d8] sm:$0xff]
    %v350 = vld [vmem:[#allocation4 + $0x7e0] sm:$0xff]
    %v351 = vld [vmem:[#allocation4 + $0x7e8] sm:$0xff]
    %v352 = vld [vmem:[#allocation4 + $0x7f0] sm:$0xff]
    %v353 = vld [vmem:[#allocation4 + $0x7f8] sm:$0xff]
    %v354 = vld [vmem:[#allocation4 + $0x800] sm:$0xff]
    %v355 = vld [vmem:[#allocation4 + $0x808] sm:$0xff]
    %v356 = vld [vmem:[#allocation4 + $0x810] sm:$0xff]
    %v357 = vld [vmem:[#allocation4 + $0x818] sm:$0xff]
    %v358 = vld [vmem:[#allocation4 + $0x820] sm:$0xff]
    %v359 = vld [vmem:[#allocation4 + $0x828] sm:$0xff]
    %v360 = vld [vmem:[#allocation4 + $0x830] sm:$0xff]
    %v361 = vld [vmem:[#allocation4 + $0x838] sm:$0xff]
    %v362 = vld [vmem:[#allocation4 + $0x840] sm:$0xff]
    %v363 = vld [vmem:[#allocation4 + $0x848] sm:$0xff]
    %v364 = vld [vmem:[#allocation4 + $0x850] sm:$0xff]
    %v365 = vld [vmem:[#allocation4 + $0x858] sm:$0xff]
    %v366 = vld [vmem:[#allocation4 + $0x860] sm:$0xff]
    %v367 = vld [vmem:[#allocation4 + $0x868] sm:$0xff]
    %v368 = vld [vmem:[#allocation4 + $0x870] sm:$0xff]
    %v369 = vld [vmem:[#allocation4 + $0x878] sm:$0xff]
    %v370 = vld [vmem:[#allocation4 + $0x880] sm:$0xff]
    %v371 = vld [vmem:[#allocation4 + $0x888] sm:$0xff]
    %v372 = vld [vmem:[#allocation4 + $0x890] sm:$0xff]
    %v373 = vld [vmem:[#allocation4 + $0x898] sm:$0xff]
    %v374 = vld [vmem:[#allocation4 + $0x8a0] sm:$0xff]
    %v375 = vld [vmem:[#allocation4 + $0x8a8] sm:$0xff]
    %v376 = vld [vmem:[#allocation4 + $0x8b0] sm:$0xff]
    %v377 = vld [vmem:[#allocation4 + $0x8b8] sm:$0xff]
    %v378 = vld [vmem:[#allocation4 + $0x8c0] sm:$0xff]
    %v379 = vld [vmem:[#allocation4 + $0x8c8] sm:$0xff]
    %v380 = vld [vmem:[#allocation4 + $0x8d0] sm:$0xff]
    %v381 = vld [vmem:[#allocation4 + $0x8d8] sm:$0xff]
    %v382 = vld [vmem:[#allocation4 + $0x8e0] sm:$0xff]
    %v383 = vld [vmem:[#allocation4 + $0x8e8] sm:$0xff]
    %v384 = vld [vmem:[#allocation4 + $0x8f0] sm:$0xff]
    %v385 = vld [vmem:[#allocation4 + $0x8f8] sm:$0xff]
    %v386 = vld [vmem:[#allocation4 + $0x900] sm:$0xff]
    %v387 = vld [vmem:[#allocation4 + $0x908] sm:$0xff]
    %v388 = vld [vmem:[#allocation4 + $0x910] sm:$0xff]
    %v389 = vld [vmem:[#allocation4 + $0x918] sm:$0xff]
    %v390 = vld [vmem:[#allocation4 + $0x920] sm:$0xff]
    %v391 = vld [vmem:[#allocation4 + $0x928] sm:$0xff]
    %v392 = vld [vmem:[#allocation4 + $0x930] sm:$0xff]
    %v393 = vld [vmem:[#allocation4 + $0x938] sm:$0xff]
    %v394 = vld [vmem:[#allocation4 + $0x940] sm:$0xff]
    %v395 = vld [vmem:[#allocation4 + $0x948] sm:$0xff]
    %v396 = vld [vmem:[#allocation4 + $0x950] sm:$0xff]
    %v397 = vld [vmem:[#allocation4 + $0x958] sm:$0xff]
    %v398 = vld [vmem:[#allocation4 + $0x960] sm:$0xff]
    %v399 = vld [vmem:[#allocation4 + $0x968] sm:$0xff]
    %v400 = vld [vmem:[#allocation4 + $0x970] sm:$0xff]
    %v401 = vld [vmem:[#allocation4 + $0x978] sm:$0xff]
    %v402 = vld [vmem:[#allocation4 + $0x980] sm:$0xff]
    %v403 = vld [vmem:[#allocation4 + $0x988] sm:$0xff]
    %v404 = vld [vmem:[#allocation4 + $0x990] sm:$0xff]
    %v405 = vld [vmem:[#allocation4 + $0x998] sm:$0xff]
    %v406 = vld [vmem:[#allocation4 + $0x9a0] sm:$0xff]
    %v407 = vld [vmem:[#allocation4 + $0x9a8] sm:$0xff]
    %v408 = vld [vmem:[#allocation4 + $0x9b0] sm:$0xff]
    %v409 = vld [vmem:[#allocation4 + $0x9b8] sm:$0xff]
    %v410 = vld [vmem:[#allocation4 + $0x9c0] sm:$0xff]
    %v411 = vld [vmem:[#allocation4 + $0x9c8] sm:$0xff]
    %v412 = vld [vmem:[#allocation4 + $0x9d0] sm:$0xff]
    %v413 = vld [vmem:[#allocation4 + $0x9d8] sm:$0xff]
    %v414 = vld [vmem:[#allocation4 + $0x9e0] sm:$0xff]
    %v415 = vld [vmem:[#allocation4 + $0x9e8] sm:$0xff]
    %v416 = vld [vmem:[#allocation4 + $0x9f0] sm:$0xff]
    %v417 = vld [vmem:[#allocation4 + $0x9f8] sm:$0xff]
    %v418 = vld [vmem:[#allocation4 + $0xa00] sm:$0xff]
    %v419 = vld [vmem:[#allocation4 + $0xa08] sm:$0xff]
    %v420 = vld [vmem:[#allocation4 + $0xa10] sm:$0xff]
    %v421 = vld [vmem:[#allocation4 + $0xa18] sm:$0xff]
    %v422 = vld [vmem:[#allocation4 + $0xa20] sm:$0xff]
    %v423 = vld [vmem:[#allocation4 + $0xa28] sm:$0xff]
    %v424 = vld [vmem:[#allocation4 + $0xa30] sm:$0xff]
    %v425 = vld [vmem:[#allocation4 + $0xa38] sm:$0xff]
    %v426 = vld [vmem:[#allocation4 + $0xa40] sm:$0xff]
    %v427 = vld [vmem:[#allocation4 + $0xa48] sm:$0xff]
    %v428 = vld [vmem:[#allocation4 + $0xa50] sm:$0xff]
    %v429 = vld [vmem:[#allocation4 + $0xa58] sm:$0xff]
    %v430 = vld [vmem:[#allocation4 + $0xa60] sm:$0xff]
    %v431 = vld [vmem:[#allocation4 + $0xa68] sm:$0xff]
    %v432 = vld [vmem:[#allocation4 + $0xa70] sm:$0xff]
    %v433 = vld [vmem:[#allocation4 + $0xa78] sm:$0xff]
    %v434 = vld [vmem:[#allocation4 + $0xa80] sm:$0xff]
    %v435 = vld [vmem:[#allocation4 + $0xa88] sm:$0xff]
    %v436 = vld [vmem:[#allocation4 + $0xa90] sm:$0xff]
    %v437 = vld [vmem:[#allocation4 + $0xa98] sm:$0xff]
    %v438 = vld [vmem:[#allocation4 + $0xaa0] sm:$0xff]
    %v439 = vld [vmem:[#allocation4 + $0xaa8] sm:$0xff]
    %v440 = vld [vmem:[#allocation4 + $0xab0] sm:$0xff]
    %v441 = vld [vmem:[#allocation4 + $0xab8] sm:$0xff]
    %v442 = vld [vmem:[#allocation4 + $0xac0] sm:$0xff]
    %v443 = vld [vmem:[#allocation4 + $0xac8] sm:$0xff]
    %v444 = vld [vmem:[#allocation4 + $0xad0] sm:$0xff]
    %v445 = vld [vmem:[#allocation4 + $0xad8] sm:$0xff]
    %v446 = vld [vmem:[#allocation4 + $0xae0] sm:$0xff]
    %v447 = vld [vmem:[#allocation4 + $0xae8] sm:$0xff]
    %v448 = vld [vmem:[#allocation4 + $0xaf0] sm:$0xff]
    %v449 = vld [vmem:[#allocation4 + $0xaf8] sm:$0xff]
    %v450 = vld [vmem:[#allocation4 + $0xb00] sm:$0xff]
    %v451 = vld [vmem:[#allocation4 + $0xb08] sm:$0xff]
    %v452 = vld [vmem:[#allocation4 + $0xb10] sm:$0xff]
    %v453 = vld [vmem:[#allocation4 + $0xb18] sm:$0xff]
    %v454 = vld [vmem:[#allocation4 + $0xb20] sm:$0xff]
    %v455 = vld [vmem:[#allocation4 + $0xb28] sm:$0xff]
    %v456 = vld [vmem:[#allocation4 + $0xb30] sm:$0xff]
    %v457 = vld [vmem:[#allocation4 + $0xb38] sm:$0xff]
    %v458 = vld [vmem:[#allocation4 + $0xb40] sm:$0xff]
    %v459 = vld [vmem:[#allocation4 + $0xb48] sm:$0xff]
    %v460 = vld [vmem:[#allocation4 + $0xb50] sm:$0xff]
    %v461 = vld [vmem:[#allocation4 + $0xb58] sm:$0xff]
    %v462 = vld [vmem:[#allocation4 + $0xb60] sm:$0xff]
    %v463 = vld [vmem:[#allocation4 + $0xb68] sm:$0xff]
    %v464 = vld [vmem:[#allocation4 + $0xb70] sm:$0xff]
    %v465 = vld [vmem:[#allocation4 + $0xb78] sm:$0xff]
    %v466 = vld [vmem:[#allocation4 + $0xb80] sm:$0xff]
    %v467 = vld [vmem:[#allocation4 + $0xb88] sm:$0xff]
    %v468 = vld [vmem:[#allocation4 + $0xb90] sm:$0xff]
    %v469 = vld [vmem:[#allocation4 + $0xb98] sm:$0xff]
    %v470 = vld [vmem:[#allocation4 + $0xba0] sm:$0x3f]
    %v471 = vld [vmem:[#allocation6] sm:$0x1]
    %v473 = vperm.slane %v471, 0
    %481 = vst [vmem:[#allocation1] ss:$4 sm:$0xff] %v92
    %s482 = scalar_lea.vmem [#allocation1], 32
    %483 = vst [vmem:[%s482] ss:$4 sm:$0xff] %v93
    %v484 = vld.sshfl [vmem:[#allocation1] sm:$0xff pattern:$0x73625140]
    %v485 = vld.sshfl [vmem:[#allocation1 + $0x8] sm:$0xff pattern:$0x73625140]
    %v486 = vld.sshfl [vmem:[#allocation1 + $0x10] sm:$0xff pattern:$0x73625140]
    %v487 = vld.sshfl [vmem:[#allocation1 + $0x18] sm:$0xff pattern:$0x73625140]
    %v488 = vld.sshfl [vmem:[#allocation1 + $0x20] sm:$0xff pattern:$0x73625140]
    %v489 = vld.sshfl [vmem:[#allocation1 + $0x28] sm:$0xff pattern:$0x73625140]
    %v490 = vld.sshfl [vmem:[#allocation1 + $0x30] sm:$0xff pattern:$0x73625140]
    %v491 = vld.sshfl [vmem:[#allocation1 + $0x38] sm:$0xff pattern:$0x73625140]
    %492 = vst [vmem:[#allocation1] ss:$4 sm:$0xff] %v94
    %493 = vst [vmem:[%s482] ss:$4 sm:$0xff] %v95
    %v494 = vld.sshfl [vmem:[#allocation1] sm:$0xff pattern:$0x73625140]
    %v495 = vld.sshfl [vmem:[#allocation1 + $0x8] sm:$0xff pattern:$0x73625140]
    %v496 = vld.sshfl [vmem:[#allocation1 + $0x10] sm:$0xff pattern:$0x73625140]
    %v497 = vld.sshfl [vmem:[#allocation1 + $0x18] sm:$0xff pattern:$0x73625140]
    %v498 = vld.sshfl [vmem:[#allocation1 + $0x20] sm:$0xff pattern:$0x73625140]
    %v499 = vld.sshfl [vmem:[#allocation1 + $0x28] sm:$0xff pattern:$0x73625140]
    %v500 = vld.sshfl [vmem:[#allocation1 + $0x30] sm:$0xff pattern:$0x73625140]
    %v501 = vld.sshfl [vmem:[#allocation1 + $0x38] sm:$0xff pattern:$0x73625140]
    %502 = vst [vmem:[#allocation1] ss:$4 sm:$0xff] %v96
    %503 = vst [vmem:[%s482] ss:$4 sm:$0xff] %v97
    %v504 = vld.sshfl [vmem:[#allocation1] sm:$0xff pattern:$0x73625140]
    %v505 = vld.sshfl [vmem:[#allocation1 + $0x8] sm:$0xff pattern:$0x73625140]
    %v506 = vld.sshfl [vmem:[#allocation1 + $0x10] sm:$0xff pattern:$0x73625140]
    %v507 = vld.sshfl [vmem:[#allocation1 + $0x18] sm:$0xff pattern:$0x73625140]
    %v508 = vld.sshfl [vmem:[#allocation1 + $0x20] sm:$0xff pattern:$0x73625140]
    %v509 = vld.sshfl [vmem:[#allocation1 + $0x28] sm:$0xff pattern:$0x73625140]
    %v510 = vld.sshfl [vmem:[#allocation1 + $0x30] sm:$0xff pattern:$0x73625140]
    %v511 = vld.sshfl [vmem:[#allocation1 + $0x38] sm:$0xff pattern:$0x73625140]
    %vm535 = vcmask 310272
    %v536 = vsel %vm535, %v511, 0
    %vm538 = vcmask 1045504
    %v540 = vsel %vm538, %v470, 0
    %542 = vmatpush.msra.mxu0 %v113
    %543 = vmatpush.msra.mxu0 %v112
    %544 = vmatpush.msra.mxu0 %v111
    %545 = vmatpush.msra.mxu0 %v110
    %546 = vmatpush.msra.mxu0 %v109
    %547 = vmatpush.msra.mxu0 %v108
    %548 = vmatpush.msra.mxu0 %v107
    %549 = vmatpush.msra.mxu0 %v106
    %550 = vmatpush.msra.mxu0 %v105
    %551 = vmatpush.msra.mxu0 %v104
    %552 = vmatpush.msra.mxu0 %v103
    %553 = vmatpush.msra.mxu0 %v102
    %554 = vmatpush.msra.mxu0 %v101
    %555 = vmatpush.msra.mxu0 %v100
    %556 = vmatpush.msra.mxu0 %v99
    %557 = vmatpush.msra.mxu0 %v98
    %558 = vmatmul.f32.gmra.mxu0 %v484
    %v559 = vpop.f32.mrf.mxu0
    %v560 = vadd.f32 %v473, %v559
    %561 = vdwg.mxu0
    %562 = vmatpush.msra.mxu0 %v129
    %563 = vmatpush.msra.mxu0 %v128
    %564 = vmatpush.msra.mxu0 %v127
    %565 = vmatpush.msra.mxu0 %v126
    %566 = vmatpush.msra.mxu0 %v125
    %567 = vmatpush.msra.mxu0 %v124
    %568 = vmatpush.msra.mxu0 %v123
    %569 = vmatpush.msra.mxu0 %v122
    %570 = vmatpush.msra.mxu0 %v121
    %571 = vmatpush.msra.mxu0 %v120
    %572 = vmatpush.msra.mxu0 %v119
    %573 = vmatpush.msra.mxu0 %v118
    %574 = vmatpush.msra.mxu0 %v117
    %575 = vmatpush.msra.mxu0 %v116
    %576 = vmatpush.msra.mxu0 %v115
    %577 = vmatpush.msra.mxu0 %v114
    %578 = vmatmul.f32.gmra.mxu0 %v485
    %v579 = vpop.f32.mrf.mxu0
    %v580 = vadd.f32 %v560, %v579
    %581 = vdwg.mxu0
    %582 = vmatpush.msra.mxu0 %v145
    %583 = vmatpush.msra.mxu0 %v144
    %584 = vmatpush.msra.mxu0 %v143
    %585 = vmatpush.msra.mxu0 %v142
    %586 = vmatpush.msra.mxu0 %v141
    %587 = vmatpush.msra.mxu0 %v140
    %588 = vmatpush.msra.mxu0 %v139
    %589 = vmatpush.msra.mxu0 %v138
    %590 = vmatpush.msra.mxu0 %v137
    %591 = vmatpush.msra.mxu0 %v136
    %592 = vmatpush.msra.mxu0 %v135
    %593 = vmatpush.msra.mxu0 %v134
    %594 = vmatpush.msra.mxu0 %v133
    %595 = vmatpush.msra.mxu0 %v132
    %596 = vmatpush.msra.mxu0 %v131
    %597 = vmatpush.msra.mxu0 %v130
    %598 = vmatmul.f32.gmra.mxu0 %v486
    %v599 = vpop.f32.mrf.mxu0
    %v600 = vadd.f32 %v580, %v599
    %601 = vdwg.mxu0
    %602 = vmatpush.msra.mxu0 %v161
    %603 = vmatpush.msra.mxu0 %v160
    %604 = vmatpush.msra.mxu0 %v159
    %605 = vmatpush.msra.mxu0 %v158
    %606 = vmatpush.msra.mxu0 %v157
    %607 = vmatpush.msra.mxu0 %v156
    %608 = vmatpush.msra.mxu0 %v155
    %609 = vmatpush.msra.mxu0 %v154
    %610 = vmatpush.msra.mxu0 %v153
    %611 = vmatpush.msra.mxu0 %v152
    %612 = vmatpush.msra.mxu0 %v151
    %613 = vmatpush.msra.mxu0 %v150
    %614 = vmatpush.msra.mxu0 %v149
    %615 = vmatpush.msra.mxu0 %v148
    %616 = vmatpush.msra.mxu0 %v147
    %617 = vmatpush.msra.mxu0 %v146
    %618 = vmatmul.f32.gmra.mxu0 %v487
    %v619 = vpop.f32.mrf.mxu0
    %v620 = vadd.f32 %v600, %v619
    %621 = vdwg.mxu0
    %622 = vmatpush.msra.mxu0 %v177
    %623 = vmatpush.msra.mxu0 %v176
    %624 = vmatpush.msra.mxu0 %v175
    %625 = vmatpush.msra.mxu0 %v174
    %626 = vmatpush.msra.mxu0 %v173
    %627 = vmatpush.msra.mxu0 %v172
    %628 = vmatpush.msra.mxu0 %v171
    %629 = vmatpush.msra.mxu0 %v170
    %630 = vmatpush.msra.mxu0 %v169
    %631 = vmatpush.msra.mxu0 %v168
    %632 = vmatpush.msra.mxu0 %v167
    %633 = vmatpush.msra.mxu0 %v166
    %634 = vmatpush.msra.mxu0 %v165
    %635 = vmatpush.msra.mxu0 %v164
    %636 = vmatpush.msra.mxu0 %v163
    %637 = vmatpush.msra.mxu0 %v162
    %638 = vmatmul.f32.gmra.mxu0 %v488
    %v639 = vpop.f32.mrf.mxu0
    %v640 = vadd.f32 %v620, %v639
    %641 = vdwg.mxu0
    %642 = vmatpush.msra.mxu0 %v193
    %643 = vmatpush.msra.mxu0 %v192
    %644 = vmatpush.msra.mxu0 %v191
    %645 = vmatpush.msra.mxu0 %v190
    %646 = vmatpush.msra.mxu0 %v189
    %647 = vmatpush.msra.mxu0 %v188
    %648 = vmatpush.msra.mxu0 %v187
    %649 = vmatpush.msra.mxu0 %v186
    %650 = vmatpush.msra.mxu0 %v185
    %651 = vmatpush.msra.mxu0 %v184
    %652 = vmatpush.msra.mxu0 %v183
    %653 = vmatpush.msra.mxu0 %v182
    %654 = vmatpush.msra.mxu0 %v181
    %655 = vmatpush.msra.mxu0 %v180
    %656 = vmatpush.msra.mxu0 %v179
    %657 = vmatpush.msra.mxu0 %v178
    %658 = vmatmul.f32.gmra.mxu0 %v489
    %v659 = vpop.f32.mrf.mxu0
    %v660 = vadd.f32 %v640, %v659
    %661 = vdwg.mxu0
    %662 = vmatpush.msra.mxu0 %v209
    %663 = vmatpush.msra.mxu0 %v208
    %664 = vmatpush.msra.mxu0 %v207
    %665 = vmatpush.msra.mxu0 %v206
    %666 = vmatpush.msra.mxu0 %v205
    %667 = vmatpush.msra.mxu0 %v204
    %668 = vmatpush.msra.mxu0 %v203
    %669 = vmatpush.msra.mxu0 %v202
    %670 = vmatpush.msra.mxu0 %v201
    %671 = vmatpush.msra.mxu0 %v200
    %672 = vmatpush.msra.mxu0 %v199
    %673 = vmatpush.msra.mxu0 %v198
    %674 = vmatpush.msra.mxu0 %v197
    %675 = vmatpush.msra.mxu0 %v196
    %676 = vmatpush.msra.mxu0 %v195
    %677 = vmatpush.msra.mxu0 %v194
    %678 = vmatmul.f32.gmra.mxu0 %v490
    %v679 = vpop.f32.mrf.mxu0
    %v680 = vadd.f32 %v660, %v679
    %681 = vdwg.mxu0
    %682 = vmatpush.msra.mxu0 %v225
    %683 = vmatpush.msra.mxu0 %v224
    %684 = vmatpush.msra.mxu0 %v223
    %685 = vmatpush.msra.mxu0 %v222
    %686 = vmatpush.msra.mxu0 %v221
    %687 = vmatpush.msra.mxu0 %v220
    %688 = vmatpush.msra.mxu0 %v219
    %689 = vmatpush.msra.mxu0 %v218
    %690 = vmatpush.msra.mxu0 %v217
    %691 = vmatpush.msra.mxu0 %v216
    %692 = vmatpush.msra.mxu0 %v215
    %693 = vmatpush.msra.mxu0 %v214
    %694 = vmatpush.msra.mxu0 %v213
    %695 = vmatpush.msra.mxu0 %v212
    %696 = vmatpush.msra.mxu0 %v211
    %697 = vmatpush.msra.mxu0 %v210
    %698 = vmatmul.f32.gmra.mxu0 %v491
    %v699 = vpop.f32.mrf.mxu0
    %v700 = vadd.f32 %v680, %v699
    %701 = vdwg.mxu0
    %702 = vmatpush.msra.mxu0 %v241
    %703 = vmatpush.msra.mxu0 %v240
    %704 = vmatpush.msra.mxu0 %v239
    %705 = vmatpush.msra.mxu0 %v238
    %706 = vmatpush.msra.mxu0 %v237
    %707 = vmatpush.msra.mxu0 %v236
    %708 = vmatpush.msra.mxu0 %v235
    %709 = vmatpush.msra.mxu0 %v234
    %710 = vmatpush.msra.mxu0 %v233
    %711 = vmatpush.msra.mxu0 %v232
    %712 = vmatpush.msra.mxu0 %v231
    %713 = vmatpush.msra.mxu0 %v230
    %714 = vmatpush.msra.mxu0 %v229
    %715 = vmatpush.msra.mxu0 %v228
    %716 = vmatpush.msra.mxu0 %v227
    %717 = vmatpush.msra.mxu0 %v226
    %718 = vmatmul.f32.gmra.mxu0 %v494
    %v719 = vpop.f32.mrf.mxu0
    %v720 = vadd.f32 %v700, %v719
    %721 = vdwg.mxu0
    %722 = vmatpush.msra.mxu0 %v257
    %723 = vmatpush.msra.mxu0 %v256
    %724 = vmatpush.msra.mxu0 %v255
    %725 = vmatpush.msra.mxu0 %v254
    %726 = vmatpush.msra.mxu0 %v253
    %727 = vmatpush.msra.mxu0 %v252
    %728 = vmatpush.msra.mxu0 %v251
    %729 = vmatpush.msra.mxu0 %v250
    %730 = vmatpush.msra.mxu0 %v249
    %731 = vmatpush.msra.mxu0 %v248
    %732 = vmatpush.msra.mxu0 %v247
    %733 = vmatpush.msra.mxu0 %v246
    %734 = vmatpush.msra.mxu0 %v245
    %735 = vmatpush.msra.mxu0 %v244
    %736 = vmatpush.msra.mxu0 %v243
    %737 = vmatpush.msra.mxu0 %v242
    %738 = vmatmul.f32.gmra.mxu0 %v495
    %v739 = vpop.f32.mrf.mxu0
    %v740 = vadd.f32 %v720, %v739
    %741 = vdwg.mxu0
    %742 = vmatpush.msra.mxu0 %v273
    %743 = vmatpush.msra.mxu0 %v272
    %744 = vmatpush.msra.mxu0 %v271
    %745 = vmatpush.msra.mxu0 %v270
    %746 = vmatpush.msra.mxu0 %v269
    %747 = vmatpush.msra.mxu0 %v268
    %748 = vmatpush.msra.mxu0 %v267
    %749 = vmatpush.msra.mxu0 %v266
    %750 = vmatpush.msra.mxu0 %v265
    %751 = vmatpush.msra.mxu0 %v264
    %752 = vmatpush.msra.mxu0 %v263
    %753 = vmatpush.msra.mxu0 %v262
    %754 = vmatpush.msra.mxu0 %v261
    %755 = vmatpush.msra.mxu0 %v260
    %756 = vmatpush.msra.mxu0 %v259
    %757 = vmatpush.msra.mxu0 %v258
    %758 = vmatmul.f32.gmra.mxu0 %v496
    %v759 = vpop.f32.mrf.mxu0
    %v760 = vadd.f32 %v740, %v759
    %761 = vdwg.mxu0
    %762 = vmatpush.msra.mxu0 %v289
    %763 = vmatpush.msra.mxu0 %v288
    %764 = vmatpush.msra.mxu0 %v287
    %765 = vmatpush.msra.mxu0 %v286
    %766 = vmatpush.msra.mxu0 %v285
    %767 = vmatpush.msra.mxu0 %v284
    %768 = vmatpush.msra.mxu0 %v283
    %769 = vmatpush.msra.mxu0 %v282
    %770 = vmatpush.msra.mxu0 %v281
    %771 = vmatpush.msra.mxu0 %v280
    %772 = vmatpush.msra.mxu0 %v279
    %773 = vmatpush.msra.mxu0 %v278
    %774 = vmatpush.msra.mxu0 %v277
    %775 = vmatpush.msra.mxu0 %v276
    %776 = vmatpush.msra.mxu0 %v275
    %777 = vmatpush.msra.mxu0 %v274
    %778 = vmatmul.f32.gmra.mxu0 %v497
    %v779 = vpop.f32.mrf.mxu0
    %v780 = vadd.f32 %v760, %v779
    %781 = vdwg.mxu0
    %782 = vmatpush.msra.mxu0 %v305
    %783 = vmatpush.msra.mxu0 %v304
    %784 = vmatpush.msra.mxu0 %v303
    %785 = vmatpush.msra.mxu0 %v302
    %786 = vmatpush.msra.mxu0 %v301
    %787 = vmatpush.msra.mxu0 %v300
    %788 = vmatpush.msra.mxu0 %v299
    %789 = vmatpush.msra.mxu0 %v298
    %790 = vmatpush.msra.mxu0 %v297
    %791 = vmatpush.msra.mxu0 %v296
    %792 = vmatpush.msra.mxu0 %v295
    %793 = vmatpush.msra.mxu0 %v294
    %794 = vmatpush.msra.mxu0 %v293
    %795 = vmatpush.msra.mxu0 %v292
    %796 = vmatpush.msra.mxu0 %v291
    %797 = vmatpush.msra.mxu0 %v290
    %798 = vmatmul.f32.gmra.mxu0 %v498
    %v799 = vpop.f32.mrf.mxu0
    %v800 = vadd.f32 %v780, %v799
    %801 = vdwg.mxu0
    %802 = vmatpush.msra.mxu0 %v321
    %803 = vmatpush.msra.mxu0 %v320
    %804 = vmatpush.msra.mxu0 %v319
    %805 = vmatpush.msra.mxu0 %v318
    %806 = vmatpush.msra.mxu0 %v317
    %807 = vmatpush.msra.mxu0 %v316
    %808 = vmatpush.msra.mxu0 %v315
    %809 = vmatpush.msra.mxu0 %v314
    %810 = vmatpush.msra.mxu0 %v313
    %811 = vmatpush.msra.mxu0 %v312
    %812 = vmatpush.msra.mxu0 %v311
    %813 = vmatpush.msra.mxu0 %v310
    %814 = vmatpush.msra.mxu0 %v309
    %815 = vmatpush.msra.mxu0 %v308
    %816 = vmatpush.msra.mxu0 %v307
    %817 = vmatpush.msra.mxu0 %v306
    %818 = vmatmul.f32.gmra.mxu0 %v499
    %v819 = vpop.f32.mrf.mxu0
    %v820 = vadd.f32 %v800, %v819
    %821 = vdwg.mxu0
    %822 = vmatpush.msra.mxu0 %v337
    %823 = vmatpush.msra.mxu0 %v336
    %824 = vmatpush.msra.mxu0 %v335
    %825 = vmatpush.msra.mxu0 %v334
    %826 = vmatpush.msra.mxu0 %v333
    %827 = vmatpush.msra.mxu0 %v332
    %828 = vmatpush.msra.mxu0 %v331
    %829 = vmatpush.msra.mxu0 %v330
    %830 = vmatpush.msra.mxu0 %v329
    %831 = vmatpush.msra.mxu0 %v328
    %832 = vmatpush.msra.mxu0 %v327
    %833 = vmatpush.msra.mxu0 %v326
    %834 = vmatpush.msra.mxu0 %v325
    %835 = vmatpush.msra.mxu0 %v324
    %836 = vmatpush.msra.mxu0 %v323
    %837 = vmatpush.msra.mxu0 %v322
    %838 = vmatmul.f32.gmra.mxu0 %v500
    %v839 = vpop.f32.mrf.mxu0
    %v840 = vadd.f32 %v820, %v839
    %841 = vdwg.mxu0
    %842 = vmatpush.msra.mxu0 %v353
    %843 = vmatpush.msra.mxu0 %v352
    %844 = vmatpush.msra.mxu0 %v351
    %845 = vmatpush.msra.mxu0 %v350
    %846 = vmatpush.msra.mxu0 %v349
    %847 = vmatpush.msra.mxu0 %v348
    %848 = vmatpush.msra.mxu0 %v347
    %849 = vmatpush.msra.mxu0 %v346
    %850 = vmatpush.msra.mxu0 %v345
    %851 = vmatpush.msra.mxu0 %v344
    %852 = vmatpush.msra.mxu0 %v343
    %853 = vmatpush.msra.mxu0 %v342
    %854 = vmatpush.msra.mxu0 %v341
    %855 = vmatpush.msra.mxu0 %v340
    %856 = vmatpush.msra.mxu0 %v339
    %857 = vmatpush.msra.mxu0 %v338
    %858 = vmatmul.f32.gmra.mxu0 %v501
    %v859 = vpop.f32.mrf.mxu0
    %v860 = vadd.f32 %v840, %v859
    %861 = vdwg.mxu0
    %862 = vmatpush.msra.mxu0 %v369
    %863 = vmatpush.msra.mxu0 %v368
    %864 = vmatpush.msra.mxu0 %v367
    %865 = vmatpush.msra.mxu0 %v366
    %866 = vmatpush.msra.mxu0 %v365
    %867 = vmatpush.msra.mxu0 %v364
    %868 = vmatpush.msra.mxu0 %v363
    %869 = vmatpush.msra.mxu0 %v362
    %870 = vmatpush.msra.mxu0 %v361
    %871 = vmatpush.msra.mxu0 %v360
    %872 = vmatpush.msra.mxu0 %v359
    %873 = vmatpush.msra.mxu0 %v358
    %874 = vmatpush.msra.mxu0 %v357
    %875 = vmatpush.msra.mxu0 %v356
    %876 = vmatpush.msra.mxu0 %v355
    %877 = vmatpush.msra.mxu0 %v354
    %878 = vmatmul.f32.gmra.mxu0 %v504
    %v879 = vpop.f32.mrf.mxu0
    %v880 = vadd.f32 %v860, %v879
    %881 = vdwg.mxu0
    %882 = vmatpush.msra.mxu0 %v385
    %883 = vmatpush.msra.mxu0 %v384
    %884 = vmatpush.msra.mxu0 %v383
    %885 = vmatpush.msra.mxu0 %v382
    %886 = vmatpush.msra.mxu0 %v381
    %887 = vmatpush.msra.mxu0 %v380
    %888 = vmatpush.msra.mxu0 %v379
    %889 = vmatpush.msra.mxu0 %v378
    %890 = vmatpush.msra.mxu0 %v377
    %891 = vmatpush.msra.mxu0 %v376
    %892 = vmatpush.msra.mxu0 %v375
    %893 = vmatpush.msra.mxu0 %v374
    %894 = vmatpush.msra.mxu0 %v373
    %895 = vmatpush.msra.mxu0 %v372
    %896 = vmatpush.msra.mxu0 %v371
    %897 = vmatpush.msra.mxu0 %v370
    %898 = vmatmul.f32.gmra.mxu0 %v505
    %v899 = vpop.f32.mrf.mxu0
    %v900 = vadd.f32 %v880, %v899
    %901 = vdwg.mxu0
    %902 = vmatpush.msra.mxu0 %v401
    %903 = vmatpush.msra.mxu0 %v400
    %904 = vmatpush.msra.mxu0 %v399
    %905 = vmatpush.msra.mxu0 %v398
    %906 = vmatpush.msra.mxu0 %v397
    %907 = vmatpush.msra.mxu0 %v396
    %908 = vmatpush.msra.mxu0 %v395
    %909 = vmatpush.msra.mxu0 %v394
    %910 = vmatpush.msra.mxu0 %v393
    %911 = vmatpush.msra.mxu0 %v392
    %912 = vmatpush.msra.mxu0 %v391
    %913 = vmatpush.msra.mxu0 %v390
    %914 = vmatpush.msra.mxu0 %v389
    %915 = vmatpush.msra.mxu0 %v388
    %916 = vmatpush.msra.mxu0 %v387
    %917 = vmatpush.msra.mxu0 %v386
    %918 = vmatmul.f32.gmra.mxu0 %v506
    %v919 = vpop.f32.mrf.mxu0
    %v920 = vadd.f32 %v900, %v919
    %921 = vdwg.mxu0
    %922 = vmatpush.msra.mxu0 %v417
    %923 = vmatpush.msra.mxu0 %v416
    %924 = vmatpush.msra.mxu0 %v415
    %925 = vmatpush.msra.mxu0 %v414
    %926 = vmatpush.msra.mxu0 %v413
    %927 = vmatpush.msra.mxu0 %v412
    %928 = vmatpush.msra.mxu0 %v411
    %929 = vmatpush.msra.mxu0 %v410
    %930 = vmatpush.msra.mxu0 %v409
    %931 = vmatpush.msra.mxu0 %v408
    %932 = vmatpush.msra.mxu0 %v407
    %933 = vmatpush.msra.mxu0 %v406
    %934 = vmatpush.msra.mxu0 %v405
    %935 = vmatpush.msra.mxu0 %v404
    %936 = vmatpush.msra.mxu0 %v403
    %937 = vmatpush.msra.mxu0 %v402
    %938 = vmatmul.f32.gmra.mxu0 %v507
    %v939 = vpop.f32.mrf.mxu0
    %v940 = vadd.f32 %v920, %v939
    %941 = vdwg.mxu0
    %942 = vmatpush.msra.mxu0 %v433
    %943 = vmatpush.msra.mxu0 %v432
    %944 = vmatpush.msra.mxu0 %v431
    %945 = vmatpush.msra.mxu0 %v430
    %946 = vmatpush.msra.mxu0 %v429
    %947 = vmatpush.msra.mxu0 %v428
    %948 = vmatpush.msra.mxu0 %v427
    %949 = vmatpush.msra.mxu0 %v426
    %950 = vmatpush.msra.mxu0 %v425
    %951 = vmatpush.msra.mxu0 %v424
    %952 = vmatpush.msra.mxu0 %v423
    %953 = vmatpush.msra.mxu0 %v422
    %954 = vmatpush.msra.mxu0 %v421
    %955 = vmatpush.msra.mxu0 %v420
    %956 = vmatpush.msra.mxu0 %v419
    %957 = vmatpush.msra.mxu0 %v418
    %958 = vmatmul.f32.gmra.mxu0 %v508
    %v959 = vpop.f32.mrf.mxu0
    %v960 = vadd.f32 %v940, %v959
    %961 = vdwg.mxu0
    %962 = vmatpush.msra.mxu0 %v449
    %963 = vmatpush.msra.mxu0 %v448
    %964 = vmatpush.msra.mxu0 %v447
    %965 = vmatpush.msra.mxu0 %v446
    %966 = vmatpush.msra.mxu0 %v445
    %967 = vmatpush.msra.mxu0 %v444
    %968 = vmatpush.msra.mxu0 %v443
    %969 = vmatpush.msra.mxu0 %v442
    %970 = vmatpush.msra.mxu0 %v441
    %971 = vmatpush.msra.mxu0 %v440
    %972 = vmatpush.msra.mxu0 %v439
    %973 = vmatpush.msra.mxu0 %v438
    %974 = vmatpush.msra.mxu0 %v437
    %975 = vmatpush.msra.mxu0 %v436
    %976 = vmatpush.msra.mxu0 %v435
    %977 = vmatpush.msra.mxu0 %v434
    %978 = vmatmul.f32.gmra.mxu0 %v509
    %v979 = vpop.f32.mrf.mxu0
    %v980 = vadd.f32 %v960, %v979
    %981 = vdwg.mxu0
    %982 = vmatpush.msra.mxu0 %v465
    %983 = vmatpush.msra.mxu0 %v464
    %984 = vmatpush.msra.mxu0 %v463
    %985 = vmatpush.msra.mxu0 %v462
    %986 = vmatpush.msra.mxu0 %v461
    %987 = vmatpush.msra.mxu0 %v460
    %988 = vmatpush.msra.mxu0 %v459
    %989 = vmatpush.msra.mxu0 %v458
    %990 = vmatpush.msra.mxu0 %v457
    %991 = vmatpush.msra.mxu0 %v456
    %992 = vmatpush.msra.mxu0 %v455
    %993 = vmatpush.msra.mxu0 %v454
    %994 = vmatpush.msra.mxu0 %v453
    %995 = vmatpush.msra.mxu0 %v452
    %996 = vmatpush.msra.mxu0 %v451
    %997 = vmatpush.msra.mxu0 %v450
    %998 = vmatmul.f32.gmra.mxu0 %v510
    %v999 = vpop.f32.mrf.mxu0
    %v1000 = vadd.f32 %v980, %v999
    %1001 = vdwg.mxu0
    %1002 = vmatpush.msra.mxu0 0.0
    %1003 = vmatpush.msra.mxu0 0.0
    %1004 = vmatpush.msra.mxu0 0.0
    %1005 = vmatpush.msra.mxu0 0.0
    %1006 = vmatpush.msra.mxu0 0.0
    %1007 = vmatpush.msra.mxu0 0.0
    %1008 = vmatpush.msra.mxu0 0.0
    %1009 = vmatpush.msra.mxu0 0.0
    %1010 = vmatpush.msra.mxu0 0.0
    %1011 = vmatpush.msra.mxu0 0.0
    %1012 = vmatpush.msra.mxu0 0.0
    %1013 = vmatpush.msra.mxu0 %v540
    %1014 = vmatpush.msra.mxu0 %v469
    %1015 = vmatpush.msra.mxu0 %v468
    %1016 = vmatpush.msra.mxu0 %v467
    %1017 = vmatpush.msra.mxu0 %v466
    %1018 = vmatmul.f32.gmra.mxu0 %v536
    %v1019 = vpop.f32.mrf.mxu0
    %v1020 = vadd.f32 %v1000, %v1019
    %1021 = vdwg.mxu0
    %v1022 = vmax.f32 %v1020, 0.0
    %v1023 = vld [vmem:[#allocation7] sm:$0xff]
    %v1024 = vld [vmem:[#allocation7 + $0x8] sm:$0xff]
    %v1025 = vld [vmem:[#allocation7 + $0x10] sm:$0xff]
    %v1026 = vld [vmem:[#allocation7 + $0x18] sm:$0xff]
    %v1027 = vld [vmem:[#allocation7 + $0x20] sm:$0xff]
    %v1028 = vld [vmem:[#allocation7 + $0x28] sm:$0xff]
    %v1029 = vld [vmem:[#allocation7 + $0x30] sm:$0xff]
    %v1030 = vld [vmem:[#allocation7 + $0x38] sm:$0xff]
    %v1031 = vld [vmem:[#allocation7 + $0x40] sm:$0xff]
    %v1032 = vld [vmem:[#allocation7 + $0x48] sm:$0xff]
    %v1033 = vld [vmem:[#allocation7 + $0x50] sm:$0xff]
    %v1034 = vld [vmem:[#allocation7 + $0x58] sm:$0xff]
    %v1035 = vld [vmem:[#allocation7 + $0x60] sm:$0xff]
    %v1036 = vld [vmem:[#allocation7 + $0x68] sm:$0xff]
    %v1037 = vld [vmem:[#allocation7 + $0x70] sm:$0xff]
    %v1038 = vld [vmem:[#allocation7 + $0x78] sm:$0xff]
    %v1039 = vld [vmem:[#allocation9] sm:$0x1]
    %v1041 = vperm.slane %v1039, 0
    %1043 = vmatpush.msra.mxu0 %v1038
    %1044 = vmatpush.msra.mxu0 %v1037
    %1045 = vmatpush.msra.mxu0 %v1036
    %1046 = vmatpush.msra.mxu0 %v1035
    %1047 = vmatpush.msra.mxu0 %v1034
    %1048 = vmatpush.msra.mxu0 %v1033
    %1049 = vmatpush.msra.mxu0 %v1032
    %1050 = vmatpush.msra.mxu0 %v1031
    %1051 = vmatpush.msra.mxu0 %v1030
    %1052 = vmatpush.msra.mxu0 %v1029
    %1053 = vmatpush.msra.mxu0 %v1028
    %1054 = vmatpush.msra.mxu0 %v1027
    %1055 = vmatpush.msra.mxu0 %v1026
    %1056 = vmatpush.msra.mxu0 %v1025
    %1057 = vmatpush.msra.mxu0 %v1024
    %1058 = vmatpush.msra.mxu0 %v1023
    %1059 = vmatmul.f32.gmra.mxu0 %v1022
    %v1060 = vpop.f32.mrf.mxu0
    %v1061 = vadd.f32 %v1041, %v1060
    %1062 = vdwg.mxu0
    %1063 = vst [vmem:[%s5] sm:$0x3] %v1061
    // Predicated region
    $region42: #{convncf_forward.13} parent=1 // pred_check
      _
    $region43: #{convncf_forward.13} parent=1 // pred_check_branch
      %1065 = sbr.rel (0) target = $region45
    $region44: #{convncf_forward.13} parent=1 // pred_region
      _
    $region45: #{convncf_forward.13} parent=1 // pred_fallthru
      _
    // Predicated region
    $region46: #{convncf_forward.13} parent=1 // pred_check
      _
    $region47: #{convncf_forward.13} parent=1 // pred_check_branch
      %1067 = sbr.rel (0) target = $region49
    $region48: #{convncf_forward.13} parent=1 // pred_region
      _
    $region49: #{convncf_forward.13} parent=1 // pred_fallthru
      _
    %1068 = vsyncpa [#allocation3], 1
    %1069 = vsyncpa [#allocation5], 1
    %1070 = vsyncpa [#allocation8], 1

// kernel: convncf_forward.17
$region0: #{convncf_forward.17}
  #allocation0 [shape = 'u32[]', space=smem, size = 0x4, offset = 0x4, fixed_abs, tag = 'smem constant byte address 0x4 - core index']
  #allocation1 [shape = 'u32[72,128]{1,0:T(1,128)}', space=vmem, size = 0x9000, scoped, tag = 'internal scratch']
  %s0 = inlined_call_operand.vmem [shape: f32[2,128], index: 0, kind: input, shape index: {}]
  %s1 = inlined_call_operand.vmem [shape: f32[2,128], index: 1, kind: input, shape index: {}]
  %s2 = inlined_call_operand.vmem [shape: f32[128,128], index: 2, kind: input, shape index: {}]
  %s3 = inlined_call_operand.vmem [shape: f32[128,128], index: 3, kind: input, shape index: {}]
  %s4 = inlined_call_operand.vmem [shape: f32[1,128], index: 4, kind: input, shape index: {}]
  %s5 = inlined_call_operand.vmem [shape: f32[128,128], index: 5, kind: input, shape index: {}]
  %s6 = inlined_call_operand.vmem [shape: f32[1,128], index: 6, kind: input, shape index: {}]
  %s7 = inlined_call_operand.vmem [shape: f32[128,2], index: 7, kind: input, shape index: {}]
  %s8 = inlined_call_operand.vmem [shape: f32[1,2], index: 8, kind: input, shape index: {}]
  %s9 = inlined_call_operand.vmem [shape: f32[2,2], index: 9, kind: output, shape index: {}]
  %s10 = sld [smem:[#allocation0]]
  $region46: #{convncf_forward.17} parent=0
    _
  %s12 = ssub.s32 1, %s10
  %s13 = scalar_select 0, %s12, %s10
  // Predicated region
  $region2: #{convncf_forward.17} parent=0 // pred_check
    _
  $region3: #{convncf_forward.17} parent=0 // pred_check_branch
    %15 = sbr.rel (0) target = $region5
  $region4: #{convncf_forward.17} parent=0 // pred_region
    _
  $region5: #{convncf_forward.17} parent=0 // pred_fallthru
    _
  // Predicated region
  $region6: #{convncf_forward.17} parent=0 // pred_check
    _
  $region7: #{convncf_forward.17} parent=0 // pred_check_branch
    %17 = sbr.rel (0) target = $region9
  $region8: #{convncf_forward.17} parent=0 // pred_region
    _
  $region9: #{convncf_forward.17} parent=0 // pred_fallthru
    _
  // Predicated region
  $region10: #{convncf_forward.17} parent=0 // pred_check
    _
  $region11: #{convncf_forward.17} parent=0 // pred_check_branch
    %19 = sbr.rel (0) target = $region13
  $region12: #{convncf_forward.17} parent=0 // pred_region
    _
  $region13: #{convncf_forward.17} parent=0 // pred_fallthru
    _
  // Predicated region
  $region14: #{convncf_forward.17} parent=0 // pred_check
    _
  $region15: #{convncf_forward.17} parent=0 // pred_check_branch
    %21 = sbr.rel (0) target = $region17
  $region16: #{convncf_forward.17} parent=0 // pred_region
    _
  $region17: #{convncf_forward.17} parent=0 // pred_fallthru
    _
  // Predicated region
  $region18: #{convncf_forward.17} parent=0 // pred_check
    _
  $region19: #{convncf_forward.17} parent=0 // pred_check_branch
    %23 = sbr.rel (0) target = $region21
  $region20: #{convncf_forward.17} parent=0 // pred_region
    _
  $region21: #{convncf_forward.17} parent=0 // pred_fallthru
    _
  // Predicated region
  $region22: #{convncf_forward.17} parent=0 // pred_check
    _
  $region23: #{convncf_forward.17} parent=0 // pred_check_branch
    %25 = sbr.rel (0) target = $region25
  $region24: #{convncf_forward.17} parent=0 // pred_region
    _
  $region25: #{convncf_forward.17} parent=0 // pred_fallthru
    _
  // Predicated region
  $region26: #{convncf_forward.17} parent=0 // pred_check
    _
  $region27: #{convncf_forward.17} parent=0 // pred_check_branch
    %27 = sbr.rel (0) target = $region29
  $region28: #{convncf_forward.17} parent=0 // pred_region
    _
  $region29: #{convncf_forward.17} parent=0 // pred_fallthru
    _
  // Predicated region
  $region30: #{convncf_forward.17} parent=0 // pred_check
    _
  $region31: #{convncf_forward.17} parent=0 // pred_check_branch
    %29 = sbr.rel (0) target = $region33
  $region32: #{convncf_forward.17} parent=0 // pred_region
    _
  $region33: #{convncf_forward.17} parent=0 // pred_fallthru
    _
  // Predicated region
  $region34: #{convncf_forward.17} parent=0 // pred_check
    _
  $region35: #{convncf_forward.17} parent=0 // pred_check_branch
    %31 = sbr.rel (0) target = $region37
  $region36: #{convncf_forward.17} parent=0 // pred_region
    _
  $region37: #{convncf_forward.17} parent=0 // pred_fallthru
    _
  %v32 = vld [vmem:[%s0] sm:$0x3]
  %v33 = vld [vmem:[%s2] sm:$0xff]
  %v34 = vld [vmem:[%s2 + $0x8] sm:$0xff]
  %v35 = vld [vmem:[%s2 + $0x10] sm:$0xff]
  %v36 = vld [vmem:[%s2 + $0x18] sm:$0xff]
  %v37 = vld [vmem:[%s2 + $0x20] sm:$0xff]
  %v38 = vld [vmem:[%s2 + $0x28] sm:$0xff]
  %v39 = vld [vmem:[%s2 + $0x30] sm:$0xff]
  %v40 = vld [vmem:[%s2 + $0x38] sm:$0xff]
  %v41 = vld [vmem:[%s2 + $0x40] sm:$0xff]
  %v42 = vld [vmem:[%s2 + $0x48] sm:$0xff]
  %v43 = vld [vmem:[%s2 + $0x50] sm:$0xff]
  %v44 = vld [vmem:[%s2 + $0x58] sm:$0xff]
  %v45 = vld [vmem:[%s2 + $0x60] sm:$0xff]
  %v46 = vld [vmem:[%s2 + $0x68] sm:$0xff]
  %v47 = vld [vmem:[%s2 + $0x70] sm:$0xff]
  %v48 = vld [vmem:[%s2 + $0x78] sm:$0xff]
  %v49 = vld [vmem:[%s1] sm:$0x3]
  %v50 = vld [vmem:[%s3] sm:$0xff]
  %v51 = vld [vmem:[%s3 + $0x8] sm:$0xff]
  %v52 = vld [vmem:[%s3 + $0x10] sm:$0xff]
  %v53 = vld [vmem:[%s3 + $0x18] sm:$0xff]
  %v54 = vld [vmem:[%s3 + $0x20] sm:$0xff]
  %v55 = vld [vmem:[%s3 + $0x28] sm:$0xff]
  %v56 = vld [vmem:[%s3 + $0x30] sm:$0xff]
  %v57 = vld [vmem:[%s3 + $0x38] sm:$0xff]
  %v58 = vld [vmem:[%s3 + $0x40] sm:$0xff]
  %v59 = vld [vmem:[%s3 + $0x48] sm:$0xff]
  %v60 = vld [vmem:[%s3 + $0x50] sm:$0xff]
  %v61 = vld [vmem:[%s3 + $0x58] sm:$0xff]
  %v62 = vld [vmem:[%s3 + $0x60] sm:$0xff]
  %v63 = vld [vmem:[%s3 + $0x68] sm:$0xff]
  %v64 = vld [vmem:[%s3 + $0x70] sm:$0xff]
  %v65 = vld [vmem:[%s3 + $0x78] sm:$0xff]
  %66 = vmatpush.msra.mxu0 %v65
  %67 = vmatpush.msra.mxu0 %v64
  %68 = vmatpush.msra.mxu0 %v63
  %69 = vmatpush.msra.mxu0 %v62
  %70 = vmatpush.msra.mxu0 %v61
  %71 = vmatpush.msra.mxu0 %v60
  %72 = vmatpush.msra.mxu0 %v59
  %73 = vmatpush.msra.mxu0 %v58
  %74 = vmatpush.msra.mxu0 %v57
  %75 = vmatpush.msra.mxu0 %v56
  %76 = vmatpush.msra.mxu0 %v55
  %77 = vmatpush.msra.mxu0 %v54
  %78 = vmatpush.msra.mxu0 %v53
  %79 = vmatpush.msra.mxu0 %v52
  %80 = vmatpush.msra.mxu0 %v51
  %81 = vmatpush.msra.mxu0 %v50
  %82 = vmatmul.f32.gmra.mxu0 %v49
  %v83 = vpop.f32.mrf.mxu0
  %v84 = vadd.f32 0.0, %v83
  %85 = vdwg.mxu0
  %86 = vmatpush.msra.mxu0 %v48
  %87 = vmatpush.msra.mxu0 %v47
  %88 = vmatpush.msra.mxu0 %v46
  %89 = vmatpush.msra.mxu0 %v45
  %90 = vmatpush.msra.mxu0 %v44
  %91 = vmatpush.msra.mxu0 %v43
  %92 = vmatpush.msra.mxu0 %v42
  %93 = vmatpush.msra.mxu0 %v41
  %94 = vmatpush.msra.mxu0 %v40
  %95 = vmatpush.msra.mxu0 %v39
  %96 = vmatpush.msra.mxu0 %v38
  %97 = vmatpush.msra.mxu0 %v37
  %98 = vmatpush.msra.mxu0 %v36
  %99 = vmatpush.msra.mxu0 %v35
  %100 = vmatpush.msra.mxu0 %v34
  %101 = vmatpush.msra.mxu0 %v33
  %102 = vmatmul.f32.gmra.mxu0 %v32
  %v103 = vpop.f32.mrf.mxu0
  %v104 = vadd.f32 %v84, %v103
  %105 = vdwg.mxu0
  %v106 = vld [vmem:[%s4] sm:$0x1]
  %v108 = vperm.slane %v106, 0
  %v110 = vadd.f32 %v104, %v108
  %v111 = vmax.f32 %v110, 0.0
  %v112 = vld [vmem:[%s5] sm:$0xff]
  %v113 = vld [vmem:[%s5 + $0x8] sm:$0xff]
  %v114 = vld [vmem:[%s5 + $0x10] sm:$0xff]
  %v115 = vld [vmem:[%s5 + $0x18] sm:$0xff]
  %v116 = vld [vmem:[%s5 + $0x20] sm:$0xff]
  %v117 = vld [vmem:[%s5 + $0x28] sm:$0xff]
  %v118 = vld [vmem:[%s5 + $0x30] sm:$0xff]
  %v119 = vld [vmem:[%s5 + $0x38] sm:$0xff]
  %v120 = vld [vmem:[%s5 + $0x40] sm:$0xff]
  %v121 = vld [vmem:[%s5 + $0x48] sm:$0xff]
  %v122 = vld [vmem:[%s5 + $0x50] sm:$0xff]
  %v123 = vld [vmem:[%s5 + $0x58] sm:$0xff]
  %v124 = vld [vmem:[%s5 + $0x60] sm:$0xff]
  %v125 = vld [vmem:[%s5 + $0x68] sm:$0xff]
  %v126 = vld [vmem:[%s5 + $0x70] sm:$0xff]
  %v127 = vld [vmem:[%s5 + $0x78] sm:$0xff]
  %v128 = vld [vmem:[%s6] sm:$0x1]
  %v130 = vperm.slane %v128, 0
  %132 = vmatpush.msra.mxu0 %v127
  %133 = vmatpush.msra.mxu0 %v126
  %134 = vmatpush.msra.mxu0 %v125
  %135 = vmatpush.msra.mxu0 %v124
  %136 = vmatpush.msra.mxu0 %v123
  %137 = vmatpush.msra.mxu0 %v122
  %138 = vmatpush.msra.mxu0 %v121
  %139 = vmatpush.msra.mxu0 %v120
  %140 = vmatpush.msra.mxu0 %v119
  %141 = vmatpush.msra.mxu0 %v118
  %142 = vmatpush.msra.mxu0 %v117
  %143 = vmatpush.msra.mxu0 %v116
  %144 = vmatpush.msra.mxu0 %v115
  %145 = vmatpush.msra.mxu0 %v114
  %146 = vmatpush.msra.mxu0 %v113
  %147 = vmatpush.msra.mxu0 %v112
  %148 = vmatmul.f32.gmra.mxu0 %v111
  %v149 = vpop.f32.mrf.mxu0
  %v150 = vadd.f32 %v130, %v149
  %151 = vdwg.mxu0
  %v152 = vmax.f32 %v150, 0.0
  %v153 = vld [vmem:[%s7] sm:$0xff]
  %v154 = vld [vmem:[%s7 + $0x8] sm:$0xff]
  %v155 = vld [vmem:[%s7 + $0x10] sm:$0xff]
  %v156 = vld [vmem:[%s7 + $0x18] sm:$0xff]
  %v157 = vld [vmem:[%s7 + $0x20] sm:$0xff]
  %v158 = vld [vmem:[%s7 + $0x28] sm:$0xff]
  %v159 = vld [vmem:[%s7 + $0x30] sm:$0xff]
  %v160 = vld [vmem:[%s7 + $0x38] sm:$0xff]
  %v161 = vld [vmem:[%s7 + $0x40] sm:$0xff]
  %v162 = vld [vmem:[%s7 + $0x48] sm:$0xff]
  %v163 = vld [vmem:[%s7 + $0x50] sm:$0xff]
  %v164 = vld [vmem:[%s7 + $0x58] sm:$0xff]
  %v165 = vld [vmem:[%s7 + $0x60] sm:$0xff]
  %v166 = vld [vmem:[%s7 + $0x68] sm:$0xff]
  %v167 = vld [vmem:[%s7 + $0x70] sm:$0xff]
  %v168 = vld [vmem:[%s7 + $0x78] sm:$0xff]
  %v169 = vld [vmem:[%s8] sm:$0x1]
  %v171 = vperm.slane %v169, 0
  %173 = vmatpush.msra.mxu0 %v168
  %174 = vmatpush.msra.mxu0 %v167
  %175 = vmatpush.msra.mxu0 %v166
  %176 = vmatpush.msra.mxu0 %v165
  %177 = vmatpush.msra.mxu0 %v164
  %178 = vmatpush.msra.mxu0 %v163
  %179 = vmatpush.msra.mxu0 %v162
  %180 = vmatpush.msra.mxu0 %v161
  %181 = vmatpush.msra.mxu0 %v160
  %182 = vmatpush.msra.mxu0 %v159
  %183 = vmatpush.msra.mxu0 %v158
  %184 = vmatpush.msra.mxu0 %v157
  %185 = vmatpush.msra.mxu0 %v156
  %186 = vmatpush.msra.mxu0 %v155
  %187 = vmatpush.msra.mxu0 %v154
  %188 = vmatpush.msra.mxu0 %v153
  %189 = vmatmul.f32.gmra.mxu0 %v152
  %v190 = vpop.f32.mrf.mxu0
  %v191 = vadd.f32 %v171, %v190
  %192 = vdwg.mxu0
  %v193 = vlaneseq
  %v194 = vand.u32 %v193, 127
  %vm195 = vcmp.eq.s32.totalorder %v194, 0
  %v196 = vxor.u32 %v191, 2147483648
  %v197 = vmul.f32 %v196, 1.442695
  %v198 = vpow.pop %v197
  %v199 = vadd.f32 %v198, 1.0
  %v200 = vrcp.pop %v199
  %v201 = vmul.f32 %v199, %v200
  %v202 = vsub.f32 1.0, %v201
  %v203 = vmul.f32 %v200, %v202
  %v204 = vadd.f32 %v200, %v203
  %vm205 = vweird.f32 %v199
  %vm206 = vweird.f32 %v200
  %vm207 = vmor %vm205, %vm206
  %v208 = vsel %vm207, %v200, %v204
  %v209 = vand.u32 2147483647, %v199
  %vm210 = vcmp.eq.f32.partialorder %v209, 8.507059e+37
  %v211 = vand.u32 %v199, 2147483648
  %v212 = vor.u32 1.1754944e-38, %v211
  %v213 = vsel %vm210, %v212, %v208
  %v214 = vmul.f32 1.0, %v213
  %v215 = vsel %vm195, %v214, %v191
  %vm216 = vcmask 9216
  %217 = vst.msk [vmem:[%s9] sm:$0x3] %vm216, %v215
  // Predicated region
  $region38: #{convncf_forward.17} parent=0 // pred_check
    _
  $region39: #{convncf_forward.17} parent=0 // pred_check_branch
    %219 = sbr.rel (0) target = $region41
  $region40: #{convncf_forward.17} parent=0 // pred_region
    _
  $region41: #{convncf_forward.17} parent=0 // pred_fallthru
    _
  // Predicated region
  $region42: #{convncf_forward.17} parent=0 // pred_check
    _
  $region43: #{convncf_forward.17} parent=0 // pred_check_branch
    %221 = sbr.rel (0) target = $region45
  $region44: #{convncf_forward.17} parent=0 // pred_region
    _
  $region45: #{convncf_forward.17} parent=0 // pred_fallthru
    _

// kernel: convncf_forward.14
$region0: #{convncf_forward.14}
  #allocation0 [shape = 'u32[]', space=smem, size = 0x4, offset = 0x4, fixed_abs, tag = 'smem constant byte address 0x4 - core index']
  #allocation1 [shape = 'u32[72,128]{1,0:T(1,128)}', space=vmem, size = 0x9000, scoped, tag = 'internal scratch']
  %s0 = inlined_call_operand.vmem [shape: f32[2,128], index: 0, kind: input, shape index: {}]
  %s1 = inlined_call_operand.vmem [shape: f32[2,128], index: 1, kind: input, shape index: {}]
  %s2 = inlined_call_operand.vmem [shape: f32[2,1], index: 2, kind: output, shape index: {}]
  %s3 = sld [smem:[#allocation0]]
  $region18: #{convncf_forward.14} parent=0
    _
  %s5 = ssub.s32 1, %s3
  %s6 = scalar_select 0, %s5, %s3
  // Predicated region
  $region2: #{convncf_forward.14} parent=0 // pred_check
    _
  $region3: #{convncf_forward.14} parent=0 // pred_check_branch
    %8 = sbr.rel (0) target = $region5
  $region4: #{convncf_forward.14} parent=0 // pred_region
    _
  $region5: #{convncf_forward.14} parent=0 // pred_fallthru
    _
  // Predicated region
  $region6: #{convncf_forward.14} parent=0 // pred_check
    _
  $region7: #{convncf_forward.14} parent=0 // pred_check_branch
    %10 = sbr.rel (0) target = $region9
  $region8: #{convncf_forward.14} parent=0 // pred_region
    _
  $region9: #{convncf_forward.14} parent=0 // pred_fallthru
    _
  %v11 = vld [vmem:[%s0] sm:$0x3]
  %v12 = vld [vmem:[%s1] sm:$0x3]
  %v13 = vmul.f32 %v11, %v12
  %vm14 = vcmask 1041408
  %v15 = vsel %vm14, %v13, 0.0
  %16 = vadd.xlane.f32.xlu0 %v15
  %v17 = vpop.xlane.xlu0 %16
  %v18 = vmul.f32 %v11, %v11
  %v19 = vsel %vm14, %v18, 0.0
  %20 = vadd.xlane.f32.xlu0 %v19
  %v21 = vpop.xlane.xlu0 %20
  %v22 = vrsqrt.pop %v21
  %v23 = vmul.f32 %v22, %v21
  %v24 = vmul.f32 %v23, %v22
  %v25 = vmul.f32 0.5, %v24
  %v26 = vsub.f32 1.5, %v25
  %v27 = vmul.f32 %v22, %v26
  %v28 = vmul.f32 %v21, %v27
  %vm29 = vcmp.eq.f32.partialorder %v21, inf
  %v30 = vsel %vm29, %v21, %v28
  %vm31 = vcmp.eq.f32.partialorder %v21, 0.0
  %v32 = vand.u32 %v21, 2147483648
  %v33 = vsel %vm31, %v32, %v30
  %v34 = vmax.f32 %v33, 1e-08
  %v35 = vmul.f32 %v12, %v12
  %v36 = vsel %vm14, %v35, 0.0
  %37 = vadd.xlane.f32.xlu0 %v36
  %v38 = vpop.xlane.xlu0 %37
  %v39 = vrsqrt.pop %v38
  %v40 = vmul.f32 %v39, %v38
  %v41 = vmul.f32 %v40, %v39
  %v42 = vmul.f32 0.5, %v41
  %v43 = vsub.f32 1.5, %v42
  %v44 = vmul.f32 %v39, %v43
  %v45 = vmul.f32 %v38, %v44
  %vm46 = vcmp.eq.f32.partialorder %v38, inf
  %v47 = vsel %vm46, %v38, %v45
  %vm48 = vcmp.eq.f32.partialorder %v38, 0.0
  %v49 = vand.u32 %v38, 2147483648
  %v50 = vsel %vm48, %v49, %v47
  %v51 = vmax.f32 %v50, 1e-08
  %v52 = vmul.f32 %v34, %v51
  %v53 = vrcp.pop %v52
  %v54 = vmul.f32 %v52, %v53
  %v55 = vsub.f32 1.0, %v54
  %v56 = vmul.f32 %v53, %v55
  %v57 = vadd.f32 %v53, %v56
  %vm58 = vweird.f32 %v52
  %vm59 = vweird.f32 %v53
  %vm60 = vmor %vm58, %vm59
  %v61 = vsel %vm60, %v53, %v57
  %v62 = vand.u32 2147483647, %v52
  %vm63 = vcmp.eq.f32.partialorder %v62, 8.507059e+37
  %v64 = vand.u32 %v52, 2147483648
  %v65 = vor.u32 1.1754944e-38, %v64
  %v66 = vsel %vm63, %v65, %v61
  %v67 = vmul.f32 %v17, %v66
  %v68 = vand.u32 2147483647, %v67
  %v69 = vsub.f32 1.0, %v68
  %vm70 = vcmask 1024
  %71 = vst.msk [vmem:[%s2] sm:$0x3] %vm70, %v69
  // Predicated region
  $region10: #{convncf_forward.14} parent=0 // pred_check
    _
  $region11: #{convncf_forward.14} parent=0 // pred_check_branch
    %73 = sbr.rel (0) target = $region13
  $region12: #{convncf_forward.14} parent=0 // pred_region
    _
  $region13: #{convncf_forward.14} parent=0 // pred_fallthru
    _
  // Predicated region
  $region14: #{convncf_forward.14} parent=0 // pred_check
    _
  $region15: #{convncf_forward.14} parent=0 // pred_check_branch
    %75 = sbr.rel (0) target = $region17
  $region16: #{convncf_forward.14} parent=0 // pred_region
    _
  $region17: #{convncf_forward.14} parent=0 // pred_fallthru
    _

// kernel: convncf_forward.16
$region0: #{convncf_forward.16}
  #allocation0 [shape = 'u32[]', space=smem, size = 0x4, offset = 0x4, fixed_abs, tag = 'smem constant byte address 0x4 - core index']
  #allocation1 [shape = 'u32[72,128]{1,0:T(1,128)}', space=vmem, size = 0x9000, scoped, tag = 'internal scratch']
  #allocation2 [shape = 'f32[8,64,64]{2,1,0:T(8,128)}', space=vmem, size = 0x40000, scoped, tag = 'scratch operand']
  #allocation3 [shape = 'f32[8,32,32]{2,1,0:T(8,128)}', space=vmem, size = 0x20000, scoped, tag = 'scratch operand']
  #allocation4 [shape = 'f32[8,16,16]{2,1,0:T(8,128)}', space=vmem, size = 0x10000, scoped, tag = 'scratch operand']
  #allocation5 [shape = 'f32[8,8,8]{2,1,0:T(8,128)}', space=vmem, size = 0x8000, scoped, tag = 'scratch operand']
  %s0 = inlined_call_operand.vmem [shape: f32[2,64,8], index: 0, kind: input, shape index: {}]
  %s1 = inlined_call_operand.vmem [shape: f32[2,4,64], index: 1, kind: input, shape index: {}]
  %s2 = inlined_call_operand.vmem [shape: f32[64,4], index: 2, kind: input, shape index: {}]
  %s3 = inlined_call_operand.vmem [shape: f32[40,33], index: 3, kind: input, shape index: {}]
  %s4 = inlined_call_operand.vmem [shape: f32[2,8,4,4], index: 4, kind: output, shape index: {}]
  %s5 = sld [smem:[#allocation0]]
  $region77: #{convncf_forward.16} parent=0
    _
  %s7 = ssub.s32 1, %s5
  %s8 = scalar_select 0, %s7, %s5
  loop: start=0, step=1, limit=4
  $region2: #{convncf_forward.16} parent=0 // loop_pre_header
    _
  $region3: #{convncf_forward.16} parent=0 // loop_header
    %s10 = sphi 0, %s14
    %p11 = scmp.ge.s32.totalorder %s10, 4
    %s20 = sphi 0, %s22
    %s23 = sphi 0, %s20
    %s24 = sphi 0, %s23
    %s40 = sphi 0, %s24
    %s46 = sphi 0, %s48
    %s49 = sphi 0, %s46
    %s50 = sphi 0, %s49
    %s66 = sphi 0, %s50
    %s70 = sphi 0, %s70
    %s72 = sphi 0, %s70
    %s73 = sphi 0, %s72
    %s87 = sphi 0, %s73
    %s91 = sphi 0, %s91
    %s93 = sphi 0, %s91
    %s94 = sphi 0, %s93
    %s108 = sphi 0, %s94
    %s114 = sphi 0, %s116
    %s117 = sphi 0, %s114
    %s118 = sphi 0, %s117
    %s134 = sphi 0, %s118
  $region4: #{convncf_forward.16} parent=0 // loop_header_branch
    %13 = sbr.rel (%p11) target = $region8
  $region5: #{convncf_forward.16} parent=0 // loop_body
    %s15 = ssub.s32 %s10, 1
    %s16 = ssub.s32 %s10, 2
    %s17 = sadd.s32 %s10, 1
    %s18 = ssub.s32 %s10, %s17
    %p19 = scmp.eq.s32.totalorder %s18, 0
    %s21 = sadd.s32 %s20, 1
    %s22 = scalar_select %p19, %s20, %s21
    %p25 = pneg %p19
    %p26 = scmp.eq.s32.totalorder %s10, 1
    %p27 = por %p25, %p26
    %p28 = scmp.ne.s32.totalorder %s20, %s23
    %p29 = scmp.eq.s32.totalorder %s10, 0
    %p30 = por %p28, %p29
    %p31 = scmp.ne.s32.totalorder %s20, %s23
    %p32 = scmp.eq.s32.totalorder %s15, 1
    %p33 = por %p31, %p32
    %p34 = scmp.ne.s32.totalorder %s23, %s24
    %p35 = scmp.eq.s32.totalorder %s15, 0
    %p36 = por %p34, %p35
    %p37 = scmp.ne.s32.totalorder %s23, %s24
    %p38 = scmp.eq.s32.totalorder %s16, 1
    %p39 = por %p37, %p38
    %p41 = scmp.ne.s32.totalorder %s24, %s40
    %p42 = scmp.eq.s32.totalorder %s16, 0
    %p43 = por %p41, %p42
    %s44 = ssub.s32 %s10, %s17
    %p45 = scmp.eq.s32.totalorder %s44, 0
    %s47 = sadd.s32 %s46, 1
    %s48 = scalar_select %p45, %s46, %s47
    %p51 = pneg %p45
    %p52 = scmp.eq.s32.totalorder %s10, 1
    %p53 = por %p51, %p52
    %p54 = scmp.ne.s32.totalorder %s46, %s49
    %p55 = scmp.eq.s32.totalorder %s10, 0
    %p56 = por %p54, %p55
    %p57 = scmp.ne.s32.totalorder %s46, %s49
    %p58 = scmp.eq.s32.totalorder %s15, 1
    %p59 = por %p57, %p58
    %p60 = scmp.ne.s32.totalorder %s49, %s50
    %p61 = scmp.eq.s32.totalorder %s15, 0
    %p62 = por %p60, %p61
    %p63 = scmp.ne.s32.totalorder %s49, %s50
    %p64 = scmp.eq.s32.totalorder %s16, 1
    %p65 = por %p63, %p64
    %p67 = scmp.ne.s32.totalorder %s50, %s66
    %p68 = scmp.eq.s32.totalorder %s16, 0
    %p69 = por %p67, %p68
    %s71 = sadd.s32 %s70, 1
    %p74 = scmp.eq.s32.totalorder %s10, 1
    %p75 = scmp.ne.s32.totalorder %s70, %s72
    %p76 = scmp.eq.s32.totalorder %s10, 0
    %p77 = por %p75, %p76
    %p78 = scmp.ne.s32.totalorder %s70, %s72
    %p79 = scmp.eq.s32.totalorder %s15, 1
    %p80 = por %p78, %p79
    %p81 = scmp.ne.s32.totalorder %s72, %s73
    %p82 = scmp.eq.s32.totalorder %s15, 0
    %p83 = por %p81, %p82
    %p84 = scmp.ne.s32.totalorder %s72, %s73
    %p85 = scmp.eq.s32.totalorder %s16, 1
    %p86 = por %p84, %p85
    %p88 = scmp.ne.s32.totalorder %s73, %s87
    %p89 = scmp.eq.s32.totalorder %s16, 0
    %p90 = por %p88, %p89
    %s92 = sadd.s32 %s91, 1
    %p95 = scmp.eq.s32.totalorder %s10, 1
    %p96 = scmp.ne.s32.totalorder %s91, %s93
    %p97 = scmp.eq.s32.totalorder %s10, 0
    %p98 = por %p96, %p97
    %p99 = scmp.ne.s32.totalorder %s91, %s93
    %p100 = scmp.eq.s32.totalorder %s15, 1
    %p101 = por %p99, %p100
    %p102 = scmp.ne.s32.totalorder %s93, %s94
    %p103 = scmp.eq.s32.totalorder %s15, 0
    %p104 = por %p102, %p103
    %p105 = scmp.ne.s32.totalorder %s93, %s94
    %p106 = scmp.eq.s32.totalorder %s16, 1
    %p107 = por %p105, %p106
    %p109 = scmp.ne.s32.totalorder %s94, %s108
    %p110 = scmp.eq.s32.totalorder %s16, 0
    %p111 = por %p109, %p110
    %s112 = ssub.s32 %s10, %s17
    %p113 = scmp.eq.s32.totalorder %s112, 0
    %s115 = sadd.s32 %s114, 1
    %s116 = scalar_select %p113, %s114, %s115
    %p119 = pneg %p113
    %p120 = scmp.eq.s32.totalorder %s10, 1
    %p121 = por %p119, %p120
    %p122 = scmp.ne.s32.totalorder %s114, %s117
    %p123 = scmp.eq.s32.totalorder %s10, 0
    %p124 = por %p122, %p123
    %p125 = scmp.ne.s32.totalorder %s114, %s117
    %p126 = scmp.eq.s32.totalorder %s15, 1
    %p127 = por %p125, %p126
    %p128 = scmp.ne.s32.totalorder %s117, %s118
    %p129 = scmp.eq.s32.totalorder %s15, 0
    %p130 = por %p128, %p129
    %p131 = scmp.ne.s32.totalorder %s117, %s118
    %p132 = scmp.eq.s32.totalorder %s16, 1
    %p133 = por %p131, %p132
    %p135 = scmp.ne.s32.totalorder %s118, %s134
    %p136 = scmp.eq.s32.totalorder %s16, 0
    %p137 = por %p135, %p136
    %p138 = scmp.le.s32.totalorder 1, %s10
    %p139 = scmp.lt.s32.totalorder %s10, 3
    %p140 = pnand %p138, %p139
    %p141 = pneg %p140
    // Predicated region
    $region9: #{convncf_forward.16} parent=5 // pred_check
      _
    $region10: #{convncf_forward.16} parent=5 // pred_check_branch
      %143 = sbr.rel (%p140) target = $region12
    $region11: #{convncf_forward.16} parent=5 // pred_region
      %s144 = ssub.s32 %s10, 1
      // Predicated region
      $region13: #{convncf_forward.16} parent=11 // pred_check
        %p145 = pneg %p83
      $region14: #{convncf_forward.16} parent=11 // pred_check_branch
        %147 = sbr.rel (%p145) target = $region16
      $region15: #{convncf_forward.16} parent=11 // pred_region
        _
      $region16: #{convncf_forward.16} parent=11 // pred_fallthru
        _
      // Predicated region
      $region17: #{convncf_forward.16} parent=11 // pred_check
        %p148 = pneg %p104
      $region18: #{convncf_forward.16} parent=11 // pred_check_branch
        %150 = sbr.rel (%p148) target = $region20
      $region19: #{convncf_forward.16} parent=11 // pred_region
        _
      $region20: #{convncf_forward.16} parent=11 // pred_fallthru
        _
    $region12: #{convncf_forward.16} parent=5 // pred_fallthru
      _
    %p151 = scmp.lt.s32.totalorder %s10, 2
    // Predicated region
    $region21: #{convncf_forward.16} parent=5 // pred_check
      %p152 = pneg %p151
    $region22: #{convncf_forward.16} parent=5 // pred_check_branch
      %154 = sbr.rel (%p152) target = $region24
    $region23: #{convncf_forward.16} parent=5 // pred_region
      // Predicated region
      $region25: #{convncf_forward.16} parent=23 // pred_check
        %p155 = pneg %p30
      $region26: #{convncf_forward.16} parent=23 // pred_check_branch
        %157 = sbr.rel (%p155) target = $region28
      $region27: #{convncf_forward.16} parent=23 // pred_region
        %p158 = scmp.lt.s32.totalorder %s10, 1
        %s159 = scalar_select %p158, %s10, 1
        %s160 = smul.addr %s159, 8
        %s161 = smul.addr %s160, 8
        %s162 = scalar_lea.vmem %s0, %s161
      $region28: #{convncf_forward.16} parent=23 // pred_fallthru
        _
      // Predicated region
      $region29: #{convncf_forward.16} parent=23 // pred_check
        %p163 = pneg %p56
      $region30: #{convncf_forward.16} parent=23 // pred_check_branch
        %165 = sbr.rel (%p163) target = $region32
      $region31: #{convncf_forward.16} parent=23 // pred_region
        %p166 = scmp.lt.s32.totalorder %s10, 1
        %s167 = scalar_select %p166, %s10, 1
        %s168 = smul.addr %s167, 4
        %s169 = scalar_lea.vmem %s1, %s168
      $region32: #{convncf_forward.16} parent=23 // pred_fallthru
        _
    $region24: #{convncf_forward.16} parent=5 // pred_fallthru
      _
    %p170 = scmp.le.s32.totalorder 1, %s10
    %p171 = scmp.lt.s32.totalorder %s10, 3
    %p172 = pnand %p170, %p171
    %p173 = pneg %p172
    // Predicated region
    $region33: #{convncf_forward.16} parent=5 // pred_check
      _
    $region34: #{convncf_forward.16} parent=5 // pred_check_branch
      %175 = sbr.rel (%p172) target = $region36
    $region35: #{convncf_forward.16} parent=5 // pred_region
      %s176 = ssub.s32 %s10, 1
      %p177 = scmp.lt.s32.totalorder %s15, 1
      %s178 = scalar_select %p177, %s15, 1
      %s179 = smul.addr %s178, 8
      %s180 = smul.addr %s179, 8
      %s181 = scalar_lea.vmem %s0, %s180
      %p182 = pneg %p36
      %p183 = pneg %p33
      %p184 = scmp.lt.s32.totalorder %s15, 1
      %s185 = scalar_select %p184, %s15, 1
      %s186 = smul.addr %s185, 4
      %s187 = scalar_lea.vmem %s1, %s186
      %p188 = pneg %p62
      %p189 = pneg %p59
      %p190 = pneg %p83
      %p191 = pneg %p80
      %p192 = pneg %p104
      %p193 = pneg %p101
      %p194 = pneg %p130
      %p195 = pneg %p127
      %p196 = scmp.lt.s32.totalorder %s15, 1
      %s197 = scalar_select %p196, %s15, 1
      %s198 = smul.addr %s197, 8
      %s199 = smul.addr %s198, 4
      %s200 = scalar_lea.vmem %s4, %s199
      %p201 = scmp.lt.s32.totalorder %s15, 1
      %s202 = scalar_select %p201, %s15, 1
      %s203 = smul.addr %s202, 8
      %s204 = smul.addr %s203, 8
      %s205 = scalar_lea.vmem %s0, %s204
      %p206 = scmp.lt.s32.totalorder %s15, 1
      %s207 = scalar_select %p206, %s15, 1
      %s208 = smul.addr %s207, 4
      %s209 = scalar_lea.vmem %s1, %s208
      %p210 = scmp.lt.s32.totalorder %s15, 1
      %s211 = scalar_select %p210, %s15, 1
      %s212 = smul.addr %s211, 8
      %s213 = smul.addr %s212, 4
      %s214 = scalar_lea.vmem %s4, %s213
      %v215 = vld [vmem:[%s205] sm:$0xff]
      %v216 = vld [vmem:[%s205 + $0x8] sm:$0xff]
      %v217 = vld [vmem:[%s205 + $0x10] sm:$0xff]
      %v218 = vld [vmem:[%s205 + $0x18] sm:$0xff]
      %v219 = vld [vmem:[%s205 + $0x20] sm:$0xff]
      %v220 = vld [vmem:[%s205 + $0x28] sm:$0xff]
      %v221 = vld [vmem:[%s205 + $0x30] sm:$0xff]
      %v222 = vld [vmem:[%s205 + $0x38] sm:$0xff]
      %v223 = vld [vmem:[%s209] sm:$0xf]
      %v224 = vld [vmem:[%s2] sm:$0xff]
      %v225 = vld [vmem:[%s2 + $0x8] sm:$0xff]
      %v226 = vld [vmem:[%s2 + $0x10] sm:$0xff]
      %v227 = vld [vmem:[%s2 + $0x18] sm:$0xff]
      %v228 = vld [vmem:[%s2 + $0x20] sm:$0xff]
      %v229 = vld [vmem:[%s2 + $0x28] sm:$0xff]
      %v230 = vld [vmem:[%s2 + $0x30] sm:$0xff]
      %v231 = vld [vmem:[%s2 + $0x38] sm:$0xff]
      %vm232 = vcmask 31744
      %v234 = vsel %vm232, %v224, 0
      %v237 = vsel %vm232, %v225, 0
      %v240 = vsel %vm232, %v226, 0
      %v243 = vsel %vm232, %v227, 0
      %v246 = vsel %vm232, %v228, 0
      %v249 = vsel %vm232, %v229, 0
      %v252 = vsel %vm232, %v230, 0
      %v255 = vsel %vm232, %v231, 0
      %vm257 = vcmask 1043456
      %v259 = vsel %vm257, %v223, 0
      %261 = vmatpush.msra.mxu0 0.0
      %262 = vmatpush.msra.mxu0 0.0
      %263 = vmatpush.msra.mxu0 0.0
      %264 = vmatpush.msra.mxu0 0.0
      %265 = vmatpush.msra.mxu0 0.0
      %266 = vmatpush.msra.mxu0 0.0
      %267 = vmatpush.msra.mxu0 0.0
      %268 = vmatpush.msra.mxu0 0.0
      %269 = vmatpush.msra.mxu0 0.0
      %270 = vmatpush.msra.mxu0 0.0
      %271 = vmatpush.msra.mxu0 0.0
      %272 = vmatpush.msra.mxu0 0.0
      %273 = vmatpush.msra.mxu0 0.0
      %274 = vmatpush.msra.mxu0 0.0
      %275 = vmatpush.msra.mxu0 0.0
      %276 = vmatpush.msra.mxu0 %v259
      %277 = vmatmul.f32.gmra.mxu0 %v234
      %v278 = vpop.f32.mrf.mxu0
      %v279 = vadd.f32 0.0, %v278
      %280 = vmatmul.f32.gmra.mxu0 %v237
      %v281 = vpop.f32.mrf.mxu0
      %v282 = vadd.f32 0.0, %v281
      %283 = vmatmul.f32.gmra.mxu0 %v240
      %v284 = vpop.f32.mrf.mxu0
      %v285 = vadd.f32 0.0, %v284
      %286 = vmatmul.f32.gmra.mxu0 %v243
      %v287 = vpop.f32.mrf.mxu0
      %v288 = vadd.f32 0.0, %v287
      %289 = vmatmul.f32.gmra.mxu0 %v246
      %v290 = vpop.f32.mrf.mxu0
      %v291 = vadd.f32 0.0, %v290
      %292 = vmatmul.f32.gmra.mxu0 %v249
      %v293 = vpop.f32.mrf.mxu0
      %v294 = vadd.f32 0.0, %v293
      %295 = vmatmul.f32.gmra.mxu0 %v252
      %v296 = vpop.f32.mrf.mxu0
      %v297 = vadd.f32 0.0, %v296
      %298 = vmatmul.f32.gmra.mxu0 %v255
      %v299 = vpop.f32.mrf.mxu0
      %v300 = vadd.f32 0.0, %v299
      %301 = vdwg.mxu0
      %v302 = vld [vmem:[%s3] sm:$0x1]
      %304 = vrot.lane.b32.xlu0 %v302, 96
      %v305 = vpop.permute.xlu0 %304
      %s306 = vtos %v305
      %v307 = vstv %s306
      %vm309 = vcmask 64512
      %v311 = vsel %vm309, %v215, 0
      %v314 = vsel %vm309, %v216, 0
      %v317 = vsel %vm309, %v217, 0
      %v320 = vsel %vm309, %v218, 0
      %v323 = vsel %vm309, %v219, 0
      %v326 = vsel %vm309, %v220, 0
      %v329 = vsel %vm309, %v221, 0
      %v332 = vsel %vm309, %v222, 0
      %334 = vmatpush.msra.mxu0 0.0
      %335 = vmatpush.msra.mxu0 0.0
      %336 = vmatpush.msra.mxu0 0.0
      %337 = vmatpush.msra.mxu0 0.0
      %338 = vmatpush.msra.mxu0 0.0
      %339 = vmatpush.msra.mxu0 0.0
      %340 = vmatpush.msra.mxu0 0.0
      %341 = vmatpush.msra.mxu0 0.0
      %342 = vmatpush.msra.mxu0 0.0
      %343 = vmatpush.msra.mxu0 0.0
      %344 = vmatpush.msra.mxu0 0.0
      %345 = vmatpush.msra.mxu0 0.0
      %346 = vmatpush.msra.mxu0 0.0
      %347 = vmatpush.msra.mxu0 0.0
      %348 = vmatpush.msra.mxu0 0.0
      %349 = vmatpush.msra.mxu0 %v279
      %350 = vmatmul.f32.gmra.mxu0 %v311
      %v351 = vpop.f32.mrf.mxu0
      %v352 = vadd.f32 %v307, %v351
      %353 = vmatmul.f32.gmra.mxu0 %v314
      %v354 = vpop.f32.mrf.mxu0
      %v355 = vadd.f32 %v307, %v354
      %356 = vmatmul.f32.gmra.mxu0 %v317
      %v357 = vpop.f32.mrf.mxu0
      %v358 = vadd.f32 %v307, %v357
      %359 = vmatmul.f32.gmra.mxu0 %v320
      %v360 = vpop.f32.mrf.mxu0
      %v361 = vadd.f32 %v307, %v360
      %362 = vmatmul.f32.gmra.mxu0 %v323
      %v363 = vpop.f32.mrf.mxu0
      %v364 = vadd.f32 %v307, %v363
      %365 = vmatmul.f32.gmra.mxu0 %v326
      %v366 = vpop.f32.mrf.mxu0
      %v367 = vadd.f32 %v307, %v366
      %368 = vmatmul.f32.gmra.mxu0 %v329
      %v369 = vpop.f32.mrf.mxu0
      %v370 = vadd.f32 %v307, %v369
      %371 = vmatmul.f32.gmra.mxu0 %v332
      %v372 = vpop.f32.mrf.mxu0
      %v373 = vadd.f32 %v307, %v372
      %374 = vdwg.mxu0
      %v375 = vmax.f32 %v352, 0.0
      %v376 = vmax.f32 %v355, 0.0
      %v377 = vmax.f32 %v358, 0.0
      %v378 = vmax.f32 %v361, 0.0
      %v379 = vmax.f32 %v364, 0.0
      %v380 = vmax.f32 %v367, 0.0
      %v381 = vmax.f32 %v370, 0.0
      %v382 = vmax.f32 %v373, 0.0
      %vm383 = vcmask 523264
      %384 = vst.msk [vmem:[#allocation2] sm:$0xff] %vm383, %v375
      %385 = vst.msk [vmem:[#allocation2 + $0x8] sm:$0xff] %vm383, %v376
      %386 = vst.msk [vmem:[#allocation2 + $0x10] sm:$0xff] %vm383, %v377
      %387 = vst.msk [vmem:[#allocation2 + $0x18] sm:$0xff] %vm383, %v378
      %388 = vst.msk [vmem:[#allocation2 + $0x20] sm:$0xff] %vm383, %v379
      %389 = vst.msk [vmem:[#allocation2 + $0x28] sm:$0xff] %vm383, %v380
      %390 = vst.msk [vmem:[#allocation2 + $0x30] sm:$0xff] %vm383, %v381
      %391 = vst.msk [vmem:[#allocation2 + $0x38] sm:$0xff] %vm383, %v382
      %v392 = vld [vmem:[%s3 + $0x1] sm:$0x1]
      %394 = vrot.lane.b32.xlu0 %v392, 96
      %v395 = vpop.permute.xlu0 %394
      %s396 = vtos %v395
      %v397 = vstv %s396
      %399 = vmatpush.msra.mxu0 0.0
      %400 = vmatpush.msra.mxu0 0.0
      %401 = vmatpush.msra.mxu0 0.0
      %402 = vmatpush.msra.mxu0 0.0
      %403 = vmatpush.msra.mxu0 0.0
      %404 = vmatpush.msra.mxu0 0.0
      %405 = vmatpush.msra.mxu0 0.0
      %406 = vmatpush.msra.mxu0 0.0
      %407 = vmatpush.msra.mxu0 0.0
      %408 = vmatpush.msra.mxu0 0.0
      %409 = vmatpush.msra.mxu0 0.0
      %410 = vmatpush.msra.mxu0 0.0
      %411 = vmatpush.msra.mxu0 0.0
      %412 = vmatpush.msra.mxu0 0.0
      %413 = vmatpush.msra.mxu0 0.0
      %414 = vmatpush.msra.mxu0 %v282
      %415 = vmatmul.f32.gmra.mxu0 %v311
      %v416 = vpop.f32.mrf.mxu0
      %v417 = vadd.f32 %v397, %v416
      %418 = vmatmul.f32.gmra.mxu0 %v314
      %v419 = vpop.f32.mrf.mxu0
      %v420 = vadd.f32 %v397, %v419
      %421 = vmatmul.f32.gmra.mxu0 %v317
      %v422 = vpop.f32.mrf.mxu0
      %v423 = vadd.f32 %v397, %v422
      %424 = vmatmul.f32.gmra.mxu0 %v320
      %v425 = vpop.f32.mrf.mxu0
      %v426 = vadd.f32 %v397, %v425
      %427 = vmatmul.f32.gmra.mxu0 %v323
      %v428 = vpop.f32.mrf.mxu0
      %v429 = vadd.f32 %v397, %v428
      %430 = vmatmul.f32.gmra.mxu0 %v326
      %v431 = vpop.f32.mrf.mxu0
      %v432 = vadd.f32 %v397, %v431
      %433 = vmatmul.f32.gmra.mxu0 %v329
      %v434 = vpop.f32.mrf.mxu0
      %v435 = vadd.f32 %v397, %v434
      %436 = vmatmul.f32.gmra.mxu0 %v332
      %v437 = vpop.f32.mrf.mxu0
      %v438 = vadd.f32 %v397, %v437
      %439 = vdwg.mxu0
      %v440 = vmax.f32 %v417, 0.0
      %v441 = vmax.f32 %v420, 0.0
      %v442 = vmax.f32 %v423, 0.0
      %v443 = vmax.f32 %v426, 0.0
      %v444 = vmax.f32 %v429, 0.0
      %v445 = vmax.f32 %v432, 0.0
      %v446 = vmax.f32 %v435, 0.0
      %v447 = vmax.f32 %v438, 0.0
      %s448 = scalar_lea.vmem [#allocation2], 64
      %449 = vst.msk [vmem:[%s448] sm:$0xff] %vm383, %v440
      %450 = vst.msk [vmem:[%s448 + $0x8] sm:$0xff] %vm383, %v441
      %451 = vst.msk [vmem:[%s448 + $0x10] sm:$0xff] %vm383, %v442
      %452 = vst.msk [vmem:[%s448 + $0x18] sm:$0xff] %vm383, %v443
      %453 = vst.msk [vmem:[%s448 + $0x20] sm:$0xff] %vm383, %v444
      %454 = vst.msk [vmem:[%s448 + $0x28] sm:$0xff] %vm383, %v445
      %455 = vst.msk [vmem:[%s448 + $0x30] sm:$0xff] %vm383, %v446
      %456 = vst.msk [vmem:[%s448 + $0x38] sm:$0xff] %vm383, %v447
      %v457 = vld [vmem:[%s3 + $0x2] sm:$0x1]
      %459 = vrot.lane.b32.xlu0 %v457, 96
      %v460 = vpop.permute.xlu0 %459
      %s461 = vtos %v460
      %v462 = vstv %s461
      %464 = vmatpush.msra.mxu0 0.0
      %465 = vmatpush.msra.mxu0 0.0
      %466 = vmatpush.msra.mxu0 0.0
      %467 = vmatpush.msra.mxu0 0.0
      %468 = vmatpush.msra.mxu0 0.0
      %469 = vmatpush.msra.mxu0 0.0
      %470 = vmatpush.msra.mxu0 0.0
      %471 = vmatpush.msra.mxu0 0.0
      %472 = vmatpush.msra.mxu0 0.0
      %473 = vmatpush.msra.mxu0 0.0
      %474 = vmatpush.msra.mxu0 0.0
      %475 = vmatpush.msra.mxu0 0.0
      %476 = vmatpush.msra.mxu0 0.0
      %477 = vmatpush.msra.mxu0 0.0
      %478 = vmatpush.msra.mxu0 0.0
      %479 = vmatpush.msra.mxu0 %v285
      %480 = vmatmul.f32.gmra.mxu0 %v311
      %v481 = vpop.f32.mrf.mxu0
      %v482 = vadd.f32 %v462, %v481
      %483 = vmatmul.f32.gmra.mxu0 %v314
      %v484 = vpop.f32.mrf.mxu0
      %v485 = vadd.f32 %v462, %v484
      %486 = vmatmul.f32.gmra.mxu0 %v317
      %v487 = vpop.f32.mrf.mxu0
      %v488 = vadd.f32 %v462, %v487
      %489 = vmatmul.f32.gmra.mxu0 %v320
      %v490 = vpop.f32.mrf.mxu0
      %v491 = vadd.f32 %v462, %v490
      %492 = vmatmul.f32.gmra.mxu0 %v323
      %v493 = vpop.f32.mrf.mxu0
      %v494 = vadd.f32 %v462, %v493
      %495 = vmatmul.f32.gmra.mxu0 %v326
      %v496 = vpop.f32.mrf.mxu0
      %v497 = vadd.f32 %v462, %v496
      %498 = vmatmul.f32.gmra.mxu0 %v329
      %v499 = vpop.f32.mrf.mxu0
      %v500 = vadd.f32 %v462, %v499
      %501 = vmatmul.f32.gmra.mxu0 %v332
      %v502 = vpop.f32.mrf.mxu0
      %v503 = vadd.f32 %v462, %v502
      %504 = vdwg.mxu0
      %v505 = vmax.f32 %v482, 0.0
      %v506 = vmax.f32 %v485, 0.0
      %v507 = vmax.f32 %v488, 0.0
      %v508 = vmax.f32 %v491, 0.0
      %v509 = vmax.f32 %v494, 0.0
      %v510 = vmax.f32 %v497, 0.0
      %v511 = vmax.f32 %v500, 0.0
      %v512 = vmax.f32 %v503, 0.0
      %s513 = scalar_lea.vmem [#allocation2], 128
      %514 = vst.msk [vmem:[%s513] sm:$0xff] %vm383, %v505
      %515 = vst.msk [vmem:[%s513 + $0x8] sm:$0xff] %vm383, %v506
      %516 = vst.msk [vmem:[%s513 + $0x10] sm:$0xff] %vm383, %v507
      %517 = vst.msk [vmem:[%s513 + $0x18] sm:$0xff] %vm383, %v508
      %518 = vst.msk [vmem:[%s513 + $0x20] sm:$0xff] %vm383, %v509
      %519 = vst.msk [vmem:[%s513 + $0x28] sm:$0xff] %vm383, %v510
      %520 = vst.msk [vmem:[%s513 + $0x30] sm:$0xff] %vm383, %v511
      %521 = vst.msk [vmem:[%s513 + $0x38] sm:$0xff] %vm383, %v512
      %v522 = vld [vmem:[%s3 + $0x3] sm:$0x1]
      %524 = vrot.lane.b32.xlu0 %v522, 96
      %v525 = vpop.permute.xlu0 %524
      %s526 = vtos %v525
      %v527 = vstv %s526
      %529 = vmatpush.msra.mxu0 0.0
      %530 = vmatpush.msra.mxu0 0.0
      %531 = vmatpush.msra.mxu0 0.0
      %532 = vmatpush.msra.mxu0 0.0
      %533 = vmatpush.msra.mxu0 0.0
      %534 = vmatpush.msra.mxu0 0.0
      %535 = vmatpush.msra.mxu0 0.0
      %536 = vmatpush.msra.mxu0 0.0
      %537 = vmatpush.msra.mxu0 0.0
      %538 = vmatpush.msra.mxu0 0.0
      %539 = vmatpush.msra.mxu0 0.0
      %540 = vmatpush.msra.mxu0 0.0
      %541 = vmatpush.msra.mxu0 0.0
      %542 = vmatpush.msra.mxu0 0.0
      %543 = vmatpush.msra.mxu0 0.0
      %544 = vmatpush.msra.mxu0 %v288
      %545 = vmatmul.f32.gmra.mxu0 %v311
      %v546 = vpop.f32.mrf.mxu0
      %v547 = vadd.f32 %v527, %v546
      %548 = vmatmul.f32.gmra.mxu0 %v314
      %v549 = vpop.f32.mrf.mxu0
      %v550 = vadd.f32 %v527, %v549
      %551 = vmatmul.f32.gmra.mxu0 %v317
      %v552 = vpop.f32.mrf.mxu0
      %v553 = vadd.f32 %v527, %v552
      %554 = vmatmul.f32.gmra.mxu0 %v320
      %v555 = vpop.f32.mrf.mxu0
      %v556 = vadd.f32 %v527, %v555
      %557 = vmatmul.f32.gmra.mxu0 %v323
      %v558 = vpop.f32.mrf.mxu0
      %v559 = vadd.f32 %v527, %v558
      %560 = vmatmul.f32.gmra.mxu0 %v326
      %v561 = vpop.f32.mrf.mxu0
      %v562 = vadd.f32 %v527, %v561
      %563 = vmatmul.f32.gmra.mxu0 %v329
      %v564 = vpop.f32.mrf.mxu0
      %v565 = vadd.f32 %v527, %v564
      %566 = vmatmul.f32.gmra.mxu0 %v332
      %v567 = vpop.f32.mrf.mxu0
      %v568 = vadd.f32 %v527, %v567
      %569 = vdwg.mxu0
      %v570 = vmax.f32 %v547, 0.0
      %v571 = vmax.f32 %v550, 0.0
      %v572 = vmax.f32 %v553, 0.0
      %v573 = vmax.f32 %v556, 0.0
      %v574 = vmax.f32 %v559, 0.0
      %v575 = vmax.f32 %v562, 0.0
      %v576 = vmax.f32 %v565, 0.0
      %v577 = vmax.f32 %v568, 0.0
      %s578 = scalar_lea.vmem [#allocation2], 192
      %579 = vst.msk [vmem:[%s578] sm:$0xff] %vm383, %v570
      %580 = vst.msk [vmem:[%s578 + $0x8] sm:$0xff] %vm383, %v571
      %581 = vst.msk [vmem:[%s578 + $0x10] sm:$0xff] %vm383, %v572
      %582 = vst.msk [vmem:[%s578 + $0x18] sm:$0xff] %vm383, %v573
      %583 = vst.msk [vmem:[%s578 + $0x20] sm:$0xff] %vm383, %v574
      %584 = vst.msk [vmem:[%s578 + $0x28] sm:$0xff] %vm383, %v575
      %585 = vst.msk [vmem:[%s578 + $0x30] sm:$0xff] %vm383, %v576
      %586 = vst.msk [vmem:[%s578 + $0x38] sm:$0xff] %vm383, %v577
      %v587 = vld [vmem:[%s3 + $0x4] sm:$0x1]
      %589 = vrot.lane.b32.xlu0 %v587, 96
      %v590 = vpop.permute.xlu0 %589
      %s591 = vtos %v590
      %v592 = vstv %s591
      %594 = vmatpush.msra.mxu0 0.0
      %595 = vmatpush.msra.mxu0 0.0
      %596 = vmatpush.msra.mxu0 0.0
      %597 = vmatpush.msra.mxu0 0.0
      %598 = vmatpush.msra.mxu0 0.0
      %599 = vmatpush.msra.mxu0 0.0
      %600 = vmatpush.msra.mxu0 0.0
      %601 = vmatpush.msra.mxu0 0.0
      %602 = vmatpush.msra.mxu0 0.0
      %603 = vmatpush.msra.mxu0 0.0
      %604 = vmatpush.msra.mxu0 0.0
      %605 = vmatpush.msra.mxu0 0.0
      %606 = vmatpush.msra.mxu0 0.0
      %607 = vmatpush.msra.mxu0 0.0
      %608 = vmatpush.msra.mxu0 0.0
      %609 = vmatpush.msra.mxu0 %v291
      %610 = vmatmul.f32.gmra.mxu0 %v311
      %v611 = vpop.f32.mrf.mxu0
      %v612 = vadd.f32 %v592, %v611
      %613 = vmatmul.f32.gmra.mxu0 %v314
      %v614 = vpop.f32.mrf.mxu0
      %v615 = vadd.f32 %v592, %v614
      %616 = vmatmul.f32.gmra.mxu0 %v317
      %v617 = vpop.f32.mrf.mxu0
      %v618 = vadd.f32 %v592, %v617
      %619 = vmatmul.f32.gmra.mxu0 %v320
      %v620 = vpop.f32.mrf.mxu0
      %v621 = vadd.f32 %v592, %v620
      %622 = vmatmul.f32.gmra.mxu0 %v323
      %v623 = vpop.f32.mrf.mxu0
      %v624 = vadd.f32 %v592, %v623
      %625 = vmatmul.f32.gmra.mxu0 %v326
      %v626 = vpop.f32.mrf.mxu0
      %v627 = vadd.f32 %v592, %v626
      %628 = vmatmul.f32.gmra.mxu0 %v329
      %v629 = vpop.f32.mrf.mxu0
      %v630 = vadd.f32 %v592, %v629
      %631 = vmatmul.f32.gmra.mxu0 %v332
      %v632 = vpop.f32.mrf.mxu0
      %v633 = vadd.f32 %v592, %v632
      %634 = vdwg.mxu0
      %v635 = vmax.f32 %v612, 0.0
      %v636 = vmax.f32 %v615, 0.0
      %v637 = vmax.f32 %v618, 0.0
      %v638 = vmax.f32 %v621, 0.0
      %v639 = vmax.f32 %v624, 0.0
      %v640 = vmax.f32 %v627, 0.0
      %v641 = vmax.f32 %v630, 0.0
      %v642 = vmax.f32 %v633, 0.0
      %s643 = scalar_lea.vmem [#allocation2], 256
      %644 = vst.msk [vmem:[%s643] sm:$0xff] %vm383, %v635
      %645 = vst.msk [vmem:[%s643 + $0x8] sm:$0xff] %vm383, %v636
      %646 = vst.msk [vmem:[%s643 + $0x10] sm:$0xff] %vm383, %v637
      %647 = vst.msk [vmem:[%s643 + $0x18] sm:$0xff] %vm383, %v638
      %648 = vst.msk [vmem:[%s643 + $0x20] sm:$0xff] %vm383, %v639
      %649 = vst.msk [vmem:[%s643 + $0x28] sm:$0xff] %vm383, %v640
      %650 = vst.msk [vmem:[%s643 + $0x30] sm:$0xff] %vm383, %v641
      %651 = vst.msk [vmem:[%s643 + $0x38] sm:$0xff] %vm383, %v642
      %v652 = vld [vmem:[%s3 + $0x5] sm:$0x1]
      %654 = vrot.lane.b32.xlu0 %v652, 96
      %v655 = vpop.permute.xlu0 %654
      %s656 = vtos %v655
      %v657 = vstv %s656
      %659 = vmatpush.msra.mxu0 0.0
      %660 = vmatpush.msra.mxu0 0.0
      %661 = vmatpush.msra.mxu0 0.0
      %662 = vmatpush.msra.mxu0 0.0
      %663 = vmatpush.msra.mxu0 0.0
      %664 = vmatpush.msra.mxu0 0.0
      %665 = vmatpush.msra.mxu0 0.0
      %666 = vmatpush.msra.mxu0 0.0
      %667 = vmatpush.msra.mxu0 0.0
      %668 = vmatpush.msra.mxu0 0.0
      %669 = vmatpush.msra.mxu0 0.0
      %670 = vmatpush.msra.mxu0 0.0
      %671 = vmatpush.msra.mxu0 0.0
      %672 = vmatpush.msra.mxu0 0.0
      %673 = vmatpush.msra.mxu0 0.0
      %674 = vmatpush.msra.mxu0 %v294
      %675 = vmatmul.f32.gmra.mxu0 %v311
      %v676 = vpop.f32.mrf.mxu0
      %v677 = vadd.f32 %v657, %v676
      %678 = vmatmul.f32.gmra.mxu0 %v314
      %v679 = vpop.f32.mrf.mxu0
      %v680 = vadd.f32 %v657, %v679
      %681 = vmatmul.f32.gmra.mxu0 %v317
      %v682 = vpop.f32.mrf.mxu0
      %v683 = vadd.f32 %v657, %v682
      %684 = vmatmul.f32.gmra.mxu0 %v320
      %v685 = vpop.f32.mrf.mxu0
      %v686 = vadd.f32 %v657, %v685
      %687 = vmatmul.f32.gmra.mxu0 %v323
      %v688 = vpop.f32.mrf.mxu0
      %v689 = vadd.f32 %v657, %v688
      %690 = vmatmul.f32.gmra.mxu0 %v326
      %v691 = vpop.f32.mrf.mxu0
      %v692 = vadd.f32 %v657, %v691
      %693 = vmatmul.f32.gmra.mxu0 %v329
      %v694 = vpop.f32.mrf.mxu0
      %v695 = vadd.f32 %v657, %v694
      %696 = vmatmul.f32.gmra.mxu0 %v332
      %v697 = vpop.f32.mrf.mxu0
      %v698 = vadd.f32 %v657, %v697
      %699 = vdwg.mxu0
      %v700 = vmax.f32 %v677, 0.0
      %v701 = vmax.f32 %v680, 0.0
      %v702 = vmax.f32 %v683, 0.0
      %v703 = vmax.f32 %v686, 0.0
      %v704 = vmax.f32 %v689, 0.0
      %v705 = vmax.f32 %v692, 0.0
      %v706 = vmax.f32 %v695, 0.0
      %v707 = vmax.f32 %v698, 0.0
      %s708 = scalar_lea.vmem [#allocation2], 320
      %709 = vst.msk [vmem:[%s708] sm:$0xff] %vm383, %v700
      %710 = vst.msk [vmem:[%s708 + $0x8] sm:$0xff] %vm383, %v701
      %711 = vst.msk [vmem:[%s708 + $0x10] sm:$0xff] %vm383, %v702
      %712 = vst.msk [vmem:[%s708 + $0x18] sm:$0xff] %vm383, %v703
      %713 = vst.msk [vmem:[%s708 + $0x20] sm:$0xff] %vm383, %v704
      %714 = vst.msk [vmem:[%s708 + $0x28] sm:$0xff] %vm383, %v705
      %715 = vst.msk [vmem:[%s708 + $0x30] sm:$0xff] %vm383, %v706
      %716 = vst.msk [vmem:[%s708 + $0x38] sm:$0xff] %vm383, %v707
      %v717 = vld [vmem:[%s3 + $0x6] sm:$0x1]
      %719 = vrot.lane.b32.xlu0 %v717, 96
      %v720 = vpop.permute.xlu0 %719
      %s721 = vtos %v720
      %v722 = vstv %s721
      %724 = vmatpush.msra.mxu0 0.0
      %725 = vmatpush.msra.mxu0 0.0
      %726 = vmatpush.msra.mxu0 0.0
      %727 = vmatpush.msra.mxu0 0.0
      %728 = vmatpush.msra.mxu0 0.0
      %729 = vmatpush.msra.mxu0 0.0
      %730 = vmatpush.msra.mxu0 0.0
      %731 = vmatpush.msra.mxu0 0.0
      %732 = vmatpush.msra.mxu0 0.0
      %733 = vmatpush.msra.mxu0 0.0
      %734 = vmatpush.msra.mxu0 0.0
      %735 = vmatpush.msra.mxu0 0.0
      %736 = vmatpush.msra.mxu0 0.0
      %737 = vmatpush.msra.mxu0 0.0
      %738 = vmatpush.msra.mxu0 0.0
      %739 = vmatpush.msra.mxu0 %v297
      %740 = vmatmul.f32.gmra.mxu0 %v311
      %v741 = vpop.f32.mrf.mxu0
      %v742 = vadd.f32 %v722, %v741
      %743 = vmatmul.f32.gmra.mxu0 %v314
      %v744 = vpop.f32.mrf.mxu0
      %v745 = vadd.f32 %v722, %v744
      %746 = vmatmul.f32.gmra.mxu0 %v317
      %v747 = vpop.f32.mrf.mxu0
      %v748 = vadd.f32 %v722, %v747
      %749 = vmatmul.f32.gmra.mxu0 %v320
      %v750 = vpop.f32.mrf.mxu0
      %v751 = vadd.f32 %v722, %v750
      %752 = vmatmul.f32.gmra.mxu0 %v323
      %v753 = vpop.f32.mrf.mxu0
      %v754 = vadd.f32 %v722, %v753
      %755 = vmatmul.f32.gmra.mxu0 %v326
      %v756 = vpop.f32.mrf.mxu0
      %v757 = vadd.f32 %v722, %v756
      %758 = vmatmul.f32.gmra.mxu0 %v329
      %v759 = vpop.f32.mrf.mxu0
      %v760 = vadd.f32 %v722, %v759
      %761 = vmatmul.f32.gmra.mxu0 %v332
      %v762 = vpop.f32.mrf.mxu0
      %v763 = vadd.f32 %v722, %v762
      %764 = vdwg.mxu0
      %v765 = vmax.f32 %v742, 0.0
      %v766 = vmax.f32 %v745, 0.0
      %v767 = vmax.f32 %v748, 0.0
      %v768 = vmax.f32 %v751, 0.0
      %v769 = vmax.f32 %v754, 0.0
      %v770 = vmax.f32 %v757, 0.0
      %v771 = vmax.f32 %v760, 0.0
      %v772 = vmax.f32 %v763, 0.0
      %s773 = scalar_lea.vmem [#allocation2], 384
      %774 = vst.msk [vmem:[%s773] sm:$0xff] %vm383, %v765
      %775 = vst.msk [vmem:[%s773 + $0x8] sm:$0xff] %vm383, %v766
      %776 = vst.msk [vmem:[%s773 + $0x10] sm:$0xff] %vm383, %v767
      %777 = vst.msk [vmem:[%s773 + $0x18] sm:$0xff] %vm383, %v768
      %778 = vst.msk [vmem:[%s773 + $0x20] sm:$0xff] %vm383, %v769
      %779 = vst.msk [vmem:[%s773 + $0x28] sm:$0xff] %vm383, %v770
      %780 = vst.msk [vmem:[%s773 + $0x30] sm:$0xff] %vm383, %v771
      %781 = vst.msk [vmem:[%s773 + $0x38] sm:$0xff] %vm383, %v772
      %v782 = vld [vmem:[%s3 + $0x7] sm:$0x1]
      %784 = vrot.lane.b32.xlu0 %v782, 96
      %v785 = vpop.permute.xlu0 %784
      %s786 = vtos %v785
      %v787 = vstv %s786
      %789 = vmatpush.msra.mxu0 0.0
      %790 = vmatpush.msra.mxu0 0.0
      %791 = vmatpush.msra.mxu0 0.0
      %792 = vmatpush.msra.mxu0 0.0
      %793 = vmatpush.msra.mxu0 0.0
      %794 = vmatpush.msra.mxu0 0.0
      %795 = vmatpush.msra.mxu0 0.0
      %796 = vmatpush.msra.mxu0 0.0
      %797 = vmatpush.msra.mxu0 0.0
      %798 = vmatpush.msra.mxu0 0.0
      %799 = vmatpush.msra.mxu0 0.0
      %800 = vmatpush.msra.mxu0 0.0
      %801 = vmatpush.msra.mxu0 0.0
      %802 = vmatpush.msra.mxu0 0.0
      %803 = vmatpush.msra.mxu0 0.0
      %804 = vmatpush.msra.mxu0 %v300
      %805 = vmatmul.f32.gmra.mxu0 %v311
      %v806 = vpop.f32.mrf.mxu0
      %v807 = vadd.f32 %v787, %v806
      %808 = vmatmul.f32.gmra.mxu0 %v314
      %v809 = vpop.f32.mrf.mxu0
      %v810 = vadd.f32 %v787, %v809
      %811 = vmatmul.f32.gmra.mxu0 %v317
      %v812 = vpop.f32.mrf.mxu0
      %v813 = vadd.f32 %v787, %v812
      %814 = vmatmul.f32.gmra.mxu0 %v320
      %v815 = vpop.f32.mrf.mxu0
      %v816 = vadd.f32 %v787, %v815
      %817 = vmatmul.f32.gmra.mxu0 %v323
      %v818 = vpop.f32.mrf.mxu0
      %v819 = vadd.f32 %v787, %v818
      %820 = vmatmul.f32.gmra.mxu0 %v326
      %v821 = vpop.f32.mrf.mxu0
      %v822 = vadd.f32 %v787, %v821
      %823 = vmatmul.f32.gmra.mxu0 %v329
      %v824 = vpop.f32.mrf.mxu0
      %v825 = vadd.f32 %v787, %v824
      %826 = vmatmul.f32.gmra.mxu0 %v332
      %v827 = vpop.f32.mrf.mxu0
      %v828 = vadd.f32 %v787, %v827
      %829 = vdwg.mxu0
      %v830 = vmax.f32 %v807, 0.0
      %v831 = vmax.f32 %v810, 0.0
      %v832 = vmax.f32 %v813, 0.0
      %v833 = vmax.f32 %v816, 0.0
      %v834 = vmax.f32 %v819, 0.0
      %v835 = vmax.f32 %v822, 0.0
      %v836 = vmax.f32 %v825, 0.0
      %v837 = vmax.f32 %v828, 0.0
      %s838 = scalar_lea.vmem [#allocation2], 448
      %839 = vst.msk [vmem:[%s838] sm:$0xff] %vm383, %v830
      %840 = vst.msk [vmem:[%s838 + $0x8] sm:$0xff] %vm383, %v831
      %841 = vst.msk [vmem:[%s838 + $0x10] sm:$0xff] %vm383, %v832
      %842 = vst.msk [vmem:[%s838 + $0x18] sm:$0xff] %vm383, %v833
      %843 = vst.msk [vmem:[%s838 + $0x20] sm:$0xff] %vm383, %v834
      %844 = vst.msk [vmem:[%s838 + $0x28] sm:$0xff] %vm383, %v835
      %845 = vst.msk [vmem:[%s838 + $0x30] sm:$0xff] %vm383, %v836
      %846 = vst.msk [vmem:[%s838 + $0x38] sm:$0xff] %vm383, %v837
      loop: start=0, step=1, limit=8
      $region37: #{convncf_forward.16} parent=35 // loop_pre_header
        _
      $region38: #{convncf_forward.16} parent=35 // loop_header
        %s848 = sphi 0, %s852
        %p849 = scmp.ge.s32.totalorder %s848, 8
      $region39: #{convncf_forward.16} parent=35 // loop_header_branch
        %851 = sbr.rel (%p849) target = $region43
      $region40: #{convncf_forward.16} parent=35 // loop_body
        %s853 = sadd.s32 %s848, 8
        %s854 = scalar_lea.vmem %s3, %s853
        %v855 = vld [vmem:[%s854] sm:$0x1]
        %v856 = vld [vmem:[#allocation2] sm:$0xff]
        %v857 = vld [vmem:[#allocation2 + $0x8] sm:$0xff]
        %v858 = vld [vmem:[#allocation2 + $0x10] sm:$0xff]
        %v859 = vld [vmem:[#allocation2 + $0x18] sm:$0xff]
        %s861 = vtos %v855
        %v862 = vstv %s861
        %v864 = vmul.f32 %v862, %v856
        %v865 = vmul.f32 %v862, %v857
        %v866 = vmul.f32 %v862, %v858
        %v867 = vmul.f32 %v862, %v859
        %868 = vrot.lane.b32.xlu0 %v855, 127
        %v869 = vpop.permute.xlu0 %868
        %s870 = vtos %v869
        %v871 = vstv %s870
        %v873 = vmul.f32 %v871, %v856
        %v874 = vmul.f32 %v871, %v857
        %v875 = vmul.f32 %v871, %v858
        %v876 = vmul.f32 %v871, %v859
        %881 = vrot.lane.b32.xlu0 %v873, 96
        %v882 = vpop.permute.xlu0 %881
        %883 = vrot.lane.b32.xlu0 %v874, 96
        %v884 = vpop.permute.xlu0 %883
        %885 = vrot.lane.b32.xlu0 %v875, 96
        %v886 = vpop.permute.xlu0 %885
        %887 = vrot.lane.b32.xlu0 %v876, 96
        %v888 = vpop.permute.xlu0 %887
        %v893 = vadd.f32 %v864, %v882
        %v894 = vadd.f32 %v865, %v884
        %v895 = vadd.f32 %v866, %v886
        %v896 = vadd.f32 %v867, %v888
        %v897 = vld [vmem:[#allocation2 + $0x20] sm:$0xff]
        %v898 = vld [vmem:[#allocation2 + $0x28] sm:$0xff]
        %v899 = vld [vmem:[#allocation2 + $0x30] sm:$0xff]
        %v900 = vld [vmem:[#allocation2 + $0x38] sm:$0xff]
        %901 = vrot.lane.b32.xlu0 %v855, 126
        %v902 = vpop.permute.xlu0 %901
        %s903 = vtos %v902
        %v904 = vstv %s903
        %v906 = vmul.f32 %v904, %v897
        %v907 = vmul.f32 %v904, %v898
        %v908 = vmul.f32 %v904, %v899
        %v909 = vmul.f32 %v904, %v900
        %v910 = vadd.f32 %v893, %v906
        %v911 = vadd.f32 %v894, %v907
        %v912 = vadd.f32 %v895, %v908
        %v913 = vadd.f32 %v896, %v909
        %914 = vrot.lane.b32.xlu0 %v855, 125
        %v915 = vpop.permute.xlu0 %914
        %s916 = vtos %v915
        %v917 = vstv %s916
        %v919 = vmul.f32 %v917, %v897
        %v920 = vmul.f32 %v917, %v898
        %v921 = vmul.f32 %v917, %v899
        %v922 = vmul.f32 %v917, %v900
        %927 = vrot.lane.b32.xlu0 %v919, 96
        %v928 = vpop.permute.xlu0 %927
        %929 = vrot.lane.b32.xlu0 %v920, 96
        %v930 = vpop.permute.xlu0 %929
        %931 = vrot.lane.b32.xlu0 %v921, 96
        %v932 = vpop.permute.xlu0 %931
        %933 = vrot.lane.b32.xlu0 %v922, 96
        %v934 = vpop.permute.xlu0 %933
        %v939 = vadd.f32 %v910, %v928
        %v940 = vadd.f32 %v911, %v930
        %v941 = vadd.f32 %v912, %v932
        %v942 = vadd.f32 %v913, %v934
        %v943 = vld [vmem:[%s448] sm:$0xff]
        %v944 = vld [vmem:[%s448 + $0x8] sm:$0xff]
        %v945 = vld [vmem:[%s448 + $0x10] sm:$0xff]
        %v946 = vld [vmem:[%s448 + $0x18] sm:$0xff]
        %947 = vrot.lane.b32.xlu0 %v855, 124
        %v948 = vpop.permute.xlu0 %947
        %s949 = vtos %v948
        %v950 = vstv %s949
        %v952 = vmul.f32 %v950, %v943
        %v953 = vmul.f32 %v950, %v944
        %v954 = vmul.f32 %v950, %v945
        %v955 = vmul.f32 %v950, %v946
        %v956 = vadd.f32 %v939, %v952
        %v957 = vadd.f32 %v940, %v953
        %v958 = vadd.f32 %v941, %v954
        %v959 = vadd.f32 %v942, %v955
        %960 = vrot.lane.b32.xlu0 %v855, 123
        %v961 = vpop.permute.xlu0 %960
        %s962 = vtos %v961
        %v963 = vstv %s962
        %v965 = vmul.f32 %v963, %v943
        %v966 = vmul.f32 %v963, %v944
        %v967 = vmul.f32 %v963, %v945
        %v968 = vmul.f32 %v963, %v946
        %973 = vrot.lane.b32.xlu0 %v965, 96
        %v974 = vpop.permute.xlu0 %973
        %975 = vrot.lane.b32.xlu0 %v966, 96
        %v976 = vpop.permute.xlu0 %975
        %977 = vrot.lane.b32.xlu0 %v967, 96
        %v978 = vpop.permute.xlu0 %977
        %979 = vrot.lane.b32.xlu0 %v968, 96
        %v980 = vpop.permute.xlu0 %979
        %v985 = vadd.f32 %v956, %v974
        %v986 = vadd.f32 %v957, %v976
        %v987 = vadd.f32 %v958, %v978
        %v988 = vadd.f32 %v959, %v980
        %v989 = vld [vmem:[%s448 + $0x20] sm:$0xff]
        %v990 = vld [vmem:[%s448 + $0x28] sm:$0xff]
        %v991 = vld [vmem:[%s448 + $0x30] sm:$0xff]
        %v992 = vld [vmem:[%s448 + $0x38] sm:$0xff]
        %993 = vrot.lane.b32.xlu0 %v855, 122
        %v994 = vpop.permute.xlu0 %993
        %s995 = vtos %v994
        %v996 = vstv %s995
        %v998 = vmul.f32 %v996, %v989
        %v999 = vmul.f32 %v996, %v990
        %v1000 = vmul.f32 %v996, %v991
        %v1001 = vmul.f32 %v996, %v992
        %v1002 = vadd.f32 %v985, %v998
        %v1003 = vadd.f32 %v986, %v999
        %v1004 = vadd.f32 %v987, %v1000
        %v1005 = vadd.f32 %v988, %v1001
        %1006 = vrot.lane.b32.xlu0 %v855, 121
        %v1007 = vpop.permute.xlu0 %1006
        %s1008 = vtos %v1007
        %v1009 = vstv %s1008
        %v1011 = vmul.f32 %v1009, %v989
        %v1012 = vmul.f32 %v1009, %v990
        %v1013 = vmul.f32 %v1009, %v991
        %v1014 = vmul.f32 %v1009, %v992
        %1019 = vrot.lane.b32.xlu0 %v1011, 96
        %v1020 = vpop.permute.xlu0 %1019
        %1021 = vrot.lane.b32.xlu0 %v1012, 96
        %v1022 = vpop.permute.xlu0 %1021
        %1023 = vrot.lane.b32.xlu0 %v1013, 96
        %v1024 = vpop.permute.xlu0 %1023
        %1025 = vrot.lane.b32.xlu0 %v1014, 96
        %v1026 = vpop.permute.xlu0 %1025
        %v1031 = vadd.f32 %v1002, %v1020
        %v1032 = vadd.f32 %v1003, %v1022
        %v1033 = vadd.f32 %v1004, %v1024
        %v1034 = vadd.f32 %v1005, %v1026
        %v1035 = vld [vmem:[%s513] sm:$0xff]
        %v1036 = vld [vmem:[%s513 + $0x8] sm:$0xff]
        %v1037 = vld [vmem:[%s513 + $0x10] sm:$0xff]
        %v1038 = vld [vmem:[%s513 + $0x18] sm:$0xff]
        %1039 = vrot.lane.b32.xlu0 %v855, 120
        %v1040 = vpop.permute.xlu0 %1039
        %s1041 = vtos %v1040
        %v1042 = vstv %s1041
        %v1044 = vmul.f32 %v1042, %v1035
        %v1045 = vmul.f32 %v1042, %v1036
        %v1046 = vmul.f32 %v1042, %v1037
        %v1047 = vmul.f32 %v1042, %v1038
        %v1048 = vadd.f32 %v1031, %v1044
        %v1049 = vadd.f32 %v1032, %v1045
        %v1050 = vadd.f32 %v1033, %v1046
        %v1051 = vadd.f32 %v1034, %v1047
        %1052 = vrot.lane.b32.xlu0 %v855, 119
        %v1053 = vpop.permute.xlu0 %1052
        %s1054 = vtos %v1053
        %v1055 = vstv %s1054
        %v1057 = vmul.f32 %v1055, %v1035
        %v1058 = vmul.f32 %v1055, %v1036
        %v1059 = vmul.f32 %v1055, %v1037
        %v1060 = vmul.f32 %v1055, %v1038
        %1065 = vrot.lane.b32.xlu0 %v1057, 96
        %v1066 = vpop.permute.xlu0 %1065
        %1067 = vrot.lane.b32.xlu0 %v1058, 96
        %v1068 = vpop.permute.xlu0 %1067
        %1069 = vrot.lane.b32.xlu0 %v1059, 96
        %v1070 = vpop.permute.xlu0 %1069
        %1071 = vrot.lane.b32.xlu0 %v1060, 96
        %v1072 = vpop.permute.xlu0 %1071
        %v1077 = vadd.f32 %v1048, %v1066
        %v1078 = vadd.f32 %v1049, %v1068
        %v1079 = vadd.f32 %v1050, %v1070
        %v1080 = vadd.f32 %v1051, %v1072
        %v1081 = vld [vmem:[%s513 + $0x20] sm:$0xff]
        %v1082 = vld [vmem:[%s513 + $0x28] sm:$0xff]
        %v1083 = vld [vmem:[%s513 + $0x30] sm:$0xff]
        %v1084 = vld [vmem:[%s513 + $0x38] sm:$0xff]
        %1085 = vrot.lane.b32.xlu0 %v855, 118
        %v1086 = vpop.permute.xlu0 %1085
        %s1087 = vtos %v1086
        %v1088 = vstv %s1087
        %v1090 = vmul.f32 %v1088, %v1081
        %v1091 = vmul.f32 %v1088, %v1082
        %v1092 = vmul.f32 %v1088, %v1083
        %v1093 = vmul.f32 %v1088, %v1084
        %v1094 = vadd.f32 %v1077, %v1090
        %v1095 = vadd.f32 %v1078, %v1091
        %v1096 = vadd.f32 %v1079, %v1092
        %v1097 = vadd.f32 %v1080, %v1093
        %1098 = vrot.lane.b32.xlu0 %v855, 117
        %v1099 = vpop.permute.xlu0 %1098
        %s1100 = vtos %v1099
        %v1101 = vstv %s1100
        %v1103 = vmul.f32 %v1101, %v1081
        %v1104 = vmul.f32 %v1101, %v1082
        %v1105 = vmul.f32 %v1101, %v1083
        %v1106 = vmul.f32 %v1101, %v1084
        %1111 = vrot.lane.b32.xlu0 %v1103, 96
        %v1112 = vpop.permute.xlu0 %1111
        %1113 = vrot.lane.b32.xlu0 %v1104, 96
        %v1114 = vpop.permute.xlu0 %1113
        %1115 = vrot.lane.b32.xlu0 %v1105, 96
        %v1116 = vpop.permute.xlu0 %1115
        %1117 = vrot.lane.b32.xlu0 %v1106, 96
        %v1118 = vpop.permute.xlu0 %1117
        %v1123 = vadd.f32 %v1094, %v1112
        %v1124 = vadd.f32 %v1095, %v1114
        %v1125 = vadd.f32 %v1096, %v1116
        %v1126 = vadd.f32 %v1097, %v1118
        %v1127 = vld [vmem:[%s578] sm:$0xff]
        %v1128 = vld [vmem:[%s578 + $0x8] sm:$0xff]
        %v1129 = vld [vmem:[%s578 + $0x10] sm:$0xff]
        %v1130 = vld [vmem:[%s578 + $0x18] sm:$0xff]
        %1131 = vrot.lane.b32.xlu0 %v855, 116
        %v1132 = vpop.permute.xlu0 %1131
        %s1133 = vtos %v1132
        %v1134 = vstv %s1133
        %v1136 = vmul.f32 %v1134, %v1127
        %v1137 = vmul.f32 %v1134, %v1128
        %v1138 = vmul.f32 %v1134, %v1129
        %v1139 = vmul.f32 %v1134, %v1130
        %v1140 = vadd.f32 %v1123, %v1136
        %v1141 = vadd.f32 %v1124, %v1137
        %v1142 = vadd.f32 %v1125, %v1138
        %v1143 = vadd.f32 %v1126, %v1139
        %1144 = vrot.lane.b32.xlu0 %v855, 115
        %v1145 = vpop.permute.xlu0 %1144
        %s1146 = vtos %v1145
        %v1147 = vstv %s1146
        %v1149 = vmul.f32 %v1147, %v1127
        %v1150 = vmul.f32 %v1147, %v1128
        %v1151 = vmul.f32 %v1147, %v1129
        %v1152 = vmul.f32 %v1147, %v1130
        %1157 = vrot.lane.b32.xlu0 %v1149, 96
        %v1158 = vpop.permute.xlu0 %1157
        %1159 = vrot.lane.b32.xlu0 %v1150, 96
        %v1160 = vpop.permute.xlu0 %1159
        %1161 = vrot.lane.b32.xlu0 %v1151, 96
        %v1162 = vpop.permute.xlu0 %1161
        %1163 = vrot.lane.b32.xlu0 %v1152, 96
        %v1164 = vpop.permute.xlu0 %1163
        %v1169 = vadd.f32 %v1140, %v1158
        %v1170 = vadd.f32 %v1141, %v1160
        %v1171 = vadd.f32 %v1142, %v1162
        %v1172 = vadd.f32 %v1143, %v1164
        %v1173 = vld [vmem:[%s578 + $0x20] sm:$0xff]
        %v1174 = vld [vmem:[%s578 + $0x28] sm:$0xff]
        %v1175 = vld [vmem:[%s578 + $0x30] sm:$0xff]
        %v1176 = vld [vmem:[%s578 + $0x38] sm:$0xff]
        %1177 = vrot.lane.b32.xlu0 %v855, 114
        %v1178 = vpop.permute.xlu0 %1177
        %s1179 = vtos %v1178
        %v1180 = vstv %s1179
        %v1182 = vmul.f32 %v1180, %v1173
        %v1183 = vmul.f32 %v1180, %v1174
        %v1184 = vmul.f32 %v1180, %v1175
        %v1185 = vmul.f32 %v1180, %v1176
        %v1186 = vadd.f32 %v1169, %v1182
        %v1187 = vadd.f32 %v1170, %v1183
        %v1188 = vadd.f32 %v1171, %v1184
        %v1189 = vadd.f32 %v1172, %v1185
        %1190 = vrot.lane.b32.xlu0 %v855, 113
        %v1191 = vpop.permute.xlu0 %1190
        %s1192 = vtos %v1191
        %v1193 = vstv %s1192
        %v1195 = vmul.f32 %v1193, %v1173
        %v1196 = vmul.f32 %v1193, %v1174
        %v1197 = vmul.f32 %v1193, %v1175
        %v1198 = vmul.f32 %v1193, %v1176
        %1203 = vrot.lane.b32.xlu0 %v1195, 96
        %v1204 = vpop.permute.xlu0 %1203
        %1205 = vrot.lane.b32.xlu0 %v1196, 96
        %v1206 = vpop.permute.xlu0 %1205
        %1207 = vrot.lane.b32.xlu0 %v1197, 96
        %v1208 = vpop.permute.xlu0 %1207
        %1209 = vrot.lane.b32.xlu0 %v1198, 96
        %v1210 = vpop.permute.xlu0 %1209
        %v1215 = vadd.f32 %v1186, %v1204
        %v1216 = vadd.f32 %v1187, %v1206
        %v1217 = vadd.f32 %v1188, %v1208
        %v1218 = vadd.f32 %v1189, %v1210
        %v1219 = vld [vmem:[%s643] sm:$0xff]
        %v1220 = vld [vmem:[%s643 + $0x8] sm:$0xff]
        %v1221 = vld [vmem:[%s643 + $0x10] sm:$0xff]
        %v1222 = vld [vmem:[%s643 + $0x18] sm:$0xff]
        %1223 = vrot.lane.b32.xlu0 %v855, 112
        %v1224 = vpop.permute.xlu0 %1223
        %s1225 = vtos %v1224
        %v1226 = vstv %s1225
        %v1228 = vmul.f32 %v1226, %v1219
        %v1229 = vmul.f32 %v1226, %v1220
        %v1230 = vmul.f32 %v1226, %v1221
        %v1231 = vmul.f32 %v1226, %v1222
        %v1232 = vadd.f32 %v1215, %v1228
        %v1233 = vadd.f32 %v1216, %v1229
        %v1234 = vadd.f32 %v1217, %v1230
        %v1235 = vadd.f32 %v1218, %v1231
        %1236 = vrot.lane.b32.xlu0 %v855, 111
        %v1237 = vpop.permute.xlu0 %1236
        %s1238 = vtos %v1237
        %v1239 = vstv %s1238
        %v1241 = vmul.f32 %v1239, %v1219
        %v1242 = vmul.f32 %v1239, %v1220
        %v1243 = vmul.f32 %v1239, %v1221
        %v1244 = vmul.f32 %v1239, %v1222
        %1249 = vrot.lane.b32.xlu0 %v1241, 96
        %v1250 = vpop.permute.xlu0 %1249
        %1251 = vrot.lane.b32.xlu0 %v1242, 96
        %v1252 = vpop.permute.xlu0 %1251
        %1253 = vrot.lane.b32.xlu0 %v1243, 96
        %v1254 = vpop.permute.xlu0 %1253
        %1255 = vrot.lane.b32.xlu0 %v1244, 96
        %v1256 = vpop.permute.xlu0 %1255
        %v1261 = vadd.f32 %v1232, %v1250
        %v1262 = vadd.f32 %v1233, %v1252
        %v1263 = vadd.f32 %v1234, %v1254
        %v1264 = vadd.f32 %v1235, %v1256
        %v1265 = vld [vmem:[%s643 + $0x20] sm:$0xff]
        %v1266 = vld [vmem:[%s643 + $0x28] sm:$0xff]
        %v1267 = vld [vmem:[%s643 + $0x30] sm:$0xff]
        %v1268 = vld [vmem:[%s643 + $0x38] sm:$0xff]
        %1269 = vrot.lane.b32.xlu0 %v855, 110
        %v1270 = vpop.permute.xlu0 %1269
        %s1271 = vtos %v1270
        %v1272 = vstv %s1271
        %v1274 = vmul.f32 %v1272, %v1265
        %v1275 = vmul.f32 %v1272, %v1266
        %v1276 = vmul.f32 %v1272, %v1267
        %v1277 = vmul.f32 %v1272, %v1268
        %v1278 = vadd.f32 %v1261, %v1274
        %v1279 = vadd.f32 %v1262, %v1275
        %v1280 = vadd.f32 %v1263, %v1276
        %v1281 = vadd.f32 %v1264, %v1277
        %1282 = vrot.lane.b32.xlu0 %v855, 109
        %v1283 = vpop.permute.xlu0 %1282
        %s1284 = vtos %v1283
        %v1285 = vstv %s1284
        %v1287 = vmul.f32 %v1285, %v1265
        %v1288 = vmul.f32 %v1285, %v1266
        %v1289 = vmul.f32 %v1285, %v1267
        %v1290 = vmul.f32 %v1285, %v1268
        %1295 = vrot.lane.b32.xlu0 %v1287, 96
        %v1296 = vpop.permute.xlu0 %1295
        %1297 = vrot.lane.b32.xlu0 %v1288, 96
        %v1298 = vpop.permute.xlu0 %1297
        %1299 = vrot.lane.b32.xlu0 %v1289, 96
        %v1300 = vpop.permute.xlu0 %1299
        %1301 = vrot.lane.b32.xlu0 %v1290, 96
        %v1302 = vpop.permute.xlu0 %1301
        %v1307 = vadd.f32 %v1278, %v1296
        %v1308 = vadd.f32 %v1279, %v1298
        %v1309 = vadd.f32 %v1280, %v1300
        %v1310 = vadd.f32 %v1281, %v1302
        %v1311 = vld [vmem:[%s708] sm:$0xff]
        %v1312 = vld [vmem:[%s708 + $0x8] sm:$0xff]
        %v1313 = vld [vmem:[%s708 + $0x10] sm:$0xff]
        %v1314 = vld [vmem:[%s708 + $0x18] sm:$0xff]
        %1315 = vrot.lane.b32.xlu0 %v855, 108
        %v1316 = vpop.permute.xlu0 %1315
        %s1317 = vtos %v1316
        %v1318 = vstv %s1317
        %v1320 = vmul.f32 %v1318, %v1311
        %v1321 = vmul.f32 %v1318, %v1312
        %v1322 = vmul.f32 %v1318, %v1313
        %v1323 = vmul.f32 %v1318, %v1314
        %v1324 = vadd.f32 %v1307, %v1320
        %v1325 = vadd.f32 %v1308, %v1321
        %v1326 = vadd.f32 %v1309, %v1322
        %v1327 = vadd.f32 %v1310, %v1323
        %1328 = vrot.lane.b32.xlu0 %v855, 107
        %v1329 = vpop.permute.xlu0 %1328
        %s1330 = vtos %v1329
        %v1331 = vstv %s1330
        %v1333 = vmul.f32 %v1331, %v1311
        %v1334 = vmul.f32 %v1331, %v1312
        %v1335 = vmul.f32 %v1331, %v1313
        %v1336 = vmul.f32 %v1331, %v1314
        %1341 = vrot.lane.b32.xlu0 %v1333, 96
        %v1342 = vpop.permute.xlu0 %1341
        %1343 = vrot.lane.b32.xlu0 %v1334, 96
        %v1344 = vpop.permute.xlu0 %1343
        %1345 = vrot.lane.b32.xlu0 %v1335, 96
        %v1346 = vpop.permute.xlu0 %1345
        %1347 = vrot.lane.b32.xlu0 %v1336, 96
        %v1348 = vpop.permute.xlu0 %1347
        %v1353 = vadd.f32 %v1324, %v1342
        %v1354 = vadd.f32 %v1325, %v1344
        %v1355 = vadd.f32 %v1326, %v1346
        %v1356 = vadd.f32 %v1327, %v1348
        %v1357 = vld [vmem:[%s708 + $0x20] sm:$0xff]
        %v1358 = vld [vmem:[%s708 + $0x28] sm:$0xff]
        %v1359 = vld [vmem:[%s708 + $0x30] sm:$0xff]
        %v1360 = vld [vmem:[%s708 + $0x38] sm:$0xff]
        %1361 = vrot.lane.b32.xlu0 %v855, 106
        %v1362 = vpop.permute.xlu0 %1361
        %s1363 = vtos %v1362
        %v1364 = vstv %s1363
        %v1366 = vmul.f32 %v1364, %v1357
        %v1367 = vmul.f32 %v1364, %v1358
        %v1368 = vmul.f32 %v1364, %v1359
        %v1369 = vmul.f32 %v1364, %v1360
        %v1370 = vadd.f32 %v1353, %v1366
        %v1371 = vadd.f32 %v1354, %v1367
        %v1372 = vadd.f32 %v1355, %v1368
        %v1373 = vadd.f32 %v1356, %v1369
        %1374 = vrot.lane.b32.xlu0 %v855, 105
        %v1375 = vpop.permute.xlu0 %1374
        %s1376 = vtos %v1375
        %v1377 = vstv %s1376
        %v1379 = vmul.f32 %v1377, %v1357
        %v1380 = vmul.f32 %v1377, %v1358
        %v1381 = vmul.f32 %v1377, %v1359
        %v1382 = vmul.f32 %v1377, %v1360
        %1387 = vrot.lane.b32.xlu0 %v1379, 96
        %v1388 = vpop.permute.xlu0 %1387
        %1389 = vrot.lane.b32.xlu0 %v1380, 96
        %v1390 = vpop.permute.xlu0 %1389
        %1391 = vrot.lane.b32.xlu0 %v1381, 96
        %v1392 = vpop.permute.xlu0 %1391
        %1393 = vrot.lane.b32.xlu0 %v1382, 96
        %v1394 = vpop.permute.xlu0 %1393
        %v1399 = vadd.f32 %v1370, %v1388
        %v1400 = vadd.f32 %v1371, %v1390
        %v1401 = vadd.f32 %v1372, %v1392
        %v1402 = vadd.f32 %v1373, %v1394
        %v1403 = vld [vmem:[%s773] sm:$0xff]
        %v1404 = vld [vmem:[%s773 + $0x8] sm:$0xff]
        %v1405 = vld [vmem:[%s773 + $0x10] sm:$0xff]
        %v1406 = vld [vmem:[%s773 + $0x18] sm:$0xff]
        %1407 = vrot.lane.b32.xlu0 %v855, 104
        %v1408 = vpop.permute.xlu0 %1407
        %s1409 = vtos %v1408
        %v1410 = vstv %s1409
        %v1412 = vmul.f32 %v1410, %v1403
        %v1413 = vmul.f32 %v1410, %v1404
        %v1414 = vmul.f32 %v1410, %v1405
        %v1415 = vmul.f32 %v1410, %v1406
        %v1416 = vadd.f32 %v1399, %v1412
        %v1417 = vadd.f32 %v1400, %v1413
        %v1418 = vadd.f32 %v1401, %v1414
        %v1419 = vadd.f32 %v1402, %v1415
        %1420 = vrot.lane.b32.xlu0 %v855, 103
        %v1421 = vpop.permute.xlu0 %1420
        %s1422 = vtos %v1421
        %v1423 = vstv %s1422
        %v1425 = vmul.f32 %v1423, %v1403
        %v1426 = vmul.f32 %v1423, %v1404
        %v1427 = vmul.f32 %v1423, %v1405
        %v1428 = vmul.f32 %v1423, %v1406
        %1433 = vrot.lane.b32.xlu0 %v1425, 96
        %v1434 = vpop.permute.xlu0 %1433
        %1435 = vrot.lane.b32.xlu0 %v1426, 96
        %v1436 = vpop.permute.xlu0 %1435
        %1437 = vrot.lane.b32.xlu0 %v1427, 96
        %v1438 = vpop.permute.xlu0 %1437
        %1439 = vrot.lane.b32.xlu0 %v1428, 96
        %v1440 = vpop.permute.xlu0 %1439
        %v1445 = vadd.f32 %v1416, %v1434
        %v1446 = vadd.f32 %v1417, %v1436
        %v1447 = vadd.f32 %v1418, %v1438
        %v1448 = vadd.f32 %v1419, %v1440
        %v1449 = vld [vmem:[%s773 + $0x20] sm:$0xff]
        %v1450 = vld [vmem:[%s773 + $0x28] sm:$0xff]
        %v1451 = vld [vmem:[%s773 + $0x30] sm:$0xff]
        %v1452 = vld [vmem:[%s773 + $0x38] sm:$0xff]
        %1453 = vrot.lane.b32.xlu0 %v855, 102
        %v1454 = vpop.permute.xlu0 %1453
        %s1455 = vtos %v1454
        %v1456 = vstv %s1455
        %v1458 = vmul.f32 %v1456, %v1449
        %v1459 = vmul.f32 %v1456, %v1450
        %v1460 = vmul.f32 %v1456, %v1451
        %v1461 = vmul.f32 %v1456, %v1452
        %v1462 = vadd.f32 %v1445, %v1458
        %v1463 = vadd.f32 %v1446, %v1459
        %v1464 = vadd.f32 %v1447, %v1460
        %v1465 = vadd.f32 %v1448, %v1461
        %1466 = vrot.lane.b32.xlu0 %v855, 101
        %v1467 = vpop.permute.xlu0 %1466
        %s1468 = vtos %v1467
        %v1469 = vstv %s1468
        %v1471 = vmul.f32 %v1469, %v1449
        %v1472 = vmul.f32 %v1469, %v1450
        %v1473 = vmul.f32 %v1469, %v1451
        %v1474 = vmul.f32 %v1469, %v1452
        %1479 = vrot.lane.b32.xlu0 %v1471, 96
        %v1480 = vpop.permute.xlu0 %1479
        %1481 = vrot.lane.b32.xlu0 %v1472, 96
        %v1482 = vpop.permute.xlu0 %1481
        %1483 = vrot.lane.b32.xlu0 %v1473, 96
        %v1484 = vpop.permute.xlu0 %1483
        %1485 = vrot.lane.b32.xlu0 %v1474, 96
        %v1486 = vpop.permute.xlu0 %1485
        %v1491 = vadd.f32 %v1462, %v1480
        %v1492 = vadd.f32 %v1463, %v1482
        %v1493 = vadd.f32 %v1464, %v1484
        %v1494 = vadd.f32 %v1465, %v1486
        %v1495 = vld [vmem:[%s838] sm:$0xff]
        %v1496 = vld [vmem:[%s838 + $0x8] sm:$0xff]
        %v1497 = vld [vmem:[%s838 + $0x10] sm:$0xff]
        %v1498 = vld [vmem:[%s838 + $0x18] sm:$0xff]
        %1499 = vrot.lane.b32.xlu0 %v855, 100
        %v1500 = vpop.permute.xlu0 %1499
        %s1501 = vtos %v1500
        %v1502 = vstv %s1501
        %v1504 = vmul.f32 %v1502, %v1495
        %v1505 = vmul.f32 %v1502, %v1496
        %v1506 = vmul.f32 %v1502, %v1497
        %v1507 = vmul.f32 %v1502, %v1498
        %v1508 = vadd.f32 %v1491, %v1504
        %v1509 = vadd.f32 %v1492, %v1505
        %v1510 = vadd.f32 %v1493, %v1506
        %v1511 = vadd.f32 %v1494, %v1507
        %1512 = vrot.lane.b32.xlu0 %v855, 99
        %v1513 = vpop.permute.xlu0 %1512
        %s1514 = vtos %v1513
        %v1515 = vstv %s1514
        %v1517 = vmul.f32 %v1515, %v1495
        %v1518 = vmul.f32 %v1515, %v1496
        %v1519 = vmul.f32 %v1515, %v1497
        %v1520 = vmul.f32 %v1515, %v1498
        %1525 = vrot.lane.b32.xlu0 %v1517, 96
        %v1526 = vpop.permute.xlu0 %1525
        %1527 = vrot.lane.b32.xlu0 %v1518, 96
        %v1528 = vpop.permute.xlu0 %1527
        %1529 = vrot.lane.b32.xlu0 %v1519, 96
        %v1530 = vpop.permute.xlu0 %1529
        %1531 = vrot.lane.b32.xlu0 %v1520, 96
        %v1532 = vpop.permute.xlu0 %1531
        %v1537 = vadd.f32 %v1508, %v1526
        %v1538 = vadd.f32 %v1509, %v1528
        %v1539 = vadd.f32 %v1510, %v1530
        %v1540 = vadd.f32 %v1511, %v1532
        %v1541 = vld [vmem:[%s838 + $0x20] sm:$0xff]
        %v1542 = vld [vmem:[%s838 + $0x28] sm:$0xff]
        %v1543 = vld [vmem:[%s838 + $0x30] sm:$0xff]
        %v1544 = vld [vmem:[%s838 + $0x38] sm:$0xff]
        %1545 = vrot.lane.b32.xlu0 %v855, 98
        %v1546 = vpop.permute.xlu0 %1545
        %s1547 = vtos %v1546
        %v1548 = vstv %s1547
        %v1550 = vmul.f32 %v1548, %v1541
        %v1551 = vmul.f32 %v1548, %v1542
        %v1552 = vmul.f32 %v1548, %v1543
        %v1553 = vmul.f32 %v1548, %v1544
        %v1554 = vadd.f32 %v1537, %v1550
        %v1555 = vadd.f32 %v1538, %v1551
        %v1556 = vadd.f32 %v1539, %v1552
        %v1557 = vadd.f32 %v1540, %v1553
        %1558 = vrot.lane.b32.xlu0 %v855, 97
        %v1559 = vpop.permute.xlu0 %1558
        %s1560 = vtos %v1559
        %v1561 = vstv %s1560
        %v1563 = vmul.f32 %v1561, %v1541
        %v1564 = vmul.f32 %v1561, %v1542
        %v1565 = vmul.f32 %v1561, %v1543
        %v1566 = vmul.f32 %v1561, %v1544
        %1571 = vrot.lane.b32.xlu0 %v1563, 96
        %v1572 = vpop.permute.xlu0 %1571
        %1573 = vrot.lane.b32.xlu0 %v1564, 96
        %v1574 = vpop.permute.xlu0 %1573
        %1575 = vrot.lane.b32.xlu0 %v1565, 96
        %v1576 = vpop.permute.xlu0 %1575
        %1577 = vrot.lane.b32.xlu0 %v1566, 96
        %v1578 = vpop.permute.xlu0 %1577
        %v1583 = vadd.f32 %v1554, %v1572
        %v1584 = vadd.f32 %v1555, %v1574
        %v1585 = vadd.f32 %v1556, %v1576
        %v1586 = vadd.f32 %v1557, %v1578
        %1587 = vrot.lane.b32.xlu0 %v855, 96
        %v1588 = vpop.permute.xlu0 %1587
        %s1589 = vtos %v1588
        %v1590 = vstv %s1589
        %v1592 = vadd.f32 %v1583, %v1590
        %v1593 = vadd.f32 %v1584, %v1590
        %v1594 = vadd.f32 %v1585, %v1590
        %v1595 = vadd.f32 %v1586, %v1590
        %v1596 = vmax.f32 %v1592, 0.0
        %v1597 = vmax.f32 %v1593, 0.0
        %v1598 = vmax.f32 %v1594, 0.0
        %v1599 = vmax.f32 %v1595, 0.0
        %s1600 = smul.u32 %s848, 32
        %s1601 = scalar_lea.vmem [#allocation3], %s1600
        %vm1602 = vcmask 261120
        %1603 = vst.msk [vmem:[%s1601] sm:$0xff] %vm1602, %v1596
        %1604 = vst.msk [vmem:[%s1601 + $0x8] sm:$0xff] %vm1602, %v1597
        %1605 = vst.msk [vmem:[%s1601 + $0x10] sm:$0xff] %vm1602, %v1598
        %1606 = vst.msk [vmem:[%s1601 + $0x18] sm:$0xff] %vm1602, %v1599
      $region41: #{convncf_forward.16} parent=35 // loop_footer
        %s852 = sadd.s32 1, %s848
      $region42: #{convncf_forward.16} parent=35 // loop_footer_branch
        %847 = sbr.rel target = $region38
      $region43: #{convncf_forward.16} parent=35 // loop_exit
        _
      loop: start=0, step=1, limit=8
      $region44: #{convncf_forward.16} parent=35 // loop_pre_header
        _
      $region45: #{convncf_forward.16} parent=35 // loop_header
        %s1608 = sphi 0, %s1612
        %p1609 = scmp.ge.s32.totalorder %s1608, 8
      $region46: #{convncf_forward.16} parent=35 // loop_header_branch
        %1611 = sbr.rel (%p1609) target = $region50
      $region47: #{convncf_forward.16} parent=35 // loop_body
        %s1613 = sadd.s32 %s1608, 16
        %s1614 = scalar_lea.vmem %s3, %s1613
        %v1615 = vld [vmem:[%s1614] sm:$0x1]
        %v1616 = vld [vmem:[#allocation3] sm:$0xff]
        %v1617 = vld [vmem:[#allocation3 + $0x8] sm:$0xff]
        %s1619 = vtos %v1615
        %v1620 = vstv %s1619
        %v1622 = vmul.f32 %v1620, %v1616
        %v1623 = vmul.f32 %v1620, %v1617
        %1624 = vrot.lane.b32.xlu0 %v1615, 127
        %v1625 = vpop.permute.xlu0 %1624
        %s1626 = vtos %v1625
        %v1627 = vstv %s1626
        %v1629 = vmul.f32 %v1627, %v1616
        %v1630 = vmul.f32 %v1627, %v1617
        %1633 = vrot.lane.b32.xlu0 %v1629, 112
        %v1634 = vpop.permute.xlu0 %1633
        %1635 = vrot.lane.b32.xlu0 %v1630, 112
        %v1636 = vpop.permute.xlu0 %1635
        %v1639 = vadd.f32 %v1622, %v1634
        %v1640 = vadd.f32 %v1623, %v1636
        %v1641 = vld [vmem:[#allocation3 + $0x10] sm:$0xff]
        %v1642 = vld [vmem:[#allocation3 + $0x18] sm:$0xff]
        %1643 = vrot.lane.b32.xlu0 %v1615, 126
        %v1644 = vpop.permute.xlu0 %1643
        %s1645 = vtos %v1644
        %v1646 = vstv %s1645
        %v1648 = vmul.f32 %v1646, %v1641
        %v1649 = vmul.f32 %v1646, %v1642
        %v1650 = vadd.f32 %v1639, %v1648
        %v1651 = vadd.f32 %v1640, %v1649
        %1652 = vrot.lane.b32.xlu0 %v1615, 125
        %v1653 = vpop.permute.xlu0 %1652
        %s1654 = vtos %v1653
        %v1655 = vstv %s1654
        %v1657 = vmul.f32 %v1655, %v1641
        %v1658 = vmul.f32 %v1655, %v1642
        %1661 = vrot.lane.b32.xlu0 %v1657, 112
        %v1662 = vpop.permute.xlu0 %1661
        %1663 = vrot.lane.b32.xlu0 %v1658, 112
        %v1664 = vpop.permute.xlu0 %1663
        %v1667 = vadd.f32 %v1650, %v1662
        %v1668 = vadd.f32 %v1651, %v1664
        %s1669 = scalar_lea.vmem [#allocation3], 32
        %v1670 = vld [vmem:[%s1669] sm:$0xff]
        %v1671 = vld [vmem:[%s1669 + $0x8] sm:$0xff]
        %1672 = vrot.lane.b32.xlu0 %v1615, 124
        %v1673 = vpop.permute.xlu0 %1672
        %s1674 = vtos %v1673
        %v1675 = vstv %s1674
        %v1677 = vmul.f32 %v1675, %v1670
        %v1678 = vmul.f32 %v1675, %v1671
        %v1679 = vadd.f32 %v1667, %v1677
        %v1680 = vadd.f32 %v1668, %v1678
        %1681 = vrot.lane.b32.xlu0 %v1615, 123
        %v1682 = vpop.permute.xlu0 %1681
        %s1683 = vtos %v1682
        %v1684 = vstv %s1683
        %v1686 = vmul.f32 %v1684, %v1670
        %v1687 = vmul.f32 %v1684, %v1671
        %1690 = vrot.lane.b32.xlu0 %v1686, 112
        %v1691 = vpop.permute.xlu0 %1690
        %1692 = vrot.lane.b32.xlu0 %v1687, 112
        %v1693 = vpop.permute.xlu0 %1692
        %v1696 = vadd.f32 %v1679, %v1691
        %v1697 = vadd.f32 %v1680, %v1693
        %v1698 = vld [vmem:[%s1669 + $0x10] sm:$0xff]
        %v1699 = vld [vmem:[%s1669 + $0x18] sm:$0xff]
        %1700 = vrot.lane.b32.xlu0 %v1615, 122
        %v1701 = vpop.permute.xlu0 %1700
        %s1702 = vtos %v1701
        %v1703 = vstv %s1702
        %v1705 = vmul.f32 %v1703, %v1698
        %v1706 = vmul.f32 %v1703, %v1699
        %v1707 = vadd.f32 %v1696, %v1705
        %v1708 = vadd.f32 %v1697, %v1706
        %1709 = vrot.lane.b32.xlu0 %v1615, 121
        %v1710 = vpop.permute.xlu0 %1709
        %s1711 = vtos %v1710
        %v1712 = vstv %s1711
        %v1714 = vmul.f32 %v1712, %v1698
        %v1715 = vmul.f32 %v1712, %v1699
        %1718 = vrot.lane.b32.xlu0 %v1714, 112
        %v1719 = vpop.permute.xlu0 %1718
        %1720 = vrot.lane.b32.xlu0 %v1715, 112
        %v1721 = vpop.permute.xlu0 %1720
        %v1724 = vadd.f32 %v1707, %v1719
        %v1725 = vadd.f32 %v1708, %v1721
        %s1726 = scalar_lea.vmem [#allocation3], 64
        %v1727 = vld [vmem:[%s1726] sm:$0xff]
        %v1728 = vld [vmem:[%s1726 + $0x8] sm:$0xff]
        %1729 = vrot.lane.b32.xlu0 %v1615, 120
        %v1730 = vpop.permute.xlu0 %1729
        %s1731 = vtos %v1730
        %v1732 = vstv %s1731
        %v1734 = vmul.f32 %v1732, %v1727
        %v1735 = vmul.f32 %v1732, %v1728
        %v1736 = vadd.f32 %v1724, %v1734
        %v1737 = vadd.f32 %v1725, %v1735
        %1738 = vrot.lane.b32.xlu0 %v1615, 119
        %v1739 = vpop.permute.xlu0 %1738
        %s1740 = vtos %v1739
        %v1741 = vstv %s1740
        %v1743 = vmul.f32 %v1741, %v1727
        %v1744 = vmul.f32 %v1741, %v1728
        %1747 = vrot.lane.b32.xlu0 %v1743, 112
        %v1748 = vpop.permute.xlu0 %1747
        %1749 = vrot.lane.b32.xlu0 %v1744, 112
        %v1750 = vpop.permute.xlu0 %1749
        %v1753 = vadd.f32 %v1736, %v1748
        %v1754 = vadd.f32 %v1737, %v1750
        %v1755 = vld [vmem:[%s1726 + $0x10] sm:$0xff]
        %v1756 = vld [vmem:[%s1726 + $0x18] sm:$0xff]
        %1757 = vrot.lane.b32.xlu0 %v1615, 118
        %v1758 = vpop.permute.xlu0 %1757
        %s1759 = vtos %v1758
        %v1760 = vstv %s1759
        %v1762 = vmul.f32 %v1760, %v1755
        %v1763 = vmul.f32 %v1760, %v1756
        %v1764 = vadd.f32 %v1753, %v1762
        %v1765 = vadd.f32 %v1754, %v1763
        %1766 = vrot.lane.b32.xlu0 %v1615, 117
        %v1767 = vpop.permute.xlu0 %1766
        %s1768 = vtos %v1767
        %v1769 = vstv %s1768
        %v1771 = vmul.f32 %v1769, %v1755
        %v1772 = vmul.f32 %v1769, %v1756
        %1775 = vrot.lane.b32.xlu0 %v1771, 112
        %v1776 = vpop.permute.xlu0 %1775
        %1777 = vrot.lane.b32.xlu0 %v1772, 112
        %v1778 = vpop.permute.xlu0 %1777
        %v1781 = vadd.f32 %v1764, %v1776
        %v1782 = vadd.f32 %v1765, %v1778
        %s1783 = scalar_lea.vmem [#allocation3], 96
        %v1784 = vld [vmem:[%s1783] sm:$0xff]
        %v1785 = vld [vmem:[%s1783 + $0x8] sm:$0xff]
        %1786 = vrot.lane.b32.xlu0 %v1615, 116
        %v1787 = vpop.permute.xlu0 %1786
        %s1788 = vtos %v1787
        %v1789 = vstv %s1788
        %v1791 = vmul.f32 %v1789, %v1784
        %v1792 = vmul.f32 %v1789, %v1785
        %v1793 = vadd.f32 %v1781, %v1791
        %v1794 = vadd.f32 %v1782, %v1792
        %1795 = vrot.lane.b32.xlu0 %v1615, 115
        %v1796 = vpop.permute.xlu0 %1795
        %s1797 = vtos %v1796
        %v1798 = vstv %s1797
        %v1800 = vmul.f32 %v1798, %v1784
        %v1801 = vmul.f32 %v1798, %v1785
        %1804 = vrot.lane.b32.xlu0 %v1800, 112
        %v1805 = vpop.permute.xlu0 %1804
        %1806 = vrot.lane.b32.xlu0 %v1801, 112
        %v1807 = vpop.permute.xlu0 %1806
        %v1810 = vadd.f32 %v1793, %v1805
        %v1811 = vadd.f32 %v1794, %v1807
        %v1812 = vld [vmem:[%s1783 + $0x10] sm:$0xff]
        %v1813 = vld [vmem:[%s1783 + $0x18] sm:$0xff]
        %1814 = vrot.lane.b32.xlu0 %v1615, 114
        %v1815 = vpop.permute.xlu0 %1814
        %s1816 = vtos %v1815
        %v1817 = vstv %s1816
        %v1819 = vmul.f32 %v1817, %v1812
        %v1820 = vmul.f32 %v1817, %v1813
        %v1821 = vadd.f32 %v1810, %v1819
        %v1822 = vadd.f32 %v1811, %v1820
        %1823 = vrot.lane.b32.xlu0 %v1615, 113
        %v1824 = vpop.permute.xlu0 %1823
        %s1825 = vtos %v1824
        %v1826 = vstv %s1825
        %v1828 = vmul.f32 %v1826, %v1812
        %v1829 = vmul.f32 %v1826, %v1813
        %1832 = vrot.lane.b32.xlu0 %v1828, 112
        %v1833 = vpop.permute.xlu0 %1832
        %1834 = vrot.lane.b32.xlu0 %v1829, 112
        %v1835 = vpop.permute.xlu0 %1834
        %v1838 = vadd.f32 %v1821, %v1833
        %v1839 = vadd.f32 %v1822, %v1835
        %s1840 = scalar_lea.vmem [#allocation3], 128
        %v1841 = vld [vmem:[%s1840] sm:$0xff]
        %v1842 = vld [vmem:[%s1840 + $0x8] sm:$0xff]
        %1843 = vrot.lane.b32.xlu0 %v1615, 112
        %v1844 = vpop.permute.xlu0 %1843
        %s1845 = vtos %v1844
        %v1846 = vstv %s1845
        %v1848 = vmul.f32 %v1846, %v1841
        %v1849 = vmul.f32 %v1846, %v1842
        %v1850 = vadd.f32 %v1838, %v1848
        %v1851 = vadd.f32 %v1839, %v1849
        %1852 = vrot.lane.b32.xlu0 %v1615, 111
        %v1853 = vpop.permute.xlu0 %1852
        %s1854 = vtos %v1853
        %v1855 = vstv %s1854
        %v1857 = vmul.f32 %v1855, %v1841
        %v1858 = vmul.f32 %v1855, %v1842
        %1861 = vrot.lane.b32.xlu0 %v1857, 112
        %v1862 = vpop.permute.xlu0 %1861
        %1863 = vrot.lane.b32.xlu0 %v1858, 112
        %v1864 = vpop.permute.xlu0 %1863
        %v1867 = vadd.f32 %v1850, %v1862
        %v1868 = vadd.f32 %v1851, %v1864
        %v1869 = vld [vmem:[%s1840 + $0x10] sm:$0xff]
        %v1870 = vld [vmem:[%s1840 + $0x18] sm:$0xff]
        %1871 = vrot.lane.b32.xlu0 %v1615, 110
        %v1872 = vpop.permute.xlu0 %1871
        %s1873 = vtos %v1872
        %v1874 = vstv %s1873
        %v1876 = vmul.f32 %v1874, %v1869
        %v1877 = vmul.f32 %v1874, %v1870
        %v1878 = vadd.f32 %v1867, %v1876
        %v1879 = vadd.f32 %v1868, %v1877
        %1880 = vrot.lane.b32.xlu0 %v1615, 109
        %v1881 = vpop.permute.xlu0 %1880
        %s1882 = vtos %v1881
        %v1883 = vstv %s1882
        %v1885 = vmul.f32 %v1883, %v1869
        %v1886 = vmul.f32 %v1883, %v1870
        %1889 = vrot.lane.b32.xlu0 %v1885, 112
        %v1890 = vpop.permute.xlu0 %1889
        %1891 = vrot.lane.b32.xlu0 %v1886, 112
        %v1892 = vpop.permute.xlu0 %1891
        %v1895 = vadd.f32 %v1878, %v1890
        %v1896 = vadd.f32 %v1879, %v1892
        %s1897 = scalar_lea.vmem [#allocation3], 160
        %v1898 = vld [vmem:[%s1897] sm:$0xff]
        %v1899 = vld [vmem:[%s1897 + $0x8] sm:$0xff]
        %1900 = vrot.lane.b32.xlu0 %v1615, 108
        %v1901 = vpop.permute.xlu0 %1900
        %s1902 = vtos %v1901
        %v1903 = vstv %s1902
        %v1905 = vmul.f32 %v1903, %v1898
        %v1906 = vmul.f32 %v1903, %v1899
        %v1907 = vadd.f32 %v1895, %v1905
        %v1908 = vadd.f32 %v1896, %v1906
        %1909 = vrot.lane.b32.xlu0 %v1615, 107
        %v1910 = vpop.permute.xlu0 %1909
        %s1911 = vtos %v1910
        %v1912 = vstv %s1911
        %v1914 = vmul.f32 %v1912, %v1898
        %v1915 = vmul.f32 %v1912, %v1899
        %1918 = vrot.lane.b32.xlu0 %v1914, 112
        %v1919 = vpop.permute.xlu0 %1918
        %1920 = vrot.lane.b32.xlu0 %v1915, 112
        %v1921 = vpop.permute.xlu0 %1920
        %v1924 = vadd.f32 %v1907, %v1919
        %v1925 = vadd.f32 %v1908, %v1921
        %v1926 = vld [vmem:[%s1897 + $0x10] sm:$0xff]
        %v1927 = vld [vmem:[%s1897 + $0x18] sm:$0xff]
        %1928 = vrot.lane.b32.xlu0 %v1615, 106
        %v1929 = vpop.permute.xlu0 %1928
        %s1930 = vtos %v1929
        %v1931 = vstv %s1930
        %v1933 = vmul.f32 %v1931, %v1926
        %v1934 = vmul.f32 %v1931, %v1927
        %v1935 = vadd.f32 %v1924, %v1933
        %v1936 = vadd.f32 %v1925, %v1934
        %1937 = vrot.lane.b32.xlu0 %v1615, 105
        %v1938 = vpop.permute.xlu0 %1937
        %s1939 = vtos %v1938
        %v1940 = vstv %s1939
        %v1942 = vmul.f32 %v1940, %v1926
        %v1943 = vmul.f32 %v1940, %v1927
        %1946 = vrot.lane.b32.xlu0 %v1942, 112
        %v1947 = vpop.permute.xlu0 %1946
        %1948 = vrot.lane.b32.xlu0 %v1943, 112
        %v1949 = vpop.permute.xlu0 %1948
        %v1952 = vadd.f32 %v1935, %v1947
        %v1953 = vadd.f32 %v1936, %v1949
        %s1954 = scalar_lea.vmem [#allocation3], 192
        %v1955 = vld [vmem:[%s1954] sm:$0xff]
        %v1956 = vld [vmem:[%s1954 + $0x8] sm:$0xff]
        %1957 = vrot.lane.b32.xlu0 %v1615, 104
        %v1958 = vpop.permute.xlu0 %1957
        %s1959 = vtos %v1958
        %v1960 = vstv %s1959
        %v1962 = vmul.f32 %v1960, %v1955
        %v1963 = vmul.f32 %v1960, %v1956
        %v1964 = vadd.f32 %v1952, %v1962
        %v1965 = vadd.f32 %v1953, %v1963
        %1966 = vrot.lane.b32.xlu0 %v1615, 103
        %v1967 = vpop.permute.xlu0 %1966
        %s1968 = vtos %v1967
        %v1969 = vstv %s1968
        %v1971 = vmul.f32 %v1969, %v1955
        %v1972 = vmul.f32 %v1969, %v1956
        %1975 = vrot.lane.b32.xlu0 %v1971, 112
        %v1976 = vpop.permute.xlu0 %1975
        %1977 = vrot.lane.b32.xlu0 %v1972, 112
        %v1978 = vpop.permute.xlu0 %1977
        %v1981 = vadd.f32 %v1964, %v1976
        %v1982 = vadd.f32 %v1965, %v1978
        %v1983 = vld [vmem:[%s1954 + $0x10] sm:$0xff]
        %v1984 = vld [vmem:[%s1954 + $0x18] sm:$0xff]
        %1985 = vrot.lane.b32.xlu0 %v1615, 102
        %v1986 = vpop.permute.xlu0 %1985
        %s1987 = vtos %v1986
        %v1988 = vstv %s1987
        %v1990 = vmul.f32 %v1988, %v1983
        %v1991 = vmul.f32 %v1988, %v1984
        %v1992 = vadd.f32 %v1981, %v1990
        %v1993 = vadd.f32 %v1982, %v1991
        %1994 = vrot.lane.b32.xlu0 %v1615, 101
        %v1995 = vpop.permute.xlu0 %1994
        %s1996 = vtos %v1995
        %v1997 = vstv %s1996
        %v1999 = vmul.f32 %v1997, %v1983
        %v2000 = vmul.f32 %v1997, %v1984
        %2003 = vrot.lane.b32.xlu0 %v1999, 112
        %v2004 = vpop.permute.xlu0 %2003
        %2005 = vrot.lane.b32.xlu0 %v2000, 112
        %v2006 = vpop.permute.xlu0 %2005
        %v2009 = vadd.f32 %v1992, %v2004
        %v2010 = vadd.f32 %v1993, %v2006
        %s2011 = scalar_lea.vmem [#allocation3], 224
        %v2012 = vld [vmem:[%s2011] sm:$0xff]
        %v2013 = vld [vmem:[%s2011 + $0x8] sm:$0xff]
        %2014 = vrot.lane.b32.xlu0 %v1615, 100
        %v2015 = vpop.permute.xlu0 %2014
        %s2016 = vtos %v2015
        %v2017 = vstv %s2016
        %v2019 = vmul.f32 %v2017, %v2012
        %v2020 = vmul.f32 %v2017, %v2013
        %v2021 = vadd.f32 %v2009, %v2019
        %v2022 = vadd.f32 %v2010, %v2020
        %2023 = vrot.lane.b32.xlu0 %v1615, 99
        %v2024 = vpop.permute.xlu0 %2023
        %s2025 = vtos %v2024
        %v2026 = vstv %s2025
        %v2028 = vmul.f32 %v2026, %v2012
        %v2029 = vmul.f32 %v2026, %v2013
        %2032 = vrot.lane.b32.xlu0 %v2028, 112
        %v2033 = vpop.permute.xlu0 %2032
        %2034 = vrot.lane.b32.xlu0 %v2029, 112
        %v2035 = vpop.permute.xlu0 %2034
        %v2038 = vadd.f32 %v2021, %v2033
        %v2039 = vadd.f32 %v2022, %v2035
        %v2040 = vld [vmem:[%s2011 + $0x10] sm:$0xff]
        %v2041 = vld [vmem:[%s2011 + $0x18] sm:$0xff]
        %2042 = vrot.lane.b32.xlu0 %v1615, 98
        %v2043 = vpop.permute.xlu0 %2042
        %s2044 = vtos %v2043
        %v2045 = vstv %s2044
        %v2047 = vmul.f32 %v2045, %v2040
        %v2048 = vmul.f32 %v2045, %v2041
        %v2049 = vadd.f32 %v2038, %v2047
        %v2050 = vadd.f32 %v2039, %v2048
        %2051 = vrot.lane.b32.xlu0 %v1615, 97
        %v2052 = vpop.permute.xlu0 %2051
        %s2053 = vtos %v2052
        %v2054 = vstv %s2053
        %v2056 = vmul.f32 %v2054, %v2040
        %v2057 = vmul.f32 %v2054, %v2041
        %2060 = vrot.lane.b32.xlu0 %v2056, 112
        %v2061 = vpop.permute.xlu0 %2060
        %2062 = vrot.lane.b32.xlu0 %v2057, 112
        %v2063 = vpop.permute.xlu0 %2062
        %v2066 = vadd.f32 %v2049, %v2061
        %v2067 = vadd.f32 %v2050, %v2063
        %2068 = vrot.lane.b32.xlu0 %v1615, 96
        %v2069 = vpop.permute.xlu0 %2068
        %s2070 = vtos %v2069
        %v2071 = vstv %s2070
        %v2073 = vadd.f32 %v2066, %v2071
        %v2074 = vadd.f32 %v2067, %v2071
        %v2075 = vmax.f32 %v2073, 0.0
        %v2076 = vmax.f32 %v2074, 0.0
        %s2077 = smul.u32 %s1608, 16
        %s2078 = scalar_lea.vmem [#allocation4], %s2077
        %vm2079 = vcmask 130048
        %2080 = vst.msk [vmem:[%s2078] sm:$0xff] %vm2079, %v2075
        %2081 = vst.msk [vmem:[%s2078 + $0x8] sm:$0xff] %vm2079, %v2076
      $region48: #{convncf_forward.16} parent=35 // loop_footer
        %s1612 = sadd.s32 1, %s1608
      $region49: #{convncf_forward.16} parent=35 // loop_footer_branch
        %1607 = sbr.rel target = $region45
      $region50: #{convncf_forward.16} parent=35 // loop_exit
        _
      loop: start=0, step=1, limit=8
      $region51: #{convncf_forward.16} parent=35 // loop_pre_header
        _
      $region52: #{convncf_forward.16} parent=35 // loop_header
        %s2083 = sphi 0, %s2087
        %p2084 = scmp.ge.s32.totalorder %s2083, 8
      $region53: #{convncf_forward.16} parent=35 // loop_header_branch
        %2086 = sbr.rel (%p2084) target = $region57
      $region54: #{convncf_forward.16} parent=35 // loop_body
        %s2088 = sadd.s32 %s2083, 24
        %s2089 = scalar_lea.vmem %s3, %s2088
        %v2090 = vld [vmem:[%s2089] sm:$0x1]
        %v2091 = vld [vmem:[#allocation4] sm:$0xff]
        %s2093 = vtos %v2090
        %v2094 = vstv %s2093
        %v2096 = vmul.f32 %v2094, %v2091
        %2097 = vrot.lane.b32.xlu0 %v2090, 127
        %v2098 = vpop.permute.xlu0 %2097
        %s2099 = vtos %v2098
        %v2100 = vstv %s2099
        %v2102 = vmul.f32 %v2100, %v2091
        %2104 = vrot.lane.b32.xlu0 %v2102, 120
        %v2105 = vpop.permute.xlu0 %2104
        %v2107 = vadd.f32 %v2096, %v2105
        %v2108 = vld [vmem:[#allocation4 + $0x8] sm:$0xff]
        %2109 = vrot.lane.b32.xlu0 %v2090, 126
        %v2110 = vpop.permute.xlu0 %2109
        %s2111 = vtos %v2110
        %v2112 = vstv %s2111
        %v2114 = vmul.f32 %v2112, %v2108
        %v2115 = vadd.f32 %v2107, %v2114
        %2116 = vrot.lane.b32.xlu0 %v2090, 125
        %v2117 = vpop.permute.xlu0 %2116
        %s2118 = vtos %v2117
        %v2119 = vstv %s2118
        %v2121 = vmul.f32 %v2119, %v2108
        %2123 = vrot.lane.b32.xlu0 %v2121, 120
        %v2124 = vpop.permute.xlu0 %2123
        %v2126 = vadd.f32 %v2115, %v2124
        %s2127 = scalar_lea.vmem [#allocation4], 16
        %v2128 = vld [vmem:[%s2127] sm:$0xff]
        %2129 = vrot.lane.b32.xlu0 %v2090, 124
        %v2130 = vpop.permute.xlu0 %2129
        %s2131 = vtos %v2130
        %v2132 = vstv %s2131
        %v2134 = vmul.f32 %v2132, %v2128
        %v2135 = vadd.f32 %v2126, %v2134
        %2136 = vrot.lane.b32.xlu0 %v2090, 123
        %v2137 = vpop.permute.xlu0 %2136
        %s2138 = vtos %v2137
        %v2139 = vstv %s2138
        %v2141 = vmul.f32 %v2139, %v2128
        %2143 = vrot.lane.b32.xlu0 %v2141, 120
        %v2144 = vpop.permute.xlu0 %2143
        %v2146 = vadd.f32 %v2135, %v2144
        %v2147 = vld [vmem:[%s2127 + $0x8] sm:$0xff]
        %2148 = vrot.lane.b32.xlu0 %v2090, 122
        %v2149 = vpop.permute.xlu0 %2148
        %s2150 = vtos %v2149
        %v2151 = vstv %s2150
        %v2153 = vmul.f32 %v2151, %v2147
        %v2154 = vadd.f32 %v2146, %v2153
        %2155 = vrot.lane.b32.xlu0 %v2090, 121
        %v2156 = vpop.permute.xlu0 %2155
        %s2157 = vtos %v2156
        %v2158 = vstv %s2157
        %v2160 = vmul.f32 %v2158, %v2147
        %2162 = vrot.lane.b32.xlu0 %v2160, 120
        %v2163 = vpop.permute.xlu0 %2162
        %v2165 = vadd.f32 %v2154, %v2163
        %s2166 = scalar_lea.vmem [#allocation4], 32
        %v2167 = vld [vmem:[%s2166] sm:$0xff]
        %2168 = vrot.lane.b32.xlu0 %v2090, 120
        %v2169 = vpop.permute.xlu0 %2168
        %s2170 = vtos %v2169
        %v2171 = vstv %s2170
        %v2173 = vmul.f32 %v2171, %v2167
        %v2174 = vadd.f32 %v2165, %v2173
        %2175 = vrot.lane.b32.xlu0 %v2090, 119
        %v2176 = vpop.permute.xlu0 %2175
        %s2177 = vtos %v2176
        %v2178 = vstv %s2177
        %v2180 = vmul.f32 %v2178, %v2167
        %2182 = vrot.lane.b32.xlu0 %v2180, 120
        %v2183 = vpop.permute.xlu0 %2182
        %v2185 = vadd.f32 %v2174, %v2183
        %v2186 = vld [vmem:[%s2166 + $0x8] sm:$0xff]
        %2187 = vrot.lane.b32.xlu0 %v2090, 118
        %v2188 = vpop.permute.xlu0 %2187
        %s2189 = vtos %v2188
        %v2190 = vstv %s2189
        %v2192 = vmul.f32 %v2190, %v2186
        %v2193 = vadd.f32 %v2185, %v2192
        %2194 = vrot.lane.b32.xlu0 %v2090, 117
        %v2195 = vpop.permute.xlu0 %2194
        %s2196 = vtos %v2195
        %v2197 = vstv %s2196
        %v2199 = vmul.f32 %v2197, %v2186
        %2201 = vrot.lane.b32.xlu0 %v2199, 120
        %v2202 = vpop.permute.xlu0 %2201
        %v2204 = vadd.f32 %v2193, %v2202
        %s2205 = scalar_lea.vmem [#allocation4], 48
        %v2206 = vld [vmem:[%s2205] sm:$0xff]
        %2207 = vrot.lane.b32.xlu0 %v2090, 116
        %v2208 = vpop.permute.xlu0 %2207
        %s2209 = vtos %v2208
        %v2210 = vstv %s2209
        %v2212 = vmul.f32 %v2210, %v2206
        %v2213 = vadd.f32 %v2204, %v2212
        %2214 = vrot.lane.b32.xlu0 %v2090, 115
        %v2215 = vpop.permute.xlu0 %2214
        %s2216 = vtos %v2215
        %v2217 = vstv %s2216
        %v2219 = vmul.f32 %v2217, %v2206
        %2221 = vrot.lane.b32.xlu0 %v2219, 120
        %v2222 = vpop.permute.xlu0 %2221
        %v2224 = vadd.f32 %v2213, %v2222
        %v2225 = vld [vmem:[%s2205 + $0x8] sm:$0xff]
        %2226 = vrot.lane.b32.xlu0 %v2090, 114
        %v2227 = vpop.permute.xlu0 %2226
        %s2228 = vtos %v2227
        %v2229 = vstv %s2228
        %v2231 = vmul.f32 %v2229, %v2225
        %v2232 = vadd.f32 %v2224, %v2231
        %2233 = vrot.lane.b32.xlu0 %v2090, 113
        %v2234 = vpop.permute.xlu0 %2233
        %s2235 = vtos %v2234
        %v2236 = vstv %s2235
        %v2238 = vmul.f32 %v2236, %v2225
        %2240 = vrot.lane.b32.xlu0 %v2238, 120
        %v2241 = vpop.permute.xlu0 %2240
        %v2243 = vadd.f32 %v2232, %v2241
        %s2244 = scalar_lea.vmem [#allocation4], 64
        %v2245 = vld [vmem:[%s2244] sm:$0xff]
        %2246 = vrot.lane.b32.xlu0 %v2090, 112
        %v2247 = vpop.permute.xlu0 %2246
        %s2248 = vtos %v2247
        %v2249 = vstv %s2248
        %v2251 = vmul.f32 %v2249, %v2245
        %v2252 = vadd.f32 %v2243, %v2251
        %2253 = vrot.lane.b32.xlu0 %v2090, 111
        %v2254 = vpop.permute.xlu0 %2253
        %s2255 = vtos %v2254
        %v2256 = vstv %s2255
        %v2258 = vmul.f32 %v2256, %v2245
        %2260 = vrot.lane.b32.xlu0 %v2258, 120
        %v2261 = vpop.permute.xlu0 %2260
        %v2263 = vadd.f32 %v2252, %v2261
        %v2264 = vld [vmem:[%s2244 + $0x8] sm:$0xff]
        %2265 = vrot.lane.b32.xlu0 %v2090, 110
        %v2266 = vpop.permute.xlu0 %2265
        %s2267 = vtos %v2266
        %v2268 = vstv %s2267
        %v2270 = vmul.f32 %v2268, %v2264
        %v2271 = vadd.f32 %v2263, %v2270
        %2272 = vrot.lane.b32.xlu0 %v2090, 109
        %v2273 = vpop.permute.xlu0 %2272
        %s2274 = vtos %v2273
        %v2275 = vstv %s2274
        %v2277 = vmul.f32 %v2275, %v2264
        %2279 = vrot.lane.b32.xlu0 %v2277, 120
        %v2280 = vpop.permute.xlu0 %2279
        %v2282 = vadd.f32 %v2271, %v2280
        %s2283 = scalar_lea.vmem [#allocation4], 80
        %v2284 = vld [vmem:[%s2283] sm:$0xff]
        %2285 = vrot.lane.b32.xlu0 %v2090, 108
        %v2286 = vpop.permute.xlu0 %2285
        %s2287 = vtos %v2286
        %v2288 = vstv %s2287
        %v2290 = vmul.f32 %v2288, %v2284
        %v2291 = vadd.f32 %v2282, %v2290
        %2292 = vrot.lane.b32.xlu0 %v2090, 107
        %v2293 = vpop.permute.xlu0 %2292
        %s2294 = vtos %v2293
        %v2295 = vstv %s2294
        %v2297 = vmul.f32 %v2295, %v2284
        %2299 = vrot.lane.b32.xlu0 %v2297, 120
        %v2300 = vpop.permute.xlu0 %2299
        %v2302 = vadd.f32 %v2291, %v2300
        %v2303 = vld [vmem:[%s2283 + $0x8] sm:$0xff]
        %2304 = vrot.lane.b32.xlu0 %v2090, 106
        %v2305 = vpop.permute.xlu0 %2304
        %s2306 = vtos %v2305
        %v2307 = vstv %s2306
        %v2309 = vmul.f32 %v2307, %v2303
        %v2310 = vadd.f32 %v2302, %v2309
        %2311 = vrot.lane.b32.xlu0 %v2090, 105
        %v2312 = vpop.permute.xlu0 %2311
        %s2313 = vtos %v2312
        %v2314 = vstv %s2313
        %v2316 = vmul.f32 %v2314, %v2303
        %2318 = vrot.lane.b32.xlu0 %v2316, 120
        %v2319 = vpop.permute.xlu0 %2318
        %v2321 = vadd.f32 %v2310, %v2319
        %s2322 = scalar_lea.vmem [#allocation4], 96
        %v2323 = vld [vmem:[%s2322] sm:$0xff]
        %2324 = vrot.lane.b32.xlu0 %v2090, 104
        %v2325 = vpop.permute.xlu0 %2324
        %s2326 = vtos %v2325
        %v2327 = vstv %s2326
        %v2329 = vmul.f32 %v2327, %v2323
        %v2330 = vadd.f32 %v2321, %v2329
        %2331 = vrot.lane.b32.xlu0 %v2090, 103
        %v2332 = vpop.permute.xlu0 %2331
        %s2333 = vtos %v2332
        %v2334 = vstv %s2333
        %v2336 = vmul.f32 %v2334, %v2323
        %2338 = vrot.lane.b32.xlu0 %v2336, 120
        %v2339 = vpop.permute.xlu0 %2338
        %v2341 = vadd.f32 %v2330, %v2339
        %v2342 = vld [vmem:[%s2322 + $0x8] sm:$0xff]
        %2343 = vrot.lane.b32.xlu0 %v2090, 102
        %v2344 = vpop.permute.xlu0 %2343
        %s2345 = vtos %v2344
        %v2346 = vstv %s2345
        %v2348 = vmul.f32 %v2346, %v2342
        %v2349 = vadd.f32 %v2341, %v2348
        %2350 = vrot.lane.b32.xlu0 %v2090, 101
        %v2351 = vpop.permute.xlu0 %2350
        %s2352 = vtos %v2351
        %v2353 = vstv %s2352
        %v2355 = vmul.f32 %v2353, %v2342
        %2357 = vrot.lane.b32.xlu0 %v2355, 120
        %v2358 = vpop.permute.xlu0 %2357
        %v2360 = vadd.f32 %v2349, %v2358
        %s2361 = scalar_lea.vmem [#allocation4], 112
        %v2362 = vld [vmem:[%s2361] sm:$0xff]
        %2363 = vrot.lane.b32.xlu0 %v2090, 100
        %v2364 = vpop.permute.xlu0 %2363
        %s2365 = vtos %v2364
        %v2366 = vstv %s2365
        %v2368 = vmul.f32 %v2366, %v2362
        %v2369 = vadd.f32 %v2360, %v2368
        %2370 = vrot.lane.b32.xlu0 %v2090, 99
        %v2371 = vpop.permute.xlu0 %2370
        %s2372 = vtos %v2371
        %v2373 = vstv %s2372
        %v2375 = vmul.f32 %v2373, %v2362
        %2377 = vrot.lane.b32.xlu0 %v2375, 120
        %v2378 = vpop.permute.xlu0 %2377
        %v2380 = vadd.f32 %v2369, %v2378
        %v2381 = vld [vmem:[%s2361 + $0x8] sm:$0xff]
        %2382 = vrot.lane.b32.xlu0 %v2090, 98
        %v2383 = vpop.permute.xlu0 %2382
        %s2384 = vtos %v2383
        %v2385 = vstv %s2384
        %v2387 = vmul.f32 %v2385, %v2381
        %v2388 = vadd.f32 %v2380, %v2387
        %2389 = vrot.lane.b32.xlu0 %v2090, 97
        %v2390 = vpop.permute.xlu0 %2389
        %s2391 = vtos %v2390
        %v2392 = vstv %s2391
        %v2394 = vmul.f32 %v2392, %v2381
        %2396 = vrot.lane.b32.xlu0 %v2394, 120
        %v2397 = vpop.permute.xlu0 %2396
        %v2399 = vadd.f32 %v2388, %v2397
        %2400 = vrot.lane.b32.xlu0 %v2090, 96
        %v2401 = vpop.permute.xlu0 %2400
        %s2402 = vtos %v2401
        %v2403 = vstv %s2402
        %v2405 = vadd.f32 %v2399, %v2403
        %v2406 = vmax.f32 %v2405, 0.0
        %s2407 = smul.u32 %s2083, 8
        %s2408 = scalar_lea.vmem [#allocation5], %s2407
        %2409 = vst.msk [vmem:[%s2408] sm:$0xff] %vm309, %v2406
      $region55: #{convncf_forward.16} parent=35 // loop_footer
        %s2087 = sadd.s32 1, %s2083
      $region56: #{convncf_forward.16} parent=35 // loop_footer_branch
        %2082 = sbr.rel target = $region52
      $region57: #{convncf_forward.16} parent=35 // loop_exit
        _
      loop: start=0, step=1, limit=8
      $region58: #{convncf_forward.16} parent=35 // loop_pre_header
        _
      $region59: #{convncf_forward.16} parent=35 // loop_header
        %s2411 = sphi 0, %s2415
        %p2412 = scmp.ge.s32.totalorder %s2411, 8
      $region60: #{convncf_forward.16} parent=35 // loop_header_branch
        %2414 = sbr.rel (%p2412) target = $region64
      $region61: #{convncf_forward.16} parent=35 // loop_body
        %s2416 = sadd.s32 %s2411, 32
        %s2417 = scalar_lea.vmem %s3, %s2416
        %v2418 = vld [vmem:[%s2417] sm:$0x1]
        %v2419 = vld [vmem:[#allocation5] sm:$0xf]
        %s2421 = vtos %v2418
        %v2422 = vstv %s2421
        %v2424 = vmul.f32 %v2422, %v2419
        %2425 = vrot.lane.b32.xlu0 %v2418, 127
        %v2426 = vpop.permute.xlu0 %2425
        %s2427 = vtos %v2426
        %v2428 = vstv %s2427
        %v2430 = vmul.f32 %v2428, %v2419
        %2432 = vrot.lane.b32.xlu0 %v2430, 124
        %v2433 = vpop.permute.xlu0 %2432
        %v2435 = vadd.f32 %v2424, %v2433
        %v2436 = vld [vmem:[#allocation5 + $0x4] sm:$0xf]
        %2437 = vrot.lane.b32.xlu0 %v2418, 126
        %v2438 = vpop.permute.xlu0 %2437
        %s2439 = vtos %v2438
        %v2440 = vstv %s2439
        %v2442 = vmul.f32 %v2440, %v2436
        %v2443 = vadd.f32 %v2435, %v2442
        %2444 = vrot.lane.b32.xlu0 %v2418, 125
        %v2445 = vpop.permute.xlu0 %2444
        %s2446 = vtos %v2445
        %v2447 = vstv %s2446
        %v2449 = vmul.f32 %v2447, %v2436
        %2451 = vrot.lane.b32.xlu0 %v2449, 124
        %v2452 = vpop.permute.xlu0 %2451
        %v2454 = vadd.f32 %v2443, %v2452
        %s2455 = scalar_lea.vmem [#allocation5], 8
        %v2456 = vld [vmem:[%s2455] sm:$0xf]
        %2457 = vrot.lane.b32.xlu0 %v2418, 124
        %v2458 = vpop.permute.xlu0 %2457
        %s2459 = vtos %v2458
        %v2460 = vstv %s2459
        %v2462 = vmul.f32 %v2460, %v2456
        %v2463 = vadd.f32 %v2454, %v2462
        %2464 = vrot.lane.b32.xlu0 %v2418, 123
        %v2465 = vpop.permute.xlu0 %2464
        %s2466 = vtos %v2465
        %v2467 = vstv %s2466
        %v2469 = vmul.f32 %v2467, %v2456
        %2471 = vrot.lane.b32.xlu0 %v2469, 124
        %v2472 = vpop.permute.xlu0 %2471
        %v2474 = vadd.f32 %v2463, %v2472
        %v2475 = vld [vmem:[%s2455 + $0x4] sm:$0xf]
        %2476 = vrot.lane.b32.xlu0 %v2418, 122
        %v2477 = vpop.permute.xlu0 %2476
        %s2478 = vtos %v2477
        %v2479 = vstv %s2478
        %v2481 = vmul.f32 %v2479, %v2475
        %v2482 = vadd.f32 %v2474, %v2481
        %2483 = vrot.lane.b32.xlu0 %v2418, 121
        %v2484 = vpop.permute.xlu0 %2483
        %s2485 = vtos %v2484
        %v2486 = vstv %s2485
        %v2488 = vmul.f32 %v2486, %v2475
        %2490 = vrot.lane.b32.xlu0 %v2488, 124
        %v2491 = vpop.permute.xlu0 %2490
        %v2493 = vadd.f32 %v2482, %v2491
        %s2494 = scalar_lea.vmem [#allocation5], 16
        %v2495 = vld [vmem:[%s2494] sm:$0xf]
        %2496 = vrot.lane.b32.xlu0 %v2418, 120
        %v2497 = vpop.permute.xlu0 %2496
        %s2498 = vtos %v2497
        %v2499 = vstv %s2498
        %v2501 = vmul.f32 %v2499, %v2495
        %v2502 = vadd.f32 %v2493, %v2501
        %2503 = vrot.lane.b32.xlu0 %v2418, 119
        %v2504 = vpop.permute.xlu0 %2503
        %s2505 = vtos %v2504
        %v2506 = vstv %s2505
        %v2508 = vmul.f32 %v2506, %v2495
        %2510 = vrot.lane.b32.xlu0 %v2508, 124
        %v2511 = vpop.permute.xlu0 %2510
        %v2513 = vadd.f32 %v2502, %v2511
        %v2514 = vld [vmem:[%s2494 + $0x4] sm:$0xf]
        %2515 = vrot.lane.b32.xlu0 %v2418, 118
        %v2516 = vpop.permute.xlu0 %2515
        %s2517 = vtos %v2516
        %v2518 = vstv %s2517
        %v2520 = vmul.f32 %v2518, %v2514
        %v2521 = vadd.f32 %v2513, %v2520
        %2522 = vrot.lane.b32.xlu0 %v2418, 117
        %v2523 = vpop.permute.xlu0 %2522
        %s2524 = vtos %v2523
        %v2525 = vstv %s2524
        %v2527 = vmul.f32 %v2525, %v2514
        %2529 = vrot.lane.b32.xlu0 %v2527, 124
        %v2530 = vpop.permute.xlu0 %2529
        %v2532 = vadd.f32 %v2521, %v2530
        %s2533 = scalar_lea.vmem [#allocation5], 24
        %v2534 = vld [vmem:[%s2533] sm:$0xf]
        %2535 = vrot.lane.b32.xlu0 %v2418, 116
        %v2536 = vpop.permute.xlu0 %2535
        %s2537 = vtos %v2536
        %v2538 = vstv %s2537
        %v2540 = vmul.f32 %v2538, %v2534
        %v2541 = vadd.f32 %v2532, %v2540
        %2542 = vrot.lane.b32.xlu0 %v2418, 115
        %v2543 = vpop.permute.xlu0 %2542
        %s2544 = vtos %v2543
        %v2545 = vstv %s2544
        %v2547 = vmul.f32 %v2545, %v2534
        %2549 = vrot.lane.b32.xlu0 %v2547, 124
        %v2550 = vpop.permute.xlu0 %2549
        %v2552 = vadd.f32 %v2541, %v2550
        %v2553 = vld [vmem:[%s2533 + $0x4] sm:$0xf]
        %2554 = vrot.lane.b32.xlu0 %v2418, 114
        %v2555 = vpop.permute.xlu0 %2554
        %s2556 = vtos %v2555
        %v2557 = vstv %s2556
        %v2559 = vmul.f32 %v2557, %v2553
        %v2560 = vadd.f32 %v2552, %v2559
        %2561 = vrot.lane.b32.xlu0 %v2418, 113
        %v2562 = vpop.permute.xlu0 %2561
        %s2563 = vtos %v2562
        %v2564 = vstv %s2563
        %v2566 = vmul.f32 %v2564, %v2553
        %2568 = vrot.lane.b32.xlu0 %v2566, 124
        %v2569 = vpop.permute.xlu0 %2568
        %v2571 = vadd.f32 %v2560, %v2569
        %s2572 = scalar_lea.vmem [#allocation5], 32
        %v2573 = vld [vmem:[%s2572] sm:$0xf]
        %2574 = vrot.lane.b32.xlu0 %v2418, 112
        %v2575 = vpop.permute.xlu0 %2574
        %s2576 = vtos %v2575
        %v2577 = vstv %s2576
        %v2579 = vmul.f32 %v2577, %v2573
        %v2580 = vadd.f32 %v2571, %v2579
        %2581 = vrot.lane.b32.xlu0 %v2418, 111
        %v2582 = vpop.permute.xlu0 %2581
        %s2583 = vtos %v2582
        %v2584 = vstv %s2583
        %v2586 = vmul.f32 %v2584, %v2573
        %2588 = vrot.lane.b32.xlu0 %v2586, 124
        %v2589 = vpop.permute.xlu0 %2588
        %v2591 = vadd.f32 %v2580, %v2589
        %v2592 = vld [vmem:[%s2572 + $0x4] sm:$0xf]
        %2593 = vrot.lane.b32.xlu0 %v2418, 110
        %v2594 = vpop.permute.xlu0 %2593
        %s2595 = vtos %v2594
        %v2596 = vstv %s2595
        %v2598 = vmul.f32 %v2596, %v2592
        %v2599 = vadd.f32 %v2591, %v2598
        %2600 = vrot.lane.b32.xlu0 %v2418, 109
        %v2601 = vpop.permute.xlu0 %2600
        %s2602 = vtos %v2601
        %v2603 = vstv %s2602
        %v2605 = vmul.f32 %v2603, %v2592
        %2607 = vrot.lane.b32.xlu0 %v2605, 124
        %v2608 = vpop.permute.xlu0 %2607
        %v2610 = vadd.f32 %v2599, %v2608
        %s2611 = scalar_lea.vmem [#allocation5], 40
        %v2612 = vld [vmem:[%s2611] sm:$0xf]
        %2613 = vrot.lane.b32.xlu0 %v2418, 108
        %v2614 = vpop.permute.xlu0 %2613
        %s2615 = vtos %v2614
        %v2616 = vstv %s2615
        %v2618 = vmul.f32 %v2616, %v2612
        %v2619 = vadd.f32 %v2610, %v2618
        %2620 = vrot.lane.b32.xlu0 %v2418, 107
        %v2621 = vpop.permute.xlu0 %2620
        %s2622 = vtos %v2621
        %v2623 = vstv %s2622
        %v2625 = vmul.f32 %v2623, %v2612
        %2627 = vrot.lane.b32.xlu0 %v2625, 124
        %v2628 = vpop.permute.xlu0 %2627
        %v2630 = vadd.f32 %v2619, %v2628
        %v2631 = vld [vmem:[%s2611 + $0x4] sm:$0xf]
        %2632 = vrot.lane.b32.xlu0 %v2418, 106
        %v2633 = vpop.permute.xlu0 %2632
        %s2634 = vtos %v2633
        %v2635 = vstv %s2634
        %v2637 = vmul.f32 %v2635, %v2631
        %v2638 = vadd.f32 %v2630, %v2637
        %2639 = vrot.lane.b32.xlu0 %v2418, 105
        %v2640 = vpop.permute.xlu0 %2639
        %s2641 = vtos %v2640
        %v2642 = vstv %s2641
        %v2644 = vmul.f32 %v2642, %v2631
        %2646 = vrot.lane.b32.xlu0 %v2644, 124
        %v2647 = vpop.permute.xlu0 %2646
        %v2649 = vadd.f32 %v2638, %v2647
        %s2650 = scalar_lea.vmem [#allocation5], 48
        %v2651 = vld [vmem:[%s2650] sm:$0xf]
        %2652 = vrot.lane.b32.xlu0 %v2418, 104
        %v2653 = vpop.permute.xlu0 %2652
        %s2654 = vtos %v2653
        %v2655 = vstv %s2654
        %v2657 = vmul.f32 %v2655, %v2651
        %v2658 = vadd.f32 %v2649, %v2657
        %2659 = vrot.lane.b32.xlu0 %v2418, 103
        %v2660 = vpop.permute.xlu0 %2659
        %s2661 = vtos %v2660
        %v2662 = vstv %s2661
        %v2664 = vmul.f32 %v2662, %v2651
        %2666 = vrot.lane.b32.xlu0 %v2664, 124
        %v2667 = vpop.permute.xlu0 %2666
        %v2669 = vadd.f32 %v2658, %v2667
        %v2670 = vld [vmem:[%s2650 + $0x4] sm:$0xf]
        %2671 = vrot.lane.b32.xlu0 %v2418, 102
        %v2672 = vpop.permute.xlu0 %2671
        %s2673 = vtos %v2672
        %v2674 = vstv %s2673
        %v2676 = vmul.f32 %v2674, %v2670
        %v2677 = vadd.f32 %v2669, %v2676
        %2678 = vrot.lane.b32.xlu0 %v2418, 101
        %v2679 = vpop.permute.xlu0 %2678
        %s2680 = vtos %v2679
        %v2681 = vstv %s2680
        %v2683 = vmul.f32 %v2681, %v2670
        %2685 = vrot.lane.b32.xlu0 %v2683, 124
        %v2686 = vpop.permute.xlu0 %2685
        %v2688 = vadd.f32 %v2677, %v2686
        %s2689 = scalar_lea.vmem [#allocation5], 56
        %v2690 = vld [vmem:[%s2689] sm:$0xf]
        %2691 = vrot.lane.b32.xlu0 %v2418, 100
        %v2692 = vpop.permute.xlu0 %2691
        %s2693 = vtos %v2692
        %v2694 = vstv %s2693
        %v2696 = vmul.f32 %v2694, %v2690
        %v2697 = vadd.f32 %v2688, %v2696
        %2698 = vrot.lane.b32.xlu0 %v2418, 99
        %v2699 = vpop.permute.xlu0 %2698
        %s2700 = vtos %v2699
        %v2701 = vstv %s2700
        %v2703 = vmul.f32 %v2701, %v2690
        %2705 = vrot.lane.b32.xlu0 %v2703, 124
        %v2706 = vpop.permute.xlu0 %2705
        %v2708 = vadd.f32 %v2697, %v2706
        %v2709 = vld [vmem:[%s2689 + $0x4] sm:$0xf]
        %2710 = vrot.lane.b32.xlu0 %v2418, 98
        %v2711 = vpop.permute.xlu0 %2710
        %s2712 = vtos %v2711
        %v2713 = vstv %s2712
        %v2715 = vmul.f32 %v2713, %v2709
        %v2716 = vadd.f32 %v2708, %v2715
        %2717 = vrot.lane.b32.xlu0 %v2418, 97
        %v2718 = vpop.permute.xlu0 %2717
        %s2719 = vtos %v2718
        %v2720 = vstv %s2719
        %v2722 = vmul.f32 %v2720, %v2709
        %2724 = vrot.lane.b32.xlu0 %v2722, 124
        %v2725 = vpop.permute.xlu0 %2724
        %v2727 = vadd.f32 %v2716, %v2725
        %2728 = vrot.lane.b32.xlu0 %v2418, 96
        %v2729 = vpop.permute.xlu0 %2728
        %s2730 = vtos %v2729
        %v2731 = vstv %s2730
        %v2733 = vadd.f32 %v2727, %v2731
        %v2734 = vmax.f32 %v2733, 0.0
        %s2735 = smul.u32 %s2411, 4
        %s2736 = scalar_lea.vmem %s214, %s2735
        %vm2737 = vcmask 27648
        %2738 = vst.msk [vmem:[%s2736] sm:$0xf] %vm2737, %v2734
      $region62: #{convncf_forward.16} parent=35 // loop_footer
        %s2415 = sadd.s32 1, %s2411
      $region63: #{convncf_forward.16} parent=35 // loop_footer_branch
        %2410 = sbr.rel target = $region59
      $region64: #{convncf_forward.16} parent=35 // loop_exit
        _
      %p2739 = scmp.lt.s32.totalorder %s15, 1
      %s2740 = scalar_select %p2739, %s15, 1
      %s2741 = smul.addr %s2740, 8
      %s2742 = smul.addr %s2741, 4
      %s2743 = scalar_lea.vmem %s4, %s2742
      // Predicated region
      $region65: #{convncf_forward.16} parent=35 // pred_check
        %p2744 = pneg %p127
      $region66: #{convncf_forward.16} parent=35 // pred_check_branch
        %2746 = sbr.rel (%p2744) target = $region68
      $region67: #{convncf_forward.16} parent=35 // pred_region
        _
      $region68: #{convncf_forward.16} parent=35 // pred_fallthru
        _
    $region36: #{convncf_forward.16} parent=5 // pred_fallthru
      _
    %p2747 = scmp.le.s32.totalorder 2, %s10
    // Predicated region
    $region69: #{convncf_forward.16} parent=5 // pred_check
      %p2748 = pneg %p2747
    $region70: #{convncf_forward.16} parent=5 // pred_check_branch
      %2750 = sbr.rel (%p2748) target = $region72
    $region71: #{convncf_forward.16} parent=5 // pred_region
      %s2751 = ssub.s32 %s10, 2
      // Predicated region
      $region73: #{convncf_forward.16} parent=71 // pred_check
        %p2752 = pneg %p133
      $region74: #{convncf_forward.16} parent=71 // pred_check_branch
        %2754 = sbr.rel (%p2752) target = $region76
      $region75: #{convncf_forward.16} parent=71 // pred_region
        %p2755 = scmp.lt.s32.totalorder %s16, 1
        %s2756 = scalar_select %p2755, %s16, 1
        %s2757 = smul.addr %s2756, 8
        %s2758 = smul.addr %s2757, 4
        %s2759 = scalar_lea.vmem %s4, %s2758
      $region76: #{convncf_forward.16} parent=71 // pred_fallthru
        _
    $region72: #{convncf_forward.16} parent=5 // pred_fallthru
      _
  $region6: #{convncf_forward.16} parent=0 // loop_footer
    %s14 = sadd.s32 1, %s10
  $region7: #{convncf_forward.16} parent=0 // loop_footer_branch
    %9 = sbr.rel target = $region3
  $region8: #{convncf_forward.16} parent=0 // loop_exit
    _

</llo_original>
